<compile_context>
chip_gen: v7x
topology: tpu7x:2x2x1
jax: 0.10.0
libtpu: 0.0.40
codegen_flags: <defaults>
</compile_context>

<pallas_src>
import functools

import jax
import jax.numpy as jnp
from jax import lax
from jax.experimental import pallas as pl
from jax.experimental.pallas import tpu as pltpu


def _round_up(x, m):
    return (x + m - 1) // m * m


# ----------------------------------------------------------------------------
# Pallas kernels
# ----------------------------------------------------------------------------
def _apply_act(x, act):
    """Activation math in f32 (keeps v5e free of bf16 VPU/EUP churn)."""
    if act == "relu":
        return jnp.maximum(x, 0.0)
    if act == "erf":
        return lax.erf(x)
    if act == "elu01":  # torch.nn.ELU(alpha=0.1); exp only on the <=0 branch
        return jnp.where(x > 0, x, 0.1 * (jnp.exp(jnp.minimum(x, 0.0)) - 1.0))
    if act == "none":
        return x
    raise ValueError(f"unknown activation {act}")


def _conv_mm_kernel(w_ref, b_ref, p_ref, o_ref, *, act):
    # w: (OC, K) f32, b: (OC, 1) f32, p: (K, TM) f32  ->  o: (OC, TM) f32
    acc = jnp.dot(w_ref[...], p_ref[...], preferred_element_type=jnp.float32)
    o_ref[...] = _apply_act(acc + b_ref[...], act)


def _maxpool3x3s2_kernel(a_ref, b_ref, c_ref, o_ref):
    # a/b/c: (H, OW, Q) = input columns {2*ow, 2*ow+1, 2*ow+2}; o: (OH, OW, Q).
    # W-direction 3-window max first (pure VPU), then the H-direction
    # 3-window / stride-2 max via static leading-axis indexing.
    m = jnp.maximum(jnp.maximum(a_ref[...], b_ref[...]), c_ref[...])
    oh_total = o_ref.shape[0]
    for oh in range(oh_total):
        o_ref[oh] = jnp.maximum(jnp.maximum(m[2 * oh], m[2 * oh + 1]),
                                m[2 * oh + 2])


def _head_kernel(p_ref, w1_ref, b1_ref, w2_ref, b2_ref, w3_ref, b3_ref, o_ref):
    # p: (HW, N, C) f32.  Fuses AdaptiveMaxPool2d(1) + Flatten + the 3 linear
    # layers (tanh / reciprocal activations) into one kernel.
    g = jnp.max(p_ref[...], axis=0)                                   # (N, C)
    h1 = jnp.dot(g, w1_ref[...],
                 preferred_element_type=jnp.float32) + b1_ref[...]
    h1 = jnp.tanh(h1)                                                 # Tanh
    h2 = jnp.dot(h1, w2_ref[...],
                 preferred_element_type=jnp.float32) + b2_ref[...]
    h2 = 1.0 / h2                                                     # torch.reciprocal
    o_ref[...] = jnp.dot(h2, w3_ref[...],
                         preferred_element_type=jnp.float32) + b3_ref[...]


# ----------------------------------------------------------------------------
# Layer wrappers
# ----------------------------------------------------------------------------
def conv_matmul(wmat, bias, patches, act):
    """(OC, K) f32 @ (K, M) f32 + bias + act -> (OC, M) f32, gridded over M."""
    OC, K = wmat.shape
    _, M = patches.shape
    TM = _round_up(M, 128) if M <= 512 else 512
    Mp = _round_up(M, TM)
    if Mp != M:
        patches = jnp.pad(patches, ((0, 0), (0, Mp - M)))
    out = pl.pallas_call(
        functools.partial(_conv_mm_kernel, act=act),
        out_shape=jax.ShapeDtypeStruct((OC, Mp), jnp.float32),
        grid=(Mp // TM,),
        in_specs=[
            pl.BlockSpec((OC, K), lambda i: (0, 0)),   # weights: resident
            pl.BlockSpec((OC, 1), lambda i: (0, 0)),   # bias:    resident
            pl.BlockSpec((K, TM), lambda i: (0, i)),   # patch tile (pipelined)
        ],
        out_specs=pl.BlockSpec((OC, TM), lambda i: (0, i)),
        compiler_params=pltpu.CompilerParams(
            dimension_semantics=("parallel",)),        # v7x megacore sharding
    )(wmat, bias, patches)
    return out[:, :M]


def conv2d(x, wmat, bias, kernel_size, stride, padding, dilation, act):
    """x: (C, N, H, W) f32; wmat: (OC, KH*KW*C) f32, K ordered (kh, kw, ic)."""
    C, N, H, W = x.shape
    KH, KW = kernel_size
    sh, sw = stride
    ph, pw = padding
    dh, dw = dilation
    xp = jnp.pad(x, ((0, 0), (0, 0), (ph, ph), (pw, pw)))
    Hp, Wp = H + 2 * ph, W + 2 * pw
    OH = (Hp - ((KH - 1) * dh + 1)) // sh + 1
    OW = (Wp - ((KW - 1) * dw + 1)) // sw + 1
    # im2col patch matrix (layout glue in XLA; all FLOPs go through the
    # fused Pallas matmul below).
    # TODO(synk): fold this window gather into the matmul kernel (K grid axis
    # with in-kernel accumulation) to remove the conv1 patch-matrix round trip.
    cols = []
    for i in range(KH):
        for j in range(KW):
            cols.append(xp[:, :, i * dh: i * dh + (OH - 1) * sh + 1: sh,
                               j * dw: j * dw + (OW - 1) * sw + 1: sw])
    patches = jnp.stack(cols, axis=0).reshape(KH * KW * C, N * OH * OW)
    out = conv_matmul(wmat, bias, patches, act)          # (OC, M) f32
    OC = wmat.shape[0]
    return out.reshape(OC, N, OH, OW)


def maxpool_3x3_s2(x):
    """MaxPool2d(kernel=3, stride=2, padding=0) on (C, N, H, W)."""
    C, N, H, W = x.shape
    OH = (H - 3) // 2 + 1
    OW = (W - 3) // 2 + 1
    y = jnp.transpose(x, (2, 3, 0, 1)).reshape(H, W, C * N)
    ye, yo = y[:, 0::2, :], y[:, 1::2, :]          # W even/odd deinterleave (XLA glue)
    a = ye[:, :OW, :]                              # column 2*ow
    b = yo[:, :OW, :]                              # column 2*ow + 1
    c = ye[:, 1:OW + 1, :]                         # column 2*ow + 2
    p = pl.pallas_call(
        _maxpool3x3s2_kernel,
        out_shape=jax.ShapeDtypeStruct((OH, OW, C * N), jnp.float32),
    )(a, b, c)
    return jnp.transpose(p.reshape(OH, OW, C, N), (2, 3, 0, 1))


def head(p3, lin1, lin2, lin3):
    """Fused global-max-pool + flatten + linear1(tanh) + linear2(recip) + tail_fc."""
    C, N, OH, OW = p3.shape
    x = jnp.transpose(p3, (2, 3, 1, 0)).reshape(OH * OW, N, C)   # tiny relayout
    w1, b1 = lin1
    w2, b2 = lin2
    w3, b3 = lin3
    return pl.pallas_call(
        _head_kernel,
        out_shape=jax.ShapeDtypeStruct((N, w3.shape[1]), jnp.float32),
    )(x, w1, b1, w2, b2, w3, b3)


# ----------------------------------------------------------------------------
# Parameters (deterministic init, PyTorch-style fan-in uniform; weights are
# pre-reshaped / pre-transposed at init time).
# ----------------------------------------------------------------------------
def init_params(key):
    def conv_p(k, oc, ic, kh, kw):
        k1, k2 = jax.random.split(k)
        s = 1.0 / (ic * kh * kw) ** 0.5
        w = jax.random.uniform(k1, (oc, ic, kh, kw), jnp.float32, -s, s)
        b = jax.random.uniform(k2, (oc,), jnp.float32, -s, s)
        wmat = jnp.transpose(w, (0, 2, 3, 1)).reshape(oc, kh * kw * ic)
        return wmat, b.reshape(oc, 1)

    def lin_p(k, out_f, in_f):
        k1, k2 = jax.random.split(k)
        s = 1.0 / in_f ** 0.5
        w = jax.random.uniform(k1, (out_f, in_f), jnp.float32, -s, s)
        b = jax.random.uniform(k2, (out_f,), jnp.float32, -s, s)
        return jnp.transpose(w), b.reshape(1, out_f)

    keys = jax.random.split(key, 8)
    return {
        "conv1": conv_p(keys[0], 4, 3, 11, 11),
        "conv2": conv_p(keys[1], 6, 4, 5, 5),
        "conv3": conv_p(keys[2], 8, 6, 7, 5),
        "conv4": conv_p(keys[3], 10, 8, 3, 3),
        "conv5": conv_p(keys[4], 12, 10, 3, 3),
        "linear1": lin_p(keys[5], 864, 12),
        "linear2": lin_p(keys[6], 864, 864),
        "tail_fc": lin_p(keys[7], 1000, 864),
    }


# ----------------------------------------------------------------------------
# Forward pass (mirrors the PyTorch module's forward)
# ----------------------------------------------------------------------------
def forward(params, x_nchw):
    x = jnp.transpose(x_nchw, (1, 0, 2, 3)).astype(jnp.float32)   # NCHW -> (C, N, H, W)

    w, b = params["conv1"]
    r1 = conv2d(x, w, b, (11, 11), (4, 4), (2, 2), (3, 5), "relu")
    # NOTE: pool1 (maxpool of relu1) is dead code in the reference forward
    # (its output is never consumed), so it is skipped here.

    w, b = params["conv2"]
    r2 = conv2d(r1, w, b, (5, 5), (1, 1), (2, 2), (8, 8), "relu")
    p2 = maxpool_3x3_s2(r2)

    w, b = params["conv3"]
    r3 = conv2d(p2, w, b, (7, 5), (1, 1), (1, 1), (1, 1), "relu")

    w, b = params["conv4"]
    r4 = conv2d(r3, w, b, (3, 3), (1, 1), (1, 1), (1, 1), "erf")

    w, b = params["conv5"]
    r5 = conv2d(r4, w, b, (3, 3), (1, 1), (1, 7), (1, 1), "elu01")
    p3 = maxpool_3x3_s2(r5)

    return head(p3, params["linear1"], params["linear2"], params["tail_fc"])


if __name__ == "__main__":
    key = jax.random.PRNGKey(0)
    pkey, xkey = jax.random.split(key)
    params = init_params(pkey)
    # The mutated dilations (conv1 d=(3,5) on 11x11, conv2 d=8 on 5x5) require
    # an input of at least ~195x183; use the canonical 224x224 with batch 2.
    x = jax.random.normal(xkey, (2, 3, 224, 224), jnp.float32)   # NCHW like PyTorch
    out = jax.jit(forward)(params, x)
    jax.block_until_ready(out)
    assert out.shape == (2, 1000), out.shape
    assert out.dtype == jnp.float32
    print("KERNEL_OK")
</pallas_src>

<mosaic_0001>
module attributes {stable_mosaic.version = 11 : i64} {
  func.func @_conv_mm_kernel(%arg0: i32, %arg1: memref<4x363xf32, #tpu.memory_space<vmem>>, %arg2: memref<4x1xf32, #tpu.memory_space<vmem>>, %arg3: memref<363x512xf32, #tpu.memory_space<vmem>>, %arg4: memref<4x512xf32, #tpu.memory_space<vmem>>) attributes {dimension_semantics = [#tpu.dimension_semantics<parallel>], iteration_bounds = array<i64: 9>, scalar_prefetch = 0 : i64, scratch_operands = 0 : i64, tpu.core_type = #tpu.core_type<tc>, window_params = [{pipeline_mode = #tpu.pipeline_mode<synchronous>, transform_indices = @transform_0, window_bounds = array<i64: 4, 363>}, {pipeline_mode = #tpu.pipeline_mode<synchronous>, transform_indices = @transform_1, window_bounds = array<i64: 4, 1>}, {transform_indices = @transform_2, window_bounds = array<i64: 363, 512>}, {transform_indices = @transform_3, window_bounds = array<i64: 4, 512>}]} {
    %c0 = arith.constant 0 : index
    %c0_0 = arith.constant 0 : index
    %0 = vector.load %arg1[%c0, %c0_0] : memref<4x363xf32, #tpu.memory_space<vmem>>, vector<4x363xf32>
    %c0_1 = arith.constant 0 : index
    %c0_2 = arith.constant 0 : index
    %1 = vector.load %arg3[%c0_1, %c0_2] : memref<363x512xf32, #tpu.memory_space<vmem>>, vector<363x512xf32>
    %cst = arith.constant dense<0.000000e+00> : vector<4x512xf32>
    %2 = tpu.matmul %0, %1, %cst {dimension_numbers = #tpu.dot_dimension_numbers<[1], [0], [0], [1], [0, 0, 1, 1], [], []>} : vector<4x363xf32>, vector<363x512xf32>, vector<4x512xf32> -> vector<4x512xf32>
    %c0_3 = arith.constant 0 : index
    %c0_4 = arith.constant 0 : index
    %3 = vector.load %arg2[%c0_3, %c0_4] : memref<4x1xf32, #tpu.memory_space<vmem>>, vector<4x1xf32>
    %4 = vector.broadcast %3 : vector<4x1xf32> to vector<4x512xf32>
    %5 = arith.addf %2, %4 : vector<4x512xf32>
    %cst_5 = arith.constant 0.000000e+00 : f32
    %6 = vector.broadcast %cst_5 : f32 to vector<4x512xf32>
    %7 = arith.maximumf %5, %6 : vector<4x512xf32>
    %c0_6 = arith.constant 0 : index
    %c0_7 = arith.constant 0 : index
    %8 = vector.load %arg4[%c0_6, %c0_7] : memref<4x512xf32, #tpu.memory_space<vmem>>, vector<4x512xf32>
    tpu.vector_store %arg4[%c0_6, %c0_7], %7 {strides = array<i32>} : memref<4x512xf32, #tpu.memory_space<vmem>>, vector<4x512xf32>,
    return
  }
  func.func @transform_0(%arg0: i32) -> (i32, i32) {
    %c0_i32 = arith.constant 0 : i32
    %c0_i32_0 = arith.constant 0 : i32
    %c0_i32_1 = arith.constant 0 : i32
    return %c0_i32, %c0_i32_0 : i32, i32
  }
  func.func @transform_1(%arg0: i32) -> (i32, i32) {
    %c0_i32 = arith.constant 0 : i32
    %c0_i32_0 = arith.constant 0 : i32
    %c0_i32_1 = arith.constant 0 : i32
    return %c0_i32, %c0_i32_0 : i32, i32
  }
  func.func @transform_2(%arg0: i32) -> (i32, i32) {
    %c0_i32 = arith.constant 0 : i32
    %c0_i32_0 = arith.constant 0 : i32
    return %c0_i32, %arg0 : i32, i32
  }
  func.func @transform_3(%arg0: i32) -> (i32, i32) {
    %c0_i32 = arith.constant 0 : i32
    %c0_i32_0 = arith.constant 0 : i32
    return %c0_i32, %arg0 : i32, i32
  }
}

module attributes {stable_mosaic.version = 11 : i64} {
  func.func @_conv_mm_kernel(%arg0: i32, %arg1: memref<6x100xf32, #tpu.memory_space<vmem>>, %arg2: memref<6x1xf32, #tpu.memory_space<vmem>>, %arg3: memref<100x512xf32, #tpu.memory_space<vmem>>, %arg4: memref<6x512xf32, #tpu.memory_space<vmem>>) attributes {dimension_semantics = [#tpu.dimension_semantics<parallel>], iteration_bounds = array<i64: 2>, scalar_prefetch = 0 : i64, scratch_operands = 0 : i64, tpu.core_type = #tpu.core_type<tc>, window_params = [{pipeline_mode = #tpu.pipeline_mode<synchronous>, transform_indices = @transform_0, window_bounds = array<i64: 6, 100>}, {pipeline_mode = #tpu.pipeline_mode<synchronous>, transform_indices = @transform_1, window_bounds = array<i64: 6, 1>}, {transform_indices = @transform_2, window_bounds = array<i64: 100, 512>}, {transform_indices = @transform_3, window_bounds = array<i64: 6, 512>}]} {
    %c0 = arith.constant 0 : index
    %c0_0 = arith.constant 0 : index
    %0 = vector.load %arg1[%c0, %c0_0] : memref<6x100xf32, #tpu.memory_space<vmem>>, vector<6x100xf32>
    %c0_1 = arith.constant 0 : index
    %c0_2 = arith.constant 0 : index
    %1 = vector.load %arg3[%c0_1, %c0_2] : memref<100x512xf32, #tpu.memory_space<vmem>>, vector<100x512xf32>
    %cst = arith.constant dense<0.000000e+00> : vector<6x512xf32>
    %2 = tpu.matmul %0, %1, %cst {dimension_numbers = #tpu.dot_dimension_numbers<[1], [0], [0], [1], [0, 0, 1, 1], [], []>} : vector<6x100xf32>, vector<100x512xf32>, vector<6x512xf32> -> vector<6x512xf32>
    %c0_3 = arith.constant 0 : index
    %c0_4 = arith.constant 0 : index
    %3 = vector.load %arg2[%c0_3, %c0_4] : memref<6x1xf32, #tpu.memory_space<vmem>>, vector<6x1xf32>
    %4 = vector.broadcast %3 : vector<6x1xf32> to vector<6x512xf32>
    %5 = arith.addf %2, %4 : vector<6x512xf32>
    %cst_5 = arith.constant 0.000000e+00 : f32
    %6 = vector.broadcast %cst_5 : f32 to vector<6x512xf32>
    %7 = arith.maximumf %5, %6 : vector<6x512xf32>
    %c0_6 = arith.constant 0 : index
    %c0_7 = arith.constant 0 : index
    %8 = vector.load %arg4[%c0_6, %c0_7] : memref<6x512xf32, #tpu.memory_space<vmem>>, vector<6x512xf32>
    tpu.vector_store %arg4[%c0_6, %c0_7], %7 {strides = array<i32>} : memref<6x512xf32, #tpu.memory_space<vmem>>, vector<6x512xf32>,
    return
  }
  func.func @transform_0(%arg0: i32) -> (i32, i32) {
    %c0_i32 = arith.constant 0 : i32
    %c0_i32_0 = arith.constant 0 : i32
    %c0_i32_1 = arith.constant 0 : i32
    return %c0_i32, %c0_i32_0 : i32, i32
  }
  func.func @transform_1(%arg0: i32) -> (i32, i32) {
    %c0_i32 = arith.constant 0 : i32
    %c0_i32_0 = arith.constant 0 : i32
    %c0_i32_1 = arith.constant 0 : i32
    return %c0_i32, %c0_i32_0 : i32, i32
  }
  func.func @transform_2(%arg0: i32) -> (i32, i32) {
    %c0_i32 = arith.constant 0 : i32
    %c0_i32_0 = arith.constant 0 : i32
    return %c0_i32, %arg0 : i32, i32
  }
  func.func @transform_3(%arg0: i32) -> (i32, i32) {
    %c0_i32 = arith.constant 0 : i32
    %c0_i32_0 = arith.constant 0 : i32
    return %c0_i32, %arg0 : i32, i32
  }
}

module attributes {stable_mosaic.version = 11 : i64} {
  func.func @_maxpool3x3s2_kernel(%arg0: memref<22x8x12xf32, #tpu.memory_space<vmem>>, %arg1: memref<22x8x12xf32, #tpu.memory_space<vmem>>, %arg2: memref<22x8x12xf32, #tpu.memory_space<vmem>>, %arg3: memref<10x8x12xf32, #tpu.memory_space<vmem>>) attributes {dimension_semantics = [], scalar_prefetch = 0 : i64, scratch_operands = 0 : i64, tpu.core_type = #tpu.core_type<tc>} {
    %c0 = arith.constant 0 : index
    %c0_0 = arith.constant 0 : index
    %c0_1 = arith.constant 0 : index
    %0 = vector.load %arg0[%c0, %c0_0, %c0_1] : memref<22x8x12xf32, #tpu.memory_space<vmem>>, vector<22x8x12xf32>
    %c0_2 = arith.constant 0 : index
    %c0_3 = arith.constant 0 : index
    %c0_4 = arith.constant 0 : index
    %1 = vector.load %arg1[%c0_2, %c0_3, %c0_4] : memref<22x8x12xf32, #tpu.memory_space<vmem>>, vector<22x8x12xf32>
    %2 = arith.maximumf %0, %1 : vector<22x8x12xf32>
    %c0_5 = arith.constant 0 : index
    %c0_6 = arith.constant 0 : index
    %c0_7 = arith.constant 0 : index
    %3 = vector.load %arg2[%c0_5, %c0_6, %c0_7] : memref<22x8x12xf32, #tpu.memory_space<vmem>>, vector<22x8x12xf32>
    %4 = arith.maximumf %2, %3 : vector<22x8x12xf32>
    %5 = vector.extract_strided_slice %4 {offsets = [0, 0, 0], sizes = [1, 8, 12], strides = [1, 1, 1]} : vector<22x8x12xf32> to vector<1x8x12xf32>
    %6 = vector.shape_cast %5 : vector<1x8x12xf32> to vector<8x12xf32>
    %7 = vector.extract_strided_slice %4 {offsets = [1, 0, 0], sizes = [1, 8, 12], strides = [1, 1, 1]} : vector<22x8x12xf32> to vector<1x8x12xf32>
    %8 = vector.shape_cast %7 : vector<1x8x12xf32> to vector<8x12xf32>
    %9 = arith.maximumf %6, %8 : vector<8x12xf32>
    %10 = vector.extract_strided_slice %4 {offsets = [2, 0, 0], sizes = [1, 8, 12], strides = [1, 1, 1]} : vector<22x8x12xf32> to vector<1x8x12xf32>
    %11 = vector.shape_cast %10 : vector<1x8x12xf32> to vector<8x12xf32>
    %12 = arith.maximumf %9, %11 : vector<8x12xf32>
    %c0_8 = arith.constant 0 : index
    %c0_9 = arith.constant 0 : index
    %c0_10 = arith.constant 0 : index
    %13 = vector.load %arg3[%c0_8, %c0_9, %c0_10] : memref<10x8x12xf32, #tpu.memory_space<vmem>>, vector<1x8x12xf32>
    %14 = vector.shape_cast %13 : vector<1x8x12xf32> to vector<8x12xf32>
    %15 = vector.shape_cast %12 : vector<8x12xf32> to vector<1x8x12xf32>
    tpu.vector_store %arg3[%c0_8, %c0_9, %c0_10], %15 {strides = array<i32>} : memref<10x8x12xf32, #tpu.memory_space<vmem>>, vector<1x8x12xf32>,
    %16 = vector.extract_strided_slice %4 {offsets = [2, 0, 0], sizes = [1, 8, 12], strides = [1, 1, 1]} : vector<22x8x12xf32> to vector<1x8x12xf32>
    %17 = vector.shape_cast %16 : vector<1x8x12xf32> to vector<8x12xf32>
    %18 = vector.extract_strided_slice %4 {offsets = [3, 0, 0], sizes = [1, 8, 12], strides = [1, 1, 1]} : vector<22x8x12xf32> to vector<1x8x12xf32>
    %19 = vector.shape_cast %18 : vector<1x8x12xf32> to vector<8x12xf32>
    %20 = arith.maximumf %17, %19 : vector<8x12xf32>
    %21 = vector.extract_strided_slice %4 {offsets = [4, 0, 0], sizes = [1, 8, 12], strides = [1, 1, 1]} : vector<22x8x12xf32> to vector<1x8x12xf32>
    %22 = vector.shape_cast %21 : vector<1x8x12xf32> to vector<8x12xf32>
    %23 = arith.maximumf %20, %22 : vector<8x12xf32>
    %c1 = arith.constant 1 : index
    %c0_11 = arith.constant 0 : index
    %c0_12 = arith.constant 0 : index
    %24 = vector.load %arg3[%c1, %c0_11, %c0_12] : memref<10x8x12xf32, #tpu.memory_space<vmem>>, vector<1x8x12xf32>
    %25 = vector.shape_cast %24 : vector<1x8x12xf32> to vector<8x12xf32>
    %26 = vector.shape_cast %23 : vector<8x12xf32> to vector<1x8x12xf32>
    tpu.vector_store %arg3[%c1, %c0_11, %c0_12], %26 {strides = array<i32>} : memref<10x8x12xf32, #tpu.memory_space<vmem>>, vector<1x8x12xf32>,
    %27 = vector.extract_strided_slice %4 {offsets = [4, 0, 0], sizes = [1, 8, 12], strides = [1, 1, 1]} : vector<22x8x12xf32> to vector<1x8x12xf32>
    %28 = vector.shape_cast %27 : vector<1x8x12xf32> to vector<8x12xf32>
    %29 = vector.extract_strided_slice %4 {offsets = [5, 0, 0], sizes = [1, 8, 12], strides = [1, 1, 1]} : vector<22x8x12xf32> to vector<1x8x12xf32>
    %30 = vector.shape_cast %29 : vector<1x8x12xf32> to vector<8x12xf32>
    %31 = arith.maximumf %28, %30 : vector<8x12xf32>
    %32 = vector.extract_strided_slice %4 {offsets = [6, 0, 0], sizes = [1, 8, 12], strides = [1, 1, 1]} : vector<22x8x12xf32> to vector<1x8x12xf32>
    %33 = vector.shape_cast %32 : vector<1x8x12xf32> to vector<8x12xf32>
    %34 = arith.maximumf %31, %33 : vector<8x12xf32>
    %c2 = arith.constant 2 : index
    %c0_13 = arith.constant 0 : index
    %c0_14 = arith.constant 0 : index
    %35 = vector.load %arg3[%c2, %c0_13, %c0_14] : memref<10x8x12xf32, #tpu.memory_space<vmem>>, vector<1x8x12xf32>
    %36 = vector.shape_cast %35 : vector<1x8x12xf32> to vector<8x12xf32>
    %37 = vector.shape_cast %34 : vector<8x12xf32> to vector<1x8x12xf32>
    tpu.vector_store %arg3[%c2, %c0_13, %c0_14], %37 {strides = array<i32>} : memref<10x8x12xf32, #tpu.memory_space<vmem>>, vector<1x8x12xf32>,
    %38 = vector.extract_strided_slice %4 {offsets = [6, 0, 0], sizes = [1, 8, 12], strides = [1, 1, 1]} : vector<22x8x12xf32> to vector<1x8x12xf32>
    %39 = vector.shape_cast %38 : vector<1x8x12xf32> to vector<8x12xf32>
    %40 = vector.extract_strided_slice %4 {offsets = [7, 0, 0], sizes = [1, 8, 12], strides = [1, 1, 1]} : vector<22x8x12xf32> to vector<1x8x12xf32>
    %41 = vector.shape_cast %40 : vector<1x8x12xf32> to vector<8x12xf32>
    %42 = arith.maximumf %39, %41 : vector<8x12xf32>
    %43 = vector.extract_strided_slice %4 {offsets = [8, 0, 0], sizes = [1, 8, 12], strides = [1, 1, 1]} : vector<22x8x12xf32> to vector<1x8x12xf32>
    %44 = vector.shape_cast %43 : vector<1x8x12xf32> to vector<8x12xf32>
    %45 = arith.maximumf %42, %44 : vector<8x12xf32>
    %c3 = arith.constant 3 : index
    %c0_15 = arith.constant 0 : index
    %c0_16 = arith.constant 0 : index
    %46 = vector.load %arg3[%c3, %c0_15, %c0_16] : memref<10x8x12xf32, #tpu.memory_space<vmem>>, vector<1x8x12xf32>
    %47 = vector.shape_cast %46 : vector<1x8x12xf32> to vector<8x12xf32>
    %48 = vector.shape_cast %45 : vector<8x12xf32> to vector<1x8x12xf32>
    tpu.vector_store %arg3[%c3, %c0_15, %c0_16], %48 {strides = array<i32>} : memref<10x8x12xf32, #tpu.memory_space<vmem>>, vector<1x8x12xf32>,
    %49 = vector.extract_strided_slice %4 {offsets = [8, 0, 0], sizes = [1, 8, 12], strides = [1, 1, 1]} : vector<22x8x12xf32> to vector<1x8x12xf32>
    %50 = vector.shape_cast %49 : vector<1x8x12xf32> to vector<8x12xf32>
    %51 = vector.extract_strided_slice %4 {offsets = [9, 0, 0], sizes = [1, 8, 12], strides = [1, 1, 1]} : vector<22x8x12xf32> to vector<1x8x12xf32>
    %52 = vector.shape_cast %51 : vector<1x8x12xf32> to vector<8x12xf32>
    %53 = arith.maximumf %50, %52 : vector<8x12xf32>
    %54 = vector.extract_strided_slice %4 {offsets = [10, 0, 0], sizes = [1, 8, 12], strides = [1, 1, 1]} : vector<22x8x12xf32> to vector<1x8x12xf32>
    %55 = vector.shape_cast %54 : vector<1x8x12xf32> to vector<8x12xf32>
    %56 = arith.maximumf %53, %55 : vector<8x12xf32>
    %c4 = arith.constant 4 : index
    %c0_17 = arith.constant 0 : index
    %c0_18 = arith.constant 0 : index
    %57 = vector.load %arg3[%c4, %c0_17, %c0_18] : memref<10x8x12xf32, #tpu.memory_space<vmem>>, vector<1x8x12xf32>
    %58 = vector.shape_cast %57 : vector<1x8x12xf32> to vector<8x12xf32>
    %59 = vector.shape_cast %56 : vector<8x12xf32> to vector<1x8x12xf32>
    tpu.vector_store %arg3[%c4, %c0_17, %c0_18], %59 {strides = array<i32>} : memref<10x8x12xf32, #tpu.memory_space<vmem>>, vector<1x8x12xf32>,
    %60 = vector.extract_strided_slice %4 {offsets = [10, 0, 0], sizes = [1, 8, 12], strides = [1, 1, 1]} : vector<22x8x12xf32> to vector<1x8x12xf32>
    %61 = vector.shape_cast %60 : vector<1x8x12xf32> to vector<8x12xf32>
    %62 = vector.extract_strided_slice %4 {offsets = [11, 0, 0], sizes = [1, 8, 12], strides = [1, 1, 1]} : vector<22x8x12xf32> to vector<1x8x12xf32>
    %63 = vector.shape_cast %62 : vector<1x8x12xf32> to vector<8x12xf32>
    %64 = arith.maximumf %61, %63 : vector<8x12xf32>
    %65 = vector.extract_strided_slice %4 {offsets = [12, 0, 0], sizes = [1, 8, 12], strides = [1, 1, 1]} : vector<22x8x12xf32> to vector<1x8x12xf32>
    %66 = vector.shape_cast %65 : vector<1x8x12xf32> to vector<8x12xf32>
    %67 = arith.maximumf %64, %66 : vector<8x12xf32>
    %c5 = arith.constant 5 : index
    %c0_19 = arith.constant 0 : index
    %c0_20 = arith.constant 0 : index
    %68 = vector.load %arg3[%c5, %c0_19, %c0_20] : memref<10x8x12xf32, #tpu.memory_space<vmem>>, vector<1x8x12xf32>
    %69 = vector.shape_cast %68 : vector<1x8x12xf32> to vector<8x12xf32>
    %70 = vector.shape_cast %67 : vector<8x12xf32> to vector<1x8x12xf32>
    tpu.vector_store %arg3[%c5, %c0_19, %c0_20], %70 {strides = array<i32>} : memref<10x8x12xf32, #tpu.memory_space<vmem>>, vector<1x8x12xf32>,
    %71 = vector.extract_strided_slice %4 {offsets = [12, 0, 0], sizes = [1, 8, 12], strides = [1, 1, 1]} : vector<22x8x12xf32> to vector<1x8x12xf32>
    %72 = vector.shape_cast %71 : vector<1x8x12xf32> to vector<8x12xf32>
    %73 = vector.extract_strided_slice %4 {offsets = [13, 0, 0], sizes = [1, 8, 12], strides = [1, 1, 1]} : vector<22x8x12xf32> to vector<1x8x12xf32>
    %74 = vector.shape_cast %73 : vector<1x8x12xf32> to vector<8x12xf32>
    %75 = arith.maximumf %72, %74 : vector<8x12xf32>
    %76 = vector.extract_strided_slice %4 {offsets = [14, 0, 0], sizes = [1, 8, 12], strides = [1, 1, 1]} : vector<22x8x12xf32> to vector<1x8x12xf32>
    %77 = vector.shape_cast %76 : vector<1x8x12xf32> to vector<8x12xf32>
    %78 = arith.maximumf %75, %77 : vector<8x12xf32>
    %c6 = arith.constant 6 : index
    %c0_21 = arith.constant 0 : index
    %c0_22 = arith.constant 0 : index
    %79 = vector.load %arg3[%c6, %c0_21, %c0_22] : memref<10x8x12xf32, #tpu.memory_space<vmem>>, vector<1x8x12xf32>
    %80 = vector.shape_cast %79 : vector<1x8x12xf32> to vector<8x12xf32>
    %81 = vector.shape_cast %78 : vector<8x12xf32> to vector<1x8x12xf32>
    tpu.vector_store %arg3[%c6, %c0_21, %c0_22], %81 {strides = array<i32>} : memref<10x8x12xf32, #tpu.memory_space<vmem>>, vector<1x8x12xf32>,
    %82 = vector.extract_strided_slice %4 {offsets = [14, 0, 0], sizes = [1, 8, 12], strides = [1, 1, 1]} : vector<22x8x12xf32> to vector<1x8x12xf32>
    %83 = vector.shape_cast %82 : vector<1x8x12xf32> to vector<8x12xf32>
    %84 = vector.extract_strided_slice %4 {offsets = [15, 0, 0], sizes = [1, 8, 12], strides = [1, 1, 1]} : vector<22x8x12xf32> to vector<1x8x12xf32>
    %85 = vector.shape_cast %84 : vector<1x8x12xf32> to vector<8x12xf32>
    %86 = arith.maximumf %83, %85 : vector<8x12xf32>
    %87 = vector.extract_strided_slice %4 {offsets = [16, 0, 0], sizes = [1, 8, 12], strides = [1, 1, 1]} : vector<22x8x12xf32> to vector<1x8x12xf32>
    %88 = vector.shape_cast %87 : vector<1x8x12xf32> to vector<8x12xf32>
    %89 = arith.maximumf %86, %88 : vector<8x12xf32>
    %c7 = arith.constant 7 : index
    %c0_23 = arith.constant 0 : index
    %c0_24 = arith.constant 0 : index
    %90 = vector.load %arg3[%c7, %c0_23, %c0_24] : memref<10x8x12xf32, #tpu.memory_space<vmem>>, vector<1x8x12xf32>
    %91 = vector.shape_cast %90 : vector<1x8x12xf32> to vector<8x12xf32>
    %92 = vector.shape_cast %89 : vector<8x12xf32> to vector<1x8x12xf32>
    tpu.vector_store %arg3[%c7, %c0_23, %c0_24], %92 {strides = array<i32>} : memref<10x8x12xf32, #tpu.memory_space<vmem>>, vector<1x8x12xf32>,
    %93 = vector.extract_strided_slice %4 {offsets = [16, 0, 0], sizes = [1, 8, 12], strides = [1, 1, 1]} : vector<22x8x12xf32> to vector<1x8x12xf32>
    %94 = vector.shape_cast %93 : vector<1x8x12xf32> to vector<8x12xf32>
    %95 = vector.extract_strided_slice %4 {offsets = [17, 0, 0], sizes = [1, 8, 12], strides = [1, 1, 1]} : vector<22x8x12xf32> to vector<1x8x12xf32>
    %96 = vector.shape_cast %95 : vector<1x8x12xf32> to vector<8x12xf32>
    %97 = arith.maximumf %94, %96 : vector<8x12xf32>
    %98 = vector.extract_strided_slice %4 {offsets = [18, 0, 0], sizes = [1, 8, 12], strides = [1, 1, 1]} : vector<22x8x12xf32> to vector<1x8x12xf32>
    %99 = vector.shape_cast %98 : vector<1x8x12xf32> to vector<8x12xf32>
    %100 = arith.maximumf %97, %99 : vector<8x12xf32>
    %c8 = arith.constant 8 : index
    %c0_25 = arith.constant 0 : index
    %c0_26 = arith.constant 0 : index
    %101 = vector.load %arg3[%c8, %c0_25, %c0_26] : memref<10x8x12xf32, #tpu.memory_space<vmem>>, vector<1x8x12xf32>
    %102 = vector.shape_cast %101 : vector<1x8x12xf32> to vector<8x12xf32>
    %103 = vector.shape_cast %100 : vector<8x12xf32> to vector<1x8x12xf32>
    tpu.vector_store %arg3[%c8, %c0_25, %c0_26], %103 {strides = array<i32>} : memref<10x8x12xf32, #tpu.memory_space<vmem>>, vector<1x8x12xf32>,
    %104 = vector.extract_strided_slice %4 {offsets = [18, 0, 0], sizes = [1, 8, 12], strides = [1, 1, 1]} : vector<22x8x12xf32> to vector<1x8x12xf32>
    %105 = vector.shape_cast %104 : vector<1x8x12xf32> to vector<8x12xf32>
    %106 = vector.extract_strided_slice %4 {offsets = [19, 0, 0], sizes = [1, 8, 12], strides = [1, 1, 1]} : vector<22x8x12xf32> to vector<1x8x12xf32>
    %107 = vector.shape_cast %106 : vector<1x8x12xf32> to vector<8x12xf32>
    %108 = arith.maximumf %105, %107 : vector<8x12xf32>
    %109 = vector.extract_strided_slice %4 {offsets = [20, 0, 0], sizes = [1, 8, 12], strides = [1, 1, 1]} : vector<22x8x12xf32> to vector<1x8x12xf32>
    %110 = vector.shape_cast %109 : vector<1x8x12xf32> to vector<8x12xf32>
    %111 = arith.maximumf %108, %110 : vector<8x12xf32>
    %c9 = arith.constant 9 : index
    %c0_27 = arith.constant 0 : index
    %c0_28 = arith.constant 0 : index
    %112 = vector.load %arg3[%c9, %c0_27, %c0_28] : memref<10x8x12xf32, #tpu.memory_space<vmem>>, vector<1x8x12xf32>
    %113 = vector.shape_cast %112 : vector<1x8x12xf32> to vector<8x12xf32>
    %114 = vector.shape_cast %111 : vector<8x12xf32> to vector<1x8x12xf32>
    tpu.vector_store %arg3[%c9, %c0_27, %c0_28], %114 {strides = array<i32>} : memref<10x8x12xf32, #tpu.memory_space<vmem>>, vector<1x8x12xf32>,
    return
  }
}

module attributes {stable_mosaic.version = 11 : i64} {
  func.func @_conv_mm_kernel(%arg0: i32, %arg1: memref<8x210xf32, #tpu.memory_space<vmem>>, %arg2: memref<8x1xf32, #tpu.memory_space<vmem>>, %arg3: memref<210x128xf32, #tpu.memory_space<vmem>>, %arg4: memref<8x128xf32, #tpu.memory_space<vmem>>) attributes {dimension_semantics = [#tpu.dimension_semantics<parallel>], iteration_bounds = array<i64: 1>, scalar_prefetch = 0 : i64, scratch_operands = 0 : i64, tpu.core_type = #tpu.core_type<tc>, window_params = [{pipeline_mode = #tpu.pipeline_mode<synchronous>, transform_indices = @transform_0, window_bounds = array<i64: 8, 210>}, {pipeline_mode = #tpu.pipeline_mode<synchronous>, transform_indices = @transform_1, window_bounds = array<i64: 8, 1>}, {transform_indices = @transform_2, window_bounds = array<i64: 210, 128>}, {transform_indices = @transform_3, window_bounds = array<i64: 8, 128>}]} {
    %c0 = arith.constant 0 : index
    %c0_0 = arith.constant 0 : index
    %0 = vector.load %arg1[%c0, %c0_0] : memref<8x210xf32, #tpu.memory_space<vmem>>, vector<8x210xf32>
    %c0_1 = arith.constant 0 : index
    %c0_2 = arith.constant 0 : index
    %1 = vector.load %arg3[%c0_1, %c0_2] : memref<210x128xf32, #tpu.memory_space<vmem>>, vector<210x128xf32>
    %cst = arith.constant dense<0.000000e+00> : vector<8x128xf32>
    %2 = tpu.matmul %0, %1, %cst {dimension_numbers = #tpu.dot_dimension_numbers<[1], [0], [0], [1], [0, 0, 1, 1], [], []>} : vector<8x210xf32>, vector<210x128xf32>, vector<8x128xf32> -> vector<8x128xf32>
    %c0_3 = arith.constant 0 : index
    %c0_4 = arith.constant 0 : index
    %3 = vector.load %arg2[%c0_3, %c0_4] : memref<8x1xf32, #tpu.memory_space<vmem>>, vector<8x1xf32>
    %4 = vector.broadcast %3 : vector<8x1xf32> to vector<8x128xf32>
    %5 = arith.addf %2, %4 : vector<8x128xf32>
    %cst_5 = arith.constant 0.000000e+00 : f32
    %6 = vector.broadcast %cst_5 : f32 to vector<8x128xf32>
    %7 = arith.maximumf %5, %6 : vector<8x128xf32>
    %c0_6 = arith.constant 0 : index
    %c0_7 = arith.constant 0 : index
    %8 = vector.load %arg4[%c0_6, %c0_7] : memref<8x128xf32, #tpu.memory_space<vmem>>, vector<8x128xf32>
    tpu.vector_store %arg4[%c0_6, %c0_7], %7 {strides = array<i32>} : memref<8x128xf32, #tpu.memory_space<vmem>>, vector<8x128xf32>,
    return
  }
  func.func @transform_0(%arg0: i32) -> (i32, i32) {
    %c0_i32 = arith.constant 0 : i32
    %c0_i32_0 = arith.constant 0 : i32
    %c0_i32_1 = arith.constant 0 : i32
    return %c0_i32, %c0_i32_0 : i32, i32
  }
  func.func @transform_1(%arg0: i32) -> (i32, i32) {
    %c0_i32 = arith.constant 0 : i32
    %c0_i32_0 = arith.constant 0 : i32
    %c0_i32_1 = arith.constant 0 : i32
    return %c0_i32, %c0_i32_0 : i32, i32
  }
  func.func @transform_2(%arg0: i32) -> (i32, i32) {
    %c0_i32 = arith.constant 0 : i32
    %c0_i32_0 = arith.constant 0 : i32
    return %c0_i32, %arg0 : i32, i32
  }
  func.func @transform_3(%arg0: i32) -> (i32, i32) {
    %c0_i32 = arith.constant 0 : i32
    %c0_i32_0 = arith.constant 0 : i32
    return %c0_i32, %arg0 : i32, i32
  }
}

module attributes {stable_mosaic.version = 11 : i64} {
  func.func @_conv_mm_kernel(%arg0: i32, %arg1: memref<10x72xf32, #tpu.memory_space<vmem>>, %arg2: memref<10x1xf32, #tpu.memory_space<vmem>>, %arg3: memref<72x128xf32, #tpu.memory_space<vmem>>, %arg4: memref<10x128xf32, #tpu.memory_space<vmem>>) attributes {dimension_semantics = [#tpu.dimension_semantics<parallel>], iteration_bounds = array<i64: 1>, scalar_prefetch = 0 : i64, scratch_operands = 0 : i64, tpu.core_type = #tpu.core_type<tc>, window_params = [{pipeline_mode = #tpu.pipeline_mode<synchronous>, transform_indices = @transform_0, window_bounds = array<i64: 10, 72>}, {pipeline_mode = #tpu.pipeline_mode<synchronous>, transform_indices = @transform_1, window_bounds = array<i64: 10, 1>}, {transform_indices = @transform_2, window_bounds = array<i64: 72, 128>}, {transform_indices = @transform_3, window_bounds = array<i64: 10, 128>}]} {
    %c0 = arith.constant 0 : index
    %c0_0 = arith.constant 0 : index
    %0 = vector.load %arg1[%c0, %c0_0] : memref<10x72xf32, #tpu.memory_space<vmem>>, vector<10x72xf32>
    %c0_1 = arith.constant 0 : index
    %c0_2 = arith.constant 0 : index
    %1 = vector.load %arg3[%c0_1, %c0_2] : memref<72x128xf32, #tpu.memory_space<vmem>>, vector<72x128xf32>
    %cst = arith.constant dense<0.000000e+00> : vector<10x128xf32>
    %2 = tpu.matmul %0, %1, %cst {dimension_numbers = #tpu.dot_dimension_numbers<[1], [0], [0], [1], [0, 0, 1, 1], [], []>} : vector<10x72xf32>, vector<72x128xf32>, vector<10x128xf32> -> vector<10x128xf32>
    %c0_3 = arith.constant 0 : index
    %c0_4 = arith.constant 0 : index
    %3 = vector.load %arg2[%c0_3, %c0_4] : memref<10x1xf32, #tpu.memory_space<vmem>>, vector<10x1xf32>
    %4 = vector.broadcast %3 : vector<10x1xf32> to vector<10x128xf32>
    %5 = arith.addf %2, %4 : vector<10x128xf32>
    %6 = math.erf %5 : vector<10x128xf32>
    %c0_5 = arith.constant 0 : index
    %c0_6 = arith.constant 0 : index
    %7 = vector.load %arg4[%c0_5, %c0_6] : memref<10x128xf32, #tpu.memory_space<vmem>>, vector<10x128xf32>
    tpu.vector_store %arg4[%c0_5, %c0_6], %6 {strides = array<i32>} : memref<10x128xf32, #tpu.memory_space<vmem>>, vector<10x128xf32>,
    return
  }
  func.func @transform_0(%arg0: i32) -> (i32, i32) {
    %c0_i32 = arith.constant 0 : i32
    %c0_i32_0 = arith.constant 0 : i32
    %c0_i32_1 = arith.constant 0 : i32
    return %c0_i32, %c0_i32_0 : i32, i32
  }
  func.func @transform_1(%arg0: i32) -> (i32, i32) {
    %c0_i32 = arith.constant 0 : i32
    %c0_i32_0 = arith.constant 0 : i32
    %c0_i32_1 = arith.constant 0 : i32
    return %c0_i32, %c0_i32_0 : i32, i32
  }
  func.func @transform_2(%arg0: i32) -> (i32, i32) {
    %c0_i32 = arith.constant 0 : i32
    %c0_i32_0 = arith.constant 0 : i32
    return %c0_i32, %arg0 : i32, i32
  }
  func.func @transform_3(%arg0: i32) -> (i32, i32) {
    %c0_i32 = arith.constant 0 : i32
    %c0_i32_0 = arith.constant 0 : i32
    return %c0_i32, %arg0 : i32, i32
  }
}

module attributes {stable_mosaic.version = 11 : i64} {
  func.func @_conv_mm_kernel(%arg0: i32, %arg1: memref<12x90xf32, #tpu.memory_space<vmem>>, %arg2: memref<12x1xf32, #tpu.memory_space<vmem>>, %arg3: memref<90x256xf32, #tpu.memory_space<vmem>>, %arg4: memref<12x256xf32, #tpu.memory_space<vmem>>) attributes {dimension_semantics = [#tpu.dimension_semantics<parallel>], iteration_bounds = array<i64: 1>, scalar_prefetch = 0 : i64, scratch_operands = 0 : i64, tpu.core_type = #tpu.core_type<tc>, window_params = [{pipeline_mode = #tpu.pipeline_mode<synchronous>, transform_indices = @transform_0, window_bounds = array<i64: 12, 90>}, {pipeline_mode = #tpu.pipeline_mode<synchronous>, transform_indices = @transform_1, window_bounds = array<i64: 12, 1>}, {transform_indices = @transform_2, window_bounds = array<i64: 90, 256>}, {transform_indices = @transform_3, window_bounds = array<i64: 12, 256>}]} {
    %c0 = arith.constant 0 : index
    %c0_0 = arith.constant 0 : index
    %0 = vector.load %arg1[%c0, %c0_0] : memref<12x90xf32, #tpu.memory_space<vmem>>, vector<12x90xf32>
    %c0_1 = arith.constant 0 : index
    %c0_2 = arith.constant 0 : index
    %1 = vector.load %arg3[%c0_1, %c0_2] : memref<90x256xf32, #tpu.memory_space<vmem>>, vector<90x256xf32>
    %cst = arith.constant dense<0.000000e+00> : vector<12x256xf32>
    %2 = tpu.matmul %0, %1, %cst {dimension_numbers = #tpu.dot_dimension_numbers<[1], [0], [0], [1], [0, 0, 1, 1], [], []>} : vector<12x90xf32>, vector<90x256xf32>, vector<12x256xf32> -> vector<12x256xf32>
    %c0_3 = arith.constant 0 : index
    %c0_4 = arith.constant 0 : index
    %3 = vector.load %arg2[%c0_3, %c0_4] : memref<12x1xf32, #tpu.memory_space<vmem>>, vector<12x1xf32>
    %4 = vector.broadcast %3 : vector<12x1xf32> to vector<12x256xf32>
    %5 = arith.addf %2, %4 : vector<12x256xf32>
    %cst_5 = arith.constant 0.000000e+00 : f32
    %6 = vector.broadcast %cst_5 : f32 to vector<12x256xf32>
    %7 = arith.cmpf ogt, %5, %6 : vector<12x256xf32>
    %cst_6 = arith.constant 0.000000e+00 : f32
    %8 = vector.broadcast %cst_6 : f32 to vector<12x256xf32>
    %9 = arith.minimumf %5, %8 : vector<12x256xf32>
    %10 = math.exp %9 : vector<12x256xf32>
    %cst_7 = arith.constant 1.000000e+00 : f32
    %11 = vector.broadcast %cst_7 : f32 to vector<12x256xf32>
    %12 = arith.subf %10, %11 : vector<12x256xf32>
    %cst_8 = arith.constant 1.000000e-01 : f32
    %13 = vector.broadcast %cst_8 : f32 to vector<12x256xf32>
    %14 = arith.mulf %13, %12 : vector<12x256xf32>
    %15 = arith.select %7, %5, %14 : vector<12x256xi1>, vector<12x256xf32>
    %c0_9 = arith.constant 0 : index
    %c0_10 = arith.constant 0 : index
    %16 = vector.load %arg4[%c0_9, %c0_10] : memref<12x256xf32, #tpu.memory_space<vmem>>, vector<12x256xf32>
    tpu.vector_store %arg4[%c0_9, %c0_10], %15 {strides = array<i32>} : memref<12x256xf32, #tpu.memory_space<vmem>>, vector<12x256xf32>,
    return
  }
  func.func @transform_0(%arg0: i32) -> (i32, i32) {
    %c0_i32 = arith.constant 0 : i32
    %c0_i32_0 = arith.constant 0 : i32
    %c0_i32_1 = arith.constant 0 : i32
    return %c0_i32, %c0_i32_0 : i32, i32
  }
  func.func @transform_1(%arg0: i32) -> (i32, i32) {
    %c0_i32 = arith.constant 0 : i32
    %c0_i32_0 = arith.constant 0 : i32
    %c0_i32_1 = arith.constant 0 : i32
    return %c0_i32, %c0_i32_0 : i32, i32
  }
  func.func @transform_2(%arg0: i32) -> (i32, i32) {
    %c0_i32 = arith.constant 0 : i32
    %c0_i32_0 = arith.constant 0 : i32
    return %c0_i32, %arg0 : i32, i32
  }
  func.func @transform_3(%arg0: i32) -> (i32, i32) {
    %c0_i32 = arith.constant 0 : i32
    %c0_i32_0 = arith.constant 0 : i32
    return %c0_i32, %arg0 : i32, i32
  }
}

module attributes {stable_mosaic.version = 11 : i64} {
  func.func @_maxpool3x3s2_kernel(%arg0: memref<6x8x24xf32, #tpu.memory_space<vmem>>, %arg1: memref<6x8x24xf32, #tpu.memory_space<vmem>>, %arg2: memref<6x8x24xf32, #tpu.memory_space<vmem>>, %arg3: memref<2x8x24xf32, #tpu.memory_space<vmem>>) attributes {dimension_semantics = [], scalar_prefetch = 0 : i64, scratch_operands = 0 : i64, tpu.core_type = #tpu.core_type<tc>} {
    %c0 = arith.constant 0 : index
    %c0_0 = arith.constant 0 : index
    %c0_1 = arith.constant 0 : index
    %0 = vector.load %arg0[%c0, %c0_0, %c0_1] : memref<6x8x24xf32, #tpu.memory_space<vmem>>, vector<6x8x24xf32>
    %c0_2 = arith.constant 0 : index
    %c0_3 = arith.constant 0 : index
    %c0_4 = arith.constant 0 : index
    %1 = vector.load %arg1[%c0_2, %c0_3, %c0_4] : memref<6x8x24xf32, #tpu.memory_space<vmem>>, vector<6x8x24xf32>
    %2 = arith.maximumf %0, %1 : vector<6x8x24xf32>
    %c0_5 = arith.constant 0 : index
    %c0_6 = arith.constant 0 : index
    %c0_7 = arith.constant 0 : index
    %3 = vector.load %arg2[%c0_5, %c0_6, %c0_7] : memref<6x8x24xf32, #tpu.memory_space<vmem>>, vector<6x8x24xf32>
    %4 = arith.maximumf %2, %3 : vector<6x8x24xf32>
    %5 = vector.extract_strided_slice %4 {offsets = [0, 0, 0], sizes = [1, 8, 24], strides = [1, 1, 1]} : vector<6x8x24xf32> to vector<1x8x24xf32>
    %6 = vector.shape_cast %5 : vector<1x8x24xf32> to vector<8x24xf32>
    %7 = vector.extract_strided_slice %4 {offsets = [1, 0, 0], sizes = [1, 8, 24], strides = [1, 1, 1]} : vector<6x8x24xf32> to vector<1x8x24xf32>
    %8 = vector.shape_cast %7 : vector<1x8x24xf32> to vector<8x24xf32>
    %9 = arith.maximumf %6, %8 : vector<8x24xf32>
    %10 = vector.extract_strided_slice %4 {offsets = [2, 0, 0], sizes = [1, 8, 24], strides = [1, 1, 1]} : vector<6x8x24xf32> to vector<1x8x24xf32>
    %11 = vector.shape_cast %10 : vector<1x8x24xf32> to vector<8x24xf32>
    %12 = arith.maximumf %9, %11 : vector<8x24xf32>
    %c0_8 = arith.constant 0 : index
    %c0_9 = arith.constant 0 : index
    %c0_10 = arith.constant 0 : index
    %13 = vector.load %arg3[%c0_8, %c0_9, %c0_10] : memref<2x8x24xf32, #tpu.memory_space<vmem>>, vector<1x8x24xf32>
    %14 = vector.shape_cast %13 : vector<1x8x24xf32> to vector<8x24xf32>
    %15 = vector.shape_cast %12 : vector<8x24xf32> to vector<1x8x24xf32>
    tpu.vector_store %arg3[%c0_8, %c0_9, %c0_10], %15 {strides = array<i32>} : memref<2x8x24xf32, #tpu.memory_space<vmem>>, vector<1x8x24xf32>,
    %16 = vector.extract_strided_slice %4 {offsets = [2, 0, 0], sizes = [1, 8, 24], strides = [1, 1, 1]} : vector<6x8x24xf32> to vector<1x8x24xf32>
    %17 = vector.shape_cast %16 : vector<1x8x24xf32> to vector<8x24xf32>
    %18 = vector.extract_strided_slice %4 {offsets = [3, 0, 0], sizes = [1, 8, 24], strides = [1, 1, 1]} : vector<6x8x24xf32> to vector<1x8x24xf32>
    %19 = vector.shape_cast %18 : vector<1x8x24xf32> to vector<8x24xf32>
    %20 = arith.maximumf %17, %19 : vector<8x24xf32>
    %21 = vector.extract_strided_slice %4 {offsets = [4, 0, 0], sizes = [1, 8, 24], strides = [1, 1, 1]} : vector<6x8x24xf32> to vector<1x8x24xf32>
    %22 = vector.shape_cast %21 : vector<1x8x24xf32> to vector<8x24xf32>
    %23 = arith.maximumf %20, %22 : vector<8x24xf32>
    %c1 = arith.constant 1 : index
    %c0_11 = arith.constant 0 : index
    %c0_12 = arith.constant 0 : index
    %24 = vector.load %arg3[%c1, %c0_11, %c0_12] : memref<2x8x24xf32, #tpu.memory_space<vmem>>, vector<1x8x24xf32>
    %25 = vector.shape_cast %24 : vector<1x8x24xf32> to vector<8x24xf32>
    %26 = vector.shape_cast %23 : vector<8x24xf32> to vector<1x8x24xf32>
    tpu.vector_store %arg3[%c1, %c0_11, %c0_12], %26 {strides = array<i32>} : memref<2x8x24xf32, #tpu.memory_space<vmem>>, vector<1x8x24xf32>,
    return
  }
}

module attributes {stable_mosaic.version = 11 : i64} {
  func.func @_head_kernel(%arg0: memref<16x2x12xf32, #tpu.memory_space<vmem>>, %arg1: memref<12x864xf32, #tpu.memory_space<vmem>>, %arg2: memref<1x864xf32, #tpu.memory_space<vmem>>, %arg3: memref<864x864xf32, #tpu.memory_space<vmem>>, %arg4: memref<1x864xf32, #tpu.memory_space<vmem>>, %arg5: memref<864x1000xf32, #tpu.memory_space<vmem>>, %arg6: memref<1x1000xf32, #tpu.memory_space<vmem>>, %arg7: memref<2x1000xf32, #tpu.memory_space<vmem>>) attributes {dimension_semantics = [], scalar_prefetch = 0 : i64, scratch_operands = 0 : i64, tpu.core_type = #tpu.core_type<tc>} {
    %c0 = arith.constant 0 : index
    %c0_0 = arith.constant 0 : index
    %c0_1 = arith.constant 0 : index
    %0 = vector.load %arg0[%c0, %c0_0, %c0_1] : memref<16x2x12xf32, #tpu.memory_space<vmem>>, vector<16x2x12xf32>
    %cst = arith.constant dense<0xFF800000> : vector<2x12xf32>
    %1 = vector.multi_reduction <maximumf>, %0, %cst [0] : vector<16x2x12xf32> to vector<2x12xf32>
    %c0_2 = arith.constant 0 : index
    %c0_3 = arith.constant 0 : index
    %2 = vector.load %arg1[%c0_2, %c0_3] : memref<12x864xf32, #tpu.memory_space<vmem>>, vector<12x864xf32>
    %cst_4 = arith.constant dense<0.000000e+00> : vector<2x864xf32>
    %3 = tpu.matmul %1, %2, %cst_4 {dimension_numbers = #tpu.dot_dimension_numbers<[1], [0], [0], [1], [0, 0, 1, 1], [], []>} : vector<2x12xf32>, vector<12x864xf32>, vector<2x864xf32> -> vector<2x864xf32>
    %c0_5 = arith.constant 0 : index
    %c0_6 = arith.constant 0 : index
    %4 = vector.load %arg2[%c0_5, %c0_6] : memref<1x864xf32, #tpu.memory_space<vmem>>, vector<1x864xf32>
    %5 = vector.broadcast %4 : vector<1x864xf32> to vector<2x864xf32>
    %6 = arith.addf %3, %5 : vector<2x864xf32>
    %7 = math.tanh %6 : vector<2x864xf32>
    %c0_7 = arith.constant 0 : index
    %c0_8 = arith.constant 0 : index
    %8 = vector.load %arg3[%c0_7, %c0_8] : memref<864x864xf32, #tpu.memory_space<vmem>>, vector<864x864xf32>
    %cst_9 = arith.constant dense<0.000000e+00> : vector<2x864xf32>
    %9 = tpu.matmul %7, %8, %cst_9 {dimension_numbers = #tpu.dot_dimension_numbers<[1], [0], [0], [1], [0, 0, 1, 1], [], []>} : vector<2x864xf32>, vector<864x864xf32>, vector<2x864xf32> -> vector<2x864xf32>
    %c0_10 = arith.constant 0 : index
    %c0_11 = arith.constant 0 : index
    %10 = vector.load %arg4[%c0_10, %c0_11] : memref<1x864xf32, #tpu.memory_space<vmem>>, vector<1x864xf32>
    %11 = vector.broadcast %10 : vector<1x864xf32> to vector<2x864xf32>
    %12 = arith.addf %9, %11 : vector<2x864xf32>
    %cst_12 = arith.constant 1.000000e+00 : f32
    %13 = vector.broadcast %cst_12 : f32 to vector<2x864xf32>
    %14 = arith.divf %13, %12 : vector<2x864xf32>
    %c0_13 = arith.constant 0 : index
    %c0_14 = arith.constant 0 : index
    %15 = vector.load %arg5[%c0_13, %c0_14] : memref<864x1000xf32, #tpu.memory_space<vmem>>, vector<864x1000xf32>
    %cst_15 = arith.constant dense<0.000000e+00> : vector<2x1000xf32>
    %16 = tpu.matmul %14, %15, %cst_15 {dimension_numbers = #tpu.dot_dimension_numbers<[1], [0], [0], [1], [0, 0, 1, 1], [], []>} : vector<2x864xf32>, vector<864x1000xf32>, vector<2x1000xf32> -> vector<2x1000xf32>
    %c0_16 = arith.constant 0 : index
    %c0_17 = arith.constant 0 : index
    %17 = vector.load %arg6[%c0_16, %c0_17] : memref<1x1000xf32, #tpu.memory_space<vmem>>, vector<1x1000xf32>
    %18 = vector.broadcast %17 : vector<1x1000xf32> to vector<2x1000xf32>
    %19 = arith.addf %16, %18 : vector<2x1000xf32>
    %c0_18 = arith.constant 0 : index
    %c0_19 = arith.constant 0 : index
    %20 = vector.load %arg7[%c0_18, %c0_19] : memref<2x1000xf32, #tpu.memory_space<vmem>>, vector<2x1000xf32>
    tpu.vector_store %arg7[%c0_18, %c0_19], %19 {strides = array<i32>} : memref<2x1000xf32, #tpu.memory_space<vmem>>, vector<2x1000xf32>,
    return
  }
}

</mosaic_0001>

<llo_original>
// kernel: forward.8
$region0: #{forward.8}
  #allocation0 [shape = 'u32[]', space=smem, size = 0x4, offset = 0x4, fixed_abs, tag = 'smem constant byte address 0x4 - core index']
  #allocation1 [shape = 'u32[144,128]{1,0:T(1,128)}', space=vmem, size = 0x12000, scoped, tag = 'internal scratch']
  %s0 = inlined_call_operand.vmem [shape: f32[4,363], index: 0, kind: input, shape index: {}]
  %s1 = inlined_call_operand.vmem [shape: f32[4,1], index: 1, kind: input, shape index: {}]
  %s2 = inlined_call_operand.vmem [shape: f32[363,4608], index: 2, kind: input, shape index: {}]
  %s3 = inlined_call_operand.vmem [shape: f32[4,4608], index: 3, kind: output, shape index: {}]
  %s4 = sld [smem:[#allocation0]]
  $region68: #{forward.8} parent=0
    _
  %s6 = ssub.s32 1, %s4
  %s7 = scalar_select 0, %s6, %s4
  $region1: #{forward.8} parent=0
    #allocation2 [shape = 'u8[1507328]{0}', space=vmem, size = 0x170000, scoped, tag = 'input window, operand 2']
    loop: start=0, step=1, limit=11
    $region2: #{forward.8} parent=1 // loop_pre_header
      _
    $region3: #{forward.8} parent=1 // loop_header
      %s9 = sphi 0, %s13
      %p10 = scmp.ge.s32.totalorder %s9, 11
      %s17 = sphi 0, %s17
      %s19 = sphi 0, %s17
      %s20 = sphi 0, %s19
      %s34 = sphi 0, %s20
      %s38 = sphi 0, %s38
      %s40 = sphi 0, %s38
      %s41 = sphi 0, %s40
      %s55 = sphi 0, %s41
      %s61 = sphi 0, %s63
      %s64 = sphi 0, %s61
      %s65 = sphi 0, %s64
      %s81 = sphi 0, %s65
      %s87 = sphi 0, %s89
      %s90 = sphi 0, %s87
      %s91 = sphi 0, %s90
      %s107 = sphi 0, %s91
    $region4: #{forward.8} parent=1 // loop_header_branch
      %12 = sbr.rel (%p10) target = $region8
    $region5: #{forward.8} parent=1 // loop_body
      %s14 = ssub.s32 %s9, 1
      %s15 = ssub.s32 %s9, 2
      %s16 = sadd.s32 %s9, 1
      %s18 = sadd.s32 %s17, 1
      %p21 = scmp.eq.s32.totalorder %s9, 8
      %p22 = scmp.ne.s32.totalorder %s17, %s19
      %p23 = scmp.eq.s32.totalorder %s9, 0
      %p24 = por %p22, %p23
      %p25 = scmp.ne.s32.totalorder %s17, %s19
      %p26 = scmp.eq.s32.totalorder %s14, 8
      %p27 = por %p25, %p26
      %p28 = scmp.ne.s32.totalorder %s19, %s20
      %p29 = scmp.eq.s32.totalorder %s14, 0
      %p30 = por %p28, %p29
      %p31 = scmp.ne.s32.totalorder %s19, %s20
      %p32 = scmp.eq.s32.totalorder %s15, 8
      %p33 = por %p31, %p32
      %p35 = scmp.ne.s32.totalorder %s20, %s34
      %p36 = scmp.eq.s32.totalorder %s15, 0
      %p37 = por %p35, %p36
      %s39 = sadd.s32 %s38, 1
      %p42 = scmp.eq.s32.totalorder %s9, 8
      %p43 = scmp.ne.s32.totalorder %s38, %s40
      %p44 = scmp.eq.s32.totalorder %s9, 0
      %p45 = por %p43, %p44
      %p46 = scmp.ne.s32.totalorder %s38, %s40
      %p47 = scmp.eq.s32.totalorder %s14, 8
      %p48 = por %p46, %p47
      %p49 = scmp.ne.s32.totalorder %s40, %s41
      %p50 = scmp.eq.s32.totalorder %s14, 0
      %p51 = por %p49, %p50
      %p52 = scmp.ne.s32.totalorder %s40, %s41
      %p53 = scmp.eq.s32.totalorder %s15, 8
      %p54 = por %p52, %p53
      %p56 = scmp.ne.s32.totalorder %s41, %s55
      %p57 = scmp.eq.s32.totalorder %s15, 0
      %p58 = por %p56, %p57
      %s59 = ssub.s32 %s9, %s16
      %p60 = scmp.eq.s32.totalorder %s59, 0
      %s62 = sadd.s32 %s61, 1
      %s63 = scalar_select %p60, %s61, %s62
      %p66 = pneg %p60
      %p67 = scmp.eq.s32.totalorder %s9, 8
      %p68 = por %p66, %p67
      %p69 = scmp.ne.s32.totalorder %s61, %s64
      %p70 = scmp.eq.s32.totalorder %s9, 0
      %p71 = por %p69, %p70
      %p72 = scmp.ne.s32.totalorder %s61, %s64
      %p73 = scmp.eq.s32.totalorder %s14, 8
      %p74 = por %p72, %p73
      %p75 = scmp.ne.s32.totalorder %s64, %s65
      %p76 = scmp.eq.s32.totalorder %s14, 0
      %p77 = por %p75, %p76
      %p78 = scmp.ne.s32.totalorder %s64, %s65
      %p79 = scmp.eq.s32.totalorder %s15, 8
      %p80 = por %p78, %p79
      %p82 = scmp.ne.s32.totalorder %s65, %s81
      %p83 = scmp.eq.s32.totalorder %s15, 0
      %p84 = por %p82, %p83
      %s85 = ssub.s32 %s9, %s16
      %p86 = scmp.eq.s32.totalorder %s85, 0
      %s88 = sadd.s32 %s87, 1
      %s89 = scalar_select %p86, %s87, %s88
      %p92 = pneg %p86
      %p93 = scmp.eq.s32.totalorder %s9, 8
      %p94 = por %p92, %p93
      %p95 = scmp.ne.s32.totalorder %s87, %s90
      %p96 = scmp.eq.s32.totalorder %s9, 0
      %p97 = por %p95, %p96
      %p98 = scmp.ne.s32.totalorder %s87, %s90
      %p99 = scmp.eq.s32.totalorder %s14, 8
      %p100 = por %p98, %p99
      %p101 = scmp.ne.s32.totalorder %s90, %s91
      %p102 = scmp.eq.s32.totalorder %s14, 0
      %p103 = por %p101, %p102
      %p104 = scmp.ne.s32.totalorder %s90, %s91
      %p105 = scmp.eq.s32.totalorder %s15, 8
      %p106 = por %p104, %p105
      %p108 = scmp.ne.s32.totalorder %s91, %s107
      %p109 = scmp.eq.s32.totalorder %s15, 0
      %p110 = por %p108, %p109
      %p111 = scmp.le.s32.totalorder 1, %s9
      %p112 = scmp.lt.s32.totalorder %s9, 10
      %p113 = pnand %p111, %p112
      %p114 = pneg %p113
      // Predicated region
      $region9: #{forward.8} parent=5 // pred_check
        _
      $region10: #{forward.8} parent=5 // pred_check_branch
        %116 = sbr.rel (%p113) target = $region12
      $region11: #{forward.8} parent=5 // pred_region
        %s117 = ssub.s32 %s9, 1
        // Predicated region
        $region13: #{forward.8} parent=11 // pred_check
          %p118 = pneg %p30
        $region14: #{forward.8} parent=11 // pred_check_branch
          %120 = sbr.rel (%p118) target = $region16
        $region15: #{forward.8} parent=11 // pred_region
          _
        $region16: #{forward.8} parent=11 // pred_fallthru
          _
        // Predicated region
        $region17: #{forward.8} parent=11 // pred_check
          %p121 = pneg %p51
        $region18: #{forward.8} parent=11 // pred_check_branch
          %123 = sbr.rel (%p121) target = $region20
        $region19: #{forward.8} parent=11 // pred_region
          _
        $region20: #{forward.8} parent=11 // pred_fallthru
          _
      $region12: #{forward.8} parent=5 // pred_fallthru
        _
      %p124 = scmp.lt.s32.totalorder %s9, 9
      // Predicated region
      $region21: #{forward.8} parent=5 // pred_check
        %p125 = pneg %p124
      $region22: #{forward.8} parent=5 // pred_check_branch
        %127 = sbr.rel (%p125) target = $region24
      $region23: #{forward.8} parent=5 // pred_region
        // Predicated region
        $region25: #{forward.8} parent=23 // pred_check
          %p128 = pneg %p71
        $region26: #{forward.8} parent=23 // pred_check_branch
          %130 = sbr.rel (%p128) target = $region28
        $region27: #{forward.8} parent=23 // pred_region
          %s131 = sand.u32 %s61, 1
          %s132 = sand.u32 %s61, 1
          %s133 = smul.addr %s132, 1472
          %s134 = scalar_lea.vmem [#allocation2], %s133
          %s135 = smul.u32 4, %s9
          %s136 = smul.addr %s135, 8
          %s137 = scalar_lea.vmem %s2, %s136
          // Predicated region
          $region29: #{forward.8} parent=27 // pred_check
            _
          $region30: #{forward.8} parent=27 // pred_check_branch
            %139 = sbr.rel (0) target = $region32
          $region31: #{forward.8} parent=27 // pred_region
            // Predicated region
            $region33: #{forward.8} parent=31 // pred_check
              _
            $region34: #{forward.8} parent=31 // pred_check_branch
              %141 = sbr.rel (0) target = $region36
            $region35: #{forward.8} parent=31 // pred_region
              loop: start=0, step=1, limit=1
              $region37: #{forward.8} parent=35 // loop_pre_header
                _
              $region38: #{forward.8} parent=35 // loop_header
                %s143 = sphi 0, %s147
                %p144 = scmp.ge.s32.totalorder %s143, 1
                %s148 = sphi %s137, %s137
                %s149 = sphi %s134, %s134
              $region39: #{forward.8} parent=35 // loop_header_branch
                %146 = sbr.rel (%p144) target = $region43
              $region40: #{forward.8} parent=35 // loop_body
                %v150 = vld [vmem:[%s148] sm:$0xff]
                %151 = vst [vmem:[%s149] sm:$0xff] %v150
                %v152 = vld [vmem:[%s148 + $0x8] sm:$0xff]
                %153 = vst [vmem:[%s149 + $0x8] sm:$0xff] %v152
                %v154 = vld [vmem:[%s148 + $0x10] sm:$0xff]
                %155 = vst [vmem:[%s149 + $0x10] sm:$0xff] %v154
                %v156 = vld [vmem:[%s148 + $0x18] sm:$0xff]
                %157 = vst [vmem:[%s149 + $0x18] sm:$0xff] %v156
                %v158 = vld [vmem:[%s148 + $0x120] sm:$0xff]
                %159 = vst [vmem:[%s149 + $0x20] sm:$0xff] %v158
                %v160 = vld [vmem:[%s148 + $0x128] sm:$0xff]
                %161 = vst [vmem:[%s149 + $0x28] sm:$0xff] %v160
                %v162 = vld [vmem:[%s148 + $0x130] sm:$0xff]
                %163 = vst [vmem:[%s149 + $0x30] sm:$0xff] %v162
                %v164 = vld [vmem:[%s148 + $0x138] sm:$0xff]
                %165 = vst [vmem:[%s149 + $0x38] sm:$0xff] %v164
                %v166 = vld [vmem:[%s148 + $0x240] sm:$0xff]
                %167 = vst [vmem:[%s149 + $0x40] sm:$0xff] %v166
                %v168 = vld [vmem:[%s148 + $0x248] sm:$0xff]
                %169 = vst [vmem:[%s149 + $0x48] sm:$0xff] %v168
                %v170 = vld [vmem:[%s148 + $0x250] sm:$0xff]
                %171 = vst [vmem:[%s149 + $0x50] sm:$0xff] %v170
                %v172 = vld [vmem:[%s148 + $0x258] sm:$0xff]
                %173 = vst [vmem:[%s149 + $0x58] sm:$0xff] %v172
                %v174 = vld [vmem:[%s148 + $0x360] sm:$0xff]
                %175 = vst [vmem:[%s149 + $0x60] sm:$0xff] %v174
                %v176 = vld [vmem:[%s148 + $0x368] sm:$0xff]
                %177 = vst [vmem:[%s149 + $0x68] sm:$0xff] %v176
                %v178 = vld [vmem:[%s148 + $0x370] sm:$0xff]
                %179 = vst [vmem:[%s149 + $0x70] sm:$0xff] %v178
                %v180 = vld [vmem:[%s148 + $0x378] sm:$0xff]
                %181 = vst [vmem:[%s149 + $0x78] sm:$0xff] %v180
                %v182 = vld [vmem:[%s148 + $0x480] sm:$0xff]
                %183 = vst [vmem:[%s149 + $0x80] sm:$0xff] %v182
                %v184 = vld [vmem:[%s148 + $0x488] sm:$0xff]
                %185 = vst [vmem:[%s149 + $0x88] sm:$0xff] %v184
                %v186 = vld [vmem:[%s148 + $0x490] sm:$0xff]
                %187 = vst [vmem:[%s149 + $0x90] sm:$0xff] %v186
                %v188 = vld [vmem:[%s148 + $0x498] sm:$0xff]
                %189 = vst [vmem:[%s149 + $0x98] sm:$0xff] %v188
                %v190 = vld [vmem:[%s148 + $0x5a0] sm:$0xff]
                %191 = vst [vmem:[%s149 + $0xa0] sm:$0xff] %v190
                %v192 = vld [vmem:[%s148 + $0x5a8] sm:$0xff]
                %193 = vst [vmem:[%s149 + $0xa8] sm:$0xff] %v192
                %v194 = vld [vmem:[%s148 + $0x5b0] sm:$0xff]
                %195 = vst [vmem:[%s149 + $0xb0] sm:$0xff] %v194
                %v196 = vld [vmem:[%s148 + $0x5b8] sm:$0xff]
                %197 = vst [vmem:[%s149 + $0xb8] sm:$0xff] %v196
                %v198 = vld [vmem:[%s148 + $0x6c0] sm:$0xff]
                %199 = vst [vmem:[%s149 + $0xc0] sm:$0xff] %v198
                %v200 = vld [vmem:[%s148 + $0x6c8] sm:$0xff]
                %201 = vst [vmem:[%s149 + $0xc8] sm:$0xff] %v200
                %v202 = vld [vmem:[%s148 + $0x6d0] sm:$0xff]
                %203 = vst [vmem:[%s149 + $0xd0] sm:$0xff] %v202
                %v204 = vld [vmem:[%s148 + $0x6d8] sm:$0xff]
                %205 = vst [vmem:[%s149 + $0xd8] sm:$0xff] %v204
                %v206 = vld [vmem:[%s148 + $0x7e0] sm:$0xff]
                %207 = vst [vmem:[%s149 + $0xe0] sm:$0xff] %v206
                %v208 = vld [vmem:[%s148 + $0x7e8] sm:$0xff]
                %209 = vst [vmem:[%s149 + $0xe8] sm:$0xff] %v208
                %v210 = vld [vmem:[%s148 + $0x7f0] sm:$0xff]
                %211 = vst [vmem:[%s149 + $0xf0] sm:$0xff] %v210
                %v212 = vld [vmem:[%s148 + $0x7f8] sm:$0xff]
                %213 = vst [vmem:[%s149 + $0xf8] sm:$0xff] %v212
                %v214 = vld [vmem:[%s148 + $0x900] sm:$0xff]
                %215 = vst [vmem:[%s149 + $0x100] sm:$0xff] %v214
                %v216 = vld [vmem:[%s148 + $0x908] sm:$0xff]
                %217 = vst [vmem:[%s149 + $0x108] sm:$0xff] %v216
                %v218 = vld [vmem:[%s148 + $0x910] sm:$0xff]
                %219 = vst [vmem:[%s149 + $0x110] sm:$0xff] %v218
                %v220 = vld [vmem:[%s148 + $0x918] sm:$0xff]
                %221 = vst [vmem:[%s149 + $0x118] sm:$0xff] %v220
                %v222 = vld [vmem:[%s148 + $0xa20] sm:$0xff]
                %223 = vst [vmem:[%s149 + $0x120] sm:$0xff] %v222
                %v224 = vld [vmem:[%s148 + $0xa28] sm:$0xff]
                %225 = vst [vmem:[%s149 + $0x128] sm:$0xff] %v224
                %v226 = vld [vmem:[%s148 + $0xa30] sm:$0xff]
                %227 = vst [vmem:[%s149 + $0x130] sm:$0xff] %v226
                %v228 = vld [vmem:[%s148 + $0xa38] sm:$0xff]
                %229 = vst [vmem:[%s149 + $0x138] sm:$0xff] %v228
                %v230 = vld [vmem:[%s148 + $0xb40] sm:$0xff]
                %231 = vst [vmem:[%s149 + $0x140] sm:$0xff] %v230
                %v232 = vld [vmem:[%s148 + $0xb48] sm:$0xff]
                %233 = vst [vmem:[%s149 + $0x148] sm:$0xff] %v232
                %v234 = vld [vmem:[%s148 + $0xb50] sm:$0xff]
                %235 = vst [vmem:[%s149 + $0x150] sm:$0xff] %v234
                %v236 = vld [vmem:[%s148 + $0xb58] sm:$0xff]
                %237 = vst [vmem:[%s149 + $0x158] sm:$0xff] %v236
                %v238 = vld [vmem:[%s148 + $0xc60] sm:$0xff]
                %239 = vst [vmem:[%s149 + $0x160] sm:$0xff] %v238
                %v240 = vld [vmem:[%s148 + $0xc68] sm:$0xff]
                %241 = vst [vmem:[%s149 + $0x168] sm:$0xff] %v240
                %v242 = vld [vmem:[%s148 + $0xc70] sm:$0xff]
                %243 = vst [vmem:[%s149 + $0x170] sm:$0xff] %v242
                %v244 = vld [vmem:[%s148 + $0xc78] sm:$0xff]
                %245 = vst [vmem:[%s149 + $0x178] sm:$0xff] %v244
                %v246 = vld [vmem:[%s148 + $0xd80] sm:$0xff]
                %247 = vst [vmem:[%s149 + $0x180] sm:$0xff] %v246
                %v248 = vld [vmem:[%s148 + $0xd88] sm:$0xff]
                %249 = vst [vmem:[%s149 + $0x188] sm:$0xff] %v248
                %v250 = vld [vmem:[%s148 + $0xd90] sm:$0xff]
                %251 = vst [vmem:[%s149 + $0x190] sm:$0xff] %v250
                %v252 = vld [vmem:[%s148 + $0xd98] sm:$0xff]
                %253 = vst [vmem:[%s149 + $0x198] sm:$0xff] %v252
                %v254 = vld [vmem:[%s148 + $0xea0] sm:$0xff]
                %255 = vst [vmem:[%s149 + $0x1a0] sm:$0xff] %v254
                %v256 = vld [vmem:[%s148 + $0xea8] sm:$0xff]
                %257 = vst [vmem:[%s149 + $0x1a8] sm:$0xff] %v256
                %v258 = vld [vmem:[%s148 + $0xeb0] sm:$0xff]
                %259 = vst [vmem:[%s149 + $0x1b0] sm:$0xff] %v258
                %v260 = vld [vmem:[%s148 + $0xeb8] sm:$0xff]
                %261 = vst [vmem:[%s149 + $0x1b8] sm:$0xff] %v260
                %v262 = vld [vmem:[%s148 + $0xfc0] sm:$0xff]
                %263 = vst [vmem:[%s149 + $0x1c0] sm:$0xff] %v262
                %v264 = vld [vmem:[%s148 + $0xfc8] sm:$0xff]
                %265 = vst [vmem:[%s149 + $0x1c8] sm:$0xff] %v264
                %v266 = vld [vmem:[%s148 + $0xfd0] sm:$0xff]
                %267 = vst [vmem:[%s149 + $0x1d0] sm:$0xff] %v266
                %v268 = vld [vmem:[%s148 + $0xfd8] sm:$0xff]
                %269 = vst [vmem:[%s149 + $0x1d8] sm:$0xff] %v268
                %v270 = vld [vmem:[%s148 + $0x10e0] sm:$0xff]
                %271 = vst [vmem:[%s149 + $0x1e0] sm:$0xff] %v270
                %v272 = vld [vmem:[%s148 + $0x10e8] sm:$0xff]
                %273 = vst [vmem:[%s149 + $0x1e8] sm:$0xff] %v272
                %v274 = vld [vmem:[%s148 + $0x10f0] sm:$0xff]
                %275 = vst [vmem:[%s149 + $0x1f0] sm:$0xff] %v274
                %v276 = vld [vmem:[%s148 + $0x10f8] sm:$0xff]
                %277 = vst [vmem:[%s149 + $0x1f8] sm:$0xff] %v276
                %v278 = vld [vmem:[%s148 + $0x1200] sm:$0xff]
                %279 = vst [vmem:[%s149 + $0x200] sm:$0xff] %v278
                %v280 = vld [vmem:[%s148 + $0x1208] sm:$0xff]
                %281 = vst [vmem:[%s149 + $0x208] sm:$0xff] %v280
                %v282 = vld [vmem:[%s148 + $0x1210] sm:$0xff]
                %283 = vst [vmem:[%s149 + $0x210] sm:$0xff] %v282
                %v284 = vld [vmem:[%s148 + $0x1218] sm:$0xff]
                %285 = vst [vmem:[%s149 + $0x218] sm:$0xff] %v284
                %v286 = vld [vmem:[%s148 + $0x1320] sm:$0xff]
                %287 = vst [vmem:[%s149 + $0x220] sm:$0xff] %v286
                %v288 = vld [vmem:[%s148 + $0x1328] sm:$0xff]
                %289 = vst [vmem:[%s149 + $0x228] sm:$0xff] %v288
                %v290 = vld [vmem:[%s148 + $0x1330] sm:$0xff]
                %291 = vst [vmem:[%s149 + $0x230] sm:$0xff] %v290
                %v292 = vld [vmem:[%s148 + $0x1338] sm:$0xff]
                %293 = vst [vmem:[%s149 + $0x238] sm:$0xff] %v292
                %v294 = vld [vmem:[%s148 + $0x1440] sm:$0xff]
                %295 = vst [vmem:[%s149 + $0x240] sm:$0xff] %v294
                %v296 = vld [vmem:[%s148 + $0x1448] sm:$0xff]
                %297 = vst [vmem:[%s149 + $0x248] sm:$0xff] %v296
                %v298 = vld [vmem:[%s148 + $0x1450] sm:$0xff]
                %299 = vst [vmem:[%s149 + $0x250] sm:$0xff] %v298
                %v300 = vld [vmem:[%s148 + $0x1458] sm:$0xff]
                %301 = vst [vmem:[%s149 + $0x258] sm:$0xff] %v300
                %v302 = vld [vmem:[%s148 + $0x1560] sm:$0xff]
                %303 = vst [vmem:[%s149 + $0x260] sm:$0xff] %v302
                %v304 = vld [vmem:[%s148 + $0x1568] sm:$0xff]
                %305 = vst [vmem:[%s149 + $0x268] sm:$0xff] %v304
                %v306 = vld [vmem:[%s148 + $0x1570] sm:$0xff]
                %307 = vst [vmem:[%s149 + $0x270] sm:$0xff] %v306
                %v308 = vld [vmem:[%s148 + $0x1578] sm:$0xff]
                %309 = vst [vmem:[%s149 + $0x278] sm:$0xff] %v308
                %v310 = vld [vmem:[%s148 + $0x1680] sm:$0xff]
                %311 = vst [vmem:[%s149 + $0x280] sm:$0xff] %v310
                %v312 = vld [vmem:[%s148 + $0x1688] sm:$0xff]
                %313 = vst [vmem:[%s149 + $0x288] sm:$0xff] %v312
                %v314 = vld [vmem:[%s148 + $0x1690] sm:$0xff]
                %315 = vst [vmem:[%s149 + $0x290] sm:$0xff] %v314
                %v316 = vld [vmem:[%s148 + $0x1698] sm:$0xff]
                %317 = vst [vmem:[%s149 + $0x298] sm:$0xff] %v316
                %v318 = vld [vmem:[%s148 + $0x17a0] sm:$0xff]
                %319 = vst [vmem:[%s149 + $0x2a0] sm:$0xff] %v318
                %v320 = vld [vmem:[%s148 + $0x17a8] sm:$0xff]
                %321 = vst [vmem:[%s149 + $0x2a8] sm:$0xff] %v320
                %v322 = vld [vmem:[%s148 + $0x17b0] sm:$0xff]
                %323 = vst [vmem:[%s149 + $0x2b0] sm:$0xff] %v322
                %v324 = vld [vmem:[%s148 + $0x17b8] sm:$0xff]
                %325 = vst [vmem:[%s149 + $0x2b8] sm:$0xff] %v324
                %v326 = vld [vmem:[%s148 + $0x18c0] sm:$0xff]
                %327 = vst [vmem:[%s149 + $0x2c0] sm:$0xff] %v326
                %v328 = vld [vmem:[%s148 + $0x18c8] sm:$0xff]
                %329 = vst [vmem:[%s149 + $0x2c8] sm:$0xff] %v328
                %v330 = vld [vmem:[%s148 + $0x18d0] sm:$0xff]
                %331 = vst [vmem:[%s149 + $0x2d0] sm:$0xff] %v330
                %v332 = vld [vmem:[%s148 + $0x18d8] sm:$0xff]
                %333 = vst [vmem:[%s149 + $0x2d8] sm:$0xff] %v332
                %v334 = vld [vmem:[%s148 + $0x19e0] sm:$0xff]
                %335 = vst [vmem:[%s149 + $0x2e0] sm:$0xff] %v334
                %v336 = vld [vmem:[%s148 + $0x19e8] sm:$0xff]
                %337 = vst [vmem:[%s149 + $0x2e8] sm:$0xff] %v336
                %v338 = vld [vmem:[%s148 + $0x19f0] sm:$0xff]
                %339 = vst [vmem:[%s149 + $0x2f0] sm:$0xff] %v338
                %v340 = vld [vmem:[%s148 + $0x19f8] sm:$0xff]
                %341 = vst [vmem:[%s149 + $0x2f8] sm:$0xff] %v340
                %v342 = vld [vmem:[%s148 + $0x1b00] sm:$0xff]
                %343 = vst [vmem:[%s149 + $0x300] sm:$0xff] %v342
                %v344 = vld [vmem:[%s148 + $0x1b08] sm:$0xff]
                %345 = vst [vmem:[%s149 + $0x308] sm:$0xff] %v344
                %v346 = vld [vmem:[%s148 + $0x1b10] sm:$0xff]
                %347 = vst [vmem:[%s149 + $0x310] sm:$0xff] %v346
                %v348 = vld [vmem:[%s148 + $0x1b18] sm:$0xff]
                %349 = vst [vmem:[%s149 + $0x318] sm:$0xff] %v348
                %v350 = vld [vmem:[%s148 + $0x1c20] sm:$0xff]
                %351 = vst [vmem:[%s149 + $0x320] sm:$0xff] %v350
                %v352 = vld [vmem:[%s148 + $0x1c28] sm:$0xff]
                %353 = vst [vmem:[%s149 + $0x328] sm:$0xff] %v352
                %v354 = vld [vmem:[%s148 + $0x1c30] sm:$0xff]
                %355 = vst [vmem:[%s149 + $0x330] sm:$0xff] %v354
                %v356 = vld [vmem:[%s148 + $0x1c38] sm:$0xff]
                %357 = vst [vmem:[%s149 + $0x338] sm:$0xff] %v356
                %v358 = vld [vmem:[%s148 + $0x1d40] sm:$0xff]
                %359 = vst [vmem:[%s149 + $0x340] sm:$0xff] %v358
                %v360 = vld [vmem:[%s148 + $0x1d48] sm:$0xff]
                %361 = vst [vmem:[%s149 + $0x348] sm:$0xff] %v360
                %v362 = vld [vmem:[%s148 + $0x1d50] sm:$0xff]
                %363 = vst [vmem:[%s149 + $0x350] sm:$0xff] %v362
                %v364 = vld [vmem:[%s148 + $0x1d58] sm:$0xff]
                %365 = vst [vmem:[%s149 + $0x358] sm:$0xff] %v364
                %v366 = vld [vmem:[%s148 + $0x1e60] sm:$0xff]
                %367 = vst [vmem:[%s149 + $0x360] sm:$0xff] %v366
                %v368 = vld [vmem:[%s148 + $0x1e68] sm:$0xff]
                %369 = vst [vmem:[%s149 + $0x368] sm:$0xff] %v368
                %v370 = vld [vmem:[%s148 + $0x1e70] sm:$0xff]
                %371 = vst [vmem:[%s149 + $0x370] sm:$0xff] %v370
                %v372 = vld [vmem:[%s148 + $0x1e78] sm:$0xff]
                %373 = vst [vmem:[%s149 + $0x378] sm:$0xff] %v372
                %v374 = vld [vmem:[%s148 + $0x1f80] sm:$0xff]
                %375 = vst [vmem:[%s149 + $0x380] sm:$0xff] %v374
                %v376 = vld [vmem:[%s148 + $0x1f88] sm:$0xff]
                %377 = vst [vmem:[%s149 + $0x388] sm:$0xff] %v376
                %v378 = vld [vmem:[%s148 + $0x1f90] sm:$0xff]
                %379 = vst [vmem:[%s149 + $0x390] sm:$0xff] %v378
                %v380 = vld [vmem:[%s148 + $0x1f98] sm:$0xff]
                %381 = vst [vmem:[%s149 + $0x398] sm:$0xff] %v380
                %v382 = vld [vmem:[%s148 + $0x20a0] sm:$0xff]
                %383 = vst [vmem:[%s149 + $0x3a0] sm:$0xff] %v382
                %v384 = vld [vmem:[%s148 + $0x20a8] sm:$0xff]
                %385 = vst [vmem:[%s149 + $0x3a8] sm:$0xff] %v384
                %v386 = vld [vmem:[%s148 + $0x20b0] sm:$0xff]
                %387 = vst [vmem:[%s149 + $0x3b0] sm:$0xff] %v386
                %v388 = vld [vmem:[%s148 + $0x20b8] sm:$0xff]
                %389 = vst [vmem:[%s149 + $0x3b8] sm:$0xff] %v388
                %v390 = vld [vmem:[%s148 + $0x21c0] sm:$0xff]
                %391 = vst [vmem:[%s149 + $0x3c0] sm:$0xff] %v390
                %v392 = vld [vmem:[%s148 + $0x21c8] sm:$0xff]
                %393 = vst [vmem:[%s149 + $0x3c8] sm:$0xff] %v392
                %v394 = vld [vmem:[%s148 + $0x21d0] sm:$0xff]
                %395 = vst [vmem:[%s149 + $0x3d0] sm:$0xff] %v394
                %v396 = vld [vmem:[%s148 + $0x21d8] sm:$0xff]
                %397 = vst [vmem:[%s149 + $0x3d8] sm:$0xff] %v396
                %v398 = vld [vmem:[%s148 + $0x22e0] sm:$0xff]
                %399 = vst [vmem:[%s149 + $0x3e0] sm:$0xff] %v398
                %v400 = vld [vmem:[%s148 + $0x22e8] sm:$0xff]
                %401 = vst [vmem:[%s149 + $0x3e8] sm:$0xff] %v400
                %v402 = vld [vmem:[%s148 + $0x22f0] sm:$0xff]
                %403 = vst [vmem:[%s149 + $0x3f0] sm:$0xff] %v402
                %v404 = vld [vmem:[%s148 + $0x22f8] sm:$0xff]
                %405 = vst [vmem:[%s149 + $0x3f8] sm:$0xff] %v404
                %v406 = vld [vmem:[%s148 + $0x2400] sm:$0xff]
                %407 = vst [vmem:[%s149 + $0x400] sm:$0xff] %v406
                %v408 = vld [vmem:[%s148 + $0x2408] sm:$0xff]
                %409 = vst [vmem:[%s149 + $0x408] sm:$0xff] %v408
                %v410 = vld [vmem:[%s148 + $0x2410] sm:$0xff]
                %411 = vst [vmem:[%s149 + $0x410] sm:$0xff] %v410
                %v412 = vld [vmem:[%s148 + $0x2418] sm:$0xff]
                %413 = vst [vmem:[%s149 + $0x418] sm:$0xff] %v412
                %v414 = vld [vmem:[%s148 + $0x2520] sm:$0xff]
                %415 = vst [vmem:[%s149 + $0x420] sm:$0xff] %v414
                %v416 = vld [vmem:[%s148 + $0x2528] sm:$0xff]
                %417 = vst [vmem:[%s149 + $0x428] sm:$0xff] %v416
                %v418 = vld [vmem:[%s148 + $0x2530] sm:$0xff]
                %419 = vst [vmem:[%s149 + $0x430] sm:$0xff] %v418
                %v420 = vld [vmem:[%s148 + $0x2538] sm:$0xff]
                %421 = vst [vmem:[%s149 + $0x438] sm:$0xff] %v420
                %v422 = vld [vmem:[%s148 + $0x2640] sm:$0xff]
                %423 = vst [vmem:[%s149 + $0x440] sm:$0xff] %v422
                %v424 = vld [vmem:[%s148 + $0x2648] sm:$0xff]
                %425 = vst [vmem:[%s149 + $0x448] sm:$0xff] %v424
                %v426 = vld [vmem:[%s148 + $0x2650] sm:$0xff]
                %427 = vst [vmem:[%s149 + $0x450] sm:$0xff] %v426
                %v428 = vld [vmem:[%s148 + $0x2658] sm:$0xff]
                %429 = vst [vmem:[%s149 + $0x458] sm:$0xff] %v428
                %v430 = vld [vmem:[%s148 + $0x2760] sm:$0xff]
                %431 = vst [vmem:[%s149 + $0x460] sm:$0xff] %v430
                %v432 = vld [vmem:[%s148 + $0x2768] sm:$0xff]
                %433 = vst [vmem:[%s149 + $0x468] sm:$0xff] %v432
                %v434 = vld [vmem:[%s148 + $0x2770] sm:$0xff]
                %435 = vst [vmem:[%s149 + $0x470] sm:$0xff] %v434
                %v436 = vld [vmem:[%s148 + $0x2778] sm:$0xff]
                %437 = vst [vmem:[%s149 + $0x478] sm:$0xff] %v436
                %v438 = vld [vmem:[%s148 + $0x2880] sm:$0xff]
                %439 = vst [vmem:[%s149 + $0x480] sm:$0xff] %v438
                %v440 = vld [vmem:[%s148 + $0x2888] sm:$0xff]
                %441 = vst [vmem:[%s149 + $0x488] sm:$0xff] %v440
                %v442 = vld [vmem:[%s148 + $0x2890] sm:$0xff]
                %443 = vst [vmem:[%s149 + $0x490] sm:$0xff] %v442
                %v444 = vld [vmem:[%s148 + $0x2898] sm:$0xff]
                %445 = vst [vmem:[%s149 + $0x498] sm:$0xff] %v444
                %v446 = vld [vmem:[%s148 + $0x29a0] sm:$0xff]
                %447 = vst [vmem:[%s149 + $0x4a0] sm:$0xff] %v446
                %v448 = vld [vmem:[%s148 + $0x29a8] sm:$0xff]
                %449 = vst [vmem:[%s149 + $0x4a8] sm:$0xff] %v448
                %v450 = vld [vmem:[%s148 + $0x29b0] sm:$0xff]
                %451 = vst [vmem:[%s149 + $0x4b0] sm:$0xff] %v450
                %v452 = vld [vmem:[%s148 + $0x29b8] sm:$0xff]
                %453 = vst [vmem:[%s149 + $0x4b8] sm:$0xff] %v452
                %v454 = vld [vmem:[%s148 + $0x2ac0] sm:$0xff]
                %455 = vst [vmem:[%s149 + $0x4c0] sm:$0xff] %v454
                %v456 = vld [vmem:[%s148 + $0x2ac8] sm:$0xff]
                %457 = vst [vmem:[%s149 + $0x4c8] sm:$0xff] %v456
                %v458 = vld [vmem:[%s148 + $0x2ad0] sm:$0xff]
                %459 = vst [vmem:[%s149 + $0x4d0] sm:$0xff] %v458
                %v460 = vld [vmem:[%s148 + $0x2ad8] sm:$0xff]
                %461 = vst [vmem:[%s149 + $0x4d8] sm:$0xff] %v460
                %v462 = vld [vmem:[%s148 + $0x2be0] sm:$0xff]
                %463 = vst [vmem:[%s149 + $0x4e0] sm:$0xff] %v462
                %v464 = vld [vmem:[%s148 + $0x2be8] sm:$0xff]
                %465 = vst [vmem:[%s149 + $0x4e8] sm:$0xff] %v464
                %v466 = vld [vmem:[%s148 + $0x2bf0] sm:$0xff]
                %467 = vst [vmem:[%s149 + $0x4f0] sm:$0xff] %v466
                %v468 = vld [vmem:[%s148 + $0x2bf8] sm:$0xff]
                %469 = vst [vmem:[%s149 + $0x4f8] sm:$0xff] %v468
                %v470 = vld [vmem:[%s148 + $0x2d00] sm:$0xff]
                %471 = vst [vmem:[%s149 + $0x500] sm:$0xff] %v470
                %v472 = vld [vmem:[%s148 + $0x2d08] sm:$0xff]
                %473 = vst [vmem:[%s149 + $0x508] sm:$0xff] %v472
                %v474 = vld [vmem:[%s148 + $0x2d10] sm:$0xff]
                %475 = vst [vmem:[%s149 + $0x510] sm:$0xff] %v474
                %v476 = vld [vmem:[%s148 + $0x2d18] sm:$0xff]
                %477 = vst [vmem:[%s149 + $0x518] sm:$0xff] %v476
                %v478 = vld [vmem:[%s148 + $0x2e20] sm:$0xff]
                %479 = vst [vmem:[%s149 + $0x520] sm:$0xff] %v478
                %v480 = vld [vmem:[%s148 + $0x2e28] sm:$0xff]
                %481 = vst [vmem:[%s149 + $0x528] sm:$0xff] %v480
                %v482 = vld [vmem:[%s148 + $0x2e30] sm:$0xff]
                %483 = vst [vmem:[%s149 + $0x530] sm:$0xff] %v482
                %v484 = vld [vmem:[%s148 + $0x2e38] sm:$0xff]
                %485 = vst [vmem:[%s149 + $0x538] sm:$0xff] %v484
                %v486 = vld [vmem:[%s148 + $0x2f40] sm:$0xff]
                %487 = vst [vmem:[%s149 + $0x540] sm:$0xff] %v486
                %v488 = vld [vmem:[%s148 + $0x2f48] sm:$0xff]
                %489 = vst [vmem:[%s149 + $0x548] sm:$0xff] %v488
                %v490 = vld [vmem:[%s148 + $0x2f50] sm:$0xff]
                %491 = vst [vmem:[%s149 + $0x550] sm:$0xff] %v490
                %v492 = vld [vmem:[%s148 + $0x2f58] sm:$0xff]
                %493 = vst [vmem:[%s149 + $0x558] sm:$0xff] %v492
                %v494 = vld [vmem:[%s148 + $0x3060] sm:$0xff]
                %495 = vst [vmem:[%s149 + $0x560] sm:$0xff] %v494
                %v496 = vld [vmem:[%s148 + $0x3068] sm:$0xff]
                %497 = vst [vmem:[%s149 + $0x568] sm:$0xff] %v496
                %v498 = vld [vmem:[%s148 + $0x3070] sm:$0xff]
                %499 = vst [vmem:[%s149 + $0x570] sm:$0xff] %v498
                %v500 = vld [vmem:[%s148 + $0x3078] sm:$0xff]
                %501 = vst [vmem:[%s149 + $0x578] sm:$0xff] %v500
                %v502 = vld [vmem:[%s148 + $0x3180] sm:$0xff]
                %503 = vst [vmem:[%s149 + $0x580] sm:$0xff] %v502
                %v504 = vld [vmem:[%s148 + $0x3188] sm:$0xff]
                %505 = vst [vmem:[%s149 + $0x588] sm:$0xff] %v504
                %v506 = vld [vmem:[%s148 + $0x3190] sm:$0xff]
                %507 = vst [vmem:[%s149 + $0x590] sm:$0xff] %v506
                %v508 = vld [vmem:[%s148 + $0x3198] sm:$0xff]
                %509 = vst [vmem:[%s149 + $0x598] sm:$0xff] %v508
                %v510 = vld [vmem:[%s148 + $0x32a0] sm:$0xff]
                %511 = vst [vmem:[%s149 + $0x5a0] sm:$0xff] %v510
                %v512 = vld [vmem:[%s148 + $0x32a8] sm:$0xff]
                %513 = vst [vmem:[%s149 + $0x5a8] sm:$0xff] %v512
                %v514 = vld [vmem:[%s148 + $0x32b0] sm:$0xff]
                %515 = vst [vmem:[%s149 + $0x5b0] sm:$0xff] %v514
                %v516 = vld [vmem:[%s148 + $0x32b8] sm:$0xff]
                %517 = vst [vmem:[%s149 + $0x5b8] sm:$0xff] %v516
              $region41: #{forward.8} parent=35 // loop_footer
                %s147 = sadd.s32 1, %s143
              $region42: #{forward.8} parent=35 // loop_footer_branch
                %142 = sbr.rel target = $region38
              $region43: #{forward.8} parent=35 // loop_exit
                _
            $region36: #{forward.8} parent=31 // pred_fallthru
              _
            // Predicated region
            $region44: #{forward.8} parent=31 // pred_check
              _
            $region45: #{forward.8} parent=31 // pred_check_branch
              %519 = sbr.rel target = $region47
            $region46: #{forward.8} parent=31 // pred_region
              _
            $region47: #{forward.8} parent=31 // pred_fallthru
              _
          $region32: #{forward.8} parent=27 // pred_fallthru
            _
          %520 = vnop
        $region28: #{forward.8} parent=23 // pred_fallthru
          _
      $region24: #{forward.8} parent=5 // pred_fallthru
        _
      %p521 = scmp.le.s32.totalorder 1, %s9
      %p522 = scmp.lt.s32.totalorder %s9, 10
      %p523 = pnand %p521, %p522
      %p524 = pneg %p523
      // Predicated region
      $region48: #{forward.8} parent=5 // pred_check
        _
      $region49: #{forward.8} parent=5 // pred_check_branch
        %526 = sbr.rel (%p523) target = $region51
      $region50: #{forward.8} parent=5 // pred_region
        %s527 = ssub.s32 %s9, 1
        %s528 = sand.u32 %s64, 1
        %s529 = sand.u32 %s64, 1
        %s530 = smul.addr %s529, 1472
        %s531 = scalar_lea.vmem [#allocation2], %s530
        // Predicated region
        $region52: #{forward.8} parent=50 // pred_check
          %p532 = pneg %p77
        $region53: #{forward.8} parent=50 // pred_check_branch
          %534 = sbr.rel (%p532) target = $region55
        $region54: #{forward.8} parent=50 // pred_region
          _
        $region55: #{forward.8} parent=50 // pred_fallthru
          _
        %p535 = pneg %p30
        %p536 = pneg %p27
        %p537 = pneg %p51
        %p538 = pneg %p48
        %s539 = sand.u32 %s64, 1
        %s540 = sand.u32 %s64, 1
        %s541 = smul.addr %s540, 1472
        %s542 = scalar_lea.vmem [#allocation2], %s541
        %p543 = pneg %p77
        %p544 = pneg %p74
        %p545 = pneg %p103
        %p546 = pneg %p100
        %s547 = smul.u32 4, %s14
        %p548 = scmp.lt.s32.totalorder %s547, 35
        %s549 = scalar_select %p548, %s547, 35
        %s550 = smul.addr %s549, 4
        %s551 = scalar_lea.vmem %s3, %s550
        %s552 = smul.u32 4, %s14
        %s553 = smul.u32 4, %s14
        %p554 = scmp.lt.s32.totalorder %s553, 35
        %s555 = scalar_select %p554, %s553, 35
        %s556 = smul.addr %s555, 4
        %s557 = scalar_lea.vmem %s3, %s556
        %s558 = smul.u32 4, %s14
        %v559 = vld [vmem:[%s0] sm:$0xff]
        %v560 = vld [vmem:[%s0 + $0x8] sm:$0xf]
        %v561 = vld [vmem:[%s531] sm:$0xff]
        %v562 = vld [vmem:[%s531 + $0x8] sm:$0xff]
        %v563 = vld [vmem:[%s531 + $0x10] sm:$0xff]
        %v564 = vld [vmem:[%s531 + $0x18] sm:$0xff]
        %v565 = vld [vmem:[%s531 + $0x20] sm:$0xff]
        %v566 = vld [vmem:[%s531 + $0x28] sm:$0xff]
        %v567 = vld [vmem:[%s531 + $0x30] sm:$0xff]
        %v568 = vld [vmem:[%s531 + $0x38] sm:$0xff]
        %v569 = vld [vmem:[%s531 + $0x40] sm:$0xff]
        %v570 = vld [vmem:[%s531 + $0x48] sm:$0xff]
        %v571 = vld [vmem:[%s531 + $0x50] sm:$0xff]
        %v572 = vld [vmem:[%s531 + $0x58] sm:$0xff]
        %v573 = vld [vmem:[%s531 + $0x60] sm:$0xff]
        %v574 = vld [vmem:[%s531 + $0x68] sm:$0xff]
        %v575 = vld [vmem:[%s531 + $0x70] sm:$0xff]
        %v576 = vld [vmem:[%s531 + $0x78] sm:$0xff]
        %v577 = vld [vmem:[%s531 + $0x80] sm:$0xff]
        %v578 = vld [vmem:[%s531 + $0x88] sm:$0xff]
        %v579 = vld [vmem:[%s531 + $0x90] sm:$0xff]
        %v580 = vld [vmem:[%s531 + $0x98] sm:$0xff]
        %v581 = vld [vmem:[%s531 + $0xa0] sm:$0xff]
        %v582 = vld [vmem:[%s531 + $0xa8] sm:$0xff]
        %v583 = vld [vmem:[%s531 + $0xb0] sm:$0xff]
        %v584 = vld [vmem:[%s531 + $0xb8] sm:$0xff]
        %v585 = vld [vmem:[%s531 + $0xc0] sm:$0xff]
        %v586 = vld [vmem:[%s531 + $0xc8] sm:$0xff]
        %v587 = vld [vmem:[%s531 + $0xd0] sm:$0xff]
        %v588 = vld [vmem:[%s531 + $0xd8] sm:$0xff]
        %v589 = vld [vmem:[%s531 + $0xe0] sm:$0xff]
        %v590 = vld [vmem:[%s531 + $0xe8] sm:$0xff]
        %v591 = vld [vmem:[%s531 + $0xf0] sm:$0xff]
        %v592 = vld [vmem:[%s531 + $0xf8] sm:$0xff]
        %v593 = vld [vmem:[%s531 + $0x100] sm:$0xff]
        %v594 = vld [vmem:[%s531 + $0x108] sm:$0xff]
        %v595 = vld [vmem:[%s531 + $0x110] sm:$0xff]
        %v596 = vld [vmem:[%s531 + $0x118] sm:$0xff]
        %v597 = vld [vmem:[%s531 + $0x120] sm:$0xff]
        %v598 = vld [vmem:[%s531 + $0x128] sm:$0xff]
        %v599 = vld [vmem:[%s531 + $0x130] sm:$0xff]
        %v600 = vld [vmem:[%s531 + $0x138] sm:$0xff]
        %v601 = vld [vmem:[%s531 + $0x140] sm:$0xff]
        %v602 = vld [vmem:[%s531 + $0x148] sm:$0xff]
        %v603 = vld [vmem:[%s531 + $0x150] sm:$0xff]
        %v604 = vld [vmem:[%s531 + $0x158] sm:$0xff]
        %v605 = vld [vmem:[%s531 + $0x160] sm:$0xff]
        %v606 = vld [vmem:[%s531 + $0x168] sm:$0xff]
        %v607 = vld [vmem:[%s531 + $0x170] sm:$0xff]
        %v608 = vld [vmem:[%s531 + $0x178] sm:$0xff]
        %v609 = vld [vmem:[%s531 + $0x180] sm:$0xff]
        %v610 = vld [vmem:[%s531 + $0x188] sm:$0xff]
        %v611 = vld [vmem:[%s531 + $0x190] sm:$0xff]
        %v612 = vld [vmem:[%s531 + $0x198] sm:$0xff]
        %v613 = vld [vmem:[%s531 + $0x1a0] sm:$0xff]
        %v614 = vld [vmem:[%s531 + $0x1a8] sm:$0xff]
        %v615 = vld [vmem:[%s531 + $0x1b0] sm:$0xff]
        %v616 = vld [vmem:[%s531 + $0x1b8] sm:$0xff]
        %v617 = vld [vmem:[%s531 + $0x1c0] sm:$0xff]
        %v618 = vld [vmem:[%s531 + $0x1c8] sm:$0xff]
        %v619 = vld [vmem:[%s531 + $0x1d0] sm:$0xff]
        %v620 = vld [vmem:[%s531 + $0x1d8] sm:$0xff]
        %v621 = vld [vmem:[%s531 + $0x1e0] sm:$0xff]
        %v622 = vld [vmem:[%s531 + $0x1e8] sm:$0xff]
        %v623 = vld [vmem:[%s531 + $0x1f0] sm:$0xff]
        %v624 = vld [vmem:[%s531 + $0x1f8] sm:$0xff]
        %v625 = vld [vmem:[%s531 + $0x200] sm:$0xff]
        %v626 = vld [vmem:[%s531 + $0x208] sm:$0xff]
        %v627 = vld [vmem:[%s531 + $0x210] sm:$0xff]
        %v628 = vld [vmem:[%s531 + $0x218] sm:$0xff]
        %v629 = vld [vmem:[%s531 + $0x220] sm:$0xff]
        %v630 = vld [vmem:[%s531 + $0x228] sm:$0xff]
        %v631 = vld [vmem:[%s531 + $0x230] sm:$0xff]
        %v632 = vld [vmem:[%s531 + $0x238] sm:$0xff]
        %v633 = vld [vmem:[%s531 + $0x240] sm:$0xff]
        %v634 = vld [vmem:[%s531 + $0x248] sm:$0xff]
        %v635 = vld [vmem:[%s531 + $0x250] sm:$0xff]
        %v636 = vld [vmem:[%s531 + $0x258] sm:$0xff]
        %v637 = vld [vmem:[%s531 + $0x260] sm:$0xff]
        %v638 = vld [vmem:[%s531 + $0x268] sm:$0xff]
        %v639 = vld [vmem:[%s531 + $0x270] sm:$0xff]
        %v640 = vld [vmem:[%s531 + $0x278] sm:$0xff]
        %v641 = vld [vmem:[%s531 + $0x280] sm:$0xff]
        %v642 = vld [vmem:[%s531 + $0x288] sm:$0xff]
        %v643 = vld [vmem:[%s531 + $0x290] sm:$0xff]
        %v644 = vld [vmem:[%s531 + $0x298] sm:$0xff]
        %v645 = vld [vmem:[%s531 + $0x2a0] sm:$0xff]
        %v646 = vld [vmem:[%s531 + $0x2a8] sm:$0xff]
        %v647 = vld [vmem:[%s531 + $0x2b0] sm:$0xff]
        %v648 = vld [vmem:[%s531 + $0x2b8] sm:$0xff]
        %v649 = vld [vmem:[%s531 + $0x2c0] sm:$0xff]
        %v650 = vld [vmem:[%s531 + $0x2c8] sm:$0xff]
        %v651 = vld [vmem:[%s531 + $0x2d0] sm:$0xff]
        %v652 = vld [vmem:[%s531 + $0x2d8] sm:$0xff]
        %v653 = vld [vmem:[%s531 + $0x2e0] sm:$0xff]
        %v654 = vld [vmem:[%s531 + $0x2e8] sm:$0xff]
        %v655 = vld [vmem:[%s531 + $0x2f0] sm:$0xff]
        %v656 = vld [vmem:[%s531 + $0x2f8] sm:$0xff]
        %v657 = vld [vmem:[%s531 + $0x300] sm:$0xff]
        %v658 = vld [vmem:[%s531 + $0x308] sm:$0xff]
        %v659 = vld [vmem:[%s531 + $0x310] sm:$0xff]
        %v660 = vld [vmem:[%s531 + $0x318] sm:$0xff]
        %v661 = vld [vmem:[%s531 + $0x320] sm:$0xff]
        %v662 = vld [vmem:[%s531 + $0x328] sm:$0xff]
        %v663 = vld [vmem:[%s531 + $0x330] sm:$0xff]
        %v664 = vld [vmem:[%s531 + $0x338] sm:$0xff]
        %v665 = vld [vmem:[%s531 + $0x340] sm:$0xff]
        %v666 = vld [vmem:[%s531 + $0x348] sm:$0xff]
        %v667 = vld [vmem:[%s531 + $0x350] sm:$0xff]
        %v668 = vld [vmem:[%s531 + $0x358] sm:$0xff]
        %v669 = vld [vmem:[%s531 + $0x360] sm:$0xff]
        %v670 = vld [vmem:[%s531 + $0x368] sm:$0xff]
        %v671 = vld [vmem:[%s531 + $0x370] sm:$0xff]
        %v672 = vld [vmem:[%s531 + $0x378] sm:$0xff]
        %v673 = vld [vmem:[%s531 + $0x380] sm:$0xff]
        %v674 = vld [vmem:[%s531 + $0x388] sm:$0xff]
        %v675 = vld [vmem:[%s531 + $0x390] sm:$0xff]
        %v676 = vld [vmem:[%s531 + $0x398] sm:$0xff]
        %v677 = vld [vmem:[%s531 + $0x3a0] sm:$0xff]
        %v678 = vld [vmem:[%s531 + $0x3a8] sm:$0xff]
        %v679 = vld [vmem:[%s531 + $0x3b0] sm:$0xff]
        %v680 = vld [vmem:[%s531 + $0x3b8] sm:$0xff]
        %v681 = vld [vmem:[%s531 + $0x3c0] sm:$0xff]
        %v682 = vld [vmem:[%s531 + $0x3c8] sm:$0xff]
        %v683 = vld [vmem:[%s531 + $0x3d0] sm:$0xff]
        %v684 = vld [vmem:[%s531 + $0x3d8] sm:$0xff]
        %v685 = vld [vmem:[%s531 + $0x3e0] sm:$0xff]
        %v686 = vld [vmem:[%s531 + $0x3e8] sm:$0xff]
        %v687 = vld [vmem:[%s531 + $0x3f0] sm:$0xff]
        %v688 = vld [vmem:[%s531 + $0x3f8] sm:$0xff]
        %v689 = vld [vmem:[%s531 + $0x400] sm:$0xff]
        %v690 = vld [vmem:[%s531 + $0x408] sm:$0xff]
        %v691 = vld [vmem:[%s531 + $0x410] sm:$0xff]
        %v692 = vld [vmem:[%s531 + $0x418] sm:$0xff]
        %v693 = vld [vmem:[%s531 + $0x420] sm:$0xff]
        %v694 = vld [vmem:[%s531 + $0x428] sm:$0xff]
        %v695 = vld [vmem:[%s531 + $0x430] sm:$0xff]
        %v696 = vld [vmem:[%s531 + $0x438] sm:$0xff]
        %v697 = vld [vmem:[%s531 + $0x440] sm:$0xff]
        %v698 = vld [vmem:[%s531 + $0x448] sm:$0xff]
        %v699 = vld [vmem:[%s531 + $0x450] sm:$0xff]
        %v700 = vld [vmem:[%s531 + $0x458] sm:$0xff]
        %v701 = vld [vmem:[%s531 + $0x460] sm:$0xff]
        %v702 = vld [vmem:[%s531 + $0x468] sm:$0xff]
        %v703 = vld [vmem:[%s531 + $0x470] sm:$0xff]
        %v704 = vld [vmem:[%s531 + $0x478] sm:$0xff]
        %v705 = vld [vmem:[%s531 + $0x480] sm:$0xff]
        %v706 = vld [vmem:[%s531 + $0x488] sm:$0xff]
        %v707 = vld [vmem:[%s531 + $0x490] sm:$0xff]
        %v708 = vld [vmem:[%s531 + $0x498] sm:$0xff]
        %v709 = vld [vmem:[%s531 + $0x4a0] sm:$0xff]
        %v710 = vld [vmem:[%s531 + $0x4a8] sm:$0xff]
        %v711 = vld [vmem:[%s531 + $0x4b0] sm:$0xff]
        %v712 = vld [vmem:[%s531 + $0x4b8] sm:$0xff]
        %v713 = vld [vmem:[%s531 + $0x4c0] sm:$0xff]
        %v714 = vld [vmem:[%s531 + $0x4c8] sm:$0xff]
        %v715 = vld [vmem:[%s531 + $0x4d0] sm:$0xff]
        %v716 = vld [vmem:[%s531 + $0x4d8] sm:$0xff]
        %v717 = vld [vmem:[%s531 + $0x4e0] sm:$0xff]
        %v718 = vld [vmem:[%s531 + $0x4e8] sm:$0xff]
        %v719 = vld [vmem:[%s531 + $0x4f0] sm:$0xff]
        %v720 = vld [vmem:[%s531 + $0x4f8] sm:$0xff]
        %v721 = vld [vmem:[%s531 + $0x500] sm:$0xff]
        %v722 = vld [vmem:[%s531 + $0x508] sm:$0xff]
        %v723 = vld [vmem:[%s531 + $0x510] sm:$0xff]
        %v724 = vld [vmem:[%s531 + $0x518] sm:$0xff]
        %v725 = vld [vmem:[%s531 + $0x520] sm:$0xff]
        %v726 = vld [vmem:[%s531 + $0x528] sm:$0xff]
        %v727 = vld [vmem:[%s531 + $0x530] sm:$0xff]
        %v728 = vld [vmem:[%s531 + $0x538] sm:$0xff]
        %v729 = vld [vmem:[%s531 + $0x540] sm:$0xff]
        %v730 = vld [vmem:[%s531 + $0x548] sm:$0xff]
        %v731 = vld [vmem:[%s531 + $0x550] sm:$0xff]
        %v732 = vld [vmem:[%s531 + $0x558] sm:$0xff]
        %v733 = vld [vmem:[%s531 + $0x560] sm:$0xff]
        %v734 = vld [vmem:[%s531 + $0x568] sm:$0xff]
        %v735 = vld [vmem:[%s531 + $0x570] sm:$0xff]
        %v736 = vld [vmem:[%s531 + $0x578] sm:$0xff]
        %v737 = vld [vmem:[%s531 + $0x580] sm:$0xff]
        %v738 = vld [vmem:[%s531 + $0x588] sm:$0xff]
        %v739 = vld [vmem:[%s531 + $0x590] sm:$0xff]
        %v740 = vld [vmem:[%s531 + $0x598] sm:$0xff]
        %v741 = vld [vmem:[%s531 + $0x5a0] sm:$0x7]
        %v742 = vld [vmem:[%s531 + $0x5a8] sm:$0x7]
        %v743 = vld [vmem:[%s531 + $0x5b0] sm:$0x7]
        %v744 = vld [vmem:[%s531 + $0x5b8] sm:$0x7]
        %v745 = vld [vmem:[%s1] sm:$0xf]
        %747 = vset.pattern.permute.xlu0 0
        %748 = vperm.xlu0 %747, %v745
        %v749 = vpop.permute.xlu0 %748
        %v753 = vcombine.high %v559, %v559
        %vm755 = vcmask 875520
        %v756 = vsel %vm755, %v560, 0
        %vm758 = vcmask 1042432
        %v760 = vsel %vm758, %v741, 0
        %v763 = vsel %vm758, %v742, 0
        %v766 = vsel %vm758, %v743, 0
        %v769 = vsel %vm758, %v744, 0
        %771 = vmatprep.subr.mxu0 %v562
        %772 = vmatpush1.msra.mxu0 %v561
        %773 = vmatprep.subr.mxu0 %v566
        %774 = vmatpush1.msra.mxu0 %v565
        %775 = vmatprep.subr.mxu0 %v570
        %776 = vmatpush1.msra.mxu0 %v569
        %777 = vmatprep.subr.mxu0 %v574
        %778 = vmatpush1.msra.mxu0 %v573
        %779 = vmatprep.subr.mxu0 %v578
        %780 = vmatpush1.msra.mxu0 %v577
        %781 = vmatprep.subr.mxu0 %v582
        %782 = vmatpush1.msra.mxu0 %v581
        %783 = vmatprep.subr.mxu0 %v586
        %784 = vmatpush1.msra.mxu0 %v585
        %785 = vmatprep.subr.mxu0 %v590
        %786 = vmatpush1.msra.mxu0 %v589
        %787 = vmatprep.subr.mxu0 %v594
        %788 = vmatpush1.msra.mxu0 %v593
        %789 = vmatprep.subr.mxu0 %v598
        %790 = vmatpush1.msra.mxu0 %v597
        %791 = vmatprep.subr.mxu0 %v602
        %792 = vmatpush1.msra.mxu0 %v601
        %793 = vmatprep.subr.mxu0 %v606
        %794 = vmatpush1.msra.mxu0 %v605
        %795 = vmatprep.subr.mxu0 %v610
        %796 = vmatpush1.msra.mxu0 %v609
        %797 = vmatprep.subr.mxu0 %v614
        %798 = vmatpush1.msra.mxu0 %v613
        %799 = vmatprep.subr.mxu0 %v618
        %800 = vmatpush1.msra.mxu0 %v617
        %801 = vmatprep.subr.mxu0 %v622
        %802 = vmatpush1.msra.mxu0 %v621
        %803 = vmatprep.subr.mxu0 %v626
        %804 = vmatpush1.msra.mxu0 %v625
        %805 = vmatprep.subr.mxu0 %v630
        %806 = vmatpush1.msra.mxu0 %v629
        %807 = vmatprep.subr.mxu0 %v634
        %808 = vmatpush1.msra.mxu0 %v633
        %809 = vmatprep.subr.mxu0 %v638
        %810 = vmatpush1.msra.mxu0 %v637
        %811 = vmatprep.subr.mxu0 %v642
        %812 = vmatpush1.msra.mxu0 %v641
        %813 = vmatprep.subr.mxu0 %v646
        %814 = vmatpush1.msra.mxu0 %v645
        %815 = vmatprep.subr.mxu0 %v650
        %816 = vmatpush1.msra.mxu0 %v649
        %817 = vmatprep.subr.mxu0 %v654
        %818 = vmatpush1.msra.mxu0 %v653
        %819 = vmatprep.subr.mxu0 %v658
        %820 = vmatpush1.msra.mxu0 %v657
        %821 = vmatprep.subr.mxu0 %v662
        %822 = vmatpush1.msra.mxu0 %v661
        %823 = vmatprep.subr.mxu0 %v666
        %824 = vmatpush1.msra.mxu0 %v665
        %825 = vmatprep.subr.mxu0 %v670
        %826 = vmatpush1.msra.mxu0 %v669
        %827 = vmatprep.subr.mxu0 %v674
        %828 = vmatpush1.msra.mxu0 %v673
        %829 = vmatprep.subr.mxu0 %v678
        %830 = vmatpush1.msra.mxu0 %v677
        %831 = vmatprep.subr.mxu0 %v682
        %832 = vmatpush1.msra.mxu0 %v681
        %833 = vmatprep.subr.mxu0 %v686
        %834 = vmatpush1.msra.mxu0 %v685
        %835 = vmatprep.mubr.f32.mxu0 %v753
        %836 = vmatmul.mubr.f32.gmra.mrb[0].mxu0 %v559
        %v837 = vpop.f32.mrb[0].mxu0
        %v838 = vadd.f32 %v749, %v837
        %v839 = vpop.f32.mrb[0].mxu0
        %v840 = vadd.f32 %v749, %v839
        %841 = vdwg.mxu0
        %842 = vmatprep.subr.mxu0 %v690
        %843 = vmatpush1.msra.mxu0 %v689
        %844 = vmatprep.subr.mxu0 %v694
        %845 = vmatpush1.msra.mxu0 %v693
        %846 = vmatprep.subr.mxu0 %v698
        %847 = vmatpush1.msra.mxu0 %v697
        %848 = vmatprep.subr.mxu0 %v702
        %849 = vmatpush1.msra.mxu0 %v701
        %850 = vmatprep.subr.mxu0 %v706
        %851 = vmatpush1.msra.mxu0 %v705
        %852 = vmatprep.subr.mxu0 %v710
        %853 = vmatpush1.msra.mxu0 %v709
        %854 = vmatprep.subr.mxu0 %v714
        %855 = vmatpush1.msra.mxu0 %v713
        %856 = vmatprep.subr.mxu0 %v718
        %857 = vmatpush1.msra.mxu0 %v717
        %858 = vmatprep.subr.mxu0 %v722
        %859 = vmatpush1.msra.mxu0 %v721
        %860 = vmatprep.subr.mxu0 %v726
        %861 = vmatpush1.msra.mxu0 %v725
        %862 = vmatprep.subr.mxu0 %v730
        %863 = vmatpush1.msra.mxu0 %v729
        %864 = vmatprep.subr.mxu0 %v734
        %865 = vmatpush1.msra.mxu0 %v733
        %866 = vmatprep.subr.mxu0 %v738
        %867 = vmatpush1.msra.mxu0 %v737
        %868 = vmatprep.subr.mxu0 %v763
        %869 = vmatpush1.msra.mxu0 %v760
        %870 = vmatprep.subr.mxu0 0.0
        %871 = vmatpush1.msra.mxu0 0.0
        %872 = vmatprep.subr.mxu0 0.0
        %873 = vmatpush1.msra.mxu0 0.0
        %874 = vmatprep.subr.mxu0 0.0
        %875 = vmatpush1.msra.mxu0 0.0
        %876 = vmatprep.subr.mxu0 0.0
        %877 = vmatpush1.msra.mxu0 0.0
        %878 = vmatprep.subr.mxu0 0.0
        %879 = vmatpush1.msra.mxu0 0.0
        %880 = vmatprep.subr.mxu0 0.0
        %881 = vmatpush1.msra.mxu0 0.0
        %882 = vmatprep.subr.mxu0 0.0
        %883 = vmatpush1.msra.mxu0 0.0
        %884 = vmatprep.subr.mxu0 0.0
        %885 = vmatpush1.msra.mxu0 0.0
        %886 = vmatprep.subr.mxu0 0.0
        %887 = vmatpush1.msra.mxu0 0.0
        %888 = vmatprep.subr.mxu0 0.0
        %889 = vmatpush1.msra.mxu0 0.0
        %890 = vmatprep.subr.mxu0 0.0
        %891 = vmatpush1.msra.mxu0 0.0
        %892 = vmatprep.subr.mxu0 0.0
        %893 = vmatpush1.msra.mxu0 0.0
        %894 = vmatprep.subr.mxu0 0.0
        %895 = vmatpush1.msra.mxu0 0.0
        %896 = vmatprep.subr.mxu0 0.0
        %897 = vmatpush1.msra.mxu0 0.0
        %898 = vmatprep.subr.mxu0 0.0
        %899 = vmatpush1.msra.mxu0 0.0
        %900 = vmatprep.subr.mxu0 0.0
        %901 = vmatpush1.msra.mxu0 0.0
        %902 = vmatprep.subr.mxu0 0.0
        %903 = vmatpush1.msra.mxu0 0.0
        %904 = vmatprep.subr.mxu0 0.0
        %905 = vmatpush1.msra.mxu0 0.0
        %906 = vmatprep.mubr.f32.mxu0 0.0
        %907 = vmatmul.mubr.f32.gmra.mrb[0].mxu0 %v756
        %v908 = vpop.f32.mrb[0].mxu0
        %v909 = vadd.f32 %v838, %v908
        %v910 = vpop.f32.mrb[0].mxu0
        %v911 = vadd.f32 %v840, %v910
        %912 = vdwg.mxu0
        %913 = vmatprep.subr.mxu0 %v564
        %914 = vmatpush1.msra.mxu0 %v563
        %915 = vmatprep.subr.mxu0 %v568
        %916 = vmatpush1.msra.mxu0 %v567
        %917 = vmatprep.subr.mxu0 %v572
        %918 = vmatpush1.msra.mxu0 %v571
        %919 = vmatprep.subr.mxu0 %v576
        %920 = vmatpush1.msra.mxu0 %v575
        %921 = vmatprep.subr.mxu0 %v580
        %922 = vmatpush1.msra.mxu0 %v579
        %923 = vmatprep.subr.mxu0 %v584
        %924 = vmatpush1.msra.mxu0 %v583
        %925 = vmatprep.subr.mxu0 %v588
        %926 = vmatpush1.msra.mxu0 %v587
        %927 = vmatprep.subr.mxu0 %v592
        %928 = vmatpush1.msra.mxu0 %v591
        %929 = vmatprep.subr.mxu0 %v596
        %930 = vmatpush1.msra.mxu0 %v595
        %931 = vmatprep.subr.mxu0 %v600
        %932 = vmatpush1.msra.mxu0 %v599
        %933 = vmatprep.subr.mxu0 %v604
        %934 = vmatpush1.msra.mxu0 %v603
        %935 = vmatprep.subr.mxu0 %v608
        %936 = vmatpush1.msra.mxu0 %v607
        %937 = vmatprep.subr.mxu0 %v612
        %938 = vmatpush1.msra.mxu0 %v611
        %939 = vmatprep.subr.mxu0 %v616
        %940 = vmatpush1.msra.mxu0 %v615
        %941 = vmatprep.subr.mxu0 %v620
        %942 = vmatpush1.msra.mxu0 %v619
        %943 = vmatprep.subr.mxu0 %v624
        %944 = vmatpush1.msra.mxu0 %v623
        %945 = vmatprep.subr.mxu0 %v628
        %946 = vmatpush1.msra.mxu0 %v627
        %947 = vmatprep.subr.mxu0 %v632
        %948 = vmatpush1.msra.mxu0 %v631
        %949 = vmatprep.subr.mxu0 %v636
        %950 = vmatpush1.msra.mxu0 %v635
        %951 = vmatprep.subr.mxu0 %v640
        %952 = vmatpush1.msra.mxu0 %v639
        %953 = vmatprep.subr.mxu0 %v644
        %954 = vmatpush1.msra.mxu0 %v643
        %955 = vmatprep.subr.mxu0 %v648
        %956 = vmatpush1.msra.mxu0 %v647
        %957 = vmatprep.subr.mxu0 %v652
        %958 = vmatpush1.msra.mxu0 %v651
        %959 = vmatprep.subr.mxu0 %v656
        %960 = vmatpush1.msra.mxu0 %v655
        %961 = vmatprep.subr.mxu0 %v660
        %962 = vmatpush1.msra.mxu0 %v659
        %963 = vmatprep.subr.mxu0 %v664
        %964 = vmatpush1.msra.mxu0 %v663
        %965 = vmatprep.subr.mxu0 %v668
        %966 = vmatpush1.msra.mxu0 %v667
        %967 = vmatprep.subr.mxu0 %v672
        %968 = vmatpush1.msra.mxu0 %v671
        %969 = vmatprep.subr.mxu0 %v676
        %970 = vmatpush1.msra.mxu0 %v675
        %971 = vmatprep.subr.mxu0 %v680
        %972 = vmatpush1.msra.mxu0 %v679
        %973 = vmatprep.subr.mxu0 %v684
        %974 = vmatpush1.msra.mxu0 %v683
        %975 = vmatprep.subr.mxu0 %v688
        %976 = vmatpush1.msra.mxu0 %v687
        %977 = vmatprep.mubr.f32.mxu0 %v753
        %978 = vmatmul.mubr.f32.gmra.mrb[0].mxu0 %v559
        %v979 = vpop.f32.mrb[0].mxu0
        %v980 = vadd.f32 %v749, %v979
        %v981 = vpop.f32.mrb[0].mxu0
        %v982 = vadd.f32 %v749, %v981
        %983 = vdwg.mxu0
        %984 = vmatprep.subr.mxu0 %v692
        %985 = vmatpush1.msra.mxu0 %v691
        %986 = vmatprep.subr.mxu0 %v696
        %987 = vmatpush1.msra.mxu0 %v695
        %988 = vmatprep.subr.mxu0 %v700
        %989 = vmatpush1.msra.mxu0 %v699
        %990 = vmatprep.subr.mxu0 %v704
        %991 = vmatpush1.msra.mxu0 %v703
        %992 = vmatprep.subr.mxu0 %v708
        %993 = vmatpush1.msra.mxu0 %v707
        %994 = vmatprep.subr.mxu0 %v712
        %995 = vmatpush1.msra.mxu0 %v711
        %996 = vmatprep.subr.mxu0 %v716
        %997 = vmatpush1.msra.mxu0 %v715
        %998 = vmatprep.subr.mxu0 %v720
        %999 = vmatpush1.msra.mxu0 %v719
        %1000 = vmatprep.subr.mxu0 %v724
        %1001 = vmatpush1.msra.mxu0 %v723
        %1002 = vmatprep.subr.mxu0 %v728
        %1003 = vmatpush1.msra.mxu0 %v727
        %1004 = vmatprep.subr.mxu0 %v732
        %1005 = vmatpush1.msra.mxu0 %v731
        %1006 = vmatprep.subr.mxu0 %v736
        %1007 = vmatpush1.msra.mxu0 %v735
        %1008 = vmatprep.subr.mxu0 %v740
        %1009 = vmatpush1.msra.mxu0 %v739
        %1010 = vmatprep.subr.mxu0 %v769
        %1011 = vmatpush1.msra.mxu0 %v766
        %1012 = vmatprep.subr.mxu0 0.0
        %1013 = vmatpush1.msra.mxu0 0.0
        %1014 = vmatprep.subr.mxu0 0.0
        %1015 = vmatpush1.msra.mxu0 0.0
        %1016 = vmatprep.subr.mxu0 0.0
        %1017 = vmatpush1.msra.mxu0 0.0
        %1018 = vmatprep.subr.mxu0 0.0
        %1019 = vmatpush1.msra.mxu0 0.0
        %1020 = vmatprep.subr.mxu0 0.0
        %1021 = vmatpush1.msra.mxu0 0.0
        %1022 = vmatprep.subr.mxu0 0.0
        %1023 = vmatpush1.msra.mxu0 0.0
        %1024 = vmatprep.subr.mxu0 0.0
        %1025 = vmatpush1.msra.mxu0 0.0
        %1026 = vmatprep.subr.mxu0 0.0
        %1027 = vmatpush1.msra.mxu0 0.0
        %1028 = vmatprep.subr.mxu0 0.0
        %1029 = vmatpush1.msra.mxu0 0.0
        %1030 = vmatprep.subr.mxu0 0.0
        %1031 = vmatpush1.msra.mxu0 0.0
        %1032 = vmatprep.subr.mxu0 0.0
        %1033 = vmatpush1.msra.mxu0 0.0
        %1034 = vmatprep.subr.mxu0 0.0
        %1035 = vmatpush1.msra.mxu0 0.0
        %1036 = vmatprep.subr.mxu0 0.0
        %1037 = vmatpush1.msra.mxu0 0.0
        %1038 = vmatprep.subr.mxu0 0.0
        %1039 = vmatpush1.msra.mxu0 0.0
        %1040 = vmatprep.subr.mxu0 0.0
        %1041 = vmatpush1.msra.mxu0 0.0
        %1042 = vmatprep.subr.mxu0 0.0
        %1043 = vmatpush1.msra.mxu0 0.0
        %1044 = vmatprep.subr.mxu0 0.0
        %1045 = vmatpush1.msra.mxu0 0.0
        %1046 = vmatprep.subr.mxu0 0.0
        %1047 = vmatpush1.msra.mxu0 0.0
        %1048 = vmatprep.mubr.f32.mxu0 0.0
        %1049 = vmatmul.mubr.f32.gmra.mrb[0].mxu0 %v756
        %v1050 = vpop.f32.mrb[0].mxu0
        %v1051 = vadd.f32 %v980, %v1050
        %v1052 = vpop.f32.mrb[0].mxu0
        %v1053 = vadd.f32 %v982, %v1052
        %1054 = vdwg.mxu0
        %v1055 = vmax.f32 %v909, 0.0
        %v1056 = vmax.f32 %v911, 0.0
        %v1057 = vmax.f32 %v1051, 0.0
        %v1058 = vmax.f32 %v1053, 0.0
        %v1063 = vcombine.low %v1055, %v1056
        %v1064 = vcombine.low %v1057, %v1058
        %1067 = vst [vmem:[%s557] sm:$0xff] %v1063
        %1068 = vst [vmem:[%s557 + $0x8] sm:$0xff] %v1064
        %s1069 = smul.u32 4, %s14
        %p1070 = scmp.lt.s32.totalorder %s1069, 35
        %s1071 = scalar_select %p1070, %s1069, 35
        %s1072 = smul.addr %s1071, 4
        %s1073 = scalar_lea.vmem %s3, %s1072
        // Predicated region
        $region56: #{forward.8} parent=50 // pred_check
          %p1074 = pneg %p100
        $region57: #{forward.8} parent=50 // pred_check_branch
          %1076 = sbr.rel (%p1074) target = $region59
        $region58: #{forward.8} parent=50 // pred_region
          %s1077 = smul.u32 4, %s14
        $region59: #{forward.8} parent=50 // pred_fallthru
          _
      $region51: #{forward.8} parent=5 // pred_fallthru
        _
      %p1078 = scmp.le.s32.totalorder 2, %s9
      // Predicated region
      $region60: #{forward.8} parent=5 // pred_check
        %p1079 = pneg %p1078
      $region61: #{forward.8} parent=5 // pred_check_branch
        %1081 = sbr.rel (%p1079) target = $region63
      $region62: #{forward.8} parent=5 // pred_region
        %s1082 = ssub.s32 %s9, 2
        // Predicated region
        $region64: #{forward.8} parent=62 // pred_check
          %p1083 = pneg %p106
        $region65: #{forward.8} parent=62 // pred_check_branch
          %1085 = sbr.rel (%p1083) target = $region67
        $region66: #{forward.8} parent=62 // pred_region
          %s1086 = smul.u32 4, %s15
          %p1087 = scmp.lt.s32.totalorder %s1086, 35
          %s1088 = scalar_select %p1087, %s1086, 35
          %s1089 = smul.addr %s1088, 4
          %s1090 = scalar_lea.vmem %s3, %s1089
        $region67: #{forward.8} parent=62 // pred_fallthru
          _
      $region63: #{forward.8} parent=5 // pred_fallthru
        _
    $region6: #{forward.8} parent=1 // loop_footer
      %s13 = sadd.s32 1, %s9
    $region7: #{forward.8} parent=1 // loop_footer_branch
      %8 = sbr.rel target = $region3
    $region8: #{forward.8} parent=1 // loop_exit
      _

// kernel: forward.9
$region0: #{forward.9}
  #allocation0 [shape = 'u32[]', space=smem, size = 0x4, offset = 0x4, fixed_abs, tag = 'smem constant byte address 0x4 - core index']
  #allocation1 [shape = 'u32[144,128]{1,0:T(1,128)}', space=vmem, size = 0x12000, scoped, tag = 'internal scratch']
  %s0 = inlined_call_operand.vmem [shape: f32[6,100], index: 0, kind: input, shape index: {}]
  %s1 = inlined_call_operand.vmem [shape: f32[6,1], index: 1, kind: input, shape index: {}]
  %s2 = inlined_call_operand.vmem [shape: f32[100,1024], index: 2, kind: input, shape index: {}]
  %s3 = inlined_call_operand.vmem [shape: f32[6,1024], index: 3, kind: output, shape index: {}]
  %s4 = sld [smem:[#allocation0]]
  $region68: #{forward.9} parent=0
    _
  %s6 = ssub.s32 1, %s4
  %s7 = scalar_select 0, %s6, %s4
  $region1: #{forward.9} parent=0
    #allocation2 [shape = 'u8[425984]{0}', space=vmem, size = 0x68000, scoped, tag = 'input window, operand 2']
    loop: start=0, step=1, limit=4
    $region2: #{forward.9} parent=1 // loop_pre_header
      _
    $region3: #{forward.9} parent=1 // loop_header
      %s9 = sphi 0, %s13
      %p10 = scmp.ge.s32.totalorder %s9, 4
      %s17 = sphi 0, %s17
      %s19 = sphi 0, %s17
      %s20 = sphi 0, %s19
      %s34 = sphi 0, %s20
      %s38 = sphi 0, %s38
      %s40 = sphi 0, %s38
      %s41 = sphi 0, %s40
      %s55 = sphi 0, %s41
      %s61 = sphi 0, %s63
      %s64 = sphi 0, %s61
      %s65 = sphi 0, %s64
      %s81 = sphi 0, %s65
      %s87 = sphi 0, %s89
      %s90 = sphi 0, %s87
      %s91 = sphi 0, %s90
      %s107 = sphi 0, %s91
    $region4: #{forward.9} parent=1 // loop_header_branch
      %12 = sbr.rel (%p10) target = $region8
    $region5: #{forward.9} parent=1 // loop_body
      %s14 = ssub.s32 %s9, 1
      %s15 = ssub.s32 %s9, 2
      %s16 = sadd.s32 %s9, 1
      %s18 = sadd.s32 %s17, 1
      %p21 = scmp.eq.s32.totalorder %s9, 1
      %p22 = scmp.ne.s32.totalorder %s17, %s19
      %p23 = scmp.eq.s32.totalorder %s9, 0
      %p24 = por %p22, %p23
      %p25 = scmp.ne.s32.totalorder %s17, %s19
      %p26 = scmp.eq.s32.totalorder %s14, 1
      %p27 = por %p25, %p26
      %p28 = scmp.ne.s32.totalorder %s19, %s20
      %p29 = scmp.eq.s32.totalorder %s14, 0
      %p30 = por %p28, %p29
      %p31 = scmp.ne.s32.totalorder %s19, %s20
      %p32 = scmp.eq.s32.totalorder %s15, 1
      %p33 = por %p31, %p32
      %p35 = scmp.ne.s32.totalorder %s20, %s34
      %p36 = scmp.eq.s32.totalorder %s15, 0
      %p37 = por %p35, %p36
      %s39 = sadd.s32 %s38, 1
      %p42 = scmp.eq.s32.totalorder %s9, 1
      %p43 = scmp.ne.s32.totalorder %s38, %s40
      %p44 = scmp.eq.s32.totalorder %s9, 0
      %p45 = por %p43, %p44
      %p46 = scmp.ne.s32.totalorder %s38, %s40
      %p47 = scmp.eq.s32.totalorder %s14, 1
      %p48 = por %p46, %p47
      %p49 = scmp.ne.s32.totalorder %s40, %s41
      %p50 = scmp.eq.s32.totalorder %s14, 0
      %p51 = por %p49, %p50
      %p52 = scmp.ne.s32.totalorder %s40, %s41
      %p53 = scmp.eq.s32.totalorder %s15, 1
      %p54 = por %p52, %p53
      %p56 = scmp.ne.s32.totalorder %s41, %s55
      %p57 = scmp.eq.s32.totalorder %s15, 0
      %p58 = por %p56, %p57
      %s59 = ssub.s32 %s9, %s16
      %p60 = scmp.eq.s32.totalorder %s59, 0
      %s62 = sadd.s32 %s61, 1
      %s63 = scalar_select %p60, %s61, %s62
      %p66 = pneg %p60
      %p67 = scmp.eq.s32.totalorder %s9, 1
      %p68 = por %p66, %p67
      %p69 = scmp.ne.s32.totalorder %s61, %s64
      %p70 = scmp.eq.s32.totalorder %s9, 0
      %p71 = por %p69, %p70
      %p72 = scmp.ne.s32.totalorder %s61, %s64
      %p73 = scmp.eq.s32.totalorder %s14, 1
      %p74 = por %p72, %p73
      %p75 = scmp.ne.s32.totalorder %s64, %s65
      %p76 = scmp.eq.s32.totalorder %s14, 0
      %p77 = por %p75, %p76
      %p78 = scmp.ne.s32.totalorder %s64, %s65
      %p79 = scmp.eq.s32.totalorder %s15, 1
      %p80 = por %p78, %p79
      %p82 = scmp.ne.s32.totalorder %s65, %s81
      %p83 = scmp.eq.s32.totalorder %s15, 0
      %p84 = por %p82, %p83
      %s85 = ssub.s32 %s9, %s16
      %p86 = scmp.eq.s32.totalorder %s85, 0
      %s88 = sadd.s32 %s87, 1
      %s89 = scalar_select %p86, %s87, %s88
      %p92 = pneg %p86
      %p93 = scmp.eq.s32.totalorder %s9, 1
      %p94 = por %p92, %p93
      %p95 = scmp.ne.s32.totalorder %s87, %s90
      %p96 = scmp.eq.s32.totalorder %s9, 0
      %p97 = por %p95, %p96
      %p98 = scmp.ne.s32.totalorder %s87, %s90
      %p99 = scmp.eq.s32.totalorder %s14, 1
      %p100 = por %p98, %p99
      %p101 = scmp.ne.s32.totalorder %s90, %s91
      %p102 = scmp.eq.s32.totalorder %s14, 0
      %p103 = por %p101, %p102
      %p104 = scmp.ne.s32.totalorder %s90, %s91
      %p105 = scmp.eq.s32.totalorder %s15, 1
      %p106 = por %p104, %p105
      %p108 = scmp.ne.s32.totalorder %s91, %s107
      %p109 = scmp.eq.s32.totalorder %s15, 0
      %p110 = por %p108, %p109
      %p111 = scmp.le.s32.totalorder 1, %s9
      %p112 = scmp.lt.s32.totalorder %s9, 3
      %p113 = pnand %p111, %p112
      %p114 = pneg %p113
      // Predicated region
      $region9: #{forward.9} parent=5 // pred_check
        _
      $region10: #{forward.9} parent=5 // pred_check_branch
        %116 = sbr.rel (%p113) target = $region12
      $region11: #{forward.9} parent=5 // pred_region
        %s117 = ssub.s32 %s9, 1
        // Predicated region
        $region13: #{forward.9} parent=11 // pred_check
          %p118 = pneg %p30
        $region14: #{forward.9} parent=11 // pred_check_branch
          %120 = sbr.rel (%p118) target = $region16
        $region15: #{forward.9} parent=11 // pred_region
          _
        $region16: #{forward.9} parent=11 // pred_fallthru
          _
        // Predicated region
        $region17: #{forward.9} parent=11 // pred_check
          %p121 = pneg %p51
        $region18: #{forward.9} parent=11 // pred_check_branch
          %123 = sbr.rel (%p121) target = $region20
        $region19: #{forward.9} parent=11 // pred_region
          _
        $region20: #{forward.9} parent=11 // pred_fallthru
          _
      $region12: #{forward.9} parent=5 // pred_fallthru
        _
      %p124 = scmp.lt.s32.totalorder %s9, 2
      // Predicated region
      $region21: #{forward.9} parent=5 // pred_check
        %p125 = pneg %p124
      $region22: #{forward.9} parent=5 // pred_check_branch
        %127 = sbr.rel (%p125) target = $region24
      $region23: #{forward.9} parent=5 // pred_region
        // Predicated region
        $region25: #{forward.9} parent=23 // pred_check
          %p128 = pneg %p71
        $region26: #{forward.9} parent=23 // pred_check_branch
          %130 = sbr.rel (%p128) target = $region28
        $region27: #{forward.9} parent=23 // pred_region
          %s131 = sand.u32 %s61, 1
          %s132 = sand.u32 %s61, 1
          %s133 = smul.addr %s132, 416
          %s134 = scalar_lea.vmem [#allocation2], %s133
          %s135 = smul.u32 4, %s9
          %s136 = smul.addr %s135, 8
          %s137 = scalar_lea.vmem %s2, %s136
          // Predicated region
          $region29: #{forward.9} parent=27 // pred_check
            _
          $region30: #{forward.9} parent=27 // pred_check_branch
            %139 = sbr.rel (0) target = $region32
          $region31: #{forward.9} parent=27 // pred_region
            // Predicated region
            $region33: #{forward.9} parent=31 // pred_check
              _
            $region34: #{forward.9} parent=31 // pred_check_branch
              %141 = sbr.rel (0) target = $region36
            $region35: #{forward.9} parent=31 // pred_region
              loop: start=0, step=1, limit=1
              $region37: #{forward.9} parent=35 // loop_pre_header
                _
              $region38: #{forward.9} parent=35 // loop_header
                %s143 = sphi 0, %s147
                %p144 = scmp.ge.s32.totalorder %s143, 1
                %s148 = sphi %s137, %s137
                %s149 = sphi %s134, %s134
              $region39: #{forward.9} parent=35 // loop_header_branch
                %146 = sbr.rel (%p144) target = $region43
              $region40: #{forward.9} parent=35 // loop_body
                %v150 = vld [vmem:[%s148] sm:$0xff]
                %151 = vst [vmem:[%s149] sm:$0xff] %v150
                %v152 = vld [vmem:[%s148 + $0x8] sm:$0xff]
                %153 = vst [vmem:[%s149 + $0x8] sm:$0xff] %v152
                %v154 = vld [vmem:[%s148 + $0x10] sm:$0xff]
                %155 = vst [vmem:[%s149 + $0x10] sm:$0xff] %v154
                %v156 = vld [vmem:[%s148 + $0x18] sm:$0xff]
                %157 = vst [vmem:[%s149 + $0x18] sm:$0xff] %v156
                %v158 = vld [vmem:[%s148 + $0x40] sm:$0xff]
                %159 = vst [vmem:[%s149 + $0x20] sm:$0xff] %v158
                %v160 = vld [vmem:[%s148 + $0x48] sm:$0xff]
                %161 = vst [vmem:[%s149 + $0x28] sm:$0xff] %v160
                %v162 = vld [vmem:[%s148 + $0x50] sm:$0xff]
                %163 = vst [vmem:[%s149 + $0x30] sm:$0xff] %v162
                %v164 = vld [vmem:[%s148 + $0x58] sm:$0xff]
                %165 = vst [vmem:[%s149 + $0x38] sm:$0xff] %v164
                %v166 = vld [vmem:[%s148 + $0x80] sm:$0xff]
                %167 = vst [vmem:[%s149 + $0x40] sm:$0xff] %v166
                %v168 = vld [vmem:[%s148 + $0x88] sm:$0xff]
                %169 = vst [vmem:[%s149 + $0x48] sm:$0xff] %v168
                %v170 = vld [vmem:[%s148 + $0x90] sm:$0xff]
                %171 = vst [vmem:[%s149 + $0x50] sm:$0xff] %v170
                %v172 = vld [vmem:[%s148 + $0x98] sm:$0xff]
                %173 = vst [vmem:[%s149 + $0x58] sm:$0xff] %v172
                %v174 = vld [vmem:[%s148 + $0xc0] sm:$0xff]
                %175 = vst [vmem:[%s149 + $0x60] sm:$0xff] %v174
                %v176 = vld [vmem:[%s148 + $0xc8] sm:$0xff]
                %177 = vst [vmem:[%s149 + $0x68] sm:$0xff] %v176
                %v178 = vld [vmem:[%s148 + $0xd0] sm:$0xff]
                %179 = vst [vmem:[%s149 + $0x70] sm:$0xff] %v178
                %v180 = vld [vmem:[%s148 + $0xd8] sm:$0xff]
                %181 = vst [vmem:[%s149 + $0x78] sm:$0xff] %v180
                %v182 = vld [vmem:[%s148 + $0x100] sm:$0xff]
                %183 = vst [vmem:[%s149 + $0x80] sm:$0xff] %v182
                %v184 = vld [vmem:[%s148 + $0x108] sm:$0xff]
                %185 = vst [vmem:[%s149 + $0x88] sm:$0xff] %v184
                %v186 = vld [vmem:[%s148 + $0x110] sm:$0xff]
                %187 = vst [vmem:[%s149 + $0x90] sm:$0xff] %v186
                %v188 = vld [vmem:[%s148 + $0x118] sm:$0xff]
                %189 = vst [vmem:[%s149 + $0x98] sm:$0xff] %v188
                %v190 = vld [vmem:[%s148 + $0x140] sm:$0xff]
                %191 = vst [vmem:[%s149 + $0xa0] sm:$0xff] %v190
                %v192 = vld [vmem:[%s148 + $0x148] sm:$0xff]
                %193 = vst [vmem:[%s149 + $0xa8] sm:$0xff] %v192
                %v194 = vld [vmem:[%s148 + $0x150] sm:$0xff]
                %195 = vst [vmem:[%s149 + $0xb0] sm:$0xff] %v194
                %v196 = vld [vmem:[%s148 + $0x158] sm:$0xff]
                %197 = vst [vmem:[%s149 + $0xb8] sm:$0xff] %v196
                %v198 = vld [vmem:[%s148 + $0x180] sm:$0xff]
                %199 = vst [vmem:[%s149 + $0xc0] sm:$0xff] %v198
                %v200 = vld [vmem:[%s148 + $0x188] sm:$0xff]
                %201 = vst [vmem:[%s149 + $0xc8] sm:$0xff] %v200
                %v202 = vld [vmem:[%s148 + $0x190] sm:$0xff]
                %203 = vst [vmem:[%s149 + $0xd0] sm:$0xff] %v202
                %v204 = vld [vmem:[%s148 + $0x198] sm:$0xff]
                %205 = vst [vmem:[%s149 + $0xd8] sm:$0xff] %v204
                %v206 = vld [vmem:[%s148 + $0x1c0] sm:$0xff]
                %207 = vst [vmem:[%s149 + $0xe0] sm:$0xff] %v206
                %v208 = vld [vmem:[%s148 + $0x1c8] sm:$0xff]
                %209 = vst [vmem:[%s149 + $0xe8] sm:$0xff] %v208
                %v210 = vld [vmem:[%s148 + $0x1d0] sm:$0xff]
                %211 = vst [vmem:[%s149 + $0xf0] sm:$0xff] %v210
                %v212 = vld [vmem:[%s148 + $0x1d8] sm:$0xff]
                %213 = vst [vmem:[%s149 + $0xf8] sm:$0xff] %v212
                %v214 = vld [vmem:[%s148 + $0x200] sm:$0xff]
                %215 = vst [vmem:[%s149 + $0x100] sm:$0xff] %v214
                %v216 = vld [vmem:[%s148 + $0x208] sm:$0xff]
                %217 = vst [vmem:[%s149 + $0x108] sm:$0xff] %v216
                %v218 = vld [vmem:[%s148 + $0x210] sm:$0xff]
                %219 = vst [vmem:[%s149 + $0x110] sm:$0xff] %v218
                %v220 = vld [vmem:[%s148 + $0x218] sm:$0xff]
                %221 = vst [vmem:[%s149 + $0x118] sm:$0xff] %v220
                %v222 = vld [vmem:[%s148 + $0x240] sm:$0xff]
                %223 = vst [vmem:[%s149 + $0x120] sm:$0xff] %v222
                %v224 = vld [vmem:[%s148 + $0x248] sm:$0xff]
                %225 = vst [vmem:[%s149 + $0x128] sm:$0xff] %v224
                %v226 = vld [vmem:[%s148 + $0x250] sm:$0xff]
                %227 = vst [vmem:[%s149 + $0x130] sm:$0xff] %v226
                %v228 = vld [vmem:[%s148 + $0x258] sm:$0xff]
                %229 = vst [vmem:[%s149 + $0x138] sm:$0xff] %v228
                %v230 = vld [vmem:[%s148 + $0x280] sm:$0xff]
                %231 = vst [vmem:[%s149 + $0x140] sm:$0xff] %v230
                %v232 = vld [vmem:[%s148 + $0x288] sm:$0xff]
                %233 = vst [vmem:[%s149 + $0x148] sm:$0xff] %v232
                %v234 = vld [vmem:[%s148 + $0x290] sm:$0xff]
                %235 = vst [vmem:[%s149 + $0x150] sm:$0xff] %v234
                %v236 = vld [vmem:[%s148 + $0x298] sm:$0xff]
                %237 = vst [vmem:[%s149 + $0x158] sm:$0xff] %v236
                %v238 = vld [vmem:[%s148 + $0x2c0] sm:$0xff]
                %239 = vst [vmem:[%s149 + $0x160] sm:$0xff] %v238
                %v240 = vld [vmem:[%s148 + $0x2c8] sm:$0xff]
                %241 = vst [vmem:[%s149 + $0x168] sm:$0xff] %v240
                %v242 = vld [vmem:[%s148 + $0x2d0] sm:$0xff]
                %243 = vst [vmem:[%s149 + $0x170] sm:$0xff] %v242
                %v244 = vld [vmem:[%s148 + $0x2d8] sm:$0xff]
                %245 = vst [vmem:[%s149 + $0x178] sm:$0xff] %v244
                %v246 = vld [vmem:[%s148 + $0x300] sm:$0xff]
                %247 = vst [vmem:[%s149 + $0x180] sm:$0xff] %v246
                %v248 = vld [vmem:[%s148 + $0x308] sm:$0xff]
                %249 = vst [vmem:[%s149 + $0x188] sm:$0xff] %v248
                %v250 = vld [vmem:[%s148 + $0x310] sm:$0xff]
                %251 = vst [vmem:[%s149 + $0x190] sm:$0xff] %v250
                %v252 = vld [vmem:[%s148 + $0x318] sm:$0xff]
                %253 = vst [vmem:[%s149 + $0x198] sm:$0xff] %v252
              $region41: #{forward.9} parent=35 // loop_footer
                %s147 = sadd.s32 1, %s143
              $region42: #{forward.9} parent=35 // loop_footer_branch
                %142 = sbr.rel target = $region38
              $region43: #{forward.9} parent=35 // loop_exit
                _
            $region36: #{forward.9} parent=31 // pred_fallthru
              _
            // Predicated region
            $region44: #{forward.9} parent=31 // pred_check
              _
            $region45: #{forward.9} parent=31 // pred_check_branch
              %255 = sbr.rel target = $region47
            $region46: #{forward.9} parent=31 // pred_region
              _
            $region47: #{forward.9} parent=31 // pred_fallthru
              _
          $region32: #{forward.9} parent=27 // pred_fallthru
            _
          %256 = vnop
        $region28: #{forward.9} parent=23 // pred_fallthru
          _
      $region24: #{forward.9} parent=5 // pred_fallthru
        _
      %p257 = scmp.le.s32.totalorder 1, %s9
      %p258 = scmp.lt.s32.totalorder %s9, 3
      %p259 = pnand %p257, %p258
      %p260 = pneg %p259
      // Predicated region
      $region48: #{forward.9} parent=5 // pred_check
        _
      $region49: #{forward.9} parent=5 // pred_check_branch
        %262 = sbr.rel (%p259) target = $region51
      $region50: #{forward.9} parent=5 // pred_region
        %s263 = ssub.s32 %s9, 1
        %s264 = sand.u32 %s64, 1
        %s265 = sand.u32 %s64, 1
        %s266 = smul.addr %s265, 416
        %s267 = scalar_lea.vmem [#allocation2], %s266
        // Predicated region
        $region52: #{forward.9} parent=50 // pred_check
          %p268 = pneg %p77
        $region53: #{forward.9} parent=50 // pred_check_branch
          %270 = sbr.rel (%p268) target = $region55
        $region54: #{forward.9} parent=50 // pred_region
          _
        $region55: #{forward.9} parent=50 // pred_fallthru
          _
        %p271 = pneg %p30
        %p272 = pneg %p27
        %p273 = pneg %p51
        %p274 = pneg %p48
        %s275 = sand.u32 %s64, 1
        %s276 = sand.u32 %s64, 1
        %s277 = smul.addr %s276, 416
        %s278 = scalar_lea.vmem [#allocation2], %s277
        %p279 = pneg %p77
        %p280 = pneg %p74
        %p281 = pneg %p103
        %p282 = pneg %p100
        %s283 = smul.u32 4, %s14
        %p284 = scmp.lt.s32.totalorder %s283, 7
        %s285 = scalar_select %p284, %s283, 7
        %s286 = smul.addr %s285, 8
        %s287 = scalar_lea.vmem %s3, %s286
        %s288 = smul.u32 4, %s14
        %s289 = smul.u32 4, %s14
        %p290 = scmp.lt.s32.totalorder %s289, 7
        %s291 = scalar_select %p290, %s289, 7
        %s292 = smul.addr %s291, 8
        %s293 = scalar_lea.vmem %s3, %s292
        %s294 = smul.u32 4, %s14
        %v295 = vld [vmem:[%s0] sm:$0x3f]
        %v296 = vld [vmem:[%s267] sm:$0xff]
        %v297 = vld [vmem:[%s267 + $0x8] sm:$0xff]
        %v298 = vld [vmem:[%s267 + $0x10] sm:$0xff]
        %v299 = vld [vmem:[%s267 + $0x18] sm:$0xff]
        %v300 = vld [vmem:[%s267 + $0x20] sm:$0xff]
        %v301 = vld [vmem:[%s267 + $0x28] sm:$0xff]
        %v302 = vld [vmem:[%s267 + $0x30] sm:$0xff]
        %v303 = vld [vmem:[%s267 + $0x38] sm:$0xff]
        %v304 = vld [vmem:[%s267 + $0x40] sm:$0xff]
        %v305 = vld [vmem:[%s267 + $0x48] sm:$0xff]
        %v306 = vld [vmem:[%s267 + $0x50] sm:$0xff]
        %v307 = vld [vmem:[%s267 + $0x58] sm:$0xff]
        %v308 = vld [vmem:[%s267 + $0x60] sm:$0xff]
        %v309 = vld [vmem:[%s267 + $0x68] sm:$0xff]
        %v310 = vld [vmem:[%s267 + $0x70] sm:$0xff]
        %v311 = vld [vmem:[%s267 + $0x78] sm:$0xff]
        %v312 = vld [vmem:[%s267 + $0x80] sm:$0xff]
        %v313 = vld [vmem:[%s267 + $0x88] sm:$0xff]
        %v314 = vld [vmem:[%s267 + $0x90] sm:$0xff]
        %v315 = vld [vmem:[%s267 + $0x98] sm:$0xff]
        %v316 = vld [vmem:[%s267 + $0xa0] sm:$0xff]
        %v317 = vld [vmem:[%s267 + $0xa8] sm:$0xff]
        %v318 = vld [vmem:[%s267 + $0xb0] sm:$0xff]
        %v319 = vld [vmem:[%s267 + $0xb8] sm:$0xff]
        %v320 = vld [vmem:[%s267 + $0xc0] sm:$0xff]
        %v321 = vld [vmem:[%s267 + $0xc8] sm:$0xff]
        %v322 = vld [vmem:[%s267 + $0xd0] sm:$0xff]
        %v323 = vld [vmem:[%s267 + $0xd8] sm:$0xff]
        %v324 = vld [vmem:[%s267 + $0xe0] sm:$0xff]
        %v325 = vld [vmem:[%s267 + $0xe8] sm:$0xff]
        %v326 = vld [vmem:[%s267 + $0xf0] sm:$0xff]
        %v327 = vld [vmem:[%s267 + $0xf8] sm:$0xff]
        %v328 = vld [vmem:[%s267 + $0x100] sm:$0xff]
        %v329 = vld [vmem:[%s267 + $0x108] sm:$0xff]
        %v330 = vld [vmem:[%s267 + $0x110] sm:$0xff]
        %v331 = vld [vmem:[%s267 + $0x118] sm:$0xff]
        %v332 = vld [vmem:[%s267 + $0x120] sm:$0xff]
        %v333 = vld [vmem:[%s267 + $0x128] sm:$0xff]
        %v334 = vld [vmem:[%s267 + $0x130] sm:$0xff]
        %v335 = vld [vmem:[%s267 + $0x138] sm:$0xff]
        %v336 = vld [vmem:[%s267 + $0x140] sm:$0xff]
        %v337 = vld [vmem:[%s267 + $0x148] sm:$0xff]
        %v338 = vld [vmem:[%s267 + $0x150] sm:$0xff]
        %v339 = vld [vmem:[%s267 + $0x158] sm:$0xff]
        %v340 = vld [vmem:[%s267 + $0x160] sm:$0xff]
        %v341 = vld [vmem:[%s267 + $0x168] sm:$0xff]
        %v342 = vld [vmem:[%s267 + $0x170] sm:$0xff]
        %v343 = vld [vmem:[%s267 + $0x178] sm:$0xff]
        %v344 = vld [vmem:[%s267 + $0x180] sm:$0xf]
        %v345 = vld [vmem:[%s267 + $0x188] sm:$0xf]
        %v346 = vld [vmem:[%s267 + $0x190] sm:$0xf]
        %v347 = vld [vmem:[%s267 + $0x198] sm:$0xf]
        %v348 = vld [vmem:[%s1] sm:$0x3f]
        %350 = vset.pattern.permute.xlu0 0
        %351 = vperm.xlu0 %350, %v348
        %v352 = vpop.permute.xlu0 %351
        %vm354 = vcmask 818176
        %v356 = vsel %vm354, %v295, 0
        %vm358 = vcmask 1043456
        %v360 = vsel %vm358, %v344, 0
        %v363 = vsel %vm358, %v345, 0
        %v366 = vsel %vm358, %v346, 0
        %v369 = vsel %vm358, %v347, 0
        %371 = vmatprep.subr.mxu0 %v297
        %372 = vmatpush1.msra.mxu0 %v296
        %373 = vmatprep.subr.mxu0 %v301
        %374 = vmatpush1.msra.mxu0 %v300
        %375 = vmatprep.subr.mxu0 %v305
        %376 = vmatpush1.msra.mxu0 %v304
        %377 = vmatprep.subr.mxu0 %v309
        %378 = vmatpush1.msra.mxu0 %v308
        %379 = vmatprep.subr.mxu0 %v313
        %380 = vmatpush1.msra.mxu0 %v312
        %381 = vmatprep.subr.mxu0 %v317
        %382 = vmatpush1.msra.mxu0 %v316
        %383 = vmatprep.subr.mxu0 %v321
        %384 = vmatpush1.msra.mxu0 %v320
        %385 = vmatprep.subr.mxu0 %v325
        %386 = vmatpush1.msra.mxu0 %v324
        %387 = vmatprep.subr.mxu0 %v329
        %388 = vmatpush1.msra.mxu0 %v328
        %389 = vmatprep.subr.mxu0 %v333
        %390 = vmatpush1.msra.mxu0 %v332
        %391 = vmatprep.subr.mxu0 %v337
        %392 = vmatpush1.msra.mxu0 %v336
        %393 = vmatprep.subr.mxu0 %v341
        %394 = vmatpush1.msra.mxu0 %v340
        %395 = vmatprep.subr.mxu0 %v363
        %396 = vmatpush1.msra.mxu0 %v360
        %397 = vmatprep.subr.mxu0 0.0
        %398 = vmatpush1.msra.mxu0 0.0
        %399 = vmatprep.subr.mxu0 0.0
        %400 = vmatpush1.msra.mxu0 0.0
        %401 = vmatprep.subr.mxu0 0.0
        %402 = vmatpush1.msra.mxu0 0.0
        %403 = vmatprep.subr.mxu0 0.0
        %404 = vmatpush1.msra.mxu0 0.0
        %405 = vmatprep.subr.mxu0 0.0
        %406 = vmatpush1.msra.mxu0 0.0
        %407 = vmatprep.subr.mxu0 0.0
        %408 = vmatpush1.msra.mxu0 0.0
        %409 = vmatprep.subr.mxu0 0.0
        %410 = vmatpush1.msra.mxu0 0.0
        %411 = vmatprep.subr.mxu0 0.0
        %412 = vmatpush1.msra.mxu0 0.0
        %413 = vmatprep.subr.mxu0 0.0
        %414 = vmatpush1.msra.mxu0 0.0
        %415 = vmatprep.subr.mxu0 0.0
        %416 = vmatpush1.msra.mxu0 0.0
        %417 = vmatprep.subr.mxu0 0.0
        %418 = vmatpush1.msra.mxu0 0.0
        %419 = vmatprep.subr.mxu0 0.0
        %420 = vmatpush1.msra.mxu0 0.0
        %421 = vmatprep.subr.mxu0 0.0
        %422 = vmatpush1.msra.mxu0 0.0
        %423 = vmatprep.subr.mxu0 0.0
        %424 = vmatpush1.msra.mxu0 0.0
        %425 = vmatprep.subr.mxu0 0.0
        %426 = vmatpush1.msra.mxu0 0.0
        %427 = vmatprep.subr.mxu0 0.0
        %428 = vmatpush1.msra.mxu0 0.0
        %429 = vmatprep.subr.mxu0 0.0
        %430 = vmatpush1.msra.mxu0 0.0
        %431 = vmatprep.subr.mxu0 0.0
        %432 = vmatpush1.msra.mxu0 0.0
        %433 = vmatprep.subr.mxu0 0.0
        %434 = vmatpush1.msra.mxu0 0.0
        %435 = vmatprep.mubr.f32.mxu0 0.0
        %436 = vmatmul.mubr.f32.gmra.mrb[0].mxu0 %v356
        %v437 = vpop.f32.mrb[0].mxu0
        %v438 = vadd.f32 %v352, %v437
        %v439 = vpop.f32.mrb[0].mxu0
        %v440 = vadd.f32 %v352, %v439
        %441 = vdwg.mxu0
        %442 = vmatprep.subr.mxu0 %v299
        %443 = vmatpush1.msra.mxu0 %v298
        %444 = vmatprep.subr.mxu0 %v303
        %445 = vmatpush1.msra.mxu0 %v302
        %446 = vmatprep.subr.mxu0 %v307
        %447 = vmatpush1.msra.mxu0 %v306
        %448 = vmatprep.subr.mxu0 %v311
        %449 = vmatpush1.msra.mxu0 %v310
        %450 = vmatprep.subr.mxu0 %v315
        %451 = vmatpush1.msra.mxu0 %v314
        %452 = vmatprep.subr.mxu0 %v319
        %453 = vmatpush1.msra.mxu0 %v318
        %454 = vmatprep.subr.mxu0 %v323
        %455 = vmatpush1.msra.mxu0 %v322
        %456 = vmatprep.subr.mxu0 %v327
        %457 = vmatpush1.msra.mxu0 %v326
        %458 = vmatprep.subr.mxu0 %v331
        %459 = vmatpush1.msra.mxu0 %v330
        %460 = vmatprep.subr.mxu0 %v335
        %461 = vmatpush1.msra.mxu0 %v334
        %462 = vmatprep.subr.mxu0 %v339
        %463 = vmatpush1.msra.mxu0 %v338
        %464 = vmatprep.subr.mxu0 %v343
        %465 = vmatpush1.msra.mxu0 %v342
        %466 = vmatprep.subr.mxu0 %v369
        %467 = vmatpush1.msra.mxu0 %v366
        %468 = vmatprep.subr.mxu0 0.0
        %469 = vmatpush1.msra.mxu0 0.0
        %470 = vmatprep.subr.mxu0 0.0
        %471 = vmatpush1.msra.mxu0 0.0
        %472 = vmatprep.subr.mxu0 0.0
        %473 = vmatpush1.msra.mxu0 0.0
        %474 = vmatprep.subr.mxu0 0.0
        %475 = vmatpush1.msra.mxu0 0.0
        %476 = vmatprep.subr.mxu0 0.0
        %477 = vmatpush1.msra.mxu0 0.0
        %478 = vmatprep.subr.mxu0 0.0
        %479 = vmatpush1.msra.mxu0 0.0
        %480 = vmatprep.subr.mxu0 0.0
        %481 = vmatpush1.msra.mxu0 0.0
        %482 = vmatprep.subr.mxu0 0.0
        %483 = vmatpush1.msra.mxu0 0.0
        %484 = vmatprep.subr.mxu0 0.0
        %485 = vmatpush1.msra.mxu0 0.0
        %486 = vmatprep.subr.mxu0 0.0
        %487 = vmatpush1.msra.mxu0 0.0
        %488 = vmatprep.subr.mxu0 0.0
        %489 = vmatpush1.msra.mxu0 0.0
        %490 = vmatprep.subr.mxu0 0.0
        %491 = vmatpush1.msra.mxu0 0.0
        %492 = vmatprep.subr.mxu0 0.0
        %493 = vmatpush1.msra.mxu0 0.0
        %494 = vmatprep.subr.mxu0 0.0
        %495 = vmatpush1.msra.mxu0 0.0
        %496 = vmatprep.subr.mxu0 0.0
        %497 = vmatpush1.msra.mxu0 0.0
        %498 = vmatprep.subr.mxu0 0.0
        %499 = vmatpush1.msra.mxu0 0.0
        %500 = vmatprep.subr.mxu0 0.0
        %501 = vmatpush1.msra.mxu0 0.0
        %502 = vmatprep.subr.mxu0 0.0
        %503 = vmatpush1.msra.mxu0 0.0
        %504 = vmatprep.subr.mxu0 0.0
        %505 = vmatpush1.msra.mxu0 0.0
        %506 = vmatprep.mubr.f32.mxu0 0.0
        %507 = vmatmul.mubr.f32.gmra.mrb[0].mxu0 %v356
        %v508 = vpop.f32.mrb[0].mxu0
        %v509 = vadd.f32 %v352, %v508
        %v510 = vpop.f32.mrb[0].mxu0
        %v511 = vadd.f32 %v352, %v510
        %512 = vdwg.mxu0
        %v513 = vmax.f32 %v438, 0.0
        %v514 = vmax.f32 %v440, 0.0
        %v515 = vmax.f32 %v509, 0.0
        %v516 = vmax.f32 %v511, 0.0
        %517 = vst [vmem:[%s293] sm:$0x3f] %v513
        %518 = vst [vmem:[%s293 + $0x8] sm:$0x3f] %v514
        %519 = vst [vmem:[%s293 + $0x10] sm:$0x3f] %v515
        %520 = vst [vmem:[%s293 + $0x18] sm:$0x3f] %v516
        %s521 = smul.u32 4, %s14
        %p522 = scmp.lt.s32.totalorder %s521, 7
        %s523 = scalar_select %p522, %s521, 7
        %s524 = smul.addr %s523, 8
        %s525 = scalar_lea.vmem %s3, %s524
        // Predicated region
        $region56: #{forward.9} parent=50 // pred_check
          %p526 = pneg %p100
        $region57: #{forward.9} parent=50 // pred_check_branch
          %528 = sbr.rel (%p526) target = $region59
        $region58: #{forward.9} parent=50 // pred_region
          %s529 = smul.u32 4, %s14
        $region59: #{forward.9} parent=50 // pred_fallthru
          _
      $region51: #{forward.9} parent=5 // pred_fallthru
        _
      %p530 = scmp.le.s32.totalorder 2, %s9
      // Predicated region
      $region60: #{forward.9} parent=5 // pred_check
        %p531 = pneg %p530
      $region61: #{forward.9} parent=5 // pred_check_branch
        %533 = sbr.rel (%p531) target = $region63
      $region62: #{forward.9} parent=5 // pred_region
        %s534 = ssub.s32 %s9, 2
        // Predicated region
        $region64: #{forward.9} parent=62 // pred_check
          %p535 = pneg %p106
        $region65: #{forward.9} parent=62 // pred_check_branch
          %537 = sbr.rel (%p535) target = $region67
        $region66: #{forward.9} parent=62 // pred_region
          %s538 = smul.u32 4, %s15
          %p539 = scmp.lt.s32.totalorder %s538, 7
          %s540 = scalar_select %p539, %s538, 7
          %s541 = smul.addr %s540, 8
          %s542 = scalar_lea.vmem %s3, %s541
        $region67: #{forward.9} parent=62 // pred_fallthru
          _
      $region63: #{forward.9} parent=5 // pred_fallthru
        _
    $region6: #{forward.9} parent=1 // loop_footer
      %s13 = sadd.s32 1, %s9
    $region7: #{forward.9} parent=1 // loop_footer_branch
      %8 = sbr.rel target = $region3
    $region8: #{forward.9} parent=1 // loop_exit
      _

// kernel: forward.10
$region0: #{forward.10}
  #allocation0 [shape = 'u32[]', space=smem, size = 0x4, offset = 0x4, fixed_abs, tag = 'smem constant byte address 0x4 - core index']
  #allocation1 [shape = 'u32[144,128]{1,0:T(1,128)}', space=vmem, size = 0x12000, scoped, tag = 'internal scratch']
  %s0 = inlined_call_operand.vmem [shape: f32[22,8,12], index: 0, kind: input, shape index: {}]
  %s1 = inlined_call_operand.vmem [shape: f32[22,8,12], index: 1, kind: input, shape index: {}]
  %s2 = inlined_call_operand.vmem [shape: f32[22,8,12], index: 2, kind: input, shape index: {}]
  %s3 = inlined_call_operand.vmem [shape: f32[10,8,12], index: 3, kind: output, shape index: {}]
  %s4 = sld [smem:[#allocation0]]
  $region22: #{forward.10} parent=0
    _
  %s6 = ssub.s32 1, %s4
  %s7 = scalar_select 0, %s6, %s4
  // Predicated region
  $region2: #{forward.10} parent=0 // pred_check
    _
  $region3: #{forward.10} parent=0 // pred_check_branch
    %9 = sbr.rel (0) target = $region5
  $region4: #{forward.10} parent=0 // pred_region
    _
  $region5: #{forward.10} parent=0 // pred_fallthru
    _
  // Predicated region
  $region6: #{forward.10} parent=0 // pred_check
    _
  $region7: #{forward.10} parent=0 // pred_check_branch
    %11 = sbr.rel (0) target = $region9
  $region8: #{forward.10} parent=0 // pred_region
    _
  $region9: #{forward.10} parent=0 // pred_fallthru
    _
  // Predicated region
  $region10: #{forward.10} parent=0 // pred_check
    _
  $region11: #{forward.10} parent=0 // pred_check_branch
    %13 = sbr.rel (0) target = $region13
  $region12: #{forward.10} parent=0 // pred_region
    _
  $region13: #{forward.10} parent=0 // pred_fallthru
    _
  %v14 = vld [vmem:[%s0] sm:$0xff]
  %v15 = vld [vmem:[%s0 + $0x8] sm:$0xff]
  %v16 = vld [vmem:[%s0 + $0x10] sm:$0xff]
  %v17 = vld [vmem:[%s0 + $0x18] sm:$0xff]
  %v18 = vld [vmem:[%s0 + $0x20] sm:$0xff]
  %v19 = vld [vmem:[%s0 + $0x28] sm:$0xff]
  %v20 = vld [vmem:[%s0 + $0x30] sm:$0xff]
  %v21 = vld [vmem:[%s0 + $0x38] sm:$0xff]
  %v22 = vld [vmem:[%s0 + $0x40] sm:$0xff]
  %v23 = vld [vmem:[%s0 + $0x48] sm:$0xff]
  %v24 = vld [vmem:[%s0 + $0x50] sm:$0xff]
  %v25 = vld [vmem:[%s0 + $0x58] sm:$0xff]
  %v26 = vld [vmem:[%s0 + $0x60] sm:$0xff]
  %v27 = vld [vmem:[%s0 + $0x68] sm:$0xff]
  %v28 = vld [vmem:[%s0 + $0x70] sm:$0xff]
  %v29 = vld [vmem:[%s0 + $0x78] sm:$0xff]
  %v30 = vld [vmem:[%s0 + $0x80] sm:$0xff]
  %v31 = vld [vmem:[%s0 + $0x88] sm:$0xff]
  %v32 = vld [vmem:[%s0 + $0x90] sm:$0xff]
  %v33 = vld [vmem:[%s0 + $0x98] sm:$0xff]
  %v34 = vld [vmem:[%s0 + $0xa0] sm:$0xff]
  %v35 = vld [vmem:[%s1] sm:$0xff]
  %v36 = vld [vmem:[%s1 + $0x8] sm:$0xff]
  %v37 = vld [vmem:[%s1 + $0x10] sm:$0xff]
  %v38 = vld [vmem:[%s1 + $0x18] sm:$0xff]
  %v39 = vld [vmem:[%s1 + $0x20] sm:$0xff]
  %v40 = vld [vmem:[%s1 + $0x28] sm:$0xff]
  %v41 = vld [vmem:[%s1 + $0x30] sm:$0xff]
  %v42 = vld [vmem:[%s1 + $0x38] sm:$0xff]
  %v43 = vld [vmem:[%s1 + $0x40] sm:$0xff]
  %v44 = vld [vmem:[%s1 + $0x48] sm:$0xff]
  %v45 = vld [vmem:[%s1 + $0x50] sm:$0xff]
  %v46 = vld [vmem:[%s1 + $0x58] sm:$0xff]
  %v47 = vld [vmem:[%s1 + $0x60] sm:$0xff]
  %v48 = vld [vmem:[%s1 + $0x68] sm:$0xff]
  %v49 = vld [vmem:[%s1 + $0x70] sm:$0xff]
  %v50 = vld [vmem:[%s1 + $0x78] sm:$0xff]
  %v51 = vld [vmem:[%s1 + $0x80] sm:$0xff]
  %v52 = vld [vmem:[%s1 + $0x88] sm:$0xff]
  %v53 = vld [vmem:[%s1 + $0x90] sm:$0xff]
  %v54 = vld [vmem:[%s1 + $0x98] sm:$0xff]
  %v55 = vld [vmem:[%s1 + $0xa0] sm:$0xff]
  %v56 = vmax.f32 %v14, %v35
  %v57 = vmax.f32 %v15, %v36
  %v58 = vmax.f32 %v16, %v37
  %v59 = vmax.f32 %v17, %v38
  %v60 = vmax.f32 %v18, %v39
  %v61 = vmax.f32 %v19, %v40
  %v62 = vmax.f32 %v20, %v41
  %v63 = vmax.f32 %v21, %v42
  %v64 = vmax.f32 %v22, %v43
  %v65 = vmax.f32 %v23, %v44
  %v66 = vmax.f32 %v24, %v45
  %v67 = vmax.f32 %v25, %v46
  %v68 = vmax.f32 %v26, %v47
  %v69 = vmax.f32 %v27, %v48
  %v70 = vmax.f32 %v28, %v49
  %v71 = vmax.f32 %v29, %v50
  %v72 = vmax.f32 %v30, %v51
  %v73 = vmax.f32 %v31, %v52
  %v74 = vmax.f32 %v32, %v53
  %v75 = vmax.f32 %v33, %v54
  %v76 = vmax.f32 %v34, %v55
  %v77 = vld [vmem:[%s2] sm:$0xff]
  %v78 = vld [vmem:[%s2 + $0x8] sm:$0xff]
  %v79 = vld [vmem:[%s2 + $0x10] sm:$0xff]
  %v80 = vld [vmem:[%s2 + $0x18] sm:$0xff]
  %v81 = vld [vmem:[%s2 + $0x20] sm:$0xff]
  %v82 = vld [vmem:[%s2 + $0x28] sm:$0xff]
  %v83 = vld [vmem:[%s2 + $0x30] sm:$0xff]
  %v84 = vld [vmem:[%s2 + $0x38] sm:$0xff]
  %v85 = vld [vmem:[%s2 + $0x40] sm:$0xff]
  %v86 = vld [vmem:[%s2 + $0x48] sm:$0xff]
  %v87 = vld [vmem:[%s2 + $0x50] sm:$0xff]
  %v88 = vld [vmem:[%s2 + $0x58] sm:$0xff]
  %v89 = vld [vmem:[%s2 + $0x60] sm:$0xff]
  %v90 = vld [vmem:[%s2 + $0x68] sm:$0xff]
  %v91 = vld [vmem:[%s2 + $0x70] sm:$0xff]
  %v92 = vld [vmem:[%s2 + $0x78] sm:$0xff]
  %v93 = vld [vmem:[%s2 + $0x80] sm:$0xff]
  %v94 = vld [vmem:[%s2 + $0x88] sm:$0xff]
  %v95 = vld [vmem:[%s2 + $0x90] sm:$0xff]
  %v96 = vld [vmem:[%s2 + $0x98] sm:$0xff]
  %v97 = vld [vmem:[%s2 + $0xa0] sm:$0xff]
  %v98 = vmax.f32 %v56, %v77
  %v99 = vmax.f32 %v57, %v78
  %v100 = vmax.f32 %v58, %v79
  %v101 = vmax.f32 %v59, %v80
  %v102 = vmax.f32 %v60, %v81
  %v103 = vmax.f32 %v61, %v82
  %v104 = vmax.f32 %v62, %v83
  %v105 = vmax.f32 %v63, %v84
  %v106 = vmax.f32 %v64, %v85
  %v107 = vmax.f32 %v65, %v86
  %v108 = vmax.f32 %v66, %v87
  %v109 = vmax.f32 %v67, %v88
  %v110 = vmax.f32 %v68, %v89
  %v111 = vmax.f32 %v69, %v90
  %v112 = vmax.f32 %v70, %v91
  %v113 = vmax.f32 %v71, %v92
  %v114 = vmax.f32 %v72, %v93
  %v115 = vmax.f32 %v73, %v94
  %v116 = vmax.f32 %v74, %v95
  %v117 = vmax.f32 %v75, %v96
  %v118 = vmax.f32 %v76, %v97
  %v119 = vmax.f32 %v98, %v99
  %v120 = vmax.f32 %v119, %v100
  %vm121 = vcmask 97280
  %122 = vst.msk [vmem:[%s3] sm:$0xff] %vm121, %v120
  %v123 = vmax.f32 %v100, %v101
  %v124 = vmax.f32 %v123, %v102
  %s125 = scalar_lea.vmem %s3, 8
  %126 = vst.msk [vmem:[%s125] sm:$0xff] %vm121, %v124
  %v127 = vmax.f32 %v102, %v103
  %v128 = vmax.f32 %v127, %v104
  %s129 = scalar_lea.vmem %s3, 16
  %130 = vst.msk [vmem:[%s129] sm:$0xff] %vm121, %v128
  %v131 = vmax.f32 %v104, %v105
  %v132 = vmax.f32 %v131, %v106
  %s133 = scalar_lea.vmem %s3, 24
  %134 = vst.msk [vmem:[%s133] sm:$0xff] %vm121, %v132
  %v135 = vmax.f32 %v106, %v107
  %v136 = vmax.f32 %v135, %v108
  %s137 = scalar_lea.vmem %s3, 32
  %138 = vst.msk [vmem:[%s137] sm:$0xff] %vm121, %v136
  %v139 = vmax.f32 %v108, %v109
  %v140 = vmax.f32 %v139, %v110
  %s141 = scalar_lea.vmem %s3, 40
  %142 = vst.msk [vmem:[%s141] sm:$0xff] %vm121, %v140
  %v143 = vmax.f32 %v110, %v111
  %v144 = vmax.f32 %v143, %v112
  %s145 = scalar_lea.vmem %s3, 48
  %146 = vst.msk [vmem:[%s145] sm:$0xff] %vm121, %v144
  %v147 = vmax.f32 %v112, %v113
  %v148 = vmax.f32 %v147, %v114
  %s149 = scalar_lea.vmem %s3, 56
  %150 = vst.msk [vmem:[%s149] sm:$0xff] %vm121, %v148
  %v151 = vmax.f32 %v114, %v115
  %v152 = vmax.f32 %v151, %v116
  %s153 = scalar_lea.vmem %s3, 64
  %154 = vst.msk [vmem:[%s153] sm:$0xff] %vm121, %v152
  %v155 = vmax.f32 %v116, %v117
  %v156 = vmax.f32 %v155, %v118
  %s157 = scalar_lea.vmem %s3, 72
  %158 = vst.msk [vmem:[%s157] sm:$0xff] %vm121, %v156
  // Predicated region
  $region14: #{forward.10} parent=0 // pred_check
    _
  $region15: #{forward.10} parent=0 // pred_check_branch
    %160 = sbr.rel (0) target = $region17
  $region16: #{forward.10} parent=0 // pred_region
    _
  $region17: #{forward.10} parent=0 // pred_fallthru
    _
  // Predicated region
  $region18: #{forward.10} parent=0 // pred_check
    _
  $region19: #{forward.10} parent=0 // pred_check_branch
    %162 = sbr.rel (0) target = $region21
  $region20: #{forward.10} parent=0 // pred_region
    _
  $region21: #{forward.10} parent=0 // pred_fallthru
    _

// kernel: forward.11
$region0: #{forward.11}
  #allocation0 [shape = 'u32[]', space=smem, size = 0x4, offset = 0x4, fixed_abs, tag = 'smem constant byte address 0x4 - core index']
  #allocation1 [shape = 'u32[144,128]{1,0:T(1,128)}', space=vmem, size = 0x12000, scoped, tag = 'internal scratch']
  %s0 = inlined_call_operand.vmem [shape: f32[8,210], index: 0, kind: input, shape index: {}]
  %s1 = inlined_call_operand.vmem [shape: f32[8,1], index: 1, kind: input, shape index: {}]
  %s2 = inlined_call_operand.vmem [shape: f32[210,128], index: 2, kind: input, shape index: {}]
  %s3 = inlined_call_operand.vmem [shape: f32[8,128], index: 3, kind: output, shape index: {}]
  %s4 = sld [smem:[#allocation0]]
  $region22: #{forward.11} parent=0
    _
  %s6 = ssub.s32 1, %s4
  %s7 = scalar_select 0, %s6, %s4
  // Predicated region
  $region2: #{forward.11} parent=0 // pred_check
    _
  $region3: #{forward.11} parent=0 // pred_check_branch
    %9 = sbr.rel (0) target = $region5
  $region4: #{forward.11} parent=0 // pred_region
    _
  $region5: #{forward.11} parent=0 // pred_fallthru
    _
  // Predicated region
  $region6: #{forward.11} parent=0 // pred_check
    _
  $region7: #{forward.11} parent=0 // pred_check_branch
    %11 = sbr.rel (0) target = $region9
  $region8: #{forward.11} parent=0 // pred_region
    _
  $region9: #{forward.11} parent=0 // pred_fallthru
    _
  // Predicated region
  $region10: #{forward.11} parent=0 // pred_check
    _
  $region11: #{forward.11} parent=0 // pred_check_branch
    %13 = sbr.rel (0) target = $region13
  $region12: #{forward.11} parent=0 // pred_region
    _
  $region13: #{forward.11} parent=0 // pred_fallthru
    _
  %v14 = vld [vmem:[%s0] sm:$0xff]
  %v15 = vld [vmem:[%s0 + $0x8] sm:$0xff]
  %v16 = vld [vmem:[%s2] sm:$0xff]
  %v17 = vld [vmem:[%s2 + $0x8] sm:$0xff]
  %v18 = vld [vmem:[%s2 + $0x10] sm:$0xff]
  %v19 = vld [vmem:[%s2 + $0x18] sm:$0xff]
  %v20 = vld [vmem:[%s2 + $0x20] sm:$0xff]
  %v21 = vld [vmem:[%s2 + $0x28] sm:$0xff]
  %v22 = vld [vmem:[%s2 + $0x30] sm:$0xff]
  %v23 = vld [vmem:[%s2 + $0x38] sm:$0xff]
  %v24 = vld [vmem:[%s2 + $0x40] sm:$0xff]
  %v25 = vld [vmem:[%s2 + $0x48] sm:$0xff]
  %v26 = vld [vmem:[%s2 + $0x50] sm:$0xff]
  %v27 = vld [vmem:[%s2 + $0x58] sm:$0xff]
  %v28 = vld [vmem:[%s2 + $0x60] sm:$0xff]
  %v29 = vld [vmem:[%s2 + $0x68] sm:$0xff]
  %v30 = vld [vmem:[%s2 + $0x70] sm:$0xff]
  %v31 = vld [vmem:[%s2 + $0x78] sm:$0xff]
  %v32 = vld [vmem:[%s2 + $0x80] sm:$0xff]
  %v33 = vld [vmem:[%s2 + $0x88] sm:$0xff]
  %v34 = vld [vmem:[%s2 + $0x90] sm:$0xff]
  %v35 = vld [vmem:[%s2 + $0x98] sm:$0xff]
  %v36 = vld [vmem:[%s2 + $0xa0] sm:$0xff]
  %v37 = vld [vmem:[%s2 + $0xa8] sm:$0xff]
  %v38 = vld [vmem:[%s2 + $0xb0] sm:$0xff]
  %v39 = vld [vmem:[%s2 + $0xb8] sm:$0xff]
  %v40 = vld [vmem:[%s2 + $0xc0] sm:$0xff]
  %v41 = vld [vmem:[%s2 + $0xc8] sm:$0xff]
  %v42 = vld [vmem:[%s2 + $0xd0] sm:$0x3]
  %v43 = vld [vmem:[%s1] sm:$0xff]
  %45 = vset.pattern.permute.xlu0 0
  %46 = vperm.xlu0 %45, %v43
  %v47 = vpop.permute.xlu0 %46
  %vm49 = vcmask 670720
  %v51 = vsel %vm49, %v15, 0
  %vm53 = vcmask 1041408
  %v55 = vsel %vm53, %v42, 0
  %57 = vmatprep.subr.mxu0 0.0
  %58 = vmatpush1.msra.mxu0 %v16
  %59 = vmatprep.subr.mxu0 0.0
  %60 = vmatpush1.msra.mxu0 %v17
  %61 = vmatprep.subr.mxu0 0.0
  %62 = vmatpush1.msra.mxu0 %v18
  %63 = vmatprep.subr.mxu0 0.0
  %64 = vmatpush1.msra.mxu0 %v19
  %65 = vmatprep.subr.mxu0 0.0
  %66 = vmatpush1.msra.mxu0 %v20
  %67 = vmatprep.subr.mxu0 0.0
  %68 = vmatpush1.msra.mxu0 %v21
  %69 = vmatprep.subr.mxu0 0.0
  %70 = vmatpush1.msra.mxu0 %v22
  %71 = vmatprep.subr.mxu0 0.0
  %72 = vmatpush1.msra.mxu0 %v23
  %73 = vmatprep.subr.mxu0 0.0
  %74 = vmatpush1.msra.mxu0 %v24
  %75 = vmatprep.subr.mxu0 0.0
  %76 = vmatpush1.msra.mxu0 %v25
  %77 = vmatprep.subr.mxu0 0.0
  %78 = vmatpush1.msra.mxu0 %v26
  %79 = vmatprep.subr.mxu0 0.0
  %80 = vmatpush1.msra.mxu0 %v27
  %81 = vmatprep.subr.mxu0 0.0
  %82 = vmatpush1.msra.mxu0 %v28
  %83 = vmatprep.subr.mxu0 0.0
  %84 = vmatpush1.msra.mxu0 %v29
  %85 = vmatprep.subr.mxu0 0.0
  %86 = vmatpush1.msra.mxu0 %v30
  %87 = vmatprep.subr.mxu0 0.0
  %88 = vmatpush1.msra.mxu0 %v31
  %89 = vmatprep.subr.mxu0 0.0
  %90 = vmatpush1.msra.mxu0 %v32
  %91 = vmatprep.subr.mxu0 0.0
  %92 = vmatpush1.msra.mxu0 %v33
  %93 = vmatprep.subr.mxu0 0.0
  %94 = vmatpush1.msra.mxu0 %v34
  %95 = vmatprep.subr.mxu0 0.0
  %96 = vmatpush1.msra.mxu0 %v35
  %97 = vmatprep.subr.mxu0 0.0
  %98 = vmatpush1.msra.mxu0 %v36
  %99 = vmatprep.subr.mxu0 0.0
  %100 = vmatpush1.msra.mxu0 %v37
  %101 = vmatprep.subr.mxu0 0.0
  %102 = vmatpush1.msra.mxu0 %v38
  %103 = vmatprep.subr.mxu0 0.0
  %104 = vmatpush1.msra.mxu0 %v39
  %105 = vmatprep.subr.mxu0 0.0
  %106 = vmatpush1.msra.mxu0 %v40
  %107 = vmatprep.subr.mxu0 0.0
  %108 = vmatpush1.msra.mxu0 %v41
  %109 = vmatprep.subr.mxu0 0.0
  %110 = vmatpush1.msra.mxu0 %v55
  %111 = vmatprep.subr.mxu0 0.0
  %112 = vmatpush1.msra.mxu0 0.0
  %113 = vmatprep.subr.mxu0 0.0
  %114 = vmatpush1.msra.mxu0 0.0
  %115 = vmatprep.subr.mxu0 0.0
  %116 = vmatpush1.msra.mxu0 0.0
  %117 = vmatprep.subr.mxu0 0.0
  %118 = vmatpush1.msra.mxu0 0.0
  %119 = vmatprep.subr.mxu0 0.0
  %120 = vmatpush1.msra.mxu0 0.0
  %121 = vmatprep.mubr.f32.mxu0 %v51
  %122 = vmatmul.mubr.f32.gmra.mrb[0].mxu0 %v14
  %v123 = vpop.f32.mrb[0].mxu0
  %v124 = vadd.f32 %v47, %v123
  %v125 = vpop.f32.mrb[0].mxu0
  %126 = vdwg.mxu0
  %v127 = vmax.f32 %v124, 0.0
  %128 = vst [vmem:[%s3] sm:$0xff] %v127
  // Predicated region
  $region14: #{forward.11} parent=0 // pred_check
    _
  $region15: #{forward.11} parent=0 // pred_check_branch
    %130 = sbr.rel (0) target = $region17
  $region16: #{forward.11} parent=0 // pred_region
    _
  $region17: #{forward.11} parent=0 // pred_fallthru
    _
  // Predicated region
  $region18: #{forward.11} parent=0 // pred_check
    _
  $region19: #{forward.11} parent=0 // pred_check_branch
    %132 = sbr.rel (0) target = $region21
  $region20: #{forward.11} parent=0 // pred_region
    _
  $region21: #{forward.11} parent=0 // pred_fallthru
    _

// kernel: forward.12
$region0: #{forward.12}
  #allocation0 [shape = 'u32[]', space=smem, size = 0x4, offset = 0x4, fixed_abs, tag = 'smem constant byte address 0x4 - core index']
  #allocation1 [shape = 'u32[144,128]{1,0:T(1,128)}', space=vmem, size = 0x12000, scoped, tag = 'internal scratch']
  %s0 = inlined_call_operand.vmem [shape: f32[10,72], index: 0, kind: input, shape index: {}]
  %s1 = inlined_call_operand.vmem [shape: f32[10,1], index: 1, kind: input, shape index: {}]
  %s2 = inlined_call_operand.vmem [shape: f32[72,128], index: 2, kind: input, shape index: {}]
  %s3 = inlined_call_operand.vmem [shape: f32[10,128], index: 3, kind: output, shape index: {}]
  %s4 = sld [smem:[#allocation0]]
  $region22: #{forward.12} parent=0
    _
  %s6 = ssub.s32 1, %s4
  %s7 = scalar_select 0, %s6, %s4
  // Predicated region
  $region2: #{forward.12} parent=0 // pred_check
    _
  $region3: #{forward.12} parent=0 // pred_check_branch
    %9 = sbr.rel (0) target = $region5
  $region4: #{forward.12} parent=0 // pred_region
    _
  $region5: #{forward.12} parent=0 // pred_fallthru
    _
  // Predicated region
  $region6: #{forward.12} parent=0 // pred_check
    _
  $region7: #{forward.12} parent=0 // pred_check_branch
    %11 = sbr.rel (0) target = $region9
  $region8: #{forward.12} parent=0 // pred_region
    _
  $region9: #{forward.12} parent=0 // pred_fallthru
    _
  // Predicated region
  $region10: #{forward.12} parent=0 // pred_check
    _
  $region11: #{forward.12} parent=0 // pred_check_branch
    %13 = sbr.rel (0) target = $region13
  $region12: #{forward.12} parent=0 // pred_region
    _
  $region13: #{forward.12} parent=0 // pred_fallthru
    _
  %v14 = vld [vmem:[%s0] sm:$0xff]
  %v15 = vld [vmem:[%s0 + $0x8] sm:$0x3]
  %v16 = vld [vmem:[%s2] sm:$0xff]
  %v17 = vld [vmem:[%s2 + $0x8] sm:$0xff]
  %v18 = vld [vmem:[%s2 + $0x10] sm:$0xff]
  %v19 = vld [vmem:[%s2 + $0x18] sm:$0xff]
  %v20 = vld [vmem:[%s2 + $0x20] sm:$0xff]
  %v21 = vld [vmem:[%s2 + $0x28] sm:$0xff]
  %v22 = vld [vmem:[%s2 + $0x30] sm:$0xff]
  %v23 = vld [vmem:[%s2 + $0x38] sm:$0xff]
  %v24 = vld [vmem:[%s2 + $0x40] sm:$0xff]
  %v25 = vld [vmem:[%s1] sm:$0xff]
  %v26 = vld [vmem:[%s1 + $0x8] sm:$0x3]
  %28 = vset.pattern.permute.xlu0 0
  %29 = vperm.xlu0 %28, %v25
  %v30 = vpop.permute.xlu0 %29
  %33 = vset.pattern.permute.xlu0 0
  %34 = vperm.xlu0 %33, %v26
  %v35 = vpop.permute.xlu0 %34
  %vm37 = vcmask 588800
  %v39 = vsel %vm37, %v14, 0
  %v42 = vsel %vm37, %v15, 0
  %44 = vmatprep.subr.mxu0 0.0
  %45 = vmatpush1.msra.mxu0 %v16
  %46 = vmatprep.subr.mxu0 0.0
  %47 = vmatpush1.msra.mxu0 %v17
  %48 = vmatprep.subr.mxu0 0.0
  %49 = vmatpush1.msra.mxu0 %v18
  %50 = vmatprep.subr.mxu0 0.0
  %51 = vmatpush1.msra.mxu0 %v19
  %52 = vmatprep.subr.mxu0 0.0
  %53 = vmatpush1.msra.mxu0 %v20
  %54 = vmatprep.subr.mxu0 0.0
  %55 = vmatpush1.msra.mxu0 %v21
  %56 = vmatprep.subr.mxu0 0.0
  %57 = vmatpush1.msra.mxu0 %v22
  %58 = vmatprep.subr.mxu0 0.0
  %59 = vmatpush1.msra.mxu0 %v23
  %60 = vmatprep.subr.mxu0 0.0
  %61 = vmatpush1.msra.mxu0 %v24
  %62 = vmatprep.subr.mxu0 0.0
  %63 = vmatpush1.msra.mxu0 0.0
  %64 = vmatprep.subr.mxu0 0.0
  %65 = vmatpush1.msra.mxu0 0.0
  %66 = vmatprep.subr.mxu0 0.0
  %67 = vmatpush1.msra.mxu0 0.0
  %68 = vmatprep.subr.mxu0 0.0
  %69 = vmatpush1.msra.mxu0 0.0
  %70 = vmatprep.subr.mxu0 0.0
  %71 = vmatpush1.msra.mxu0 0.0
  %72 = vmatprep.subr.mxu0 0.0
  %73 = vmatpush1.msra.mxu0 0.0
  %74 = vmatprep.subr.mxu0 0.0
  %75 = vmatpush1.msra.mxu0 0.0
  %76 = vmatprep.subr.mxu0 0.0
  %77 = vmatpush1.msra.mxu0 0.0
  %78 = vmatprep.subr.mxu0 0.0
  %79 = vmatpush1.msra.mxu0 0.0
  %80 = vmatprep.subr.mxu0 0.0
  %81 = vmatpush1.msra.mxu0 0.0
  %82 = vmatprep.subr.mxu0 0.0
  %83 = vmatpush1.msra.mxu0 0.0
  %84 = vmatprep.subr.mxu0 0.0
  %85 = vmatpush1.msra.mxu0 0.0
  %86 = vmatprep.subr.mxu0 0.0
  %87 = vmatpush1.msra.mxu0 0.0
  %88 = vmatprep.subr.mxu0 0.0
  %89 = vmatpush1.msra.mxu0 0.0
  %90 = vmatprep.subr.mxu0 0.0
  %91 = vmatpush1.msra.mxu0 0.0
  %92 = vmatprep.subr.mxu0 0.0
  %93 = vmatpush1.msra.mxu0 0.0
  %94 = vmatprep.subr.mxu0 0.0
  %95 = vmatpush1.msra.mxu0 0.0
  %96 = vmatprep.subr.mxu0 0.0
  %97 = vmatpush1.msra.mxu0 0.0
  %98 = vmatprep.subr.mxu0 0.0
  %99 = vmatpush1.msra.mxu0 0.0
  %100 = vmatprep.subr.mxu0 0.0
  %101 = vmatpush1.msra.mxu0 0.0
  %102 = vmatprep.subr.mxu0 0.0
  %103 = vmatpush1.msra.mxu0 0.0
  %104 = vmatprep.subr.mxu0 0.0
  %105 = vmatpush1.msra.mxu0 0.0
  %106 = vmatprep.subr.mxu0 0.0
  %107 = vmatpush1.msra.mxu0 0.0
  %108 = vmatprep.mubr.f32.mxu0 0.0
  %109 = vmatmul.mubr.f32.gmra.mrb[0].mxu0 %v39
  %v110 = vpop.f32.mrb[0].mxu0
  %v111 = vadd.f32 %v30, %v110
  %v112 = vpop.f32.mrb[0].mxu0
  %113 = vmatprep.mubr.f32.mxu0 0.0
  %114 = vmatmul.mubr.f32.gmra.mrb[0].mxu0 %v42
  %v115 = vpop.f32.mrb[0].mxu0
  %v116 = vadd.f32 %v35, %v115
  %v117 = vpop.f32.mrb[0].mxu0
  %118 = vdwg.mxu0
  %v119 = verf.f32.pop %v111
  %v120 = verf.f32.pop %v116
  %121 = vst [vmem:[%s3] sm:$0xff] %v119
  %122 = vst [vmem:[%s3 + $0x8] sm:$0x3] %v120
  // Predicated region
  $region14: #{forward.12} parent=0 // pred_check
    _
  $region15: #{forward.12} parent=0 // pred_check_branch
    %124 = sbr.rel (0) target = $region17
  $region16: #{forward.12} parent=0 // pred_region
    _
  $region17: #{forward.12} parent=0 // pred_fallthru
    _
  // Predicated region
  $region18: #{forward.12} parent=0 // pred_check
    _
  $region19: #{forward.12} parent=0 // pred_check_branch
    %126 = sbr.rel (0) target = $region21
  $region20: #{forward.12} parent=0 // pred_region
    _
  $region21: #{forward.12} parent=0 // pred_fallthru
    _

// kernel: forward.13
$region0: #{forward.13}
  #allocation0 [shape = 'u32[]', space=smem, size = 0x4, offset = 0x4, fixed_abs, tag = 'smem constant byte address 0x4 - core index']
  #allocation1 [shape = 'u32[144,128]{1,0:T(1,128)}', space=vmem, size = 0x12000, scoped, tag = 'internal scratch']
  %s0 = inlined_call_operand.vmem [shape: f32[12,90], index: 0, kind: input, shape index: {}]
  %s1 = inlined_call_operand.vmem [shape: f32[12,1], index: 1, kind: input, shape index: {}]
  %s2 = inlined_call_operand.vmem [shape: f32[90,256], index: 2, kind: input, shape index: {}]
  %s3 = inlined_call_operand.vmem [shape: f32[12,256], index: 3, kind: output, shape index: {}]
  %s4 = sld [smem:[#allocation0]]
  $region22: #{forward.13} parent=0
    _
  %s6 = ssub.s32 1, %s4
  %s7 = scalar_select 0, %s6, %s4
  // Predicated region
  $region2: #{forward.13} parent=0 // pred_check
    _
  $region3: #{forward.13} parent=0 // pred_check_branch
    %9 = sbr.rel (0) target = $region5
  $region4: #{forward.13} parent=0 // pred_region
    _
  $region5: #{forward.13} parent=0 // pred_fallthru
    _
  // Predicated region
  $region6: #{forward.13} parent=0 // pred_check
    _
  $region7: #{forward.13} parent=0 // pred_check_branch
    %11 = sbr.rel (0) target = $region9
  $region8: #{forward.13} parent=0 // pred_region
    _
  $region9: #{forward.13} parent=0 // pred_fallthru
    _
  // Predicated region
  $region10: #{forward.13} parent=0 // pred_check
    _
  $region11: #{forward.13} parent=0 // pred_check_branch
    %13 = sbr.rel (0) target = $region13
  $region12: #{forward.13} parent=0 // pred_region
    _
  $region13: #{forward.13} parent=0 // pred_fallthru
    _
  %v14 = vld [vmem:[%s0] sm:$0xff]
  %v15 = vld [vmem:[%s0 + $0x8] sm:$0xf]
  %v16 = vld [vmem:[%s2] sm:$0xff]
  %v17 = vld [vmem:[%s2 + $0x8] sm:$0xff]
  %v18 = vld [vmem:[%s2 + $0x10] sm:$0xff]
  %v19 = vld [vmem:[%s2 + $0x18] sm:$0xff]
  %v20 = vld [vmem:[%s2 + $0x20] sm:$0xff]
  %v21 = vld [vmem:[%s2 + $0x28] sm:$0xff]
  %v22 = vld [vmem:[%s2 + $0x30] sm:$0xff]
  %v23 = vld [vmem:[%s2 + $0x38] sm:$0xff]
  %v24 = vld [vmem:[%s2 + $0x40] sm:$0xff]
  %v25 = vld [vmem:[%s2 + $0x48] sm:$0xff]
  %v26 = vld [vmem:[%s2 + $0x50] sm:$0xff]
  %v27 = vld [vmem:[%s2 + $0x58] sm:$0xff]
  %v28 = vld [vmem:[%s2 + $0x60] sm:$0xff]
  %v29 = vld [vmem:[%s2 + $0x68] sm:$0xff]
  %v30 = vld [vmem:[%s2 + $0x70] sm:$0xff]
  %v31 = vld [vmem:[%s2 + $0x78] sm:$0xff]
  %v32 = vld [vmem:[%s2 + $0x80] sm:$0xff]
  %v33 = vld [vmem:[%s2 + $0x88] sm:$0xff]
  %v34 = vld [vmem:[%s2 + $0x90] sm:$0xff]
  %v35 = vld [vmem:[%s2 + $0x98] sm:$0xff]
  %v36 = vld [vmem:[%s2 + $0xa0] sm:$0xff]
  %v37 = vld [vmem:[%s2 + $0xa8] sm:$0xff]
  %v38 = vld [vmem:[%s2 + $0xb0] sm:$0x3]
  %v39 = vld [vmem:[%s2 + $0xb8] sm:$0x3]
  %v40 = vld [vmem:[%s1] sm:$0xff]
  %v41 = vld [vmem:[%s1 + $0x8] sm:$0xf]
  %43 = vset.pattern.permute.xlu0 0
  %44 = vperm.xlu0 %43, %v40
  %v45 = vpop.permute.xlu0 %44
  %48 = vset.pattern.permute.xlu0 0
  %49 = vperm.xlu0 %48, %v41
  %v50 = vpop.permute.xlu0 %49
  %vm52 = vcmask 736256
  %v54 = vsel %vm52, %v14, 0
  %v57 = vsel %vm52, %v15, 0
  %vm59 = vcmask 1041408
  %v61 = vsel %vm59, %v38, 0
  %v64 = vsel %vm59, %v39, 0
  %66 = vmatprep.subr.mxu0 %v17
  %67 = vmatpush1.msra.mxu0 %v16
  %68 = vmatprep.subr.mxu0 %v19
  %69 = vmatpush1.msra.mxu0 %v18
  %70 = vmatprep.subr.mxu0 %v21
  %71 = vmatpush1.msra.mxu0 %v20
  %72 = vmatprep.subr.mxu0 %v23
  %73 = vmatpush1.msra.mxu0 %v22
  %74 = vmatprep.subr.mxu0 %v25
  %75 = vmatpush1.msra.mxu0 %v24
  %76 = vmatprep.subr.mxu0 %v27
  %77 = vmatpush1.msra.mxu0 %v26
  %78 = vmatprep.subr.mxu0 %v29
  %79 = vmatpush1.msra.mxu0 %v28
  %80 = vmatprep.subr.mxu0 %v31
  %81 = vmatpush1.msra.mxu0 %v30
  %82 = vmatprep.subr.mxu0 %v33
  %83 = vmatpush1.msra.mxu0 %v32
  %84 = vmatprep.subr.mxu0 %v35
  %85 = vmatpush1.msra.mxu0 %v34
  %86 = vmatprep.subr.mxu0 %v37
  %87 = vmatpush1.msra.mxu0 %v36
  %88 = vmatprep.subr.mxu0 %v64
  %89 = vmatpush1.msra.mxu0 %v61
  %90 = vmatprep.subr.mxu0 0.0
  %91 = vmatpush1.msra.mxu0 0.0
  %92 = vmatprep.subr.mxu0 0.0
  %93 = vmatpush1.msra.mxu0 0.0
  %94 = vmatprep.subr.mxu0 0.0
  %95 = vmatpush1.msra.mxu0 0.0
  %96 = vmatprep.subr.mxu0 0.0
  %97 = vmatpush1.msra.mxu0 0.0
  %98 = vmatprep.subr.mxu0 0.0
  %99 = vmatpush1.msra.mxu0 0.0
  %100 = vmatprep.subr.mxu0 0.0
  %101 = vmatpush1.msra.mxu0 0.0
  %102 = vmatprep.subr.mxu0 0.0
  %103 = vmatpush1.msra.mxu0 0.0
  %104 = vmatprep.subr.mxu0 0.0
  %105 = vmatpush1.msra.mxu0 0.0
  %106 = vmatprep.subr.mxu0 0.0
  %107 = vmatpush1.msra.mxu0 0.0
  %108 = vmatprep.subr.mxu0 0.0
  %109 = vmatpush1.msra.mxu0 0.0
  %110 = vmatprep.subr.mxu0 0.0
  %111 = vmatpush1.msra.mxu0 0.0
  %112 = vmatprep.subr.mxu0 0.0
  %113 = vmatpush1.msra.mxu0 0.0
  %114 = vmatprep.subr.mxu0 0.0
  %115 = vmatpush1.msra.mxu0 0.0
  %116 = vmatprep.subr.mxu0 0.0
  %117 = vmatpush1.msra.mxu0 0.0
  %118 = vmatprep.subr.mxu0 0.0
  %119 = vmatpush1.msra.mxu0 0.0
  %120 = vmatprep.subr.mxu0 0.0
  %121 = vmatpush1.msra.mxu0 0.0
  %122 = vmatprep.subr.mxu0 0.0
  %123 = vmatpush1.msra.mxu0 0.0
  %124 = vmatprep.subr.mxu0 0.0
  %125 = vmatpush1.msra.mxu0 0.0
  %126 = vmatprep.subr.mxu0 0.0
  %127 = vmatpush1.msra.mxu0 0.0
  %128 = vmatprep.subr.mxu0 0.0
  %129 = vmatpush1.msra.mxu0 0.0
  %130 = vmatprep.mubr.f32.mxu0 0.0
  %131 = vmatmul.mubr.f32.gmra.mrb[0].mxu0 %v54
  %v132 = vpop.f32.mrb[0].mxu0
  %v133 = vadd.f32 %v45, %v132
  %v134 = vpop.f32.mrb[0].mxu0
  %v135 = vadd.f32 %v45, %v134
  %136 = vmatprep.mubr.f32.mxu0 0.0
  %137 = vmatmul.mubr.f32.gmra.mrb[0].mxu0 %v57
  %v138 = vpop.f32.mrb[0].mxu0
  %v139 = vadd.f32 %v50, %v138
  %v140 = vpop.f32.mrb[0].mxu0
  %v141 = vadd.f32 %v50, %v140
  %142 = vdwg.mxu0
  %vm143 = vcmp.gt.f32.partialorder %v133, 0.0
  %vm144 = vcmp.gt.f32.partialorder %v135, 0.0
  %vm145 = vcmp.gt.f32.partialorder %v139, 0.0
  %vm146 = vcmp.gt.f32.partialorder %v141, 0.0
  %v147 = vmin.f32 %v133, 0.0
  %v148 = vmin.f32 %v135, 0.0
  %v149 = vmin.f32 %v139, 0.0
  %v150 = vmin.f32 %v141, 0.0
  %v151 = vmul.f32 %v147, 1.442695
  %v152 = vpow.pop %v151
  %v153 = vmul.f32 %v148, 1.442695
  %v154 = vpow.pop %v153
  %v155 = vmul.f32 %v149, 1.442695
  %v156 = vpow.pop %v155
  %v157 = vmul.f32 %v150, 1.442695
  %v158 = vpow.pop %v157
  %v159 = vsub.f32 %v152, 1.0
  %v160 = vsub.f32 %v154, 1.0
  %v161 = vsub.f32 %v156, 1.0
  %v162 = vsub.f32 %v158, 1.0
  %v163 = vmul.f32 %v159, 0.1
  %v164 = vmul.f32 %v160, 0.1
  %v165 = vmul.f32 %v161, 0.1
  %v166 = vmul.f32 %v162, 0.1
  %v167 = vsel %vm143, %v133, %v163
  %v168 = vsel %vm144, %v135, %v164
  %v169 = vsel %vm145, %v139, %v165
  %v170 = vsel %vm146, %v141, %v166
  %171 = vst [vmem:[%s3] sm:$0xff] %v167
  %172 = vst [vmem:[%s3 + $0x8] sm:$0xff] %v168
  %173 = vst [vmem:[%s3 + $0x10] sm:$0xf] %v169
  %174 = vst [vmem:[%s3 + $0x18] sm:$0xf] %v170
  // Predicated region
  $region14: #{forward.13} parent=0 // pred_check
    _
  $region15: #{forward.13} parent=0 // pred_check_branch
    %176 = sbr.rel (0) target = $region17
  $region16: #{forward.13} parent=0 // pred_region
    _
  $region17: #{forward.13} parent=0 // pred_fallthru
    _
  // Predicated region
  $region18: #{forward.13} parent=0 // pred_check
    _
  $region19: #{forward.13} parent=0 // pred_check_branch
    %178 = sbr.rel (0) target = $region21
  $region20: #{forward.13} parent=0 // pred_region
    _
  $region21: #{forward.13} parent=0 // pred_fallthru
    _

// kernel: forward.14
$region0: #{forward.14}
  #allocation0 [shape = 'u32[]', space=smem, size = 0x4, offset = 0x4, fixed_abs, tag = 'smem constant byte address 0x4 - core index']
  #allocation1 [shape = 'u32[144,128]{1,0:T(1,128)}', space=vmem, size = 0x12000, scoped, tag = 'internal scratch']
  %s0 = inlined_call_operand.vmem [shape: f32[6,8,24], index: 0, kind: input, shape index: {}]
  %s1 = inlined_call_operand.vmem [shape: f32[6,8,24], index: 1, kind: input, shape index: {}]
  %s2 = inlined_call_operand.vmem [shape: f32[6,8,24], index: 2, kind: input, shape index: {}]
  %s3 = inlined_call_operand.vmem [shape: f32[2,8,24], index: 3, kind: output, shape index: {}]
  %s4 = sld [smem:[#allocation0]]
  $region22: #{forward.14} parent=0
    _
  %s6 = ssub.s32 1, %s4
  %s7 = scalar_select 0, %s6, %s4
  // Predicated region
  $region2: #{forward.14} parent=0 // pred_check
    _
  $region3: #{forward.14} parent=0 // pred_check_branch
    %9 = sbr.rel (0) target = $region5
  $region4: #{forward.14} parent=0 // pred_region
    _
  $region5: #{forward.14} parent=0 // pred_fallthru
    _
  // Predicated region
  $region6: #{forward.14} parent=0 // pred_check
    _
  $region7: #{forward.14} parent=0 // pred_check_branch
    %11 = sbr.rel (0) target = $region9
  $region8: #{forward.14} parent=0 // pred_region
    _
  $region9: #{forward.14} parent=0 // pred_fallthru
    _
  // Predicated region
  $region10: #{forward.14} parent=0 // pred_check
    _
  $region11: #{forward.14} parent=0 // pred_check_branch
    %13 = sbr.rel (0) target = $region13
  $region12: #{forward.14} parent=0 // pred_region
    _
  $region13: #{forward.14} parent=0 // pred_fallthru
    _
  %v14 = vld [vmem:[%s0] sm:$0xff]
  %v15 = vld [vmem:[%s0 + $0x8] sm:$0xff]
  %v16 = vld [vmem:[%s0 + $0x10] sm:$0xff]
  %v17 = vld [vmem:[%s0 + $0x18] sm:$0xff]
  %v18 = vld [vmem:[%s0 + $0x20] sm:$0xff]
  %v19 = vld [vmem:[%s1] sm:$0xff]
  %v20 = vld [vmem:[%s1 + $0x8] sm:$0xff]
  %v21 = vld [vmem:[%s1 + $0x10] sm:$0xff]
  %v22 = vld [vmem:[%s1 + $0x18] sm:$0xff]
  %v23 = vld [vmem:[%s1 + $0x20] sm:$0xff]
  %v24 = vmax.f32 %v14, %v19
  %v25 = vmax.f32 %v15, %v20
  %v26 = vmax.f32 %v16, %v21
  %v27 = vmax.f32 %v17, %v22
  %v28 = vmax.f32 %v18, %v23
  %v29 = vld [vmem:[%s2] sm:$0xff]
  %v30 = vld [vmem:[%s2 + $0x8] sm:$0xff]
  %v31 = vld [vmem:[%s2 + $0x10] sm:$0xff]
  %v32 = vld [vmem:[%s2 + $0x18] sm:$0xff]
  %v33 = vld [vmem:[%s2 + $0x20] sm:$0xff]
  %v34 = vmax.f32 %v24, %v29
  %v35 = vmax.f32 %v25, %v30
  %v36 = vmax.f32 %v26, %v31
  %v37 = vmax.f32 %v27, %v32
  %v38 = vmax.f32 %v28, %v33
  %v39 = vmax.f32 %v34, %v35
  %v40 = vmax.f32 %v39, %v36
  %vm41 = vcmask 195584
  %42 = vst.msk [vmem:[%s3] sm:$0xff] %vm41, %v40
  %v43 = vmax.f32 %v36, %v37
  %v44 = vmax.f32 %v43, %v38
  %s45 = scalar_lea.vmem %s3, 8
  %46 = vst.msk [vmem:[%s45] sm:$0xff] %vm41, %v44
  // Predicated region
  $region14: #{forward.14} parent=0 // pred_check
    _
  $region15: #{forward.14} parent=0 // pred_check_branch
    %48 = sbr.rel (0) target = $region17
  $region16: #{forward.14} parent=0 // pred_region
    _
  $region17: #{forward.14} parent=0 // pred_fallthru
    _
  // Predicated region
  $region18: #{forward.14} parent=0 // pred_check
    _
  $region19: #{forward.14} parent=0 // pred_check_branch
    %50 = sbr.rel (0) target = $region21
  $region20: #{forward.14} parent=0 // pred_region
    _
  $region21: #{forward.14} parent=0 // pred_fallthru
    _

// kernel: forward.15
$region0: #{forward.15}
  #allocation0 [shape = 'u32[]', space=smem, size = 0x4, offset = 0x4, fixed_abs, tag = 'smem constant byte address 0x4 - core index']
  #allocation1 [shape = 'u32[144,128]{1,0:T(1,128)}', space=vmem, size = 0x12000, scoped, tag = 'internal scratch']
  %s0 = inlined_call_operand.vmem [shape: f32[16,2,12], index: 0, kind: input, shape index: {}]
  %s1 = inlined_call_operand.vmem [shape: f32[12,864], index: 1, kind: input, shape index: {}]
  %s2 = inlined_call_operand.vmem [shape: f32[1,864], index: 2, kind: input, shape index: {}]
  %s3 = inlined_call_operand.vmem [shape: f32[864,864], index: 3, kind: input, shape index: {}]
  %s4 = inlined_call_operand.vmem [shape: f32[1,864], index: 4, kind: input, shape index: {}]
  %s5 = inlined_call_operand.vmem [shape: f32[864,1000], index: 5, kind: input, shape index: {}]
  %s6 = inlined_call_operand.vmem [shape: f32[1,1000], index: 6, kind: input, shape index: {}]
  %s7 = inlined_call_operand.hbm [shape: f32[2,1000], index: 7, kind: output, shape index: {}]
  %s8 = sld [smem:[#allocation0]]
  $region38: #{forward.15} parent=0
    _
  %s10 = ssub.s32 1, %s8
  %s11 = scalar_select 0, %s10, %s8
  $region1: #{forward.15} parent=0
    #allocation2 [shape = 'u8[8192]{0}', space=vmem, size = 0x2000, scoped, tag = 'output window, operand 0, single buffered']
    #allocation3 [shape = 's32[1]{0}', space=sflag, size = 0x4, scoped, tag = 'scoped memory for forward.15']
    %12 = vsyncpa [#allocation3], 0
    // Predicated region
    $region2: #{forward.15} parent=1 // pred_check
      _
    $region3: #{forward.15} parent=1 // pred_check_branch
      %14 = sbr.rel (0) target = $region5
    $region4: #{forward.15} parent=1 // pred_region
      _
    $region5: #{forward.15} parent=1 // pred_fallthru
      _
    // Predicated region
    $region6: #{forward.15} parent=1 // pred_check
      _
    $region7: #{forward.15} parent=1 // pred_check_branch
      %16 = sbr.rel (0) target = $region9
    $region8: #{forward.15} parent=1 // pred_region
      _
    $region9: #{forward.15} parent=1 // pred_fallthru
      _
    // Predicated region
    $region10: #{forward.15} parent=1 // pred_check
      _
    $region11: #{forward.15} parent=1 // pred_check_branch
      %18 = sbr.rel (0) target = $region13
    $region12: #{forward.15} parent=1 // pred_region
      _
    $region13: #{forward.15} parent=1 // pred_fallthru
      _
    // Predicated region
    $region14: #{forward.15} parent=1 // pred_check
      _
    $region15: #{forward.15} parent=1 // pred_check_branch
      %20 = sbr.rel (0) target = $region17
    $region16: #{forward.15} parent=1 // pred_region
      _
    $region17: #{forward.15} parent=1 // pred_fallthru
      _
    // Predicated region
    $region18: #{forward.15} parent=1 // pred_check
      _
    $region19: #{forward.15} parent=1 // pred_check_branch
      %22 = sbr.rel (0) target = $region21
    $region20: #{forward.15} parent=1 // pred_region
      _
    $region21: #{forward.15} parent=1 // pred_fallthru
      _
    // Predicated region
    $region22: #{forward.15} parent=1 // pred_check
      _
    $region23: #{forward.15} parent=1 // pred_check_branch
      %24 = sbr.rel (0) target = $region25
    $region24: #{forward.15} parent=1 // pred_region
      _
    $region25: #{forward.15} parent=1 // pred_fallthru
      _
    // Predicated region
    $region26: #{forward.15} parent=1 // pred_check
      _
    $region27: #{forward.15} parent=1 // pred_check_branch
      %26 = sbr.rel (0) target = $region29
    $region28: #{forward.15} parent=1 // pred_region
      _
    $region29: #{forward.15} parent=1 // pred_fallthru
      _
    %v27 = vld [vmem:[%s0] sm:$0x3]
    %v28 = vld [vmem:[%s0 + $0x2] sm:$0x3]
    %v29 = vld [vmem:[%s0 + $0x4] sm:$0x3]
    %v30 = vld [vmem:[%s0 + $0x6] sm:$0x3]
    %v31 = vld [vmem:[%s0 + $0x8] sm:$0x3]
    %v32 = vld [vmem:[%s0 + $0xa] sm:$0x3]
    %v33 = vld [vmem:[%s0 + $0xc] sm:$0x3]
    %v34 = vld [vmem:[%s0 + $0xe] sm:$0x3]
    %v35 = vld [vmem:[%s0 + $0x10] sm:$0x3]
    %v36 = vld [vmem:[%s0 + $0x12] sm:$0x3]
    %v37 = vld [vmem:[%s0 + $0x14] sm:$0x3]
    %v38 = vld [vmem:[%s0 + $0x16] sm:$0x3]
    %v39 = vld [vmem:[%s0 + $0x18] sm:$0x3]
    %v40 = vld [vmem:[%s0 + $0x1a] sm:$0x3]
    %v41 = vld [vmem:[%s0 + $0x1c] sm:$0x3]
    %v42 = vld [vmem:[%s0 + $0x1e] sm:$0x3]
    %vm43 = vcmask 91136
    %v44 = vsel %vm43, %v27, -inf
    %v45 = vsel %vm43, %v28, -inf
    %v46 = vsel %vm43, %v29, -inf
    %v47 = vsel %vm43, %v30, -inf
    %v48 = vsel %vm43, %v31, -inf
    %v49 = vmax.f32 %v44, %v48
    %v50 = vsel %vm43, %v32, -inf
    %v51 = vmax.f32 %v45, %v50
    %v52 = vsel %vm43, %v33, -inf
    %v53 = vmax.f32 %v46, %v52
    %v54 = vsel %vm43, %v34, -inf
    %v55 = vmax.f32 %v47, %v54
    %v56 = vsel %vm43, %v35, -inf
    %v57 = vmax.f32 %v49, %v56
    %v58 = vsel %vm43, %v36, -inf
    %v59 = vmax.f32 %v51, %v58
    %v60 = vsel %vm43, %v37, -inf
    %v61 = vmax.f32 %v53, %v60
    %v62 = vsel %vm43, %v38, -inf
    %v63 = vmax.f32 %v55, %v62
    %v64 = vsel %vm43, %v39, -inf
    %v65 = vmax.f32 %v57, %v64
    %v66 = vsel %vm43, %v40, -inf
    %v67 = vmax.f32 %v59, %v66
    %v68 = vsel %vm43, %v41, -inf
    %v69 = vmax.f32 %v61, %v68
    %v70 = vsel %vm43, %v42, -inf
    %v71 = vmax.f32 %v63, %v70
    %v72 = vmax.f32 %v65, %v67
    %v73 = vmax.f32 %v69, %v71
    %v74 = vmax.f32 %v72, %v73
    %v75 = vld [vmem:[%s1] sm:$0xff]
    %v76 = vld [vmem:[%s1 + $0x8] sm:$0xff]
    %v77 = vld [vmem:[%s1 + $0x10] sm:$0xff]
    %v78 = vld [vmem:[%s1 + $0x18] sm:$0xff]
    %v79 = vld [vmem:[%s1 + $0x20] sm:$0xff]
    %v80 = vld [vmem:[%s1 + $0x28] sm:$0xff]
    %v81 = vld [vmem:[%s1 + $0x30] sm:$0xff]
    %v82 = vld [vmem:[%s1 + $0x38] sm:$0xf]
    %v83 = vld [vmem:[%s1 + $0x40] sm:$0xf]
    %v84 = vld [vmem:[%s1 + $0x48] sm:$0xf]
    %v85 = vld [vmem:[%s1 + $0x50] sm:$0xf]
    %v86 = vld [vmem:[%s1 + $0x58] sm:$0xf]
    %v87 = vld [vmem:[%s1 + $0x60] sm:$0xf]
    %v88 = vld [vmem:[%s1 + $0x68] sm:$0xf]
    %v89 = vld [vmem:[%s2] sm:$0x7f]
    %v91 = vlaneseq
    %v92 = vshrl.u32 %v91, 7
    %v93 = vsub.s32 0, %v92
    %v94 = vrot.slane %v89, %v93
    %v95 = vlaneseq
    %v96 = vshrl.u32 %v95, 7
    %v97 = vsub.s32 1, %v96
    %v98 = vrot.slane %v89, %v97
    %v99 = vlaneseq
    %v100 = vshrl.u32 %v99, 7
    %v101 = vsub.s32 2, %v100
    %v102 = vrot.slane %v89, %v101
    %v103 = vlaneseq
    %v104 = vshrl.u32 %v103, 7
    %v105 = vsub.s32 3, %v104
    %v106 = vrot.slane %v89, %v105
    %v107 = vlaneseq
    %v108 = vshrl.u32 %v107, 7
    %v109 = vsub.s32 4, %v108
    %v110 = vrot.slane %v89, %v109
    %v111 = vlaneseq
    %v112 = vshrl.u32 %v111, 7
    %v113 = vsub.s32 5, %v112
    %v114 = vrot.slane %v89, %v113
    %v115 = vlaneseq
    %v116 = vshrl.u32 %v115, 7
    %v117 = vsub.s32 6, %v116
    %v118 = vrot.slane %v89, %v117
    %vm126 = vcmask 97280
    %v128 = vsel %vm126, %v74, 0
    %vm130 = vcmask 1043456
    %v132 = vsel %vm130, %v82, 0
    %v135 = vsel %vm130, %v83, 0
    %v138 = vsel %vm130, %v84, 0
    %v141 = vsel %vm130, %v85, 0
    %v144 = vsel %vm130, %v86, 0
    %v147 = vsel %vm130, %v87, 0
    %v150 = vsel %vm130, %v88, 0
    %152 = vmatprep.subr.mxu0 %v76
    %153 = vmatpush1.msra.mxu0 %v75
    %154 = vmatprep.subr.mxu0 %v135
    %155 = vmatpush1.msra.mxu0 %v132
    %156 = vmatprep.subr.mxu0 0.0
    %157 = vmatpush1.msra.mxu0 0.0
    %158 = vmatprep.subr.mxu0 0.0
    %159 = vmatpush1.msra.mxu0 0.0
    %160 = vmatprep.subr.mxu0 0.0
    %161 = vmatpush1.msra.mxu0 0.0
    %162 = vmatprep.subr.mxu0 0.0
    %163 = vmatpush1.msra.mxu0 0.0
    %164 = vmatprep.subr.mxu0 0.0
    %165 = vmatpush1.msra.mxu0 0.0
    %166 = vmatprep.subr.mxu0 0.0
    %167 = vmatpush1.msra.mxu0 0.0
    %168 = vmatprep.subr.mxu0 0.0
    %169 = vmatpush1.msra.mxu0 0.0
    %170 = vmatprep.subr.mxu0 0.0
    %171 = vmatpush1.msra.mxu0 0.0
    %172 = vmatprep.subr.mxu0 0.0
    %173 = vmatpush1.msra.mxu0 0.0
    %174 = vmatprep.subr.mxu0 0.0
    %175 = vmatpush1.msra.mxu0 0.0
    %176 = vmatprep.subr.mxu0 0.0
    %177 = vmatpush1.msra.mxu0 0.0
    %178 = vmatprep.subr.mxu0 0.0
    %179 = vmatpush1.msra.mxu0 0.0
    %180 = vmatprep.subr.mxu0 0.0
    %181 = vmatpush1.msra.mxu0 0.0
    %182 = vmatprep.subr.mxu0 0.0
    %183 = vmatpush1.msra.mxu0 0.0
    %184 = vmatprep.subr.mxu0 0.0
    %185 = vmatpush1.msra.mxu0 0.0
    %186 = vmatprep.subr.mxu0 0.0
    %187 = vmatpush1.msra.mxu0 0.0
    %188 = vmatprep.subr.mxu0 0.0
    %189 = vmatpush1.msra.mxu0 0.0
    %190 = vmatprep.subr.mxu0 0.0
    %191 = vmatpush1.msra.mxu0 0.0
    %192 = vmatprep.subr.mxu0 0.0
    %193 = vmatpush1.msra.mxu0 0.0
    %194 = vmatprep.subr.mxu0 0.0
    %195 = vmatpush1.msra.mxu0 0.0
    %196 = vmatprep.subr.mxu0 0.0
    %197 = vmatpush1.msra.mxu0 0.0
    %198 = vmatprep.subr.mxu0 0.0
    %199 = vmatpush1.msra.mxu0 0.0
    %200 = vmatprep.subr.mxu0 0.0
    %201 = vmatpush1.msra.mxu0 0.0
    %202 = vmatprep.subr.mxu0 0.0
    %203 = vmatpush1.msra.mxu0 0.0
    %204 = vmatprep.subr.mxu0 0.0
    %205 = vmatpush1.msra.mxu0 0.0
    %206 = vmatprep.subr.mxu0 0.0
    %207 = vmatpush1.msra.mxu0 0.0
    %208 = vmatprep.subr.mxu0 0.0
    %209 = vmatpush1.msra.mxu0 0.0
    %210 = vmatprep.subr.mxu0 0.0
    %211 = vmatpush1.msra.mxu0 0.0
    %212 = vmatprep.subr.mxu0 0.0
    %213 = vmatpush1.msra.mxu0 0.0
    %214 = vmatprep.subr.mxu0 0.0
    %215 = vmatpush1.msra.mxu0 0.0
    %216 = vmatprep.mubr.f32.mxu0 0.0
    %217 = vmatmul.mubr.f32.gmra.mrb[0].mxu0 %v128
    %v218 = vpop.f32.mrb[0].mxu0
    %v219 = vadd.f32 %v94, %v218
    %v220 = vpop.f32.mrb[0].mxu0
    %v221 = vadd.f32 %v98, %v220
    %222 = vdwg.mxu0
    %223 = vmatprep.subr.mxu0 %v78
    %224 = vmatpush1.msra.mxu0 %v77
    %225 = vmatprep.subr.mxu0 %v141
    %226 = vmatpush1.msra.mxu0 %v138
    %227 = vmatprep.subr.mxu0 0.0
    %228 = vmatpush1.msra.mxu0 0.0
    %229 = vmatprep.subr.mxu0 0.0
    %230 = vmatpush1.msra.mxu0 0.0
    %231 = vmatprep.subr.mxu0 0.0
    %232 = vmatpush1.msra.mxu0 0.0
    %233 = vmatprep.subr.mxu0 0.0
    %234 = vmatpush1.msra.mxu0 0.0
    %235 = vmatprep.subr.mxu0 0.0
    %236 = vmatpush1.msra.mxu0 0.0
    %237 = vmatprep.subr.mxu0 0.0
    %238 = vmatpush1.msra.mxu0 0.0
    %239 = vmatprep.subr.mxu0 0.0
    %240 = vmatpush1.msra.mxu0 0.0
    %241 = vmatprep.subr.mxu0 0.0
    %242 = vmatpush1.msra.mxu0 0.0
    %243 = vmatprep.subr.mxu0 0.0
    %244 = vmatpush1.msra.mxu0 0.0
    %245 = vmatprep.subr.mxu0 0.0
    %246 = vmatpush1.msra.mxu0 0.0
    %247 = vmatprep.subr.mxu0 0.0
    %248 = vmatpush1.msra.mxu0 0.0
    %249 = vmatprep.subr.mxu0 0.0
    %250 = vmatpush1.msra.mxu0 0.0
    %251 = vmatprep.subr.mxu0 0.0
    %252 = vmatpush1.msra.mxu0 0.0
    %253 = vmatprep.subr.mxu0 0.0
    %254 = vmatpush1.msra.mxu0 0.0
    %255 = vmatprep.subr.mxu0 0.0
    %256 = vmatpush1.msra.mxu0 0.0
    %257 = vmatprep.subr.mxu0 0.0
    %258 = vmatpush1.msra.mxu0 0.0
    %259 = vmatprep.subr.mxu0 0.0
    %260 = vmatpush1.msra.mxu0 0.0
    %261 = vmatprep.subr.mxu0 0.0
    %262 = vmatpush1.msra.mxu0 0.0
    %263 = vmatprep.subr.mxu0 0.0
    %264 = vmatpush1.msra.mxu0 0.0
    %265 = vmatprep.subr.mxu0 0.0
    %266 = vmatpush1.msra.mxu0 0.0
    %267 = vmatprep.subr.mxu0 0.0
    %268 = vmatpush1.msra.mxu0 0.0
    %269 = vmatprep.subr.mxu0 0.0
    %270 = vmatpush1.msra.mxu0 0.0
    %271 = vmatprep.subr.mxu0 0.0
    %272 = vmatpush1.msra.mxu0 0.0
    %273 = vmatprep.subr.mxu0 0.0
    %274 = vmatpush1.msra.mxu0 0.0
    %275 = vmatprep.subr.mxu0 0.0
    %276 = vmatpush1.msra.mxu0 0.0
    %277 = vmatprep.subr.mxu0 0.0
    %278 = vmatpush1.msra.mxu0 0.0
    %279 = vmatprep.subr.mxu0 0.0
    %280 = vmatpush1.msra.mxu0 0.0
    %281 = vmatprep.subr.mxu0 0.0
    %282 = vmatpush1.msra.mxu0 0.0
    %283 = vmatprep.subr.mxu0 0.0
    %284 = vmatpush1.msra.mxu0 0.0
    %285 = vmatprep.subr.mxu0 0.0
    %286 = vmatpush1.msra.mxu0 0.0
    %287 = vmatprep.mubr.f32.mxu0 0.0
    %288 = vmatmul.mubr.f32.gmra.mrb[0].mxu0 %v128
    %v289 = vpop.f32.mrb[0].mxu0
    %v290 = vadd.f32 %v102, %v289
    %v291 = vpop.f32.mrb[0].mxu0
    %v292 = vadd.f32 %v106, %v291
    %293 = vdwg.mxu0
    %294 = vmatprep.subr.mxu0 %v80
    %295 = vmatpush1.msra.mxu0 %v79
    %296 = vmatprep.subr.mxu0 %v147
    %297 = vmatpush1.msra.mxu0 %v144
    %298 = vmatprep.subr.mxu0 0.0
    %299 = vmatpush1.msra.mxu0 0.0
    %300 = vmatprep.subr.mxu0 0.0
    %301 = vmatpush1.msra.mxu0 0.0
    %302 = vmatprep.subr.mxu0 0.0
    %303 = vmatpush1.msra.mxu0 0.0
    %304 = vmatprep.subr.mxu0 0.0
    %305 = vmatpush1.msra.mxu0 0.0
    %306 = vmatprep.subr.mxu0 0.0
    %307 = vmatpush1.msra.mxu0 0.0
    %308 = vmatprep.subr.mxu0 0.0
    %309 = vmatpush1.msra.mxu0 0.0
    %310 = vmatprep.subr.mxu0 0.0
    %311 = vmatpush1.msra.mxu0 0.0
    %312 = vmatprep.subr.mxu0 0.0
    %313 = vmatpush1.msra.mxu0 0.0
    %314 = vmatprep.subr.mxu0 0.0
    %315 = vmatpush1.msra.mxu0 0.0
    %316 = vmatprep.subr.mxu0 0.0
    %317 = vmatpush1.msra.mxu0 0.0
    %318 = vmatprep.subr.mxu0 0.0
    %319 = vmatpush1.msra.mxu0 0.0
    %320 = vmatprep.subr.mxu0 0.0
    %321 = vmatpush1.msra.mxu0 0.0
    %322 = vmatprep.subr.mxu0 0.0
    %323 = vmatpush1.msra.mxu0 0.0
    %324 = vmatprep.subr.mxu0 0.0
    %325 = vmatpush1.msra.mxu0 0.0
    %326 = vmatprep.subr.mxu0 0.0
    %327 = vmatpush1.msra.mxu0 0.0
    %328 = vmatprep.subr.mxu0 0.0
    %329 = vmatpush1.msra.mxu0 0.0
    %330 = vmatprep.subr.mxu0 0.0
    %331 = vmatpush1.msra.mxu0 0.0
    %332 = vmatprep.subr.mxu0 0.0
    %333 = vmatpush1.msra.mxu0 0.0
    %334 = vmatprep.subr.mxu0 0.0
    %335 = vmatpush1.msra.mxu0 0.0
    %336 = vmatprep.subr.mxu0 0.0
    %337 = vmatpush1.msra.mxu0 0.0
    %338 = vmatprep.subr.mxu0 0.0
    %339 = vmatpush1.msra.mxu0 0.0
    %340 = vmatprep.subr.mxu0 0.0
    %341 = vmatpush1.msra.mxu0 0.0
    %342 = vmatprep.subr.mxu0 0.0
    %343 = vmatpush1.msra.mxu0 0.0
    %344 = vmatprep.subr.mxu0 0.0
    %345 = vmatpush1.msra.mxu0 0.0
    %346 = vmatprep.subr.mxu0 0.0
    %347 = vmatpush1.msra.mxu0 0.0
    %348 = vmatprep.subr.mxu0 0.0
    %349 = vmatpush1.msra.mxu0 0.0
    %350 = vmatprep.subr.mxu0 0.0
    %351 = vmatpush1.msra.mxu0 0.0
    %352 = vmatprep.subr.mxu0 0.0
    %353 = vmatpush1.msra.mxu0 0.0
    %354 = vmatprep.subr.mxu0 0.0
    %355 = vmatpush1.msra.mxu0 0.0
    %356 = vmatprep.subr.mxu0 0.0
    %357 = vmatpush1.msra.mxu0 0.0
    %358 = vmatprep.mubr.f32.mxu0 0.0
    %359 = vmatmul.mubr.f32.gmra.mrb[0].mxu0 %v128
    %v360 = vpop.f32.mrb[0].mxu0
    %v361 = vadd.f32 %v110, %v360
    %v362 = vpop.f32.mrb[0].mxu0
    %v363 = vadd.f32 %v114, %v362
    %364 = vdwg.mxu0
    %365 = vmatprep.subr.mxu0 0.0
    %366 = vmatpush1.msra.mxu0 %v81
    %367 = vmatprep.subr.mxu0 0.0
    %368 = vmatpush1.msra.mxu0 %v150
    %369 = vmatprep.subr.mxu0 0.0
    %370 = vmatpush1.msra.mxu0 0.0
    %371 = vmatprep.subr.mxu0 0.0
    %372 = vmatpush1.msra.mxu0 0.0
    %373 = vmatprep.subr.mxu0 0.0
    %374 = vmatpush1.msra.mxu0 0.0
    %375 = vmatprep.subr.mxu0 0.0
    %376 = vmatpush1.msra.mxu0 0.0
    %377 = vmatprep.subr.mxu0 0.0
    %378 = vmatpush1.msra.mxu0 0.0
    %379 = vmatprep.subr.mxu0 0.0
    %380 = vmatpush1.msra.mxu0 0.0
    %381 = vmatprep.subr.mxu0 0.0
    %382 = vmatpush1.msra.mxu0 0.0
    %383 = vmatprep.subr.mxu0 0.0
    %384 = vmatpush1.msra.mxu0 0.0
    %385 = vmatprep.subr.mxu0 0.0
    %386 = vmatpush1.msra.mxu0 0.0
    %387 = vmatprep.subr.mxu0 0.0
    %388 = vmatpush1.msra.mxu0 0.0
    %389 = vmatprep.subr.mxu0 0.0
    %390 = vmatpush1.msra.mxu0 0.0
    %391 = vmatprep.subr.mxu0 0.0
    %392 = vmatpush1.msra.mxu0 0.0
    %393 = vmatprep.subr.mxu0 0.0
    %394 = vmatpush1.msra.mxu0 0.0
    %395 = vmatprep.subr.mxu0 0.0
    %396 = vmatpush1.msra.mxu0 0.0
    %397 = vmatprep.subr.mxu0 0.0
    %398 = vmatpush1.msra.mxu0 0.0
    %399 = vmatprep.subr.mxu0 0.0
    %400 = vmatpush1.msra.mxu0 0.0
    %401 = vmatprep.subr.mxu0 0.0
    %402 = vmatpush1.msra.mxu0 0.0
    %403 = vmatprep.subr.mxu0 0.0
    %404 = vmatpush1.msra.mxu0 0.0
    %405 = vmatprep.subr.mxu0 0.0
    %406 = vmatpush1.msra.mxu0 0.0
    %407 = vmatprep.subr.mxu0 0.0
    %408 = vmatpush1.msra.mxu0 0.0
    %409 = vmatprep.subr.mxu0 0.0
    %410 = vmatpush1.msra.mxu0 0.0
    %411 = vmatprep.subr.mxu0 0.0
    %412 = vmatpush1.msra.mxu0 0.0
    %413 = vmatprep.subr.mxu0 0.0
    %414 = vmatpush1.msra.mxu0 0.0
    %415 = vmatprep.subr.mxu0 0.0
    %416 = vmatpush1.msra.mxu0 0.0
    %417 = vmatprep.subr.mxu0 0.0
    %418 = vmatpush1.msra.mxu0 0.0
    %419 = vmatprep.subr.mxu0 0.0
    %420 = vmatpush1.msra.mxu0 0.0
    %421 = vmatprep.subr.mxu0 0.0
    %422 = vmatpush1.msra.mxu0 0.0
    %423 = vmatprep.subr.mxu0 0.0
    %424 = vmatpush1.msra.mxu0 0.0
    %425 = vmatprep.subr.mxu0 0.0
    %426 = vmatpush1.msra.mxu0 0.0
    %427 = vmatprep.subr.mxu0 0.0
    %428 = vmatpush1.msra.mxu0 0.0
    %429 = vmatprep.mubr.f32.mxu0 0.0
    %430 = vmatmul.mubr.f32.gmra.mrb[0].mxu0 %v128
    %v431 = vpop.f32.mrb[0].mxu0
    %v432 = vadd.f32 %v118, %v431
    %v433 = vpop.f32.mrb[0].mxu0
    %434 = vdwg.mxu0
    %v435 = vtanh.pop %v219
    %v436 = vtanh.pop %v221
    %v437 = vtanh.pop %v290
    %v438 = vtanh.pop %v292
    %v439 = vtanh.pop %v361
    %v440 = vtanh.pop %v363
    %v441 = vtanh.pop %v432
    %v442 = vld [vmem:[%s3] sm:$0xff]
    %v443 = vld [vmem:[%s3 + $0x8] sm:$0xff]
    %v444 = vld [vmem:[%s3 + $0x10] sm:$0xff]
    %v445 = vld [vmem:[%s3 + $0x18] sm:$0xff]
    %v446 = vld [vmem:[%s3 + $0x20] sm:$0xff]
    %v447 = vld [vmem:[%s3 + $0x28] sm:$0xff]
    %v448 = vld [vmem:[%s3 + $0x30] sm:$0xff]
    %v449 = vld [vmem:[%s3 + $0x38] sm:$0xff]
    %v450 = vld [vmem:[%s3 + $0x40] sm:$0xff]
    %v451 = vld [vmem:[%s3 + $0x48] sm:$0xff]
    %v452 = vld [vmem:[%s3 + $0x50] sm:$0xff]
    %v453 = vld [vmem:[%s3 + $0x58] sm:$0xff]
    %v454 = vld [vmem:[%s3 + $0x60] sm:$0xff]
    %v455 = vld [vmem:[%s3 + $0x68] sm:$0xff]
    %v456 = vld [vmem:[%s3 + $0x70] sm:$0xff]
    %v457 = vld [vmem:[%s3 + $0x78] sm:$0xff]
    %v458 = vld [vmem:[%s3 + $0x80] sm:$0xff]
    %v459 = vld [vmem:[%s3 + $0x88] sm:$0xff]
    %v460 = vld [vmem:[%s3 + $0x90] sm:$0xff]
    %v461 = vld [vmem:[%s3 + $0x98] sm:$0xff]
    %v462 = vld [vmem:[%s3 + $0xa0] sm:$0xff]
    %v463 = vld [vmem:[%s3 + $0xa8] sm:$0xff]
    %v464 = vld [vmem:[%s3 + $0xb0] sm:$0xff]
    %v465 = vld [vmem:[%s3 + $0xb8] sm:$0xff]
    %v466 = vld [vmem:[%s3 + $0xc0] sm:$0xff]
    %v467 = vld [vmem:[%s3 + $0xc8] sm:$0xff]
    %v468 = vld [vmem:[%s3 + $0xd0] sm:$0xff]
    %v469 = vld [vmem:[%s3 + $0xd8] sm:$0xff]
    %v470 = vld [vmem:[%s3 + $0xe0] sm:$0xff]
    %v471 = vld [vmem:[%s3 + $0xe8] sm:$0xff]
    %v472 = vld [vmem:[%s3 + $0xf0] sm:$0xff]
    %v473 = vld [vmem:[%s3 + $0xf8] sm:$0xff]
    %v474 = vld [vmem:[%s3 + $0x100] sm:$0xff]
    %v475 = vld [vmem:[%s3 + $0x108] sm:$0xff]
    %v476 = vld [vmem:[%s3 + $0x110] sm:$0xff]
    %v477 = vld [vmem:[%s3 + $0x118] sm:$0xff]
    %v478 = vld [vmem:[%s3 + $0x120] sm:$0xff]
    %v479 = vld [vmem:[%s3 + $0x128] sm:$0xff]
    %v480 = vld [vmem:[%s3 + $0x130] sm:$0xff]
    %v481 = vld [vmem:[%s3 + $0x138] sm:$0xff]
    %v482 = vld [vmem:[%s3 + $0x140] sm:$0xff]
    %v483 = vld [vmem:[%s3 + $0x148] sm:$0xff]
    %v484 = vld [vmem:[%s3 + $0x150] sm:$0xff]
    %v485 = vld [vmem:[%s3 + $0x158] sm:$0xff]
    %v486 = vld [vmem:[%s3 + $0x160] sm:$0xff]
    %v487 = vld [vmem:[%s3 + $0x168] sm:$0xff]
    %v488 = vld [vmem:[%s3 + $0x170] sm:$0xff]
    %v489 = vld [vmem:[%s3 + $0x178] sm:$0xff]
    %v490 = vld [vmem:[%s3 + $0x180] sm:$0xff]
    %v491 = vld [vmem:[%s3 + $0x188] sm:$0xff]
    %v492 = vld [vmem:[%s3 + $0x190] sm:$0xff]
    %v493 = vld [vmem:[%s3 + $0x198] sm:$0xff]
    %v494 = vld [vmem:[%s3 + $0x1a0] sm:$0xff]
    %v495 = vld [vmem:[%s3 + $0x1a8] sm:$0xff]
    %v496 = vld [vmem:[%s3 + $0x1b0] sm:$0xff]
    %v497 = vld [vmem:[%s3 + $0x1b8] sm:$0xff]
    %v498 = vld [vmem:[%s3 + $0x1c0] sm:$0xff]
    %v499 = vld [vmem:[%s3 + $0x1c8] sm:$0xff]
    %v500 = vld [vmem:[%s3 + $0x1d0] sm:$0xff]
    %v501 = vld [vmem:[%s3 + $0x1d8] sm:$0xff]
    %v502 = vld [vmem:[%s3 + $0x1e0] sm:$0xff]
    %v503 = vld [vmem:[%s3 + $0x1e8] sm:$0xff]
    %v504 = vld [vmem:[%s3 + $0x1f0] sm:$0xff]
    %v505 = vld [vmem:[%s3 + $0x1f8] sm:$0xff]
    %v506 = vld [vmem:[%s3 + $0x200] sm:$0xff]
    %v507 = vld [vmem:[%s3 + $0x208] sm:$0xff]
    %v508 = vld [vmem:[%s3 + $0x210] sm:$0xff]
    %v509 = vld [vmem:[%s3 + $0x218] sm:$0xff]
    %v510 = vld [vmem:[%s3 + $0x220] sm:$0xff]
    %v511 = vld [vmem:[%s3 + $0x228] sm:$0xff]
    %v512 = vld [vmem:[%s3 + $0x230] sm:$0xff]
    %v513 = vld [vmem:[%s3 + $0x238] sm:$0xff]
    %v514 = vld [vmem:[%s3 + $0x240] sm:$0xff]
    %v515 = vld [vmem:[%s3 + $0x248] sm:$0xff]
    %v516 = vld [vmem:[%s3 + $0x250] sm:$0xff]
    %v517 = vld [vmem:[%s3 + $0x258] sm:$0xff]
    %v518 = vld [vmem:[%s3 + $0x260] sm:$0xff]
    %v519 = vld [vmem:[%s3 + $0x268] sm:$0xff]
    %v520 = vld [vmem:[%s3 + $0x270] sm:$0xff]
    %v521 = vld [vmem:[%s3 + $0x278] sm:$0xff]
    %v522 = vld [vmem:[%s3 + $0x280] sm:$0xff]
    %v523 = vld [vmem:[%s3 + $0x288] sm:$0xff]
    %v524 = vld [vmem:[%s3 + $0x290] sm:$0xff]
    %v525 = vld [vmem:[%s3 + $0x298] sm:$0xff]
    %v526 = vld [vmem:[%s3 + $0x2a0] sm:$0xff]
    %v527 = vld [vmem:[%s3 + $0x2a8] sm:$0xff]
    %v528 = vld [vmem:[%s3 + $0x2b0] sm:$0xff]
    %v529 = vld [vmem:[%s3 + $0x2b8] sm:$0xff]
    %v530 = vld [vmem:[%s3 + $0x2c0] sm:$0xff]
    %v531 = vld [vmem:[%s3 + $0x2c8] sm:$0xff]
    %v532 = vld [vmem:[%s3 + $0x2d0] sm:$0xff]
    %v533 = vld [vmem:[%s3 + $0x2d8] sm:$0xff]
    %v534 = vld [vmem:[%s3 + $0x2e0] sm:$0xff]
    %v535 = vld [vmem:[%s3 + $0x2e8] sm:$0xff]
    %v536 = vld [vmem:[%s3 + $0x2f0] sm:$0xff]
    %v537 = vld [vmem:[%s3 + $0x2f8] sm:$0xff]
    %v538 = vld [vmem:[%s3 + $0x300] sm:$0xff]
    %v539 = vld [vmem:[%s3 + $0x308] sm:$0xff]
    %v540 = vld [vmem:[%s3 + $0x310] sm:$0xff]
    %v541 = vld [vmem:[%s3 + $0x318] sm:$0xff]
    %v542 = vld [vmem:[%s3 + $0x320] sm:$0xff]
    %v543 = vld [vmem:[%s3 + $0x328] sm:$0xff]
    %v544 = vld [vmem:[%s3 + $0x330] sm:$0xff]
    %v545 = vld [vmem:[%s3 + $0x338] sm:$0xff]
    %v546 = vld [vmem:[%s3 + $0x340] sm:$0xff]
    %v547 = vld [vmem:[%s3 + $0x348] sm:$0xff]
    %v548 = vld [vmem:[%s3 + $0x350] sm:$0xff]
    %v549 = vld [vmem:[%s3 + $0x358] sm:$0xff]
    %v550 = vld [vmem:[%s3 + $0x360] sm:$0xff]
    %v551 = vld [vmem:[%s3 + $0x368] sm:$0xff]
    %v552 = vld [vmem:[%s3 + $0x370] sm:$0xff]
    %v553 = vld [vmem:[%s3 + $0x378] sm:$0xff]
    %v554 = vld [vmem:[%s3 + $0x380] sm:$0xff]
    %v555 = vld [vmem:[%s3 + $0x388] sm:$0xff]
    %v556 = vld [vmem:[%s3 + $0x390] sm:$0xff]
    %v557 = vld [vmem:[%s3 + $0x398] sm:$0xff]
    %v558 = vld [vmem:[%s3 + $0x3a0] sm:$0xff]
    %v559 = vld [vmem:[%s3 + $0x3a8] sm:$0xff]
    %v560 = vld [vmem:[%s3 + $0x3b0] sm:$0xff]
    %v561 = vld [vmem:[%s3 + $0x3b8] sm:$0xff]
    %v562 = vld [vmem:[%s3 + $0x3c0] sm:$0xff]
    %v563 = vld [vmem:[%s3 + $0x3c8] sm:$0xff]
    %v564 = vld [vmem:[%s3 + $0x3d0] sm:$0xff]
    %v565 = vld [vmem:[%s3 + $0x3d8] sm:$0xff]
    %v566 = vld [vmem:[%s3 + $0x3e0] sm:$0xff]
    %v567 = vld [vmem:[%s3 + $0x3e8] sm:$0xff]
    %v568 = vld [vmem:[%s3 + $0x3f0] sm:$0xff]
    %v569 = vld [vmem:[%s3 + $0x3f8] sm:$0xff]
    %v570 = vld [vmem:[%s3 + $0x400] sm:$0xff]
    %v571 = vld [vmem:[%s3 + $0x408] sm:$0xff]
    %v572 = vld [vmem:[%s3 + $0x410] sm:$0xff]
    %v573 = vld [vmem:[%s3 + $0x418] sm:$0xff]
    %v574 = vld [vmem:[%s3 + $0x420] sm:$0xff]
    %v575 = vld [vmem:[%s3 + $0x428] sm:$0xff]
    %v576 = vld [vmem:[%s3 + $0x430] sm:$0xff]
    %v577 = vld [vmem:[%s3 + $0x438] sm:$0xff]
    %v578 = vld [vmem:[%s3 + $0x440] sm:$0xff]
    %v579 = vld [vmem:[%s3 + $0x448] sm:$0xff]
    %v580 = vld [vmem:[%s3 + $0x450] sm:$0xff]
    %v581 = vld [vmem:[%s3 + $0x458] sm:$0xff]
    %v582 = vld [vmem:[%s3 + $0x460] sm:$0xff]
    %v583 = vld [vmem:[%s3 + $0x468] sm:$0xff]
    %v584 = vld [vmem:[%s3 + $0x470] sm:$0xff]
    %v585 = vld [vmem:[%s3 + $0x478] sm:$0xff]
    %v586 = vld [vmem:[%s3 + $0x480] sm:$0xff]
    %v587 = vld [vmem:[%s3 + $0x488] sm:$0xff]
    %v588 = vld [vmem:[%s3 + $0x490] sm:$0xff]
    %v589 = vld [vmem:[%s3 + $0x498] sm:$0xff]
    %v590 = vld [vmem:[%s3 + $0x4a0] sm:$0xff]
    %v591 = vld [vmem:[%s3 + $0x4a8] sm:$0xff]
    %v592 = vld [vmem:[%s3 + $0x4b0] sm:$0xff]
    %v593 = vld [vmem:[%s3 + $0x4b8] sm:$0xff]
    %v594 = vld [vmem:[%s3 + $0x4c0] sm:$0xff]
    %v595 = vld [vmem:[%s3 + $0x4c8] sm:$0xff]
    %v596 = vld [vmem:[%s3 + $0x4d0] sm:$0xff]
    %v597 = vld [vmem:[%s3 + $0x4d8] sm:$0xff]
    %v598 = vld [vmem:[%s3 + $0x4e0] sm:$0xff]
    %v599 = vld [vmem:[%s3 + $0x4e8] sm:$0xff]
    %v600 = vld [vmem:[%s3 + $0x4f0] sm:$0xff]
    %v601 = vld [vmem:[%s3 + $0x4f8] sm:$0xff]
    %v602 = vld [vmem:[%s3 + $0x500] sm:$0xff]
    %v603 = vld [vmem:[%s3 + $0x508] sm:$0xff]
    %v604 = vld [vmem:[%s3 + $0x510] sm:$0xff]
    %v605 = vld [vmem:[%s3 + $0x518] sm:$0xff]
    %v606 = vld [vmem:[%s3 + $0x520] sm:$0xff]
    %v607 = vld [vmem:[%s3 + $0x528] sm:$0xff]
    %v608 = vld [vmem:[%s3 + $0x530] sm:$0xff]
    %v609 = vld [vmem:[%s3 + $0x538] sm:$0xff]
    %v610 = vld [vmem:[%s3 + $0x540] sm:$0xff]
    %v611 = vld [vmem:[%s3 + $0x548] sm:$0xff]
    %v612 = vld [vmem:[%s3 + $0x550] sm:$0xff]
    %v613 = vld [vmem:[%s3 + $0x558] sm:$0xff]
    %v614 = vld [vmem:[%s3 + $0x560] sm:$0xff]
    %v615 = vld [vmem:[%s3 + $0x568] sm:$0xff]
    %v616 = vld [vmem:[%s3 + $0x570] sm:$0xff]
    %v617 = vld [vmem:[%s3 + $0x578] sm:$0xff]
    %v618 = vld [vmem:[%s3 + $0x580] sm:$0xff]
    %v619 = vld [vmem:[%s3 + $0x588] sm:$0xff]
    %v620 = vld [vmem:[%s3 + $0x590] sm:$0xff]
    %v621 = vld [vmem:[%s3 + $0x598] sm:$0xff]
    %v622 = vld [vmem:[%s3 + $0x5a0] sm:$0xff]
    %v623 = vld [vmem:[%s3 + $0x5a8] sm:$0xff]
    %v624 = vld [vmem:[%s3 + $0x5b0] sm:$0xff]
    %v625 = vld [vmem:[%s3 + $0x5b8] sm:$0xff]
    %v626 = vld [vmem:[%s3 + $0x5c0] sm:$0xff]
    %v627 = vld [vmem:[%s3 + $0x5c8] sm:$0xff]
    %v628 = vld [vmem:[%s3 + $0x5d0] sm:$0xff]
    %v629 = vld [vmem:[%s3 + $0x5d8] sm:$0xff]
    %v630 = vld [vmem:[%s3 + $0x5e0] sm:$0xff]
    %v631 = vld [vmem:[%s3 + $0x5e8] sm:$0xff]
    %v632 = vld [vmem:[%s3 + $0x5f0] sm:$0xff]
    %v633 = vld [vmem:[%s3 + $0x5f8] sm:$0xff]
    %v634 = vld [vmem:[%s3 + $0x600] sm:$0xff]
    %v635 = vld [vmem:[%s3 + $0x608] sm:$0xff]
    %v636 = vld [vmem:[%s3 + $0x610] sm:$0xff]
    %v637 = vld [vmem:[%s3 + $0x618] sm:$0xff]
    %v638 = vld [vmem:[%s3 + $0x620] sm:$0xff]
    %v639 = vld [vmem:[%s3 + $0x628] sm:$0xff]
    %v640 = vld [vmem:[%s3 + $0x630] sm:$0xff]
    %v641 = vld [vmem:[%s3 + $0x638] sm:$0xff]
    %v642 = vld [vmem:[%s3 + $0x640] sm:$0xff]
    %v643 = vld [vmem:[%s3 + $0x648] sm:$0xff]
    %v644 = vld [vmem:[%s3 + $0x650] sm:$0xff]
    %v645 = vld [vmem:[%s3 + $0x658] sm:$0xff]
    %v646 = vld [vmem:[%s3 + $0x660] sm:$0xff]
    %v647 = vld [vmem:[%s3 + $0x668] sm:$0xff]
    %v648 = vld [vmem:[%s3 + $0x670] sm:$0xff]
    %v649 = vld [vmem:[%s3 + $0x678] sm:$0xff]
    %v650 = vld [vmem:[%s3 + $0x680] sm:$0xff]
    %v651 = vld [vmem:[%s3 + $0x688] sm:$0xff]
    %v652 = vld [vmem:[%s3 + $0x690] sm:$0xff]
    %v653 = vld [vmem:[%s3 + $0x698] sm:$0xff]
    %v654 = vld [vmem:[%s3 + $0x6a0] sm:$0xff]
    %v655 = vld [vmem:[%s3 + $0x6a8] sm:$0xff]
    %v656 = vld [vmem:[%s3 + $0x6b0] sm:$0xff]
    %v657 = vld [vmem:[%s3 + $0x6b8] sm:$0xff]
    %v658 = vld [vmem:[%s3 + $0x6c0] sm:$0xff]
    %v659 = vld [vmem:[%s3 + $0x6c8] sm:$0xff]
    %v660 = vld [vmem:[%s3 + $0x6d0] sm:$0xff]
    %v661 = vld [vmem:[%s3 + $0x6d8] sm:$0xff]
    %v662 = vld [vmem:[%s3 + $0x6e0] sm:$0xff]
    %v663 = vld [vmem:[%s3 + $0x6e8] sm:$0xff]
    %v664 = vld [vmem:[%s3 + $0x6f0] sm:$0xff]
    %v665 = vld [vmem:[%s3 + $0x6f8] sm:$0xff]
    %v666 = vld [vmem:[%s3 + $0x700] sm:$0xff]
    %v667 = vld [vmem:[%s3 + $0x708] sm:$0xff]
    %v668 = vld [vmem:[%s3 + $0x710] sm:$0xff]
    %v669 = vld [vmem:[%s3 + $0x718] sm:$0xff]
    %v670 = vld [vmem:[%s3 + $0x720] sm:$0xff]
    %v671 = vld [vmem:[%s3 + $0x728] sm:$0xff]
    %v672 = vld [vmem:[%s3 + $0x730] sm:$0xff]
    %v673 = vld [vmem:[%s3 + $0x738] sm:$0xff]
    %v674 = vld [vmem:[%s3 + $0x740] sm:$0xff]
    %v675 = vld [vmem:[%s3 + $0x748] sm:$0xff]
    %v676 = vld [vmem:[%s3 + $0x750] sm:$0xff]
    %v677 = vld [vmem:[%s3 + $0x758] sm:$0xff]
    %v678 = vld [vmem:[%s3 + $0x760] sm:$0xff]
    %v679 = vld [vmem:[%s3 + $0x768] sm:$0xff]
    %v680 = vld [vmem:[%s3 + $0x770] sm:$0xff]
    %v681 = vld [vmem:[%s3 + $0x778] sm:$0xff]
    %v682 = vld [vmem:[%s3 + $0x780] sm:$0xff]
    %v683 = vld [vmem:[%s3 + $0x788] sm:$0xff]
    %v684 = vld [vmem:[%s3 + $0x790] sm:$0xff]
    %v685 = vld [vmem:[%s3 + $0x798] sm:$0xff]
    %v686 = vld [vmem:[%s3 + $0x7a0] sm:$0xff]
    %v687 = vld [vmem:[%s3 + $0x7a8] sm:$0xff]
    %v688 = vld [vmem:[%s3 + $0x7b0] sm:$0xff]
    %v689 = vld [vmem:[%s3 + $0x7b8] sm:$0xff]
    %v690 = vld [vmem:[%s3 + $0x7c0] sm:$0xff]
    %v691 = vld [vmem:[%s3 + $0x7c8] sm:$0xff]
    %v692 = vld [vmem:[%s3 + $0x7d0] sm:$0xff]
    %v693 = vld [vmem:[%s3 + $0x7d8] sm:$0xff]
    %v694 = vld [vmem:[%s3 + $0x7e0] sm:$0xff]
    %v695 = vld [vmem:[%s3 + $0x7e8] sm:$0xff]
    %v696 = vld [vmem:[%s3 + $0x7f0] sm:$0xff]
    %v697 = vld [vmem:[%s3 + $0x7f8] sm:$0xff]
    %v698 = vld [vmem:[%s3 + $0x800] sm:$0xff]
    %v699 = vld [vmem:[%s3 + $0x808] sm:$0xff]
    %v700 = vld [vmem:[%s3 + $0x810] sm:$0xff]
    %v701 = vld [vmem:[%s3 + $0x818] sm:$0xff]
    %v702 = vld [vmem:[%s3 + $0x820] sm:$0xff]
    %v703 = vld [vmem:[%s3 + $0x828] sm:$0xff]
    %v704 = vld [vmem:[%s3 + $0x830] sm:$0xff]
    %v705 = vld [vmem:[%s3 + $0x838] sm:$0xff]
    %v706 = vld [vmem:[%s3 + $0x840] sm:$0xff]
    %v707 = vld [vmem:[%s3 + $0x848] sm:$0xff]
    %v708 = vld [vmem:[%s3 + $0x850] sm:$0xff]
    %v709 = vld [vmem:[%s3 + $0x858] sm:$0xff]
    %v710 = vld [vmem:[%s3 + $0x860] sm:$0xff]
    %v711 = vld [vmem:[%s3 + $0x868] sm:$0xff]
    %v712 = vld [vmem:[%s3 + $0x870] sm:$0xff]
    %v713 = vld [vmem:[%s3 + $0x878] sm:$0xff]
    %v714 = vld [vmem:[%s3 + $0x880] sm:$0xff]
    %v715 = vld [vmem:[%s3 + $0x888] sm:$0xff]
    %v716 = vld [vmem:[%s3 + $0x890] sm:$0xff]
    %v717 = vld [vmem:[%s3 + $0x898] sm:$0xff]
    %v718 = vld [vmem:[%s3 + $0x8a0] sm:$0xff]
    %v719 = vld [vmem:[%s3 + $0x8a8] sm:$0xff]
    %v720 = vld [vmem:[%s3 + $0x8b0] sm:$0xff]
    %v721 = vld [vmem:[%s3 + $0x8b8] sm:$0xff]
    %v722 = vld [vmem:[%s3 + $0x8c0] sm:$0xff]
    %v723 = vld [vmem:[%s3 + $0x8c8] sm:$0xff]
    %v724 = vld [vmem:[%s3 + $0x8d0] sm:$0xff]
    %v725 = vld [vmem:[%s3 + $0x8d8] sm:$0xff]
    %v726 = vld [vmem:[%s3 + $0x8e0] sm:$0xff]
    %v727 = vld [vmem:[%s3 + $0x8e8] sm:$0xff]
    %v728 = vld [vmem:[%s3 + $0x8f0] sm:$0xff]
    %v729 = vld [vmem:[%s3 + $0x8f8] sm:$0xff]
    %v730 = vld [vmem:[%s3 + $0x900] sm:$0xff]
    %v731 = vld [vmem:[%s3 + $0x908] sm:$0xff]
    %v732 = vld [vmem:[%s3 + $0x910] sm:$0xff]
    %v733 = vld [vmem:[%s3 + $0x918] sm:$0xff]
    %v734 = vld [vmem:[%s3 + $0x920] sm:$0xff]
    %v735 = vld [vmem:[%s3 + $0x928] sm:$0xff]
    %v736 = vld [vmem:[%s3 + $0x930] sm:$0xff]
    %v737 = vld [vmem:[%s3 + $0x938] sm:$0xff]
    %v738 = vld [vmem:[%s3 + $0x940] sm:$0xff]
    %v739 = vld [vmem:[%s3 + $0x948] sm:$0xff]
    %v740 = vld [vmem:[%s3 + $0x950] sm:$0xff]
    %v741 = vld [vmem:[%s3 + $0x958] sm:$0xff]
    %v742 = vld [vmem:[%s3 + $0x960] sm:$0xff]
    %v743 = vld [vmem:[%s3 + $0x968] sm:$0xff]
    %v744 = vld [vmem:[%s3 + $0x970] sm:$0xff]
    %v745 = vld [vmem:[%s3 + $0x978] sm:$0xff]
    %v746 = vld [vmem:[%s3 + $0x980] sm:$0xff]
    %v747 = vld [vmem:[%s3 + $0x988] sm:$0xff]
    %v748 = vld [vmem:[%s3 + $0x990] sm:$0xff]
    %v749 = vld [vmem:[%s3 + $0x998] sm:$0xff]
    %v750 = vld [vmem:[%s3 + $0x9a0] sm:$0xff]
    %v751 = vld [vmem:[%s3 + $0x9a8] sm:$0xff]
    %v752 = vld [vmem:[%s3 + $0x9b0] sm:$0xff]
    %v753 = vld [vmem:[%s3 + $0x9b8] sm:$0xff]
    %v754 = vld [vmem:[%s3 + $0x9c0] sm:$0xff]
    %v755 = vld [vmem:[%s3 + $0x9c8] sm:$0xff]
    %v756 = vld [vmem:[%s3 + $0x9d0] sm:$0xff]
    %v757 = vld [vmem:[%s3 + $0x9d8] sm:$0xff]
    %v758 = vld [vmem:[%s3 + $0x9e0] sm:$0xff]
    %v759 = vld [vmem:[%s3 + $0x9e8] sm:$0xff]
    %v760 = vld [vmem:[%s3 + $0x9f0] sm:$0xff]
    %v761 = vld [vmem:[%s3 + $0x9f8] sm:$0xff]
    %v762 = vld [vmem:[%s3 + $0xa00] sm:$0xff]
    %v763 = vld [vmem:[%s3 + $0xa08] sm:$0xff]
    %v764 = vld [vmem:[%s3 + $0xa10] sm:$0xff]
    %v765 = vld [vmem:[%s3 + $0xa18] sm:$0xff]
    %v766 = vld [vmem:[%s3 + $0xa20] sm:$0xff]
    %v767 = vld [vmem:[%s3 + $0xa28] sm:$0xff]
    %v768 = vld [vmem:[%s3 + $0xa30] sm:$0xff]
    %v769 = vld [vmem:[%s3 + $0xa38] sm:$0xff]
    %v770 = vld [vmem:[%s3 + $0xa40] sm:$0xff]
    %v771 = vld [vmem:[%s3 + $0xa48] sm:$0xff]
    %v772 = vld [vmem:[%s3 + $0xa50] sm:$0xff]
    %v773 = vld [vmem:[%s3 + $0xa58] sm:$0xff]
    %v774 = vld [vmem:[%s3 + $0xa60] sm:$0xff]
    %v775 = vld [vmem:[%s3 + $0xa68] sm:$0xff]
    %v776 = vld [vmem:[%s3 + $0xa70] sm:$0xff]
    %v777 = vld [vmem:[%s3 + $0xa78] sm:$0xff]
    %v778 = vld [vmem:[%s3 + $0xa80] sm:$0xff]
    %v779 = vld [vmem:[%s3 + $0xa88] sm:$0xff]
    %v780 = vld [vmem:[%s3 + $0xa90] sm:$0xff]
    %v781 = vld [vmem:[%s3 + $0xa98] sm:$0xff]
    %v782 = vld [vmem:[%s3 + $0xaa0] sm:$0xff]
    %v783 = vld [vmem:[%s3 + $0xaa8] sm:$0xff]
    %v784 = vld [vmem:[%s3 + $0xab0] sm:$0xff]
    %v785 = vld [vmem:[%s3 + $0xab8] sm:$0xff]
    %v786 = vld [vmem:[%s3 + $0xac0] sm:$0xff]
    %v787 = vld [vmem:[%s3 + $0xac8] sm:$0xff]
    %v788 = vld [vmem:[%s3 + $0xad0] sm:$0xff]
    %v789 = vld [vmem:[%s3 + $0xad8] sm:$0xff]
    %v790 = vld [vmem:[%s3 + $0xae0] sm:$0xff]
    %v791 = vld [vmem:[%s3 + $0xae8] sm:$0xff]
    %v792 = vld [vmem:[%s3 + $0xaf0] sm:$0xff]
    %v793 = vld [vmem:[%s3 + $0xaf8] sm:$0xff]
    %v794 = vld [vmem:[%s3 + $0xb00] sm:$0xff]
    %v795 = vld [vmem:[%s3 + $0xb08] sm:$0xff]
    %v796 = vld [vmem:[%s3 + $0xb10] sm:$0xff]
    %v797 = vld [vmem:[%s3 + $0xb18] sm:$0xff]
    %v798 = vld [vmem:[%s3 + $0xb20] sm:$0xff]
    %v799 = vld [vmem:[%s3 + $0xb28] sm:$0xff]
    %v800 = vld [vmem:[%s3 + $0xb30] sm:$0xff]
    %v801 = vld [vmem:[%s3 + $0xb38] sm:$0xff]
    %v802 = vld [vmem:[%s3 + $0xb40] sm:$0xff]
    %v803 = vld [vmem:[%s3 + $0xb48] sm:$0xff]
    %v804 = vld [vmem:[%s3 + $0xb50] sm:$0xff]
    %v805 = vld [vmem:[%s3 + $0xb58] sm:$0xff]
    %v806 = vld [vmem:[%s3 + $0xb60] sm:$0xff]
    %v807 = vld [vmem:[%s3 + $0xb68] sm:$0xff]
    %v808 = vld [vmem:[%s3 + $0xb70] sm:$0xff]
    %v809 = vld [vmem:[%s3 + $0xb78] sm:$0xff]
    %v810 = vld [vmem:[%s3 + $0xb80] sm:$0xff]
    %v811 = vld [vmem:[%s3 + $0xb88] sm:$0xff]
    %v812 = vld [vmem:[%s3 + $0xb90] sm:$0xff]
    %v813 = vld [vmem:[%s3 + $0xb98] sm:$0xff]
    %v814 = vld [vmem:[%s3 + $0xba0] sm:$0xff]
    %v815 = vld [vmem:[%s3 + $0xba8] sm:$0xff]
    %v816 = vld [vmem:[%s3 + $0xbb0] sm:$0xff]
    %v817 = vld [vmem:[%s3 + $0xbb8] sm:$0xff]
    %v818 = vld [vmem:[%s3 + $0xbc0] sm:$0xff]
    %v819 = vld [vmem:[%s3 + $0xbc8] sm:$0xff]
    %v820 = vld [vmem:[%s3 + $0xbd0] sm:$0xff]
    %v821 = vld [vmem:[%s3 + $0xbd8] sm:$0xff]
    %v822 = vld [vmem:[%s3 + $0xbe0] sm:$0xff]
    %v823 = vld [vmem:[%s3 + $0xbe8] sm:$0xff]
    %v824 = vld [vmem:[%s3 + $0xbf0] sm:$0xff]
    %v825 = vld [vmem:[%s3 + $0xbf8] sm:$0xff]
    %v826 = vld [vmem:[%s3 + $0xc00] sm:$0xff]
    %v827 = vld [vmem:[%s3 + $0xc08] sm:$0xff]
    %v828 = vld [vmem:[%s3 + $0xc10] sm:$0xff]
    %v829 = vld [vmem:[%s3 + $0xc18] sm:$0xff]
    %v830 = vld [vmem:[%s3 + $0xc20] sm:$0xff]
    %v831 = vld [vmem:[%s3 + $0xc28] sm:$0xff]
    %v832 = vld [vmem:[%s3 + $0xc30] sm:$0xff]
    %v833 = vld [vmem:[%s3 + $0xc38] sm:$0xff]
    %v834 = vld [vmem:[%s3 + $0xc40] sm:$0xff]
    %v835 = vld [vmem:[%s3 + $0xc48] sm:$0xff]
    %v836 = vld [vmem:[%s3 + $0xc50] sm:$0xff]
    %v837 = vld [vmem:[%s3 + $0xc58] sm:$0xff]
    %v838 = vld [vmem:[%s3 + $0xc60] sm:$0xff]
    %v839 = vld [vmem:[%s3 + $0xc68] sm:$0xff]
    %v840 = vld [vmem:[%s3 + $0xc70] sm:$0xff]
    %v841 = vld [vmem:[%s3 + $0xc78] sm:$0xff]
    %v842 = vld [vmem:[%s3 + $0xc80] sm:$0xff]
    %v843 = vld [vmem:[%s3 + $0xc88] sm:$0xff]
    %v844 = vld [vmem:[%s3 + $0xc90] sm:$0xff]
    %v845 = vld [vmem:[%s3 + $0xc98] sm:$0xff]
    %v846 = vld [vmem:[%s3 + $0xca0] sm:$0xff]
    %v847 = vld [vmem:[%s3 + $0xca8] sm:$0xff]
    %v848 = vld [vmem:[%s3 + $0xcb0] sm:$0xff]
    %v849 = vld [vmem:[%s3 + $0xcb8] sm:$0xff]
    %v850 = vld [vmem:[%s3 + $0xcc0] sm:$0xff]
    %v851 = vld [vmem:[%s3 + $0xcc8] sm:$0xff]
    %v852 = vld [vmem:[%s3 + $0xcd0] sm:$0xff]
    %v853 = vld [vmem:[%s3 + $0xcd8] sm:$0xff]
    %v854 = vld [vmem:[%s3 + $0xce0] sm:$0xff]
    %v855 = vld [vmem:[%s3 + $0xce8] sm:$0xff]
    %v856 = vld [vmem:[%s3 + $0xcf0] sm:$0xff]
    %v857 = vld [vmem:[%s3 + $0xcf8] sm:$0xff]
    %v858 = vld [vmem:[%s3 + $0xd00] sm:$0xff]
    %v859 = vld [vmem:[%s3 + $0xd08] sm:$0xff]
    %v860 = vld [vmem:[%s3 + $0xd10] sm:$0xff]
    %v861 = vld [vmem:[%s3 + $0xd18] sm:$0xff]
    %v862 = vld [vmem:[%s3 + $0xd20] sm:$0xff]
    %v863 = vld [vmem:[%s3 + $0xd28] sm:$0xff]
    %v864 = vld [vmem:[%s3 + $0xd30] sm:$0xff]
    %v865 = vld [vmem:[%s3 + $0xd38] sm:$0xff]
    %v866 = vld [vmem:[%s3 + $0xd40] sm:$0xff]
    %v867 = vld [vmem:[%s3 + $0xd48] sm:$0xff]
    %v868 = vld [vmem:[%s3 + $0xd50] sm:$0xff]
    %v869 = vld [vmem:[%s3 + $0xd58] sm:$0xff]
    %v870 = vld [vmem:[%s3 + $0xd60] sm:$0xff]
    %v871 = vld [vmem:[%s3 + $0xd68] sm:$0xff]
    %v872 = vld [vmem:[%s3 + $0xd70] sm:$0xff]
    %v873 = vld [vmem:[%s3 + $0xd78] sm:$0xff]
    %v874 = vld [vmem:[%s3 + $0xd80] sm:$0xff]
    %v875 = vld [vmem:[%s3 + $0xd88] sm:$0xff]
    %v876 = vld [vmem:[%s3 + $0xd90] sm:$0xff]
    %v877 = vld [vmem:[%s3 + $0xd98] sm:$0xff]
    %v878 = vld [vmem:[%s3 + $0xda0] sm:$0xff]
    %v879 = vld [vmem:[%s3 + $0xda8] sm:$0xff]
    %v880 = vld [vmem:[%s3 + $0xdb0] sm:$0xff]
    %v881 = vld [vmem:[%s3 + $0xdb8] sm:$0xff]
    %v882 = vld [vmem:[%s3 + $0xdc0] sm:$0xff]
    %v883 = vld [vmem:[%s3 + $0xdc8] sm:$0xff]
    %v884 = vld [vmem:[%s3 + $0xdd0] sm:$0xff]
    %v885 = vld [vmem:[%s3 + $0xdd8] sm:$0xff]
    %v886 = vld [vmem:[%s3 + $0xde0] sm:$0xff]
    %v887 = vld [vmem:[%s3 + $0xde8] sm:$0xff]
    %v888 = vld [vmem:[%s3 + $0xdf0] sm:$0xff]
    %v889 = vld [vmem:[%s3 + $0xdf8] sm:$0xff]
    %v890 = vld [vmem:[%s3 + $0xe00] sm:$0xff]
    %v891 = vld [vmem:[%s3 + $0xe08] sm:$0xff]
    %v892 = vld [vmem:[%s3 + $0xe10] sm:$0xff]
    %v893 = vld [vmem:[%s3 + $0xe18] sm:$0xff]
    %v894 = vld [vmem:[%s3 + $0xe20] sm:$0xff]
    %v895 = vld [vmem:[%s3 + $0xe28] sm:$0xff]
    %v896 = vld [vmem:[%s3 + $0xe30] sm:$0xff]
    %v897 = vld [vmem:[%s3 + $0xe38] sm:$0xff]
    %v898 = vld [vmem:[%s3 + $0xe40] sm:$0xff]
    %v899 = vld [vmem:[%s3 + $0xe48] sm:$0xff]
    %v900 = vld [vmem:[%s3 + $0xe50] sm:$0xff]
    %v901 = vld [vmem:[%s3 + $0xe58] sm:$0xff]
    %v902 = vld [vmem:[%s3 + $0xe60] sm:$0xff]
    %v903 = vld [vmem:[%s3 + $0xe68] sm:$0xff]
    %v904 = vld [vmem:[%s3 + $0xe70] sm:$0xff]
    %v905 = vld [vmem:[%s3 + $0xe78] sm:$0xff]
    %v906 = vld [vmem:[%s3 + $0xe80] sm:$0xff]
    %v907 = vld [vmem:[%s3 + $0xe88] sm:$0xff]
    %v908 = vld [vmem:[%s3 + $0xe90] sm:$0xff]
    %v909 = vld [vmem:[%s3 + $0xe98] sm:$0xff]
    %v910 = vld [vmem:[%s3 + $0xea0] sm:$0xff]
    %v911 = vld [vmem:[%s3 + $0xea8] sm:$0xff]
    %v912 = vld [vmem:[%s3 + $0xeb0] sm:$0xff]
    %v913 = vld [vmem:[%s3 + $0xeb8] sm:$0xff]
    %v914 = vld [vmem:[%s3 + $0xec0] sm:$0xff]
    %v915 = vld [vmem:[%s3 + $0xec8] sm:$0xff]
    %v916 = vld [vmem:[%s3 + $0xed0] sm:$0xff]
    %v917 = vld [vmem:[%s3 + $0xed8] sm:$0xff]
    %v918 = vld [vmem:[%s3 + $0xee0] sm:$0xff]
    %v919 = vld [vmem:[%s3 + $0xee8] sm:$0xff]
    %v920 = vld [vmem:[%s3 + $0xef0] sm:$0xff]
    %v921 = vld [vmem:[%s3 + $0xef8] sm:$0xff]
    %v922 = vld [vmem:[%s3 + $0xf00] sm:$0xff]
    %v923 = vld [vmem:[%s3 + $0xf08] sm:$0xff]
    %v924 = vld [vmem:[%s3 + $0xf10] sm:$0xff]
    %v925 = vld [vmem:[%s3 + $0xf18] sm:$0xff]
    %v926 = vld [vmem:[%s3 + $0xf20] sm:$0xff]
    %v927 = vld [vmem:[%s3 + $0xf28] sm:$0xff]
    %v928 = vld [vmem:[%s3 + $0xf30] sm:$0xff]
    %v929 = vld [vmem:[%s3 + $0xf38] sm:$0xff]
    %v930 = vld [vmem:[%s3 + $0xf40] sm:$0xff]
    %v931 = vld [vmem:[%s3 + $0xf48] sm:$0xff]
    %v932 = vld [vmem:[%s3 + $0xf50] sm:$0xff]
    %v933 = vld [vmem:[%s3 + $0xf58] sm:$0xff]
    %v934 = vld [vmem:[%s3 + $0xf60] sm:$0xff]
    %v935 = vld [vmem:[%s3 + $0xf68] sm:$0xff]
    %v936 = vld [vmem:[%s3 + $0xf70] sm:$0xff]
    %v937 = vld [vmem:[%s3 + $0xf78] sm:$0xff]
    %v938 = vld [vmem:[%s3 + $0xf80] sm:$0xff]
    %v939 = vld [vmem:[%s3 + $0xf88] sm:$0xff]
    %v940 = vld [vmem:[%s3 + $0xf90] sm:$0xff]
    %v941 = vld [vmem:[%s3 + $0xf98] sm:$0xff]
    %v942 = vld [vmem:[%s3 + $0xfa0] sm:$0xff]
    %v943 = vld [vmem:[%s3 + $0xfa8] sm:$0xff]
    %v944 = vld [vmem:[%s3 + $0xfb0] sm:$0xff]
    %v945 = vld [vmem:[%s3 + $0xfb8] sm:$0xff]
    %v946 = vld [vmem:[%s3 + $0xfc0] sm:$0xff]
    %v947 = vld [vmem:[%s3 + $0xfc8] sm:$0xff]
    %v948 = vld [vmem:[%s3 + $0xfd0] sm:$0xff]
    %v949 = vld [vmem:[%s3 + $0xfd8] sm:$0xff]
    %v950 = vld [vmem:[%s3 + $0xfe0] sm:$0xff]
    %v951 = vld [vmem:[%s3 + $0xfe8] sm:$0xff]
    %v952 = vld [vmem:[%s3 + $0xff0] sm:$0xff]
    %v953 = vld [vmem:[%s3 + $0xff8] sm:$0xff]
    %v954 = vld [vmem:[%s3 + $0x1000] sm:$0xff]
    %v955 = vld [vmem:[%s3 + $0x1008] sm:$0xff]
    %v956 = vld [vmem:[%s3 + $0x1010] sm:$0xff]
    %v957 = vld [vmem:[%s3 + $0x1018] sm:$0xff]
    %v958 = vld [vmem:[%s3 + $0x1020] sm:$0xff]
    %v959 = vld [vmem:[%s3 + $0x1028] sm:$0xff]
    %v960 = vld [vmem:[%s3 + $0x1030] sm:$0xff]
    %v961 = vld [vmem:[%s3 + $0x1038] sm:$0xff]
    %v962 = vld [vmem:[%s3 + $0x1040] sm:$0xff]
    %v963 = vld [vmem:[%s3 + $0x1048] sm:$0xff]
    %v964 = vld [vmem:[%s3 + $0x1050] sm:$0xff]
    %v965 = vld [vmem:[%s3 + $0x1058] sm:$0xff]
    %v966 = vld [vmem:[%s3 + $0x1060] sm:$0xff]
    %v967 = vld [vmem:[%s3 + $0x1068] sm:$0xff]
    %v968 = vld [vmem:[%s3 + $0x1070] sm:$0xff]
    %v969 = vld [vmem:[%s3 + $0x1078] sm:$0xff]
    %v970 = vld [vmem:[%s3 + $0x1080] sm:$0xff]
    %v971 = vld [vmem:[%s3 + $0x1088] sm:$0xff]
    %v972 = vld [vmem:[%s3 + $0x1090] sm:$0xff]
    %v973 = vld [vmem:[%s3 + $0x1098] sm:$0xff]
    %v974 = vld [vmem:[%s3 + $0x10a0] sm:$0xff]
    %v975 = vld [vmem:[%s3 + $0x10a8] sm:$0xff]
    %v976 = vld [vmem:[%s3 + $0x10b0] sm:$0xff]
    %v977 = vld [vmem:[%s3 + $0x10b8] sm:$0xff]
    %v978 = vld [vmem:[%s3 + $0x10c0] sm:$0xff]
    %v979 = vld [vmem:[%s3 + $0x10c8] sm:$0xff]
    %v980 = vld [vmem:[%s3 + $0x10d0] sm:$0xff]
    %v981 = vld [vmem:[%s3 + $0x10d8] sm:$0xff]
    %v982 = vld [vmem:[%s3 + $0x10e0] sm:$0xff]
    %v983 = vld [vmem:[%s3 + $0x10e8] sm:$0xff]
    %v984 = vld [vmem:[%s3 + $0x10f0] sm:$0xff]
    %v985 = vld [vmem:[%s3 + $0x10f8] sm:$0xff]
    %v986 = vld [vmem:[%s3 + $0x1100] sm:$0xff]
    %v987 = vld [vmem:[%s3 + $0x1108] sm:$0xff]
    %v988 = vld [vmem:[%s3 + $0x1110] sm:$0xff]
    %v989 = vld [vmem:[%s3 + $0x1118] sm:$0xff]
    %v990 = vld [vmem:[%s3 + $0x1120] sm:$0xff]
    %v991 = vld [vmem:[%s3 + $0x1128] sm:$0xff]
    %v992 = vld [vmem:[%s3 + $0x1130] sm:$0xff]
    %v993 = vld [vmem:[%s3 + $0x1138] sm:$0xff]
    %v994 = vld [vmem:[%s3 + $0x1140] sm:$0xff]
    %v995 = vld [vmem:[%s3 + $0x1148] sm:$0xff]
    %v996 = vld [vmem:[%s3 + $0x1150] sm:$0xff]
    %v997 = vld [vmem:[%s3 + $0x1158] sm:$0xff]
    %v998 = vld [vmem:[%s3 + $0x1160] sm:$0xff]
    %v999 = vld [vmem:[%s3 + $0x1168] sm:$0xff]
    %v1000 = vld [vmem:[%s3 + $0x1170] sm:$0xff]
    %v1001 = vld [vmem:[%s3 + $0x1178] sm:$0xff]
    %v1002 = vld [vmem:[%s3 + $0x1180] sm:$0xff]
    %v1003 = vld [vmem:[%s3 + $0x1188] sm:$0xff]
    %v1004 = vld [vmem:[%s3 + $0x1190] sm:$0xff]
    %v1005 = vld [vmem:[%s3 + $0x1198] sm:$0xff]
    %v1006 = vld [vmem:[%s3 + $0x11a0] sm:$0xff]
    %v1007 = vld [vmem:[%s3 + $0x11a8] sm:$0xff]
    %v1008 = vld [vmem:[%s3 + $0x11b0] sm:$0xff]
    %v1009 = vld [vmem:[%s3 + $0x11b8] sm:$0xff]
    %v1010 = vld [vmem:[%s3 + $0x11c0] sm:$0xff]
    %v1011 = vld [vmem:[%s3 + $0x11c8] sm:$0xff]
    %v1012 = vld [vmem:[%s3 + $0x11d0] sm:$0xff]
    %v1013 = vld [vmem:[%s3 + $0x11d8] sm:$0xff]
    %v1014 = vld [vmem:[%s3 + $0x11e0] sm:$0xff]
    %v1015 = vld [vmem:[%s3 + $0x11e8] sm:$0xff]
    %v1016 = vld [vmem:[%s3 + $0x11f0] sm:$0xff]
    %v1017 = vld [vmem:[%s3 + $0x11f8] sm:$0xff]
    %v1018 = vld [vmem:[%s3 + $0x1200] sm:$0xff]
    %v1019 = vld [vmem:[%s3 + $0x1208] sm:$0xff]
    %v1020 = vld [vmem:[%s3 + $0x1210] sm:$0xff]
    %v1021 = vld [vmem:[%s3 + $0x1218] sm:$0xff]
    %v1022 = vld [vmem:[%s3 + $0x1220] sm:$0xff]
    %v1023 = vld [vmem:[%s3 + $0x1228] sm:$0xff]
    %v1024 = vld [vmem:[%s3 + $0x1230] sm:$0xff]
    %v1025 = vld [vmem:[%s3 + $0x1238] sm:$0xff]
    %v1026 = vld [vmem:[%s3 + $0x1240] sm:$0xff]
    %v1027 = vld [vmem:[%s3 + $0x1248] sm:$0xff]
    %v1028 = vld [vmem:[%s3 + $0x1250] sm:$0xff]
    %v1029 = vld [vmem:[%s3 + $0x1258] sm:$0xff]
    %v1030 = vld [vmem:[%s3 + $0x1260] sm:$0xff]
    %v1031 = vld [vmem:[%s3 + $0x1268] sm:$0xff]
    %v1032 = vld [vmem:[%s3 + $0x1270] sm:$0xff]
    %v1033 = vld [vmem:[%s3 + $0x1278] sm:$0xff]
    %v1034 = vld [vmem:[%s3 + $0x1280] sm:$0xff]
    %v1035 = vld [vmem:[%s3 + $0x1288] sm:$0xff]
    %v1036 = vld [vmem:[%s3 + $0x1290] sm:$0xff]
    %v1037 = vld [vmem:[%s3 + $0x1298] sm:$0xff]
    %v1038 = vld [vmem:[%s3 + $0x12a0] sm:$0xff]
    %v1039 = vld [vmem:[%s3 + $0x12a8] sm:$0xff]
    %v1040 = vld [vmem:[%s3 + $0x12b0] sm:$0xff]
    %v1041 = vld [vmem:[%s3 + $0x12b8] sm:$0xff]
    %v1042 = vld [vmem:[%s3 + $0x12c0] sm:$0xff]
    %v1043 = vld [vmem:[%s3 + $0x12c8] sm:$0xff]
    %v1044 = vld [vmem:[%s3 + $0x12d0] sm:$0xff]
    %v1045 = vld [vmem:[%s3 + $0x12d8] sm:$0xff]
    %v1046 = vld [vmem:[%s3 + $0x12e0] sm:$0xff]
    %v1047 = vld [vmem:[%s3 + $0x12e8] sm:$0xff]
    %v1048 = vld [vmem:[%s3 + $0x12f0] sm:$0xff]
    %v1049 = vld [vmem:[%s3 + $0x12f8] sm:$0xff]
    %v1050 = vld [vmem:[%s3 + $0x1300] sm:$0xff]
    %v1051 = vld [vmem:[%s3 + $0x1308] sm:$0xff]
    %v1052 = vld [vmem:[%s3 + $0x1310] sm:$0xff]
    %v1053 = vld [vmem:[%s3 + $0x1318] sm:$0xff]
    %v1054 = vld [vmem:[%s3 + $0x1320] sm:$0xff]
    %v1055 = vld [vmem:[%s3 + $0x1328] sm:$0xff]
    %v1056 = vld [vmem:[%s3 + $0x1330] sm:$0xff]
    %v1057 = vld [vmem:[%s3 + $0x1338] sm:$0xff]
    %v1058 = vld [vmem:[%s3 + $0x1340] sm:$0xff]
    %v1059 = vld [vmem:[%s3 + $0x1348] sm:$0xff]
    %v1060 = vld [vmem:[%s3 + $0x1350] sm:$0xff]
    %v1061 = vld [vmem:[%s3 + $0x1358] sm:$0xff]
    %v1062 = vld [vmem:[%s3 + $0x1360] sm:$0xff]
    %v1063 = vld [vmem:[%s3 + $0x1368] sm:$0xff]
    %v1064 = vld [vmem:[%s3 + $0x1370] sm:$0xff]
    %v1065 = vld [vmem:[%s3 + $0x1378] sm:$0xff]
    %v1066 = vld [vmem:[%s3 + $0x1380] sm:$0xff]
    %v1067 = vld [vmem:[%s3 + $0x1388] sm:$0xff]
    %v1068 = vld [vmem:[%s3 + $0x1390] sm:$0xff]
    %v1069 = vld [vmem:[%s3 + $0x1398] sm:$0xff]
    %v1070 = vld [vmem:[%s3 + $0x13a0] sm:$0xff]
    %v1071 = vld [vmem:[%s3 + $0x13a8] sm:$0xff]
    %v1072 = vld [vmem:[%s3 + $0x13b0] sm:$0xff]
    %v1073 = vld [vmem:[%s3 + $0x13b8] sm:$0xff]
    %v1074 = vld [vmem:[%s3 + $0x13c0] sm:$0xff]
    %v1075 = vld [vmem:[%s3 + $0x13c8] sm:$0xff]
    %v1076 = vld [vmem:[%s3 + $0x13d0] sm:$0xff]
    %v1077 = vld [vmem:[%s3 + $0x13d8] sm:$0xff]
    %v1078 = vld [vmem:[%s3 + $0x13e0] sm:$0xff]
    %v1079 = vld [vmem:[%s3 + $0x13e8] sm:$0xff]
    %v1080 = vld [vmem:[%s3 + $0x13f0] sm:$0xff]
    %v1081 = vld [vmem:[%s3 + $0x13f8] sm:$0xff]
    %v1082 = vld [vmem:[%s3 + $0x1400] sm:$0xff]
    %v1083 = vld [vmem:[%s3 + $0x1408] sm:$0xff]
    %v1084 = vld [vmem:[%s3 + $0x1410] sm:$0xff]
    %v1085 = vld [vmem:[%s3 + $0x1418] sm:$0xff]
    %v1086 = vld [vmem:[%s3 + $0x1420] sm:$0xff]
    %v1087 = vld [vmem:[%s3 + $0x1428] sm:$0xff]
    %v1088 = vld [vmem:[%s3 + $0x1430] sm:$0xff]
    %v1089 = vld [vmem:[%s3 + $0x1438] sm:$0xff]
    %v1090 = vld [vmem:[%s3 + $0x1440] sm:$0xff]
    %v1091 = vld [vmem:[%s3 + $0x1448] sm:$0xff]
    %v1092 = vld [vmem:[%s3 + $0x1450] sm:$0xff]
    %v1093 = vld [vmem:[%s3 + $0x1458] sm:$0xff]
    %v1094 = vld [vmem:[%s3 + $0x1460] sm:$0xff]
    %v1095 = vld [vmem:[%s3 + $0x1468] sm:$0xff]
    %v1096 = vld [vmem:[%s3 + $0x1470] sm:$0xff]
    %v1097 = vld [vmem:[%s3 + $0x1478] sm:$0xff]
    %v1098 = vld [vmem:[%s3 + $0x1480] sm:$0xff]
    %v1099 = vld [vmem:[%s3 + $0x1488] sm:$0xff]
    %v1100 = vld [vmem:[%s3 + $0x1490] sm:$0xff]
    %v1101 = vld [vmem:[%s3 + $0x1498] sm:$0xff]
    %v1102 = vld [vmem:[%s3 + $0x14a0] sm:$0xff]
    %v1103 = vld [vmem:[%s3 + $0x14a8] sm:$0xff]
    %v1104 = vld [vmem:[%s3 + $0x14b0] sm:$0xff]
    %v1105 = vld [vmem:[%s3 + $0x14b8] sm:$0xff]
    %v1106 = vld [vmem:[%s3 + $0x14c0] sm:$0xff]
    %v1107 = vld [vmem:[%s3 + $0x14c8] sm:$0xff]
    %v1108 = vld [vmem:[%s3 + $0x14d0] sm:$0xff]
    %v1109 = vld [vmem:[%s3 + $0x14d8] sm:$0xff]
    %v1110 = vld [vmem:[%s3 + $0x14e0] sm:$0xff]
    %v1111 = vld [vmem:[%s3 + $0x14e8] sm:$0xff]
    %v1112 = vld [vmem:[%s3 + $0x14f0] sm:$0xff]
    %v1113 = vld [vmem:[%s3 + $0x14f8] sm:$0xff]
    %v1114 = vld [vmem:[%s3 + $0x1500] sm:$0xff]
    %v1115 = vld [vmem:[%s3 + $0x1508] sm:$0xff]
    %v1116 = vld [vmem:[%s3 + $0x1510] sm:$0xff]
    %v1117 = vld [vmem:[%s3 + $0x1518] sm:$0xff]
    %v1118 = vld [vmem:[%s3 + $0x1520] sm:$0xff]
    %v1119 = vld [vmem:[%s3 + $0x1528] sm:$0xff]
    %v1120 = vld [vmem:[%s3 + $0x1530] sm:$0xff]
    %v1121 = vld [vmem:[%s3 + $0x1538] sm:$0xff]
    %v1122 = vld [vmem:[%s3 + $0x1540] sm:$0xff]
    %v1123 = vld [vmem:[%s3 + $0x1548] sm:$0xff]
    %v1124 = vld [vmem:[%s3 + $0x1550] sm:$0xff]
    %v1125 = vld [vmem:[%s3 + $0x1558] sm:$0xff]
    %v1126 = vld [vmem:[%s3 + $0x1560] sm:$0xff]
    %v1127 = vld [vmem:[%s3 + $0x1568] sm:$0xff]
    %v1128 = vld [vmem:[%s3 + $0x1570] sm:$0xff]
    %v1129 = vld [vmem:[%s3 + $0x1578] sm:$0xff]
    %v1130 = vld [vmem:[%s3 + $0x1580] sm:$0xff]
    %v1131 = vld [vmem:[%s3 + $0x1588] sm:$0xff]
    %v1132 = vld [vmem:[%s3 + $0x1590] sm:$0xff]
    %v1133 = vld [vmem:[%s3 + $0x1598] sm:$0xff]
    %v1134 = vld [vmem:[%s3 + $0x15a0] sm:$0xff]
    %v1135 = vld [vmem:[%s3 + $0x15a8] sm:$0xff]
    %v1136 = vld [vmem:[%s3 + $0x15b0] sm:$0xff]
    %v1137 = vld [vmem:[%s3 + $0x15b8] sm:$0xff]
    %v1138 = vld [vmem:[%s3 + $0x15c0] sm:$0xff]
    %v1139 = vld [vmem:[%s3 + $0x15c8] sm:$0xff]
    %v1140 = vld [vmem:[%s3 + $0x15d0] sm:$0xff]
    %v1141 = vld [vmem:[%s3 + $0x15d8] sm:$0xff]
    %v1142 = vld [vmem:[%s3 + $0x15e0] sm:$0xff]
    %v1143 = vld [vmem:[%s3 + $0x15e8] sm:$0xff]
    %v1144 = vld [vmem:[%s3 + $0x15f0] sm:$0xff]
    %v1145 = vld [vmem:[%s3 + $0x15f8] sm:$0xff]
    %v1146 = vld [vmem:[%s3 + $0x1600] sm:$0xff]
    %v1147 = vld [vmem:[%s3 + $0x1608] sm:$0xff]
    %v1148 = vld [vmem:[%s3 + $0x1610] sm:$0xff]
    %v1149 = vld [vmem:[%s3 + $0x1618] sm:$0xff]
    %v1150 = vld [vmem:[%s3 + $0x1620] sm:$0xff]
    %v1151 = vld [vmem:[%s3 + $0x1628] sm:$0xff]
    %v1152 = vld [vmem:[%s3 + $0x1630] sm:$0xff]
    %v1153 = vld [vmem:[%s3 + $0x1638] sm:$0xff]
    %v1154 = vld [vmem:[%s3 + $0x1640] sm:$0xff]
    %v1155 = vld [vmem:[%s3 + $0x1648] sm:$0xff]
    %v1156 = vld [vmem:[%s3 + $0x1650] sm:$0xff]
    %v1157 = vld [vmem:[%s3 + $0x1658] sm:$0xff]
    %v1158 = vld [vmem:[%s3 + $0x1660] sm:$0xff]
    %v1159 = vld [vmem:[%s3 + $0x1668] sm:$0xff]
    %v1160 = vld [vmem:[%s3 + $0x1670] sm:$0xff]
    %v1161 = vld [vmem:[%s3 + $0x1678] sm:$0xff]
    %v1162 = vld [vmem:[%s3 + $0x1680] sm:$0xff]
    %v1163 = vld [vmem:[%s3 + $0x1688] sm:$0xff]
    %v1164 = vld [vmem:[%s3 + $0x1690] sm:$0xff]
    %v1165 = vld [vmem:[%s3 + $0x1698] sm:$0xff]
    %v1166 = vld [vmem:[%s3 + $0x16a0] sm:$0xff]
    %v1167 = vld [vmem:[%s3 + $0x16a8] sm:$0xff]
    %v1168 = vld [vmem:[%s3 + $0x16b0] sm:$0xff]
    %v1169 = vld [vmem:[%s3 + $0x16b8] sm:$0xff]
    %v1170 = vld [vmem:[%s3 + $0x16c0] sm:$0xff]
    %v1171 = vld [vmem:[%s3 + $0x16c8] sm:$0xff]
    %v1172 = vld [vmem:[%s3 + $0x16d0] sm:$0xff]
    %v1173 = vld [vmem:[%s3 + $0x16d8] sm:$0xff]
    %v1174 = vld [vmem:[%s3 + $0x16e0] sm:$0xff]
    %v1175 = vld [vmem:[%s3 + $0x16e8] sm:$0xff]
    %v1176 = vld [vmem:[%s3 + $0x16f0] sm:$0xff]
    %v1177 = vld [vmem:[%s3 + $0x16f8] sm:$0xff]
    %v1178 = vld [vmem:[%s3 + $0x1700] sm:$0xff]
    %v1179 = vld [vmem:[%s3 + $0x1708] sm:$0xff]
    %v1180 = vld [vmem:[%s3 + $0x1710] sm:$0xff]
    %v1181 = vld [vmem:[%s3 + $0x1718] sm:$0xff]
    %v1182 = vld [vmem:[%s3 + $0x1720] sm:$0xff]
    %v1183 = vld [vmem:[%s3 + $0x1728] sm:$0xff]
    %v1184 = vld [vmem:[%s3 + $0x1730] sm:$0xff]
    %v1185 = vld [vmem:[%s3 + $0x1738] sm:$0xff]
    %v1186 = vld [vmem:[%s3 + $0x1740] sm:$0xff]
    %v1187 = vld [vmem:[%s3 + $0x1748] sm:$0xff]
    %v1188 = vld [vmem:[%s3 + $0x1750] sm:$0xff]
    %v1189 = vld [vmem:[%s3 + $0x1758] sm:$0xff]
    %v1190 = vld [vmem:[%s3 + $0x1760] sm:$0xff]
    %v1191 = vld [vmem:[%s3 + $0x1768] sm:$0xff]
    %v1192 = vld [vmem:[%s3 + $0x1770] sm:$0xff]
    %v1193 = vld [vmem:[%s3 + $0x1778] sm:$0xff]
    %v1194 = vld [vmem:[%s3 + $0x1780] sm:$0xff]
    %v1195 = vld [vmem:[%s3 + $0x1788] sm:$0xff]
    %v1196 = vld [vmem:[%s3 + $0x1790] sm:$0xff]
    %v1197 = vld [vmem:[%s3 + $0x1798] sm:$0xff]
    %v1198 = vld [vmem:[%s4] sm:$0x7f]
    %v1200 = vlaneseq
    %v1201 = vshrl.u32 %v1200, 7
    %v1202 = vsub.s32 0, %v1201
    %v1203 = vrot.slane %v1198, %v1202
    %v1204 = vlaneseq
    %v1205 = vshrl.u32 %v1204, 7
    %v1206 = vsub.s32 1, %v1205
    %v1207 = vrot.slane %v1198, %v1206
    %v1208 = vlaneseq
    %v1209 = vshrl.u32 %v1208, 7
    %v1210 = vsub.s32 2, %v1209
    %v1211 = vrot.slane %v1198, %v1210
    %v1212 = vlaneseq
    %v1213 = vshrl.u32 %v1212, 7
    %v1214 = vsub.s32 3, %v1213
    %v1215 = vrot.slane %v1198, %v1214
    %v1216 = vlaneseq
    %v1217 = vshrl.u32 %v1216, 7
    %v1218 = vsub.s32 4, %v1217
    %v1219 = vrot.slane %v1198, %v1218
    %v1220 = vlaneseq
    %v1221 = vshrl.u32 %v1220, 7
    %v1222 = vsub.s32 5, %v1221
    %v1223 = vrot.slane %v1198, %v1222
    %v1224 = vlaneseq
    %v1225 = vshrl.u32 %v1224, 7
    %v1226 = vsub.s32 6, %v1225
    %v1227 = vrot.slane %v1198, %v1226
    %vm1235 = vcmask 785408
    %v1237 = vsel %vm1235, %v441, 0
    %1239 = vmatprep.subr.mxu0 %v443
    %1240 = vmatpush1.msra.mxu0 %v442
    %1241 = vmatprep.subr.mxu0 %v450
    %1242 = vmatpush1.msra.mxu0 %v449
    %1243 = vmatprep.subr.mxu0 %v457
    %1244 = vmatpush1.msra.mxu0 %v456
    %1245 = vmatprep.subr.mxu0 %v464
    %1246 = vmatpush1.msra.mxu0 %v463
    %1247 = vmatprep.subr.mxu0 %v471
    %1248 = vmatpush1.msra.mxu0 %v470
    %1249 = vmatprep.subr.mxu0 %v478
    %1250 = vmatpush1.msra.mxu0 %v477
    %1251 = vmatprep.subr.mxu0 %v485
    %1252 = vmatpush1.msra.mxu0 %v484
    %1253 = vmatprep.subr.mxu0 %v492
    %1254 = vmatpush1.msra.mxu0 %v491
    %1255 = vmatprep.subr.mxu0 %v499
    %1256 = vmatpush1.msra.mxu0 %v498
    %1257 = vmatprep.subr.mxu0 %v506
    %1258 = vmatpush1.msra.mxu0 %v505
    %1259 = vmatprep.subr.mxu0 %v513
    %1260 = vmatpush1.msra.mxu0 %v512
    %1261 = vmatprep.subr.mxu0 %v520
    %1262 = vmatpush1.msra.mxu0 %v519
    %1263 = vmatprep.subr.mxu0 %v527
    %1264 = vmatpush1.msra.mxu0 %v526
    %1265 = vmatprep.subr.mxu0 %v534
    %1266 = vmatpush1.msra.mxu0 %v533
    %1267 = vmatprep.subr.mxu0 %v541
    %1268 = vmatpush1.msra.mxu0 %v540
    %1269 = vmatprep.subr.mxu0 %v548
    %1270 = vmatpush1.msra.mxu0 %v547
    %1271 = vmatprep.subr.mxu0 %v555
    %1272 = vmatpush1.msra.mxu0 %v554
    %1273 = vmatprep.subr.mxu0 %v562
    %1274 = vmatpush1.msra.mxu0 %v561
    %1275 = vmatprep.subr.mxu0 %v569
    %1276 = vmatpush1.msra.mxu0 %v568
    %1277 = vmatprep.subr.mxu0 %v576
    %1278 = vmatpush1.msra.mxu0 %v575
    %1279 = vmatprep.subr.mxu0 %v583
    %1280 = vmatpush1.msra.mxu0 %v582
    %1281 = vmatprep.subr.mxu0 %v590
    %1282 = vmatpush1.msra.mxu0 %v589
    %1283 = vmatprep.subr.mxu0 %v597
    %1284 = vmatpush1.msra.mxu0 %v596
    %1285 = vmatprep.subr.mxu0 %v604
    %1286 = vmatpush1.msra.mxu0 %v603
    %1287 = vmatprep.subr.mxu0 %v611
    %1288 = vmatpush1.msra.mxu0 %v610
    %1289 = vmatprep.subr.mxu0 %v618
    %1290 = vmatpush1.msra.mxu0 %v617
    %1291 = vmatprep.subr.mxu0 %v625
    %1292 = vmatpush1.msra.mxu0 %v624
    %1293 = vmatprep.subr.mxu0 %v632
    %1294 = vmatpush1.msra.mxu0 %v631
    %1295 = vmatprep.subr.mxu0 %v639
    %1296 = vmatpush1.msra.mxu0 %v638
    %1297 = vmatprep.subr.mxu0 %v646
    %1298 = vmatpush1.msra.mxu0 %v645
    %1299 = vmatprep.subr.mxu0 %v653
    %1300 = vmatpush1.msra.mxu0 %v652
    %1301 = vmatprep.subr.mxu0 %v660
    %1302 = vmatpush1.msra.mxu0 %v659
    %1303 = vmatprep.mubr.f32.mxu0 %v436
    %1304 = vmatmul.mubr.f32.gmra.mrb[0].mxu0 %v435
    %v1305 = vpop.f32.mrb[0].mxu0
    %v1306 = vadd.f32 %v1203, %v1305
    %v1307 = vpop.f32.mrb[0].mxu0
    %v1308 = vadd.f32 %v1207, %v1307
    %1309 = vdwg.mxu0
    %1310 = vmatprep.subr.mxu0 %v667
    %1311 = vmatpush1.msra.mxu0 %v666
    %1312 = vmatprep.subr.mxu0 %v674
    %1313 = vmatpush1.msra.mxu0 %v673
    %1314 = vmatprep.subr.mxu0 %v681
    %1315 = vmatpush1.msra.mxu0 %v680
    %1316 = vmatprep.subr.mxu0 %v688
    %1317 = vmatpush1.msra.mxu0 %v687
    %1318 = vmatprep.subr.mxu0 %v695
    %1319 = vmatpush1.msra.mxu0 %v694
    %1320 = vmatprep.subr.mxu0 %v702
    %1321 = vmatpush1.msra.mxu0 %v701
    %1322 = vmatprep.subr.mxu0 %v709
    %1323 = vmatpush1.msra.mxu0 %v708
    %1324 = vmatprep.subr.mxu0 %v716
    %1325 = vmatpush1.msra.mxu0 %v715
    %1326 = vmatprep.subr.mxu0 %v723
    %1327 = vmatpush1.msra.mxu0 %v722
    %1328 = vmatprep.subr.mxu0 %v730
    %1329 = vmatpush1.msra.mxu0 %v729
    %1330 = vmatprep.subr.mxu0 %v737
    %1331 = vmatpush1.msra.mxu0 %v736
    %1332 = vmatprep.subr.mxu0 %v744
    %1333 = vmatpush1.msra.mxu0 %v743
    %1334 = vmatprep.subr.mxu0 %v751
    %1335 = vmatpush1.msra.mxu0 %v750
    %1336 = vmatprep.subr.mxu0 %v758
    %1337 = vmatpush1.msra.mxu0 %v757
    %1338 = vmatprep.subr.mxu0 %v765
    %1339 = vmatpush1.msra.mxu0 %v764
    %1340 = vmatprep.subr.mxu0 %v772
    %1341 = vmatpush1.msra.mxu0 %v771
    %1342 = vmatprep.subr.mxu0 %v779
    %1343 = vmatpush1.msra.mxu0 %v778
    %1344 = vmatprep.subr.mxu0 %v786
    %1345 = vmatpush1.msra.mxu0 %v785
    %1346 = vmatprep.subr.mxu0 %v793
    %1347 = vmatpush1.msra.mxu0 %v792
    %1348 = vmatprep.subr.mxu0 %v800
    %1349 = vmatpush1.msra.mxu0 %v799
    %1350 = vmatprep.subr.mxu0 %v807
    %1351 = vmatpush1.msra.mxu0 %v806
    %1352 = vmatprep.subr.mxu0 %v814
    %1353 = vmatpush1.msra.mxu0 %v813
    %1354 = vmatprep.subr.mxu0 %v821
    %1355 = vmatpush1.msra.mxu0 %v820
    %1356 = vmatprep.subr.mxu0 %v828
    %1357 = vmatpush1.msra.mxu0 %v827
    %1358 = vmatprep.subr.mxu0 %v835
    %1359 = vmatpush1.msra.mxu0 %v834
    %1360 = vmatprep.subr.mxu0 %v842
    %1361 = vmatpush1.msra.mxu0 %v841
    %1362 = vmatprep.subr.mxu0 %v849
    %1363 = vmatpush1.msra.mxu0 %v848
    %1364 = vmatprep.subr.mxu0 %v856
    %1365 = vmatpush1.msra.mxu0 %v855
    %1366 = vmatprep.subr.mxu0 %v863
    %1367 = vmatpush1.msra.mxu0 %v862
    %1368 = vmatprep.subr.mxu0 %v870
    %1369 = vmatpush1.msra.mxu0 %v869
    %1370 = vmatprep.subr.mxu0 %v877
    %1371 = vmatpush1.msra.mxu0 %v876
    %1372 = vmatprep.subr.mxu0 %v884
    %1373 = vmatpush1.msra.mxu0 %v883
    %1374 = vmatprep.mubr.f32.mxu0 %v438
    %1375 = vmatmul.mubr.f32.gmra.mrb[0].mxu0 %v437
    %v1376 = vpop.f32.mrb[0].mxu0
    %v1377 = vadd.f32 %v1306, %v1376
    %v1378 = vpop.f32.mrb[0].mxu0
    %v1379 = vadd.f32 %v1308, %v1378
    %1380 = vdwg.mxu0
    %1381 = vmatprep.subr.mxu0 %v891
    %1382 = vmatpush1.msra.mxu0 %v890
    %1383 = vmatprep.subr.mxu0 %v898
    %1384 = vmatpush1.msra.mxu0 %v897
    %1385 = vmatprep.subr.mxu0 %v905
    %1386 = vmatpush1.msra.mxu0 %v904
    %1387 = vmatprep.subr.mxu0 %v912
    %1388 = vmatpush1.msra.mxu0 %v911
    %1389 = vmatprep.subr.mxu0 %v919
    %1390 = vmatpush1.msra.mxu0 %v918
    %1391 = vmatprep.subr.mxu0 %v926
    %1392 = vmatpush1.msra.mxu0 %v925
    %1393 = vmatprep.subr.mxu0 %v933
    %1394 = vmatpush1.msra.mxu0 %v932
    %1395 = vmatprep.subr.mxu0 %v940
    %1396 = vmatpush1.msra.mxu0 %v939
    %1397 = vmatprep.subr.mxu0 %v947
    %1398 = vmatpush1.msra.mxu0 %v946
    %1399 = vmatprep.subr.mxu0 %v954
    %1400 = vmatpush1.msra.mxu0 %v953
    %1401 = vmatprep.subr.mxu0 %v961
    %1402 = vmatpush1.msra.mxu0 %v960
    %1403 = vmatprep.subr.mxu0 %v968
    %1404 = vmatpush1.msra.mxu0 %v967
    %1405 = vmatprep.subr.mxu0 %v975
    %1406 = vmatpush1.msra.mxu0 %v974
    %1407 = vmatprep.subr.mxu0 %v982
    %1408 = vmatpush1.msra.mxu0 %v981
    %1409 = vmatprep.subr.mxu0 %v989
    %1410 = vmatpush1.msra.mxu0 %v988
    %1411 = vmatprep.subr.mxu0 %v996
    %1412 = vmatpush1.msra.mxu0 %v995
    %1413 = vmatprep.subr.mxu0 %v1003
    %1414 = vmatpush1.msra.mxu0 %v1002
    %1415 = vmatprep.subr.mxu0 %v1010
    %1416 = vmatpush1.msra.mxu0 %v1009
    %1417 = vmatprep.subr.mxu0 %v1017
    %1418 = vmatpush1.msra.mxu0 %v1016
    %1419 = vmatprep.subr.mxu0 %v1024
    %1420 = vmatpush1.msra.mxu0 %v1023
    %1421 = vmatprep.subr.mxu0 %v1031
    %1422 = vmatpush1.msra.mxu0 %v1030
    %1423 = vmatprep.subr.mxu0 %v1038
    %1424 = vmatpush1.msra.mxu0 %v1037
    %1425 = vmatprep.subr.mxu0 %v1045
    %1426 = vmatpush1.msra.mxu0 %v1044
    %1427 = vmatprep.subr.mxu0 %v1052
    %1428 = vmatpush1.msra.mxu0 %v1051
    %1429 = vmatprep.subr.mxu0 %v1059
    %1430 = vmatpush1.msra.mxu0 %v1058
    %1431 = vmatprep.subr.mxu0 %v1066
    %1432 = vmatpush1.msra.mxu0 %v1065
    %1433 = vmatprep.subr.mxu0 %v1073
    %1434 = vmatpush1.msra.mxu0 %v1072
    %1435 = vmatprep.subr.mxu0 %v1080
    %1436 = vmatpush1.msra.mxu0 %v1079
    %1437 = vmatprep.subr.mxu0 %v1087
    %1438 = vmatpush1.msra.mxu0 %v1086
    %1439 = vmatprep.subr.mxu0 %v1094
    %1440 = vmatpush1.msra.mxu0 %v1093
    %1441 = vmatprep.subr.mxu0 %v1101
    %1442 = vmatpush1.msra.mxu0 %v1100
    %1443 = vmatprep.subr.mxu0 %v1108
    %1444 = vmatpush1.msra.mxu0 %v1107
    %1445 = vmatprep.mubr.f32.mxu0 %v440
    %1446 = vmatmul.mubr.f32.gmra.mrb[0].mxu0 %v439
    %v1447 = vpop.f32.mrb[0].mxu0
    %v1448 = vadd.f32 %v1377, %v1447
    %v1449 = vpop.f32.mrb[0].mxu0
    %v1450 = vadd.f32 %v1379, %v1449
    %1451 = vdwg.mxu0
    %1452 = vmatprep.subr.mxu0 %v1115
    %1453 = vmatpush1.msra.mxu0 %v1114
    %1454 = vmatprep.subr.mxu0 %v1122
    %1455 = vmatpush1.msra.mxu0 %v1121
    %1456 = vmatprep.subr.mxu0 %v1129
    %1457 = vmatpush1.msra.mxu0 %v1128
    %1458 = vmatprep.subr.mxu0 %v1136
    %1459 = vmatpush1.msra.mxu0 %v1135
    %1460 = vmatprep.subr.mxu0 %v1143
    %1461 = vmatpush1.msra.mxu0 %v1142
    %1462 = vmatprep.subr.mxu0 %v1150
    %1463 = vmatpush1.msra.mxu0 %v1149
    %1464 = vmatprep.subr.mxu0 %v1157
    %1465 = vmatpush1.msra.mxu0 %v1156
    %1466 = vmatprep.subr.mxu0 %v1164
    %1467 = vmatpush1.msra.mxu0 %v1163
    %1468 = vmatprep.subr.mxu0 %v1171
    %1469 = vmatpush1.msra.mxu0 %v1170
    %1470 = vmatprep.subr.mxu0 %v1178
    %1471 = vmatpush1.msra.mxu0 %v1177
    %1472 = vmatprep.subr.mxu0 %v1185
    %1473 = vmatpush1.msra.mxu0 %v1184
    %1474 = vmatprep.subr.mxu0 %v1192
    %1475 = vmatpush1.msra.mxu0 %v1191
    %1476 = vmatprep.subr.mxu0 0.0
    %1477 = vmatpush1.msra.mxu0 0.0
    %1478 = vmatprep.subr.mxu0 0.0
    %1479 = vmatpush1.msra.mxu0 0.0
    %1480 = vmatprep.subr.mxu0 0.0
    %1481 = vmatpush1.msra.mxu0 0.0
    %1482 = vmatprep.subr.mxu0 0.0
    %1483 = vmatpush1.msra.mxu0 0.0
    %1484 = vmatprep.subr.mxu0 0.0
    %1485 = vmatpush1.msra.mxu0 0.0
    %1486 = vmatprep.subr.mxu0 0.0
    %1487 = vmatpush1.msra.mxu0 0.0
    %1488 = vmatprep.subr.mxu0 0.0
    %1489 = vmatpush1.msra.mxu0 0.0
    %1490 = vmatprep.subr.mxu0 0.0
    %1491 = vmatpush1.msra.mxu0 0.0
    %1492 = vmatprep.subr.mxu0 0.0
    %1493 = vmatpush1.msra.mxu0 0.0
    %1494 = vmatprep.subr.mxu0 0.0
    %1495 = vmatpush1.msra.mxu0 0.0
    %1496 = vmatprep.subr.mxu0 0.0
    %1497 = vmatpush1.msra.mxu0 0.0
    %1498 = vmatprep.subr.mxu0 0.0
    %1499 = vmatpush1.msra.mxu0 0.0
    %1500 = vmatprep.subr.mxu0 0.0
    %1501 = vmatpush1.msra.mxu0 0.0
    %1502 = vmatprep.subr.mxu0 0.0
    %1503 = vmatpush1.msra.mxu0 0.0
    %1504 = vmatprep.subr.mxu0 0.0
    %1505 = vmatpush1.msra.mxu0 0.0
    %1506 = vmatprep.subr.mxu0 0.0
    %1507 = vmatpush1.msra.mxu0 0.0
    %1508 = vmatprep.subr.mxu0 0.0
    %1509 = vmatpush1.msra.mxu0 0.0
    %1510 = vmatprep.subr.mxu0 0.0
    %1511 = vmatpush1.msra.mxu0 0.0
    %1512 = vmatprep.subr.mxu0 0.0
    %1513 = vmatpush1.msra.mxu0 0.0
    %1514 = vmatprep.subr.mxu0 0.0
    %1515 = vmatpush1.msra.mxu0 0.0
    %1516 = vmatprep.mubr.f32.mxu0 0.0
    %1517 = vmatmul.mubr.f32.gmra.mrb[0].mxu0 %v1237
    %v1518 = vpop.f32.mrb[0].mxu0
    %v1519 = vadd.f32 %v1448, %v1518
    %v1520 = vpop.f32.mrb[0].mxu0
    %v1521 = vadd.f32 %v1450, %v1520
    %1522 = vdwg.mxu0
    %1523 = vmatprep.subr.mxu0 %v445
    %1524 = vmatpush1.msra.mxu0 %v444
    %1525 = vmatprep.subr.mxu0 %v452
    %1526 = vmatpush1.msra.mxu0 %v451
    %1527 = vmatprep.subr.mxu0 %v459
    %1528 = vmatpush1.msra.mxu0 %v458
    %1529 = vmatprep.subr.mxu0 %v466
    %1530 = vmatpush1.msra.mxu0 %v465
    %1531 = vmatprep.subr.mxu0 %v473
    %1532 = vmatpush1.msra.mxu0 %v472
    %1533 = vmatprep.subr.mxu0 %v480
    %1534 = vmatpush1.msra.mxu0 %v479
    %1535 = vmatprep.subr.mxu0 %v487
    %1536 = vmatpush1.msra.mxu0 %v486
    %1537 = vmatprep.subr.mxu0 %v494
    %1538 = vmatpush1.msra.mxu0 %v493
    %1539 = vmatprep.subr.mxu0 %v501
    %1540 = vmatpush1.msra.mxu0 %v500
    %1541 = vmatprep.subr.mxu0 %v508
    %1542 = vmatpush1.msra.mxu0 %v507
    %1543 = vmatprep.subr.mxu0 %v515
    %1544 = vmatpush1.msra.mxu0 %v514
    %1545 = vmatprep.subr.mxu0 %v522
    %1546 = vmatpush1.msra.mxu0 %v521
    %1547 = vmatprep.subr.mxu0 %v529
    %1548 = vmatpush1.msra.mxu0 %v528
    %1549 = vmatprep.subr.mxu0 %v536
    %1550 = vmatpush1.msra.mxu0 %v535
    %1551 = vmatprep.subr.mxu0 %v543
    %1552 = vmatpush1.msra.mxu0 %v542
    %1553 = vmatprep.subr.mxu0 %v550
    %1554 = vmatpush1.msra.mxu0 %v549
    %1555 = vmatprep.subr.mxu0 %v557
    %1556 = vmatpush1.msra.mxu0 %v556
    %1557 = vmatprep.subr.mxu0 %v564
    %1558 = vmatpush1.msra.mxu0 %v563
    %1559 = vmatprep.subr.mxu0 %v571
    %1560 = vmatpush1.msra.mxu0 %v570
    %1561 = vmatprep.subr.mxu0 %v578
    %1562 = vmatpush1.msra.mxu0 %v577
    %1563 = vmatprep.subr.mxu0 %v585
    %1564 = vmatpush1.msra.mxu0 %v584
    %1565 = vmatprep.subr.mxu0 %v592
    %1566 = vmatpush1.msra.mxu0 %v591
    %1567 = vmatprep.subr.mxu0 %v599
    %1568 = vmatpush1.msra.mxu0 %v598
    %1569 = vmatprep.subr.mxu0 %v606
    %1570 = vmatpush1.msra.mxu0 %v605
    %1571 = vmatprep.subr.mxu0 %v613
    %1572 = vmatpush1.msra.mxu0 %v612
    %1573 = vmatprep.subr.mxu0 %v620
    %1574 = vmatpush1.msra.mxu0 %v619
    %1575 = vmatprep.subr.mxu0 %v627
    %1576 = vmatpush1.msra.mxu0 %v626
    %1577 = vmatprep.subr.mxu0 %v634
    %1578 = vmatpush1.msra.mxu0 %v633
    %1579 = vmatprep.subr.mxu0 %v641
    %1580 = vmatpush1.msra.mxu0 %v640
    %1581 = vmatprep.subr.mxu0 %v648
    %1582 = vmatpush1.msra.mxu0 %v647
    %1583 = vmatprep.subr.mxu0 %v655
    %1584 = vmatpush1.msra.mxu0 %v654
    %1585 = vmatprep.subr.mxu0 %v662
    %1586 = vmatpush1.msra.mxu0 %v661
    %1587 = vmatprep.mubr.f32.mxu0 %v436
    %1588 = vmatmul.mubr.f32.gmra.mrb[0].mxu0 %v435
    %v1589 = vpop.f32.mrb[0].mxu0
    %v1590 = vadd.f32 %v1211, %v1589
    %v1591 = vpop.f32.mrb[0].mxu0
    %v1592 = vadd.f32 %v1215, %v1591
    %1593 = vdwg.mxu0
    %1594 = vmatprep.subr.mxu0 %v669
    %1595 = vmatpush1.msra.mxu0 %v668
    %1596 = vmatprep.subr.mxu0 %v676
    %1597 = vmatpush1.msra.mxu0 %v675
    %1598 = vmatprep.subr.mxu0 %v683
    %1599 = vmatpush1.msra.mxu0 %v682
    %1600 = vmatprep.subr.mxu0 %v690
    %1601 = vmatpush1.msra.mxu0 %v689
    %1602 = vmatprep.subr.mxu0 %v697
    %1603 = vmatpush1.msra.mxu0 %v696
    %1604 = vmatprep.subr.mxu0 %v704
    %1605 = vmatpush1.msra.mxu0 %v703
    %1606 = vmatprep.subr.mxu0 %v711
    %1607 = vmatpush1.msra.mxu0 %v710
    %1608 = vmatprep.subr.mxu0 %v718
    %1609 = vmatpush1.msra.mxu0 %v717
    %1610 = vmatprep.subr.mxu0 %v725
    %1611 = vmatpush1.msra.mxu0 %v724
    %1612 = vmatprep.subr.mxu0 %v732
    %1613 = vmatpush1.msra.mxu0 %v731
    %1614 = vmatprep.subr.mxu0 %v739
    %1615 = vmatpush1.msra.mxu0 %v738
    %1616 = vmatprep.subr.mxu0 %v746
    %1617 = vmatpush1.msra.mxu0 %v745
    %1618 = vmatprep.subr.mxu0 %v753
    %1619 = vmatpush1.msra.mxu0 %v752
    %1620 = vmatprep.subr.mxu0 %v760
    %1621 = vmatpush1.msra.mxu0 %v759
    %1622 = vmatprep.subr.mxu0 %v767
    %1623 = vmatpush1.msra.mxu0 %v766
    %1624 = vmatprep.subr.mxu0 %v774
    %1625 = vmatpush1.msra.mxu0 %v773
    %1626 = vmatprep.subr.mxu0 %v781
    %1627 = vmatpush1.msra.mxu0 %v780
    %1628 = vmatprep.subr.mxu0 %v788
    %1629 = vmatpush1.msra.mxu0 %v787
    %1630 = vmatprep.subr.mxu0 %v795
    %1631 = vmatpush1.msra.mxu0 %v794
    %1632 = vmatprep.subr.mxu0 %v802
    %1633 = vmatpush1.msra.mxu0 %v801
    %1634 = vmatprep.subr.mxu0 %v809
    %1635 = vmatpush1.msra.mxu0 %v808
    %1636 = vmatprep.subr.mxu0 %v816
    %1637 = vmatpush1.msra.mxu0 %v815
    %1638 = vmatprep.subr.mxu0 %v823
    %1639 = vmatpush1.msra.mxu0 %v822
    %1640 = vmatprep.subr.mxu0 %v830
    %1641 = vmatpush1.msra.mxu0 %v829
    %1642 = vmatprep.subr.mxu0 %v837
    %1643 = vmatpush1.msra.mxu0 %v836
    %1644 = vmatprep.subr.mxu0 %v844
    %1645 = vmatpush1.msra.mxu0 %v843
    %1646 = vmatprep.subr.mxu0 %v851
    %1647 = vmatpush1.msra.mxu0 %v850
    %1648 = vmatprep.subr.mxu0 %v858
    %1649 = vmatpush1.msra.mxu0 %v857
    %1650 = vmatprep.subr.mxu0 %v865
    %1651 = vmatpush1.msra.mxu0 %v864
    %1652 = vmatprep.subr.mxu0 %v872
    %1653 = vmatpush1.msra.mxu0 %v871
    %1654 = vmatprep.subr.mxu0 %v879
    %1655 = vmatpush1.msra.mxu0 %v878
    %1656 = vmatprep.subr.mxu0 %v886
    %1657 = vmatpush1.msra.mxu0 %v885
    %1658 = vmatprep.mubr.f32.mxu0 %v438
    %1659 = vmatmul.mubr.f32.gmra.mrb[0].mxu0 %v437
    %v1660 = vpop.f32.mrb[0].mxu0
    %v1661 = vadd.f32 %v1590, %v1660
    %v1662 = vpop.f32.mrb[0].mxu0
    %v1663 = vadd.f32 %v1592, %v1662
    %1664 = vdwg.mxu0
    %1665 = vmatprep.subr.mxu0 %v893
    %1666 = vmatpush1.msra.mxu0 %v892
    %1667 = vmatprep.subr.mxu0 %v900
    %1668 = vmatpush1.msra.mxu0 %v899
    %1669 = vmatprep.subr.mxu0 %v907
    %1670 = vmatpush1.msra.mxu0 %v906
    %1671 = vmatprep.subr.mxu0 %v914
    %1672 = vmatpush1.msra.mxu0 %v913
    %1673 = vmatprep.subr.mxu0 %v921
    %1674 = vmatpush1.msra.mxu0 %v920
    %1675 = vmatprep.subr.mxu0 %v928
    %1676 = vmatpush1.msra.mxu0 %v927
    %1677 = vmatprep.subr.mxu0 %v935
    %1678 = vmatpush1.msra.mxu0 %v934
    %1679 = vmatprep.subr.mxu0 %v942
    %1680 = vmatpush1.msra.mxu0 %v941
    %1681 = vmatprep.subr.mxu0 %v949
    %1682 = vmatpush1.msra.mxu0 %v948
    %1683 = vmatprep.subr.mxu0 %v956
    %1684 = vmatpush1.msra.mxu0 %v955
    %1685 = vmatprep.subr.mxu0 %v963
    %1686 = vmatpush1.msra.mxu0 %v962
    %1687 = vmatprep.subr.mxu0 %v970
    %1688 = vmatpush1.msra.mxu0 %v969
    %1689 = vmatprep.subr.mxu0 %v977
    %1690 = vmatpush1.msra.mxu0 %v976
    %1691 = vmatprep.subr.mxu0 %v984
    %1692 = vmatpush1.msra.mxu0 %v983
    %1693 = vmatprep.subr.mxu0 %v991
    %1694 = vmatpush1.msra.mxu0 %v990
    %1695 = vmatprep.subr.mxu0 %v998
    %1696 = vmatpush1.msra.mxu0 %v997
    %1697 = vmatprep.subr.mxu0 %v1005
    %1698 = vmatpush1.msra.mxu0 %v1004
    %1699 = vmatprep.subr.mxu0 %v1012
    %1700 = vmatpush1.msra.mxu0 %v1011
    %1701 = vmatprep.subr.mxu0 %v1019
    %1702 = vmatpush1.msra.mxu0 %v1018
    %1703 = vmatprep.subr.mxu0 %v1026
    %1704 = vmatpush1.msra.mxu0 %v1025
    %1705 = vmatprep.subr.mxu0 %v1033
    %1706 = vmatpush1.msra.mxu0 %v1032
    %1707 = vmatprep.subr.mxu0 %v1040
    %1708 = vmatpush1.msra.mxu0 %v1039
    %1709 = vmatprep.subr.mxu0 %v1047
    %1710 = vmatpush1.msra.mxu0 %v1046
    %1711 = vmatprep.subr.mxu0 %v1054
    %1712 = vmatpush1.msra.mxu0 %v1053
    %1713 = vmatprep.subr.mxu0 %v1061
    %1714 = vmatpush1.msra.mxu0 %v1060
    %1715 = vmatprep.subr.mxu0 %v1068
    %1716 = vmatpush1.msra.mxu0 %v1067
    %1717 = vmatprep.subr.mxu0 %v1075
    %1718 = vmatpush1.msra.mxu0 %v1074
    %1719 = vmatprep.subr.mxu0 %v1082
    %1720 = vmatpush1.msra.mxu0 %v1081
    %1721 = vmatprep.subr.mxu0 %v1089
    %1722 = vmatpush1.msra.mxu0 %v1088
    %1723 = vmatprep.subr.mxu0 %v1096
    %1724 = vmatpush1.msra.mxu0 %v1095
    %1725 = vmatprep.subr.mxu0 %v1103
    %1726 = vmatpush1.msra.mxu0 %v1102
    %1727 = vmatprep.subr.mxu0 %v1110
    %1728 = vmatpush1.msra.mxu0 %v1109
    %1729 = vmatprep.mubr.f32.mxu0 %v440
    %1730 = vmatmul.mubr.f32.gmra.mrb[0].mxu0 %v439
    %v1731 = vpop.f32.mrb[0].mxu0
    %v1732 = vadd.f32 %v1661, %v1731
    %v1733 = vpop.f32.mrb[0].mxu0
    %v1734 = vadd.f32 %v1663, %v1733
    %1735 = vdwg.mxu0
    %1736 = vmatprep.subr.mxu0 %v1117
    %1737 = vmatpush1.msra.mxu0 %v1116
    %1738 = vmatprep.subr.mxu0 %v1124
    %1739 = vmatpush1.msra.mxu0 %v1123
    %1740 = vmatprep.subr.mxu0 %v1131
    %1741 = vmatpush1.msra.mxu0 %v1130
    %1742 = vmatprep.subr.mxu0 %v1138
    %1743 = vmatpush1.msra.mxu0 %v1137
    %1744 = vmatprep.subr.mxu0 %v1145
    %1745 = vmatpush1.msra.mxu0 %v1144
    %1746 = vmatprep.subr.mxu0 %v1152
    %1747 = vmatpush1.msra.mxu0 %v1151
    %1748 = vmatprep.subr.mxu0 %v1159
    %1749 = vmatpush1.msra.mxu0 %v1158
    %1750 = vmatprep.subr.mxu0 %v1166
    %1751 = vmatpush1.msra.mxu0 %v1165
    %1752 = vmatprep.subr.mxu0 %v1173
    %1753 = vmatpush1.msra.mxu0 %v1172
    %1754 = vmatprep.subr.mxu0 %v1180
    %1755 = vmatpush1.msra.mxu0 %v1179
    %1756 = vmatprep.subr.mxu0 %v1187
    %1757 = vmatpush1.msra.mxu0 %v1186
    %1758 = vmatprep.subr.mxu0 %v1194
    %1759 = vmatpush1.msra.mxu0 %v1193
    %1760 = vmatprep.subr.mxu0 0.0
    %1761 = vmatpush1.msra.mxu0 0.0
    %1762 = vmatprep.subr.mxu0 0.0
    %1763 = vmatpush1.msra.mxu0 0.0
    %1764 = vmatprep.subr.mxu0 0.0
    %1765 = vmatpush1.msra.mxu0 0.0
    %1766 = vmatprep.subr.mxu0 0.0
    %1767 = vmatpush1.msra.mxu0 0.0
    %1768 = vmatprep.subr.mxu0 0.0
    %1769 = vmatpush1.msra.mxu0 0.0
    %1770 = vmatprep.subr.mxu0 0.0
    %1771 = vmatpush1.msra.mxu0 0.0
    %1772 = vmatprep.subr.mxu0 0.0
    %1773 = vmatpush1.msra.mxu0 0.0
    %1774 = vmatprep.subr.mxu0 0.0
    %1775 = vmatpush1.msra.mxu0 0.0
    %1776 = vmatprep.subr.mxu0 0.0
    %1777 = vmatpush1.msra.mxu0 0.0
    %1778 = vmatprep.subr.mxu0 0.0
    %1779 = vmatpush1.msra.mxu0 0.0
    %1780 = vmatprep.subr.mxu0 0.0
    %1781 = vmatpush1.msra.mxu0 0.0
    %1782 = vmatprep.subr.mxu0 0.0
    %1783 = vmatpush1.msra.mxu0 0.0
    %1784 = vmatprep.subr.mxu0 0.0
    %1785 = vmatpush1.msra.mxu0 0.0
    %1786 = vmatprep.subr.mxu0 0.0
    %1787 = vmatpush1.msra.mxu0 0.0
    %1788 = vmatprep.subr.mxu0 0.0
    %1789 = vmatpush1.msra.mxu0 0.0
    %1790 = vmatprep.subr.mxu0 0.0
    %1791 = vmatpush1.msra.mxu0 0.0
    %1792 = vmatprep.subr.mxu0 0.0
    %1793 = vmatpush1.msra.mxu0 0.0
    %1794 = vmatprep.subr.mxu0 0.0
    %1795 = vmatpush1.msra.mxu0 0.0
    %1796 = vmatprep.subr.mxu0 0.0
    %1797 = vmatpush1.msra.mxu0 0.0
    %1798 = vmatprep.subr.mxu0 0.0
    %1799 = vmatpush1.msra.mxu0 0.0
    %1800 = vmatprep.mubr.f32.mxu0 0.0
    %1801 = vmatmul.mubr.f32.gmra.mrb[0].mxu0 %v1237
    %v1802 = vpop.f32.mrb[0].mxu0
    %v1803 = vadd.f32 %v1732, %v1802
    %v1804 = vpop.f32.mrb[0].mxu0
    %v1805 = vadd.f32 %v1734, %v1804
    %1806 = vdwg.mxu0
    %1807 = vmatprep.subr.mxu0 %v447
    %1808 = vmatpush1.msra.mxu0 %v446
    %1809 = vmatprep.subr.mxu0 %v454
    %1810 = vmatpush1.msra.mxu0 %v453
    %1811 = vmatprep.subr.mxu0 %v461
    %1812 = vmatpush1.msra.mxu0 %v460
    %1813 = vmatprep.subr.mxu0 %v468
    %1814 = vmatpush1.msra.mxu0 %v467
    %1815 = vmatprep.subr.mxu0 %v475
    %1816 = vmatpush1.msra.mxu0 %v474
    %1817 = vmatprep.subr.mxu0 %v482
    %1818 = vmatpush1.msra.mxu0 %v481
    %1819 = vmatprep.subr.mxu0 %v489
    %1820 = vmatpush1.msra.mxu0 %v488
    %1821 = vmatprep.subr.mxu0 %v496
    %1822 = vmatpush1.msra.mxu0 %v495
    %1823 = vmatprep.subr.mxu0 %v503
    %1824 = vmatpush1.msra.mxu0 %v502
    %1825 = vmatprep.subr.mxu0 %v510
    %1826 = vmatpush1.msra.mxu0 %v509
    %1827 = vmatprep.subr.mxu0 %v517
    %1828 = vmatpush1.msra.mxu0 %v516
    %1829 = vmatprep.subr.mxu0 %v524
    %1830 = vmatpush1.msra.mxu0 %v523
    %1831 = vmatprep.subr.mxu0 %v531
    %1832 = vmatpush1.msra.mxu0 %v530
    %1833 = vmatprep.subr.mxu0 %v538
    %1834 = vmatpush1.msra.mxu0 %v537
    %1835 = vmatprep.subr.mxu0 %v545
    %1836 = vmatpush1.msra.mxu0 %v544
    %1837 = vmatprep.subr.mxu0 %v552
    %1838 = vmatpush1.msra.mxu0 %v551
    %1839 = vmatprep.subr.mxu0 %v559
    %1840 = vmatpush1.msra.mxu0 %v558
    %1841 = vmatprep.subr.mxu0 %v566
    %1842 = vmatpush1.msra.mxu0 %v565
    %1843 = vmatprep.subr.mxu0 %v573
    %1844 = vmatpush1.msra.mxu0 %v572
    %1845 = vmatprep.subr.mxu0 %v580
    %1846 = vmatpush1.msra.mxu0 %v579
    %1847 = vmatprep.subr.mxu0 %v587
    %1848 = vmatpush1.msra.mxu0 %v586
    %1849 = vmatprep.subr.mxu0 %v594
    %1850 = vmatpush1.msra.mxu0 %v593
    %1851 = vmatprep.subr.mxu0 %v601
    %1852 = vmatpush1.msra.mxu0 %v600
    %1853 = vmatprep.subr.mxu0 %v608
    %1854 = vmatpush1.msra.mxu0 %v607
    %1855 = vmatprep.subr.mxu0 %v615
    %1856 = vmatpush1.msra.mxu0 %v614
    %1857 = vmatprep.subr.mxu0 %v622
    %1858 = vmatpush1.msra.mxu0 %v621
    %1859 = vmatprep.subr.mxu0 %v629
    %1860 = vmatpush1.msra.mxu0 %v628
    %1861 = vmatprep.subr.mxu0 %v636
    %1862 = vmatpush1.msra.mxu0 %v635
    %1863 = vmatprep.subr.mxu0 %v643
    %1864 = vmatpush1.msra.mxu0 %v642
    %1865 = vmatprep.subr.mxu0 %v650
    %1866 = vmatpush1.msra.mxu0 %v649
    %1867 = vmatprep.subr.mxu0 %v657
    %1868 = vmatpush1.msra.mxu0 %v656
    %1869 = vmatprep.subr.mxu0 %v664
    %1870 = vmatpush1.msra.mxu0 %v663
    %1871 = vmatprep.mubr.f32.mxu0 %v436
    %1872 = vmatmul.mubr.f32.gmra.mrb[0].mxu0 %v435
    %v1873 = vpop.f32.mrb[0].mxu0
    %v1874 = vadd.f32 %v1219, %v1873
    %v1875 = vpop.f32.mrb[0].mxu0
    %v1876 = vadd.f32 %v1223, %v1875
    %1877 = vdwg.mxu0
    %1878 = vmatprep.subr.mxu0 %v671
    %1879 = vmatpush1.msra.mxu0 %v670
    %1880 = vmatprep.subr.mxu0 %v678
    %1881 = vmatpush1.msra.mxu0 %v677
    %1882 = vmatprep.subr.mxu0 %v685
    %1883 = vmatpush1.msra.mxu0 %v684
    %1884 = vmatprep.subr.mxu0 %v692
    %1885 = vmatpush1.msra.mxu0 %v691
    %1886 = vmatprep.subr.mxu0 %v699
    %1887 = vmatpush1.msra.mxu0 %v698
    %1888 = vmatprep.subr.mxu0 %v706
    %1889 = vmatpush1.msra.mxu0 %v705
    %1890 = vmatprep.subr.mxu0 %v713
    %1891 = vmatpush1.msra.mxu0 %v712
    %1892 = vmatprep.subr.mxu0 %v720
    %1893 = vmatpush1.msra.mxu0 %v719
    %1894 = vmatprep.subr.mxu0 %v727
    %1895 = vmatpush1.msra.mxu0 %v726
    %1896 = vmatprep.subr.mxu0 %v734
    %1897 = vmatpush1.msra.mxu0 %v733
    %1898 = vmatprep.subr.mxu0 %v741
    %1899 = vmatpush1.msra.mxu0 %v740
    %1900 = vmatprep.subr.mxu0 %v748
    %1901 = vmatpush1.msra.mxu0 %v747
    %1902 = vmatprep.subr.mxu0 %v755
    %1903 = vmatpush1.msra.mxu0 %v754
    %1904 = vmatprep.subr.mxu0 %v762
    %1905 = vmatpush1.msra.mxu0 %v761
    %1906 = vmatprep.subr.mxu0 %v769
    %1907 = vmatpush1.msra.mxu0 %v768
    %1908 = vmatprep.subr.mxu0 %v776
    %1909 = vmatpush1.msra.mxu0 %v775
    %1910 = vmatprep.subr.mxu0 %v783
    %1911 = vmatpush1.msra.mxu0 %v782
    %1912 = vmatprep.subr.mxu0 %v790
    %1913 = vmatpush1.msra.mxu0 %v789
    %1914 = vmatprep.subr.mxu0 %v797
    %1915 = vmatpush1.msra.mxu0 %v796
    %1916 = vmatprep.subr.mxu0 %v804
    %1917 = vmatpush1.msra.mxu0 %v803
    %1918 = vmatprep.subr.mxu0 %v811
    %1919 = vmatpush1.msra.mxu0 %v810
    %1920 = vmatprep.subr.mxu0 %v818
    %1921 = vmatpush1.msra.mxu0 %v817
    %1922 = vmatprep.subr.mxu0 %v825
    %1923 = vmatpush1.msra.mxu0 %v824
    %1924 = vmatprep.subr.mxu0 %v832
    %1925 = vmatpush1.msra.mxu0 %v831
    %1926 = vmatprep.subr.mxu0 %v839
    %1927 = vmatpush1.msra.mxu0 %v838
    %1928 = vmatprep.subr.mxu0 %v846
    %1929 = vmatpush1.msra.mxu0 %v845
    %1930 = vmatprep.subr.mxu0 %v853
    %1931 = vmatpush1.msra.mxu0 %v852
    %1932 = vmatprep.subr.mxu0 %v860
    %1933 = vmatpush1.msra.mxu0 %v859
    %1934 = vmatprep.subr.mxu0 %v867
    %1935 = vmatpush1.msra.mxu0 %v866
    %1936 = vmatprep.subr.mxu0 %v874
    %1937 = vmatpush1.msra.mxu0 %v873
    %1938 = vmatprep.subr.mxu0 %v881
    %1939 = vmatpush1.msra.mxu0 %v880
    %1940 = vmatprep.subr.mxu0 %v888
    %1941 = vmatpush1.msra.mxu0 %v887
    %1942 = vmatprep.mubr.f32.mxu0 %v438
    %1943 = vmatmul.mubr.f32.gmra.mrb[0].mxu0 %v437
    %v1944 = vpop.f32.mrb[0].mxu0
    %v1945 = vadd.f32 %v1874, %v1944
    %v1946 = vpop.f32.mrb[0].mxu0
    %v1947 = vadd.f32 %v1876, %v1946
    %1948 = vdwg.mxu0
    %1949 = vmatprep.subr.mxu0 %v895
    %1950 = vmatpush1.msra.mxu0 %v894
    %1951 = vmatprep.subr.mxu0 %v902
    %1952 = vmatpush1.msra.mxu0 %v901
    %1953 = vmatprep.subr.mxu0 %v909
    %1954 = vmatpush1.msra.mxu0 %v908
    %1955 = vmatprep.subr.mxu0 %v916
    %1956 = vmatpush1.msra.mxu0 %v915
    %1957 = vmatprep.subr.mxu0 %v923
    %1958 = vmatpush1.msra.mxu0 %v922
    %1959 = vmatprep.subr.mxu0 %v930
    %1960 = vmatpush1.msra.mxu0 %v929
    %1961 = vmatprep.subr.mxu0 %v937
    %1962 = vmatpush1.msra.mxu0 %v936
    %1963 = vmatprep.subr.mxu0 %v944
    %1964 = vmatpush1.msra.mxu0 %v943
    %1965 = vmatprep.subr.mxu0 %v951
    %1966 = vmatpush1.msra.mxu0 %v950
    %1967 = vmatprep.subr.mxu0 %v958
    %1968 = vmatpush1.msra.mxu0 %v957
    %1969 = vmatprep.subr.mxu0 %v965
    %1970 = vmatpush1.msra.mxu0 %v964
    %1971 = vmatprep.subr.mxu0 %v972
    %1972 = vmatpush1.msra.mxu0 %v971
    %1973 = vmatprep.subr.mxu0 %v979
    %1974 = vmatpush1.msra.mxu0 %v978
    %1975 = vmatprep.subr.mxu0 %v986
    %1976 = vmatpush1.msra.mxu0 %v985
    %1977 = vmatprep.subr.mxu0 %v993
    %1978 = vmatpush1.msra.mxu0 %v992
    %1979 = vmatprep.subr.mxu0 %v1000
    %1980 = vmatpush1.msra.mxu0 %v999
    %1981 = vmatprep.subr.mxu0 %v1007
    %1982 = vmatpush1.msra.mxu0 %v1006
    %1983 = vmatprep.subr.mxu0 %v1014
    %1984 = vmatpush1.msra.mxu0 %v1013
    %1985 = vmatprep.subr.mxu0 %v1021
    %1986 = vmatpush1.msra.mxu0 %v1020
    %1987 = vmatprep.subr.mxu0 %v1028
    %1988 = vmatpush1.msra.mxu0 %v1027
    %1989 = vmatprep.subr.mxu0 %v1035
    %1990 = vmatpush1.msra.mxu0 %v1034
    %1991 = vmatprep.subr.mxu0 %v1042
    %1992 = vmatpush1.msra.mxu0 %v1041
    %1993 = vmatprep.subr.mxu0 %v1049
    %1994 = vmatpush1.msra.mxu0 %v1048
    %1995 = vmatprep.subr.mxu0 %v1056
    %1996 = vmatpush1.msra.mxu0 %v1055
    %1997 = vmatprep.subr.mxu0 %v1063
    %1998 = vmatpush1.msra.mxu0 %v1062
    %1999 = vmatprep.subr.mxu0 %v1070
    %2000 = vmatpush1.msra.mxu0 %v1069
    %2001 = vmatprep.subr.mxu0 %v1077
    %2002 = vmatpush1.msra.mxu0 %v1076
    %2003 = vmatprep.subr.mxu0 %v1084
    %2004 = vmatpush1.msra.mxu0 %v1083
    %2005 = vmatprep.subr.mxu0 %v1091
    %2006 = vmatpush1.msra.mxu0 %v1090
    %2007 = vmatprep.subr.mxu0 %v1098
    %2008 = vmatpush1.msra.mxu0 %v1097
    %2009 = vmatprep.subr.mxu0 %v1105
    %2010 = vmatpush1.msra.mxu0 %v1104
    %2011 = vmatprep.subr.mxu0 %v1112
    %2012 = vmatpush1.msra.mxu0 %v1111
    %2013 = vmatprep.mubr.f32.mxu0 %v440
    %2014 = vmatmul.mubr.f32.gmra.mrb[0].mxu0 %v439
    %v2015 = vpop.f32.mrb[0].mxu0
    %v2016 = vadd.f32 %v1945, %v2015
    %v2017 = vpop.f32.mrb[0].mxu0
    %v2018 = vadd.f32 %v1947, %v2017
    %2019 = vdwg.mxu0
    %2020 = vmatprep.subr.mxu0 %v1119
    %2021 = vmatpush1.msra.mxu0 %v1118
    %2022 = vmatprep.subr.mxu0 %v1126
    %2023 = vmatpush1.msra.mxu0 %v1125
    %2024 = vmatprep.subr.mxu0 %v1133
    %2025 = vmatpush1.msra.mxu0 %v1132
    %2026 = vmatprep.subr.mxu0 %v1140
    %2027 = vmatpush1.msra.mxu0 %v1139
    %2028 = vmatprep.subr.mxu0 %v1147
    %2029 = vmatpush1.msra.mxu0 %v1146
    %2030 = vmatprep.subr.mxu0 %v1154
    %2031 = vmatpush1.msra.mxu0 %v1153
    %2032 = vmatprep.subr.mxu0 %v1161
    %2033 = vmatpush1.msra.mxu0 %v1160
    %2034 = vmatprep.subr.mxu0 %v1168
    %2035 = vmatpush1.msra.mxu0 %v1167
    %2036 = vmatprep.subr.mxu0 %v1175
    %2037 = vmatpush1.msra.mxu0 %v1174
    %2038 = vmatprep.subr.mxu0 %v1182
    %2039 = vmatpush1.msra.mxu0 %v1181
    %2040 = vmatprep.subr.mxu0 %v1189
    %2041 = vmatpush1.msra.mxu0 %v1188
    %2042 = vmatprep.subr.mxu0 %v1196
    %2043 = vmatpush1.msra.mxu0 %v1195
    %2044 = vmatprep.subr.mxu0 0.0
    %2045 = vmatpush1.msra.mxu0 0.0
    %2046 = vmatprep.subr.mxu0 0.0
    %2047 = vmatpush1.msra.mxu0 0.0
    %2048 = vmatprep.subr.mxu0 0.0
    %2049 = vmatpush1.msra.mxu0 0.0
    %2050 = vmatprep.subr.mxu0 0.0
    %2051 = vmatpush1.msra.mxu0 0.0
    %2052 = vmatprep.subr.mxu0 0.0
    %2053 = vmatpush1.msra.mxu0 0.0
    %2054 = vmatprep.subr.mxu0 0.0
    %2055 = vmatpush1.msra.mxu0 0.0
    %2056 = vmatprep.subr.mxu0 0.0
    %2057 = vmatpush1.msra.mxu0 0.0
    %2058 = vmatprep.subr.mxu0 0.0
    %2059 = vmatpush1.msra.mxu0 0.0
    %2060 = vmatprep.subr.mxu0 0.0
    %2061 = vmatpush1.msra.mxu0 0.0
    %2062 = vmatprep.subr.mxu0 0.0
    %2063 = vmatpush1.msra.mxu0 0.0
    %2064 = vmatprep.subr.mxu0 0.0
    %2065 = vmatpush1.msra.mxu0 0.0
    %2066 = vmatprep.subr.mxu0 0.0
    %2067 = vmatpush1.msra.mxu0 0.0
    %2068 = vmatprep.subr.mxu0 0.0
    %2069 = vmatpush1.msra.mxu0 0.0
    %2070 = vmatprep.subr.mxu0 0.0
    %2071 = vmatpush1.msra.mxu0 0.0
    %2072 = vmatprep.subr.mxu0 0.0
    %2073 = vmatpush1.msra.mxu0 0.0
    %2074 = vmatprep.subr.mxu0 0.0
    %2075 = vmatpush1.msra.mxu0 0.0
    %2076 = vmatprep.subr.mxu0 0.0
    %2077 = vmatpush1.msra.mxu0 0.0
    %2078 = vmatprep.subr.mxu0 0.0
    %2079 = vmatpush1.msra.mxu0 0.0
    %2080 = vmatprep.subr.mxu0 0.0
    %2081 = vmatpush1.msra.mxu0 0.0
    %2082 = vmatprep.subr.mxu0 0.0
    %2083 = vmatpush1.msra.mxu0 0.0
    %2084 = vmatprep.mubr.f32.mxu0 0.0
    %2085 = vmatmul.mubr.f32.gmra.mrb[0].mxu0 %v1237
    %v2086 = vpop.f32.mrb[0].mxu0
    %v2087 = vadd.f32 %v2016, %v2086
    %v2088 = vpop.f32.mrb[0].mxu0
    %v2089 = vadd.f32 %v2018, %v2088
    %2090 = vdwg.mxu0
    %2091 = vmatprep.subr.mxu0 0.0
    %2092 = vmatpush1.msra.mxu0 %v448
    %2093 = vmatprep.subr.mxu0 0.0
    %2094 = vmatpush1.msra.mxu0 %v455
    %2095 = vmatprep.subr.mxu0 0.0
    %2096 = vmatpush1.msra.mxu0 %v462
    %2097 = vmatprep.subr.mxu0 0.0
    %2098 = vmatpush1.msra.mxu0 %v469
    %2099 = vmatprep.subr.mxu0 0.0
    %2100 = vmatpush1.msra.mxu0 %v476
    %2101 = vmatprep.subr.mxu0 0.0
    %2102 = vmatpush1.msra.mxu0 %v483
    %2103 = vmatprep.subr.mxu0 0.0
    %2104 = vmatpush1.msra.mxu0 %v490
    %2105 = vmatprep.subr.mxu0 0.0
    %2106 = vmatpush1.msra.mxu0 %v497
    %2107 = vmatprep.subr.mxu0 0.0
    %2108 = vmatpush1.msra.mxu0 %v504
    %2109 = vmatprep.subr.mxu0 0.0
    %2110 = vmatpush1.msra.mxu0 %v511
    %2111 = vmatprep.subr.mxu0 0.0
    %2112 = vmatpush1.msra.mxu0 %v518
    %2113 = vmatprep.subr.mxu0 0.0
    %2114 = vmatpush1.msra.mxu0 %v525
    %2115 = vmatprep.subr.mxu0 0.0
    %2116 = vmatpush1.msra.mxu0 %v532
    %2117 = vmatprep.subr.mxu0 0.0
    %2118 = vmatpush1.msra.mxu0 %v539
    %2119 = vmatprep.subr.mxu0 0.0
    %2120 = vmatpush1.msra.mxu0 %v546
    %2121 = vmatprep.subr.mxu0 0.0
    %2122 = vmatpush1.msra.mxu0 %v553
    %2123 = vmatprep.subr.mxu0 0.0
    %2124 = vmatpush1.msra.mxu0 %v560
    %2125 = vmatprep.subr.mxu0 0.0
    %2126 = vmatpush1.msra.mxu0 %v567
    %2127 = vmatprep.subr.mxu0 0.0
    %2128 = vmatpush1.msra.mxu0 %v574
    %2129 = vmatprep.subr.mxu0 0.0
    %2130 = vmatpush1.msra.mxu0 %v581
    %2131 = vmatprep.subr.mxu0 0.0
    %2132 = vmatpush1.msra.mxu0 %v588
    %2133 = vmatprep.subr.mxu0 0.0
    %2134 = vmatpush1.msra.mxu0 %v595
    %2135 = vmatprep.subr.mxu0 0.0
    %2136 = vmatpush1.msra.mxu0 %v602
    %2137 = vmatprep.subr.mxu0 0.0
    %2138 = vmatpush1.msra.mxu0 %v609
    %2139 = vmatprep.subr.mxu0 0.0
    %2140 = vmatpush1.msra.mxu0 %v616
    %2141 = vmatprep.subr.mxu0 0.0
    %2142 = vmatpush1.msra.mxu0 %v623
    %2143 = vmatprep.subr.mxu0 0.0
    %2144 = vmatpush1.msra.mxu0 %v630
    %2145 = vmatprep.subr.mxu0 0.0
    %2146 = vmatpush1.msra.mxu0 %v637
    %2147 = vmatprep.subr.mxu0 0.0
    %2148 = vmatpush1.msra.mxu0 %v644
    %2149 = vmatprep.subr.mxu0 0.0
    %2150 = vmatpush1.msra.mxu0 %v651
    %2151 = vmatprep.subr.mxu0 0.0
    %2152 = vmatpush1.msra.mxu0 %v658
    %2153 = vmatprep.subr.mxu0 0.0
    %2154 = vmatpush1.msra.mxu0 %v665
    %2155 = vmatprep.mubr.f32.mxu0 %v436
    %2156 = vmatmul.mubr.f32.gmra.mrb[0].mxu0 %v435
    %v2157 = vpop.f32.mrb[0].mxu0
    %v2158 = vadd.f32 %v1227, %v2157
    %v2159 = vpop.f32.mrb[0].mxu0
    %2160 = vdwg.mxu0
    %2161 = vmatprep.subr.mxu0 0.0
    %2162 = vmatpush1.msra.mxu0 %v672
    %2163 = vmatprep.subr.mxu0 0.0
    %2164 = vmatpush1.msra.mxu0 %v679
    %2165 = vmatprep.subr.mxu0 0.0
    %2166 = vmatpush1.msra.mxu0 %v686
    %2167 = vmatprep.subr.mxu0 0.0
    %2168 = vmatpush1.msra.mxu0 %v693
    %2169 = vmatprep.subr.mxu0 0.0
    %2170 = vmatpush1.msra.mxu0 %v700
    %2171 = vmatprep.subr.mxu0 0.0
    %2172 = vmatpush1.msra.mxu0 %v707
    %2173 = vmatprep.subr.mxu0 0.0
    %2174 = vmatpush1.msra.mxu0 %v714
    %2175 = vmatprep.subr.mxu0 0.0
    %2176 = vmatpush1.msra.mxu0 %v721
    %2177 = vmatprep.subr.mxu0 0.0
    %2178 = vmatpush1.msra.mxu0 %v728
    %2179 = vmatprep.subr.mxu0 0.0
    %2180 = vmatpush1.msra.mxu0 %v735
    %2181 = vmatprep.subr.mxu0 0.0
    %2182 = vmatpush1.msra.mxu0 %v742
    %2183 = vmatprep.subr.mxu0 0.0
    %2184 = vmatpush1.msra.mxu0 %v749
    %2185 = vmatprep.subr.mxu0 0.0
    %2186 = vmatpush1.msra.mxu0 %v756
    %2187 = vmatprep.subr.mxu0 0.0
    %2188 = vmatpush1.msra.mxu0 %v763
    %2189 = vmatprep.subr.mxu0 0.0
    %2190 = vmatpush1.msra.mxu0 %v770
    %2191 = vmatprep.subr.mxu0 0.0
    %2192 = vmatpush1.msra.mxu0 %v777
    %2193 = vmatprep.subr.mxu0 0.0
    %2194 = vmatpush1.msra.mxu0 %v784
    %2195 = vmatprep.subr.mxu0 0.0
    %2196 = vmatpush1.msra.mxu0 %v791
    %2197 = vmatprep.subr.mxu0 0.0
    %2198 = vmatpush1.msra.mxu0 %v798
    %2199 = vmatprep.subr.mxu0 0.0
    %2200 = vmatpush1.msra.mxu0 %v805
    %2201 = vmatprep.subr.mxu0 0.0
    %2202 = vmatpush1.msra.mxu0 %v812
    %2203 = vmatprep.subr.mxu0 0.0
    %2204 = vmatpush1.msra.mxu0 %v819
    %2205 = vmatprep.subr.mxu0 0.0
    %2206 = vmatpush1.msra.mxu0 %v826
    %2207 = vmatprep.subr.mxu0 0.0
    %2208 = vmatpush1.msra.mxu0 %v833
    %2209 = vmatprep.subr.mxu0 0.0
    %2210 = vmatpush1.msra.mxu0 %v840
    %2211 = vmatprep.subr.mxu0 0.0
    %2212 = vmatpush1.msra.mxu0 %v847
    %2213 = vmatprep.subr.mxu0 0.0
    %2214 = vmatpush1.msra.mxu0 %v854
    %2215 = vmatprep.subr.mxu0 0.0
    %2216 = vmatpush1.msra.mxu0 %v861
    %2217 = vmatprep.subr.mxu0 0.0
    %2218 = vmatpush1.msra.mxu0 %v868
    %2219 = vmatprep.subr.mxu0 0.0
    %2220 = vmatpush1.msra.mxu0 %v875
    %2221 = vmatprep.subr.mxu0 0.0
    %2222 = vmatpush1.msra.mxu0 %v882
    %2223 = vmatprep.subr.mxu0 0.0
    %2224 = vmatpush1.msra.mxu0 %v889
    %2225 = vmatprep.mubr.f32.mxu0 %v438
    %2226 = vmatmul.mubr.f32.gmra.mrb[0].mxu0 %v437
    %v2227 = vpop.f32.mrb[0].mxu0
    %v2228 = vadd.f32 %v2158, %v2227
    %v2229 = vpop.f32.mrb[0].mxu0
    %2230 = vdwg.mxu0
    %2231 = vmatprep.subr.mxu0 0.0
    %2232 = vmatpush1.msra.mxu0 %v896
    %2233 = vmatprep.subr.mxu0 0.0
    %2234 = vmatpush1.msra.mxu0 %v903
    %2235 = vmatprep.subr.mxu0 0.0
    %2236 = vmatpush1.msra.mxu0 %v910
    %2237 = vmatprep.subr.mxu0 0.0
    %2238 = vmatpush1.msra.mxu0 %v917
    %2239 = vmatprep.subr.mxu0 0.0
    %2240 = vmatpush1.msra.mxu0 %v924
    %2241 = vmatprep.subr.mxu0 0.0
    %2242 = vmatpush1.msra.mxu0 %v931
    %2243 = vmatprep.subr.mxu0 0.0
    %2244 = vmatpush1.msra.mxu0 %v938
    %2245 = vmatprep.subr.mxu0 0.0
    %2246 = vmatpush1.msra.mxu0 %v945
    %2247 = vmatprep.subr.mxu0 0.0
    %2248 = vmatpush1.msra.mxu0 %v952
    %2249 = vmatprep.subr.mxu0 0.0
    %2250 = vmatpush1.msra.mxu0 %v959
    %2251 = vmatprep.subr.mxu0 0.0
    %2252 = vmatpush1.msra.mxu0 %v966
    %2253 = vmatprep.subr.mxu0 0.0
    %2254 = vmatpush1.msra.mxu0 %v973
    %2255 = vmatprep.subr.mxu0 0.0
    %2256 = vmatpush1.msra.mxu0 %v980
    %2257 = vmatprep.subr.mxu0 0.0
    %2258 = vmatpush1.msra.mxu0 %v987
    %2259 = vmatprep.subr.mxu0 0.0
    %2260 = vmatpush1.msra.mxu0 %v994
    %2261 = vmatprep.subr.mxu0 0.0
    %2262 = vmatpush1.msra.mxu0 %v1001
    %2263 = vmatprep.subr.mxu0 0.0
    %2264 = vmatpush1.msra.mxu0 %v1008
    %2265 = vmatprep.subr.mxu0 0.0
    %2266 = vmatpush1.msra.mxu0 %v1015
    %2267 = vmatprep.subr.mxu0 0.0
    %2268 = vmatpush1.msra.mxu0 %v1022
    %2269 = vmatprep.subr.mxu0 0.0
    %2270 = vmatpush1.msra.mxu0 %v1029
    %2271 = vmatprep.subr.mxu0 0.0
    %2272 = vmatpush1.msra.mxu0 %v1036
    %2273 = vmatprep.subr.mxu0 0.0
    %2274 = vmatpush1.msra.mxu0 %v1043
    %2275 = vmatprep.subr.mxu0 0.0
    %2276 = vmatpush1.msra.mxu0 %v1050
    %2277 = vmatprep.subr.mxu0 0.0
    %2278 = vmatpush1.msra.mxu0 %v1057
    %2279 = vmatprep.subr.mxu0 0.0
    %2280 = vmatpush1.msra.mxu0 %v1064
    %2281 = vmatprep.subr.mxu0 0.0
    %2282 = vmatpush1.msra.mxu0 %v1071
    %2283 = vmatprep.subr.mxu0 0.0
    %2284 = vmatpush1.msra.mxu0 %v1078
    %2285 = vmatprep.subr.mxu0 0.0
    %2286 = vmatpush1.msra.mxu0 %v1085
    %2287 = vmatprep.subr.mxu0 0.0
    %2288 = vmatpush1.msra.mxu0 %v1092
    %2289 = vmatprep.subr.mxu0 0.0
    %2290 = vmatpush1.msra.mxu0 %v1099
    %2291 = vmatprep.subr.mxu0 0.0
    %2292 = vmatpush1.msra.mxu0 %v1106
    %2293 = vmatprep.subr.mxu0 0.0
    %2294 = vmatpush1.msra.mxu0 %v1113
    %2295 = vmatprep.mubr.f32.mxu0 %v440
    %2296 = vmatmul.mubr.f32.gmra.mrb[0].mxu0 %v439
    %v2297 = vpop.f32.mrb[0].mxu0
    %v2298 = vadd.f32 %v2228, %v2297
    %v2299 = vpop.f32.mrb[0].mxu0
    %2300 = vdwg.mxu0
    %2301 = vmatprep.subr.mxu0 0.0
    %2302 = vmatpush1.msra.mxu0 %v1120
    %2303 = vmatprep.subr.mxu0 0.0
    %2304 = vmatpush1.msra.mxu0 %v1127
    %2305 = vmatprep.subr.mxu0 0.0
    %2306 = vmatpush1.msra.mxu0 %v1134
    %2307 = vmatprep.subr.mxu0 0.0
    %2308 = vmatpush1.msra.mxu0 %v1141
    %2309 = vmatprep.subr.mxu0 0.0
    %2310 = vmatpush1.msra.mxu0 %v1148
    %2311 = vmatprep.subr.mxu0 0.0
    %2312 = vmatpush1.msra.mxu0 %v1155
    %2313 = vmatprep.subr.mxu0 0.0
    %2314 = vmatpush1.msra.mxu0 %v1162
    %2315 = vmatprep.subr.mxu0 0.0
    %2316 = vmatpush1.msra.mxu0 %v1169
    %2317 = vmatprep.subr.mxu0 0.0
    %2318 = vmatpush1.msra.mxu0 %v1176
    %2319 = vmatprep.subr.mxu0 0.0
    %2320 = vmatpush1.msra.mxu0 %v1183
    %2321 = vmatprep.subr.mxu0 0.0
    %2322 = vmatpush1.msra.mxu0 %v1190
    %2323 = vmatprep.subr.mxu0 0.0
    %2324 = vmatpush1.msra.mxu0 %v1197
    %2325 = vmatprep.subr.mxu0 0.0
    %2326 = vmatpush1.msra.mxu0 0.0
    %2327 = vmatprep.subr.mxu0 0.0
    %2328 = vmatpush1.msra.mxu0 0.0
    %2329 = vmatprep.subr.mxu0 0.0
    %2330 = vmatpush1.msra.mxu0 0.0
    %2331 = vmatprep.subr.mxu0 0.0
    %2332 = vmatpush1.msra.mxu0 0.0
    %2333 = vmatprep.subr.mxu0 0.0
    %2334 = vmatpush1.msra.mxu0 0.0
    %2335 = vmatprep.subr.mxu0 0.0
    %2336 = vmatpush1.msra.mxu0 0.0
    %2337 = vmatprep.subr.mxu0 0.0
    %2338 = vmatpush1.msra.mxu0 0.0
    %2339 = vmatprep.subr.mxu0 0.0
    %2340 = vmatpush1.msra.mxu0 0.0
    %2341 = vmatprep.subr.mxu0 0.0
    %2342 = vmatpush1.msra.mxu0 0.0
    %2343 = vmatprep.subr.mxu0 0.0
    %2344 = vmatpush1.msra.mxu0 0.0
    %2345 = vmatprep.subr.mxu0 0.0
    %2346 = vmatpush1.msra.mxu0 0.0
    %2347 = vmatprep.subr.mxu0 0.0
    %2348 = vmatpush1.msra.mxu0 0.0
    %2349 = vmatprep.subr.mxu0 0.0
    %2350 = vmatpush1.msra.mxu0 0.0
    %2351 = vmatprep.subr.mxu0 0.0
    %2352 = vmatpush1.msra.mxu0 0.0
    %2353 = vmatprep.subr.mxu0 0.0
    %2354 = vmatpush1.msra.mxu0 0.0
    %2355 = vmatprep.subr.mxu0 0.0
    %2356 = vmatpush1.msra.mxu0 0.0
    %2357 = vmatprep.subr.mxu0 0.0
    %2358 = vmatpush1.msra.mxu0 0.0
    %2359 = vmatprep.subr.mxu0 0.0
    %2360 = vmatpush1.msra.mxu0 0.0
    %2361 = vmatprep.subr.mxu0 0.0
    %2362 = vmatpush1.msra.mxu0 0.0
    %2363 = vmatprep.subr.mxu0 0.0
    %2364 = vmatpush1.msra.mxu0 0.0
    %2365 = vmatprep.mubr.f32.mxu0 0.0
    %2366 = vmatmul.mubr.f32.gmra.mrb[0].mxu0 %v1237
    %v2367 = vpop.f32.mrb[0].mxu0
    %v2368 = vadd.f32 %v2298, %v2367
    %v2369 = vpop.f32.mrb[0].mxu0
    %2370 = vdwg.mxu0
    %v2371 = vrcp.pop %v1519
    %v2372 = vmul.f32 1.0, %v2371
    %v2373 = vrcp.pop %v1521
    %v2374 = vmul.f32 1.0, %v2373
    %v2375 = vrcp.pop %v1803
    %v2376 = vmul.f32 1.0, %v2375
    %v2377 = vrcp.pop %v1805
    %v2378 = vmul.f32 1.0, %v2377
    %v2379 = vrcp.pop %v2087
    %v2380 = vmul.f32 1.0, %v2379
    %v2381 = vrcp.pop %v2089
    %v2382 = vmul.f32 1.0, %v2381
    %v2383 = vrcp.pop %v2368
    %v2384 = vmul.f32 1.0, %v2383
    %v2385 = vld [vmem:[%s5] sm:$0xff]
    %v2386 = vld [vmem:[%s5 + $0x8] sm:$0xff]
    %v2387 = vld [vmem:[%s5 + $0x10] sm:$0xff]
    %v2388 = vld [vmem:[%s5 + $0x18] sm:$0xff]
    %v2389 = vld [vmem:[%s5 + $0x20] sm:$0xff]
    %v2390 = vld [vmem:[%s5 + $0x28] sm:$0xff]
    %v2391 = vld [vmem:[%s5 + $0x30] sm:$0xff]
    %v2392 = vld [vmem:[%s5 + $0x38] sm:$0xff]
    %v2393 = vld [vmem:[%s5 + $0x40] sm:$0xff]
    %v2394 = vld [vmem:[%s5 + $0x48] sm:$0xff]
    %v2395 = vld [vmem:[%s5 + $0x50] sm:$0xff]
    %v2396 = vld [vmem:[%s5 + $0x58] sm:$0xff]
    %v2397 = vld [vmem:[%s5 + $0x60] sm:$0xff]
    %v2398 = vld [vmem:[%s5 + $0x68] sm:$0xff]
    %v2399 = vld [vmem:[%s5 + $0x70] sm:$0xff]
    %v2400 = vld [vmem:[%s5 + $0x78] sm:$0xff]
    %v2401 = vld [vmem:[%s5 + $0x80] sm:$0xff]
    %v2402 = vld [vmem:[%s5 + $0x88] sm:$0xff]
    %v2403 = vld [vmem:[%s5 + $0x90] sm:$0xff]
    %v2404 = vld [vmem:[%s5 + $0x98] sm:$0xff]
    %v2405 = vld [vmem:[%s5 + $0xa0] sm:$0xff]
    %v2406 = vld [vmem:[%s5 + $0xa8] sm:$0xff]
    %v2407 = vld [vmem:[%s5 + $0xb0] sm:$0xff]
    %v2408 = vld [vmem:[%s5 + $0xb8] sm:$0xff]
    %v2409 = vld [vmem:[%s5 + $0xc0] sm:$0xff]
    %v2410 = vld [vmem:[%s5 + $0xc8] sm:$0xff]
    %v2411 = vld [vmem:[%s5 + $0xd0] sm:$0xff]
    %v2412 = vld [vmem:[%s5 + $0xd8] sm:$0xff]
    %v2413 = vld [vmem:[%s5 + $0xe0] sm:$0xff]
    %v2414 = vld [vmem:[%s5 + $0xe8] sm:$0xff]
    %v2415 = vld [vmem:[%s5 + $0xf0] sm:$0xff]
    %v2416 = vld [vmem:[%s5 + $0xf8] sm:$0xff]
    %v2417 = vld [vmem:[%s5 + $0x100] sm:$0xff]
    %v2418 = vld [vmem:[%s5 + $0x108] sm:$0xff]
    %v2419 = vld [vmem:[%s5 + $0x110] sm:$0xff]
    %v2420 = vld [vmem:[%s5 + $0x118] sm:$0xff]
    %v2421 = vld [vmem:[%s5 + $0x120] sm:$0xff]
    %v2422 = vld [vmem:[%s5 + $0x128] sm:$0xff]
    %v2423 = vld [vmem:[%s5 + $0x130] sm:$0xff]
    %v2424 = vld [vmem:[%s5 + $0x138] sm:$0xff]
    %v2425 = vld [vmem:[%s5 + $0x140] sm:$0xff]
    %v2426 = vld [vmem:[%s5 + $0x148] sm:$0xff]
    %v2427 = vld [vmem:[%s5 + $0x150] sm:$0xff]
    %v2428 = vld [vmem:[%s5 + $0x158] sm:$0xff]
    %v2429 = vld [vmem:[%s5 + $0x160] sm:$0xff]
    %v2430 = vld [vmem:[%s5 + $0x168] sm:$0xff]
    %v2431 = vld [vmem:[%s5 + $0x170] sm:$0xff]
    %v2432 = vld [vmem:[%s5 + $0x178] sm:$0xff]
    %v2433 = vld [vmem:[%s5 + $0x180] sm:$0xff]
    %v2434 = vld [vmem:[%s5 + $0x188] sm:$0xff]
    %v2435 = vld [vmem:[%s5 + $0x190] sm:$0xff]
    %v2436 = vld [vmem:[%s5 + $0x198] sm:$0xff]
    %v2437 = vld [vmem:[%s5 + $0x1a0] sm:$0xff]
    %v2438 = vld [vmem:[%s5 + $0x1a8] sm:$0xff]
    %v2439 = vld [vmem:[%s5 + $0x1b0] sm:$0xff]
    %v2440 = vld [vmem:[%s5 + $0x1b8] sm:$0xff]
    %v2441 = vld [vmem:[%s5 + $0x1c0] sm:$0xff]
    %v2442 = vld [vmem:[%s5 + $0x1c8] sm:$0xff]
    %v2443 = vld [vmem:[%s5 + $0x1d0] sm:$0xff]
    %v2444 = vld [vmem:[%s5 + $0x1d8] sm:$0xff]
    %v2445 = vld [vmem:[%s5 + $0x1e0] sm:$0xff]
    %v2446 = vld [vmem:[%s5 + $0x1e8] sm:$0xff]
    %v2447 = vld [vmem:[%s5 + $0x1f0] sm:$0xff]
    %v2448 = vld [vmem:[%s5 + $0x1f8] sm:$0xff]
    %v2449 = vld [vmem:[%s5 + $0x200] sm:$0xff]
    %v2450 = vld [vmem:[%s5 + $0x208] sm:$0xff]
    %v2451 = vld [vmem:[%s5 + $0x210] sm:$0xff]
    %v2452 = vld [vmem:[%s5 + $0x218] sm:$0xff]
    %v2453 = vld [vmem:[%s5 + $0x220] sm:$0xff]
    %v2454 = vld [vmem:[%s5 + $0x228] sm:$0xff]
    %v2455 = vld [vmem:[%s5 + $0x230] sm:$0xff]
    %v2456 = vld [vmem:[%s5 + $0x238] sm:$0xff]
    %v2457 = vld [vmem:[%s5 + $0x240] sm:$0xff]
    %v2458 = vld [vmem:[%s5 + $0x248] sm:$0xff]
    %v2459 = vld [vmem:[%s5 + $0x250] sm:$0xff]
    %v2460 = vld [vmem:[%s5 + $0x258] sm:$0xff]
    %v2461 = vld [vmem:[%s5 + $0x260] sm:$0xff]
    %v2462 = vld [vmem:[%s5 + $0x268] sm:$0xff]
    %v2463 = vld [vmem:[%s5 + $0x270] sm:$0xff]
    %v2464 = vld [vmem:[%s5 + $0x278] sm:$0xff]
    %v2465 = vld [vmem:[%s5 + $0x280] sm:$0xff]
    %v2466 = vld [vmem:[%s5 + $0x288] sm:$0xff]
    %v2467 = vld [vmem:[%s5 + $0x290] sm:$0xff]
    %v2468 = vld [vmem:[%s5 + $0x298] sm:$0xff]
    %v2469 = vld [vmem:[%s5 + $0x2a0] sm:$0xff]
    %v2470 = vld [vmem:[%s5 + $0x2a8] sm:$0xff]
    %v2471 = vld [vmem:[%s5 + $0x2b0] sm:$0xff]
    %v2472 = vld [vmem:[%s5 + $0x2b8] sm:$0xff]
    %v2473 = vld [vmem:[%s5 + $0x2c0] sm:$0xff]
    %v2474 = vld [vmem:[%s5 + $0x2c8] sm:$0xff]
    %v2475 = vld [vmem:[%s5 + $0x2d0] sm:$0xff]
    %v2476 = vld [vmem:[%s5 + $0x2d8] sm:$0xff]
    %v2477 = vld [vmem:[%s5 + $0x2e0] sm:$0xff]
    %v2478 = vld [vmem:[%s5 + $0x2e8] sm:$0xff]
    %v2479 = vld [vmem:[%s5 + $0x2f0] sm:$0xff]
    %v2480 = vld [vmem:[%s5 + $0x2f8] sm:$0xff]
    %v2481 = vld [vmem:[%s5 + $0x300] sm:$0xff]
    %v2482 = vld [vmem:[%s5 + $0x308] sm:$0xff]
    %v2483 = vld [vmem:[%s5 + $0x310] sm:$0xff]
    %v2484 = vld [vmem:[%s5 + $0x318] sm:$0xff]
    %v2485 = vld [vmem:[%s5 + $0x320] sm:$0xff]
    %v2486 = vld [vmem:[%s5 + $0x328] sm:$0xff]
    %v2487 = vld [vmem:[%s5 + $0x330] sm:$0xff]
    %v2488 = vld [vmem:[%s5 + $0x338] sm:$0xff]
    %v2489 = vld [vmem:[%s5 + $0x340] sm:$0xff]
    %v2490 = vld [vmem:[%s5 + $0x348] sm:$0xff]
    %v2491 = vld [vmem:[%s5 + $0x350] sm:$0xff]
    %v2492 = vld [vmem:[%s5 + $0x358] sm:$0xff]
    %v2493 = vld [vmem:[%s5 + $0x360] sm:$0xff]
    %v2494 = vld [vmem:[%s5 + $0x368] sm:$0xff]
    %v2495 = vld [vmem:[%s5 + $0x370] sm:$0xff]
    %v2496 = vld [vmem:[%s5 + $0x378] sm:$0xff]
    %v2497 = vld [vmem:[%s5 + $0x380] sm:$0xff]
    %v2498 = vld [vmem:[%s5 + $0x388] sm:$0xff]
    %v2499 = vld [vmem:[%s5 + $0x390] sm:$0xff]
    %v2500 = vld [vmem:[%s5 + $0x398] sm:$0xff]
    %v2501 = vld [vmem:[%s5 + $0x3a0] sm:$0xff]
    %v2502 = vld [vmem:[%s5 + $0x3a8] sm:$0xff]
    %v2503 = vld [vmem:[%s5 + $0x3b0] sm:$0xff]
    %v2504 = vld [vmem:[%s5 + $0x3b8] sm:$0xff]
    %v2505 = vld [vmem:[%s5 + $0x3c0] sm:$0xff]
    %v2506 = vld [vmem:[%s5 + $0x3c8] sm:$0xff]
    %v2507 = vld [vmem:[%s5 + $0x3d0] sm:$0xff]
    %v2508 = vld [vmem:[%s5 + $0x3d8] sm:$0xff]
    %v2509 = vld [vmem:[%s5 + $0x3e0] sm:$0xff]
    %v2510 = vld [vmem:[%s5 + $0x3e8] sm:$0xff]
    %v2511 = vld [vmem:[%s5 + $0x3f0] sm:$0xff]
    %v2512 = vld [vmem:[%s5 + $0x3f8] sm:$0xff]
    %v2513 = vld [vmem:[%s5 + $0x400] sm:$0xff]
    %v2514 = vld [vmem:[%s5 + $0x408] sm:$0xff]
    %v2515 = vld [vmem:[%s5 + $0x410] sm:$0xff]
    %v2516 = vld [vmem:[%s5 + $0x418] sm:$0xff]
    %v2517 = vld [vmem:[%s5 + $0x420] sm:$0xff]
    %v2518 = vld [vmem:[%s5 + $0x428] sm:$0xff]
    %v2519 = vld [vmem:[%s5 + $0x430] sm:$0xff]
    %v2520 = vld [vmem:[%s5 + $0x438] sm:$0xff]
    %v2521 = vld [vmem:[%s5 + $0x440] sm:$0xff]
    %v2522 = vld [vmem:[%s5 + $0x448] sm:$0xff]
    %v2523 = vld [vmem:[%s5 + $0x450] sm:$0xff]
    %v2524 = vld [vmem:[%s5 + $0x458] sm:$0xff]
    %v2525 = vld [vmem:[%s5 + $0x460] sm:$0xff]
    %v2526 = vld [vmem:[%s5 + $0x468] sm:$0xff]
    %v2527 = vld [vmem:[%s5 + $0x470] sm:$0xff]
    %v2528 = vld [vmem:[%s5 + $0x478] sm:$0xff]
    %v2529 = vld [vmem:[%s5 + $0x480] sm:$0xff]
    %v2530 = vld [vmem:[%s5 + $0x488] sm:$0xff]
    %v2531 = vld [vmem:[%s5 + $0x490] sm:$0xff]
    %v2532 = vld [vmem:[%s5 + $0x498] sm:$0xff]
    %v2533 = vld [vmem:[%s5 + $0x4a0] sm:$0xff]
    %v2534 = vld [vmem:[%s5 + $0x4a8] sm:$0xff]
    %v2535 = vld [vmem:[%s5 + $0x4b0] sm:$0xff]
    %v2536 = vld [vmem:[%s5 + $0x4b8] sm:$0xff]
    %v2537 = vld [vmem:[%s5 + $0x4c0] sm:$0xff]
    %v2538 = vld [vmem:[%s5 + $0x4c8] sm:$0xff]
    %v2539 = vld [vmem:[%s5 + $0x4d0] sm:$0xff]
    %v2540 = vld [vmem:[%s5 + $0x4d8] sm:$0xff]
    %v2541 = vld [vmem:[%s5 + $0x4e0] sm:$0xff]
    %v2542 = vld [vmem:[%s5 + $0x4e8] sm:$0xff]
    %v2543 = vld [vmem:[%s5 + $0x4f0] sm:$0xff]
    %v2544 = vld [vmem:[%s5 + $0x4f8] sm:$0xff]
    %v2545 = vld [vmem:[%s5 + $0x500] sm:$0xff]
    %v2546 = vld [vmem:[%s5 + $0x508] sm:$0xff]
    %v2547 = vld [vmem:[%s5 + $0x510] sm:$0xff]
    %v2548 = vld [vmem:[%s5 + $0x518] sm:$0xff]
    %v2549 = vld [vmem:[%s5 + $0x520] sm:$0xff]
    %v2550 = vld [vmem:[%s5 + $0x528] sm:$0xff]
    %v2551 = vld [vmem:[%s5 + $0x530] sm:$0xff]
    %v2552 = vld [vmem:[%s5 + $0x538] sm:$0xff]
    %v2553 = vld [vmem:[%s5 + $0x540] sm:$0xff]
    %v2554 = vld [vmem:[%s5 + $0x548] sm:$0xff]
    %v2555 = vld [vmem:[%s5 + $0x550] sm:$0xff]
    %v2556 = vld [vmem:[%s5 + $0x558] sm:$0xff]
    %v2557 = vld [vmem:[%s5 + $0x560] sm:$0xff]
    %v2558 = vld [vmem:[%s5 + $0x568] sm:$0xff]
    %v2559 = vld [vmem:[%s5 + $0x570] sm:$0xff]
    %v2560 = vld [vmem:[%s5 + $0x578] sm:$0xff]
    %v2561 = vld [vmem:[%s5 + $0x580] sm:$0xff]
    %v2562 = vld [vmem:[%s5 + $0x588] sm:$0xff]
    %v2563 = vld [vmem:[%s5 + $0x590] sm:$0xff]
    %v2564 = vld [vmem:[%s5 + $0x598] sm:$0xff]
    %v2565 = vld [vmem:[%s5 + $0x5a0] sm:$0xff]
    %v2566 = vld [vmem:[%s5 + $0x5a8] sm:$0xff]
    %v2567 = vld [vmem:[%s5 + $0x5b0] sm:$0xff]
    %v2568 = vld [vmem:[%s5 + $0x5b8] sm:$0xff]
    %v2569 = vld [vmem:[%s5 + $0x5c0] sm:$0xff]
    %v2570 = vld [vmem:[%s5 + $0x5c8] sm:$0xff]
    %v2571 = vld [vmem:[%s5 + $0x5d0] sm:$0xff]
    %v2572 = vld [vmem:[%s5 + $0x5d8] sm:$0xff]
    %v2573 = vld [vmem:[%s5 + $0x5e0] sm:$0xff]
    %v2574 = vld [vmem:[%s5 + $0x5e8] sm:$0xff]
    %v2575 = vld [vmem:[%s5 + $0x5f0] sm:$0xff]
    %v2576 = vld [vmem:[%s5 + $0x5f8] sm:$0xff]
    %v2577 = vld [vmem:[%s5 + $0x600] sm:$0xff]
    %v2578 = vld [vmem:[%s5 + $0x608] sm:$0xff]
    %v2579 = vld [vmem:[%s5 + $0x610] sm:$0xff]
    %v2580 = vld [vmem:[%s5 + $0x618] sm:$0xff]
    %v2581 = vld [vmem:[%s5 + $0x620] sm:$0xff]
    %v2582 = vld [vmem:[%s5 + $0x628] sm:$0xff]
    %v2583 = vld [vmem:[%s5 + $0x630] sm:$0xff]
    %v2584 = vld [vmem:[%s5 + $0x638] sm:$0xff]
    %v2585 = vld [vmem:[%s5 + $0x640] sm:$0xff]
    %v2586 = vld [vmem:[%s5 + $0x648] sm:$0xff]
    %v2587 = vld [vmem:[%s5 + $0x650] sm:$0xff]
    %v2588 = vld [vmem:[%s5 + $0x658] sm:$0xff]
    %v2589 = vld [vmem:[%s5 + $0x660] sm:$0xff]
    %v2590 = vld [vmem:[%s5 + $0x668] sm:$0xff]
    %v2591 = vld [vmem:[%s5 + $0x670] sm:$0xff]
    %v2592 = vld [vmem:[%s5 + $0x678] sm:$0xff]
    %v2593 = vld [vmem:[%s5 + $0x680] sm:$0xff]
    %v2594 = vld [vmem:[%s5 + $0x688] sm:$0xff]
    %v2595 = vld [vmem:[%s5 + $0x690] sm:$0xff]
    %v2596 = vld [vmem:[%s5 + $0x698] sm:$0xff]
    %v2597 = vld [vmem:[%s5 + $0x6a0] sm:$0xff]
    %v2598 = vld [vmem:[%s5 + $0x6a8] sm:$0xff]
    %v2599 = vld [vmem:[%s5 + $0x6b0] sm:$0xff]
    %v2600 = vld [vmem:[%s5 + $0x6b8] sm:$0xff]
    %v2601 = vld [vmem:[%s5 + $0x6c0] sm:$0xff]
    %v2602 = vld [vmem:[%s5 + $0x6c8] sm:$0xff]
    %v2603 = vld [vmem:[%s5 + $0x6d0] sm:$0xff]
    %v2604 = vld [vmem:[%s5 + $0x6d8] sm:$0xff]
    %v2605 = vld [vmem:[%s5 + $0x6e0] sm:$0xff]
    %v2606 = vld [vmem:[%s5 + $0x6e8] sm:$0xff]
    %v2607 = vld [vmem:[%s5 + $0x6f0] sm:$0xff]
    %v2608 = vld [vmem:[%s5 + $0x6f8] sm:$0xff]
    %v2609 = vld [vmem:[%s5 + $0x700] sm:$0xff]
    %v2610 = vld [vmem:[%s5 + $0x708] sm:$0xff]
    %v2611 = vld [vmem:[%s5 + $0x710] sm:$0xff]
    %v2612 = vld [vmem:[%s5 + $0x718] sm:$0xff]
    %v2613 = vld [vmem:[%s5 + $0x720] sm:$0xff]
    %v2614 = vld [vmem:[%s5 + $0x728] sm:$0xff]
    %v2615 = vld [vmem:[%s5 + $0x730] sm:$0xff]
    %v2616 = vld [vmem:[%s5 + $0x738] sm:$0xff]
    %v2617 = vld [vmem:[%s5 + $0x740] sm:$0xff]
    %v2618 = vld [vmem:[%s5 + $0x748] sm:$0xff]
    %v2619 = vld [vmem:[%s5 + $0x750] sm:$0xff]
    %v2620 = vld [vmem:[%s5 + $0x758] sm:$0xff]
    %v2621 = vld [vmem:[%s5 + $0x760] sm:$0xff]
    %v2622 = vld [vmem:[%s5 + $0x768] sm:$0xff]
    %v2623 = vld [vmem:[%s5 + $0x770] sm:$0xff]
    %v2624 = vld [vmem:[%s5 + $0x778] sm:$0xff]
    %v2625 = vld [vmem:[%s5 + $0x780] sm:$0xff]
    %v2626 = vld [vmem:[%s5 + $0x788] sm:$0xff]
    %v2627 = vld [vmem:[%s5 + $0x790] sm:$0xff]
    %v2628 = vld [vmem:[%s5 + $0x798] sm:$0xff]
    %v2629 = vld [vmem:[%s5 + $0x7a0] sm:$0xff]
    %v2630 = vld [vmem:[%s5 + $0x7a8] sm:$0xff]
    %v2631 = vld [vmem:[%s5 + $0x7b0] sm:$0xff]
    %v2632 = vld [vmem:[%s5 + $0x7b8] sm:$0xff]
    %v2633 = vld [vmem:[%s5 + $0x7c0] sm:$0xff]
    %v2634 = vld [vmem:[%s5 + $0x7c8] sm:$0xff]
    %v2635 = vld [vmem:[%s5 + $0x7d0] sm:$0xff]
    %v2636 = vld [vmem:[%s5 + $0x7d8] sm:$0xff]
    %v2637 = vld [vmem:[%s5 + $0x7e0] sm:$0xff]
    %v2638 = vld [vmem:[%s5 + $0x7e8] sm:$0xff]
    %v2639 = vld [vmem:[%s5 + $0x7f0] sm:$0xff]
    %v2640 = vld [vmem:[%s5 + $0x7f8] sm:$0xff]
    %v2641 = vld [vmem:[%s5 + $0x800] sm:$0xff]
    %v2642 = vld [vmem:[%s5 + $0x808] sm:$0xff]
    %v2643 = vld [vmem:[%s5 + $0x810] sm:$0xff]
    %v2644 = vld [vmem:[%s5 + $0x818] sm:$0xff]
    %v2645 = vld [vmem:[%s5 + $0x820] sm:$0xff]
    %v2646 = vld [vmem:[%s5 + $0x828] sm:$0xff]
    %v2647 = vld [vmem:[%s5 + $0x830] sm:$0xff]
    %v2648 = vld [vmem:[%s5 + $0x838] sm:$0xff]
    %v2649 = vld [vmem:[%s5 + $0x840] sm:$0xff]
    %v2650 = vld [vmem:[%s5 + $0x848] sm:$0xff]
    %v2651 = vld [vmem:[%s5 + $0x850] sm:$0xff]
    %v2652 = vld [vmem:[%s5 + $0x858] sm:$0xff]
    %v2653 = vld [vmem:[%s5 + $0x860] sm:$0xff]
    %v2654 = vld [vmem:[%s5 + $0x868] sm:$0xff]
    %v2655 = vld [vmem:[%s5 + $0x870] sm:$0xff]
    %v2656 = vld [vmem:[%s5 + $0x878] sm:$0xff]
    %v2657 = vld [vmem:[%s5 + $0x880] sm:$0xff]
    %v2658 = vld [vmem:[%s5 + $0x888] sm:$0xff]
    %v2659 = vld [vmem:[%s5 + $0x890] sm:$0xff]
    %v2660 = vld [vmem:[%s5 + $0x898] sm:$0xff]
    %v2661 = vld [vmem:[%s5 + $0x8a0] sm:$0xff]
    %v2662 = vld [vmem:[%s5 + $0x8a8] sm:$0xff]
    %v2663 = vld [vmem:[%s5 + $0x8b0] sm:$0xff]
    %v2664 = vld [vmem:[%s5 + $0x8b8] sm:$0xff]
    %v2665 = vld [vmem:[%s5 + $0x8c0] sm:$0xff]
    %v2666 = vld [vmem:[%s5 + $0x8c8] sm:$0xff]
    %v2667 = vld [vmem:[%s5 + $0x8d0] sm:$0xff]
    %v2668 = vld [vmem:[%s5 + $0x8d8] sm:$0xff]
    %v2669 = vld [vmem:[%s5 + $0x8e0] sm:$0xff]
    %v2670 = vld [vmem:[%s5 + $0x8e8] sm:$0xff]
    %v2671 = vld [vmem:[%s5 + $0x8f0] sm:$0xff]
    %v2672 = vld [vmem:[%s5 + $0x8f8] sm:$0xff]
    %v2673 = vld [vmem:[%s5 + $0x900] sm:$0xff]
    %v2674 = vld [vmem:[%s5 + $0x908] sm:$0xff]
    %v2675 = vld [vmem:[%s5 + $0x910] sm:$0xff]
    %v2676 = vld [vmem:[%s5 + $0x918] sm:$0xff]
    %v2677 = vld [vmem:[%s5 + $0x920] sm:$0xff]
    %v2678 = vld [vmem:[%s5 + $0x928] sm:$0xff]
    %v2679 = vld [vmem:[%s5 + $0x930] sm:$0xff]
    %v2680 = vld [vmem:[%s5 + $0x938] sm:$0xff]
    %v2681 = vld [vmem:[%s5 + $0x940] sm:$0xff]
    %v2682 = vld [vmem:[%s5 + $0x948] sm:$0xff]
    %v2683 = vld [vmem:[%s5 + $0x950] sm:$0xff]
    %v2684 = vld [vmem:[%s5 + $0x958] sm:$0xff]
    %v2685 = vld [vmem:[%s5 + $0x960] sm:$0xff]
    %v2686 = vld [vmem:[%s5 + $0x968] sm:$0xff]
    %v2687 = vld [vmem:[%s5 + $0x970] sm:$0xff]
    %v2688 = vld [vmem:[%s5 + $0x978] sm:$0xff]
    %v2689 = vld [vmem:[%s5 + $0x980] sm:$0xff]
    %v2690 = vld [vmem:[%s5 + $0x988] sm:$0xff]
    %v2691 = vld [vmem:[%s5 + $0x990] sm:$0xff]
    %v2692 = vld [vmem:[%s5 + $0x998] sm:$0xff]
    %v2693 = vld [vmem:[%s5 + $0x9a0] sm:$0xff]
    %v2694 = vld [vmem:[%s5 + $0x9a8] sm:$0xff]
    %v2695 = vld [vmem:[%s5 + $0x9b0] sm:$0xff]
    %v2696 = vld [vmem:[%s5 + $0x9b8] sm:$0xff]
    %v2697 = vld [vmem:[%s5 + $0x9c0] sm:$0xff]
    %v2698 = vld [vmem:[%s5 + $0x9c8] sm:$0xff]
    %v2699 = vld [vmem:[%s5 + $0x9d0] sm:$0xff]
    %v2700 = vld [vmem:[%s5 + $0x9d8] sm:$0xff]
    %v2701 = vld [vmem:[%s5 + $0x9e0] sm:$0xff]
    %v2702 = vld [vmem:[%s5 + $0x9e8] sm:$0xff]
    %v2703 = vld [vmem:[%s5 + $0x9f0] sm:$0xff]
    %v2704 = vld [vmem:[%s5 + $0x9f8] sm:$0xff]
    %v2705 = vld [vmem:[%s5 + $0xa00] sm:$0xff]
    %v2706 = vld [vmem:[%s5 + $0xa08] sm:$0xff]
    %v2707 = vld [vmem:[%s5 + $0xa10] sm:$0xff]
    %v2708 = vld [vmem:[%s5 + $0xa18] sm:$0xff]
    %v2709 = vld [vmem:[%s5 + $0xa20] sm:$0xff]
    %v2710 = vld [vmem:[%s5 + $0xa28] sm:$0xff]
    %v2711 = vld [vmem:[%s5 + $0xa30] sm:$0xff]
    %v2712 = vld [vmem:[%s5 + $0xa38] sm:$0xff]
    %v2713 = vld [vmem:[%s5 + $0xa40] sm:$0xff]
    %v2714 = vld [vmem:[%s5 + $0xa48] sm:$0xff]
    %v2715 = vld [vmem:[%s5 + $0xa50] sm:$0xff]
    %v2716 = vld [vmem:[%s5 + $0xa58] sm:$0xff]
    %v2717 = vld [vmem:[%s5 + $0xa60] sm:$0xff]
    %v2718 = vld [vmem:[%s5 + $0xa68] sm:$0xff]
    %v2719 = vld [vmem:[%s5 + $0xa70] sm:$0xff]
    %v2720 = vld [vmem:[%s5 + $0xa78] sm:$0xff]
    %v2721 = vld [vmem:[%s5 + $0xa80] sm:$0xff]
    %v2722 = vld [vmem:[%s5 + $0xa88] sm:$0xff]
    %v2723 = vld [vmem:[%s5 + $0xa90] sm:$0xff]
    %v2724 = vld [vmem:[%s5 + $0xa98] sm:$0xff]
    %v2725 = vld [vmem:[%s5 + $0xaa0] sm:$0xff]
    %v2726 = vld [vmem:[%s5 + $0xaa8] sm:$0xff]
    %v2727 = vld [vmem:[%s5 + $0xab0] sm:$0xff]
    %v2728 = vld [vmem:[%s5 + $0xab8] sm:$0xff]
    %v2729 = vld [vmem:[%s5 + $0xac0] sm:$0xff]
    %v2730 = vld [vmem:[%s5 + $0xac8] sm:$0xff]
    %v2731 = vld [vmem:[%s5 + $0xad0] sm:$0xff]
    %v2732 = vld [vmem:[%s5 + $0xad8] sm:$0xff]
    %v2733 = vld [vmem:[%s5 + $0xae0] sm:$0xff]
    %v2734 = vld [vmem:[%s5 + $0xae8] sm:$0xff]
    %v2735 = vld [vmem:[%s5 + $0xaf0] sm:$0xff]
    %v2736 = vld [vmem:[%s5 + $0xaf8] sm:$0xff]
    %v2737 = vld [vmem:[%s5 + $0xb00] sm:$0xff]
    %v2738 = vld [vmem:[%s5 + $0xb08] sm:$0xff]
    %v2739 = vld [vmem:[%s5 + $0xb10] sm:$0xff]
    %v2740 = vld [vmem:[%s5 + $0xb18] sm:$0xff]
    %v2741 = vld [vmem:[%s5 + $0xb20] sm:$0xff]
    %v2742 = vld [vmem:[%s5 + $0xb28] sm:$0xff]
    %v2743 = vld [vmem:[%s5 + $0xb30] sm:$0xff]
    %v2744 = vld [vmem:[%s5 + $0xb38] sm:$0xff]
    %v2745 = vld [vmem:[%s5 + $0xb40] sm:$0xff]
    %v2746 = vld [vmem:[%s5 + $0xb48] sm:$0xff]
    %v2747 = vld [vmem:[%s5 + $0xb50] sm:$0xff]
    %v2748 = vld [vmem:[%s5 + $0xb58] sm:$0xff]
    %v2749 = vld [vmem:[%s5 + $0xb60] sm:$0xff]
    %v2750 = vld [vmem:[%s5 + $0xb68] sm:$0xff]
    %v2751 = vld [vmem:[%s5 + $0xb70] sm:$0xff]
    %v2752 = vld [vmem:[%s5 + $0xb78] sm:$0xff]
    %v2753 = vld [vmem:[%s5 + $0xb80] sm:$0xff]
    %v2754 = vld [vmem:[%s5 + $0xb88] sm:$0xff]
    %v2755 = vld [vmem:[%s5 + $0xb90] sm:$0xff]
    %v2756 = vld [vmem:[%s5 + $0xb98] sm:$0xff]
    %v2757 = vld [vmem:[%s5 + $0xba0] sm:$0xff]
    %v2758 = vld [vmem:[%s5 + $0xba8] sm:$0xff]
    %v2759 = vld [vmem:[%s5 + $0xbb0] sm:$0xff]
    %v2760 = vld [vmem:[%s5 + $0xbb8] sm:$0xff]
    %v2761 = vld [vmem:[%s5 + $0xbc0] sm:$0xff]
    %v2762 = vld [vmem:[%s5 + $0xbc8] sm:$0xff]
    %v2763 = vld [vmem:[%s5 + $0xbd0] sm:$0xff]
    %v2764 = vld [vmem:[%s5 + $0xbd8] sm:$0xff]
    %v2765 = vld [vmem:[%s5 + $0xbe0] sm:$0xff]
    %v2766 = vld [vmem:[%s5 + $0xbe8] sm:$0xff]
    %v2767 = vld [vmem:[%s5 + $0xbf0] sm:$0xff]
    %v2768 = vld [vmem:[%s5 + $0xbf8] sm:$0xff]
    %v2769 = vld [vmem:[%s5 + $0xc00] sm:$0xff]
    %v2770 = vld [vmem:[%s5 + $0xc08] sm:$0xff]
    %v2771 = vld [vmem:[%s5 + $0xc10] sm:$0xff]
    %v2772 = vld [vmem:[%s5 + $0xc18] sm:$0xff]
    %v2773 = vld [vmem:[%s5 + $0xc20] sm:$0xff]
    %v2774 = vld [vmem:[%s5 + $0xc28] sm:$0xff]
    %v2775 = vld [vmem:[%s5 + $0xc30] sm:$0xff]
    %v2776 = vld [vmem:[%s5 + $0xc38] sm:$0xff]
    %v2777 = vld [vmem:[%s5 + $0xc40] sm:$0xff]
    %v2778 = vld [vmem:[%s5 + $0xc48] sm:$0xff]
    %v2779 = vld [vmem:[%s5 + $0xc50] sm:$0xff]
    %v2780 = vld [vmem:[%s5 + $0xc58] sm:$0xff]
    %v2781 = vld [vmem:[%s5 + $0xc60] sm:$0xff]
    %v2782 = vld [vmem:[%s5 + $0xc68] sm:$0xff]
    %v2783 = vld [vmem:[%s5 + $0xc70] sm:$0xff]
    %v2784 = vld [vmem:[%s5 + $0xc78] sm:$0xff]
    %v2785 = vld [vmem:[%s5 + $0xc80] sm:$0xff]
    %v2786 = vld [vmem:[%s5 + $0xc88] sm:$0xff]
    %v2787 = vld [vmem:[%s5 + $0xc90] sm:$0xff]
    %v2788 = vld [vmem:[%s5 + $0xc98] sm:$0xff]
    %v2789 = vld [vmem:[%s5 + $0xca0] sm:$0xff]
    %v2790 = vld [vmem:[%s5 + $0xca8] sm:$0xff]
    %v2791 = vld [vmem:[%s5 + $0xcb0] sm:$0xff]
    %v2792 = vld [vmem:[%s5 + $0xcb8] sm:$0xff]
    %v2793 = vld [vmem:[%s5 + $0xcc0] sm:$0xff]
    %v2794 = vld [vmem:[%s5 + $0xcc8] sm:$0xff]
    %v2795 = vld [vmem:[%s5 + $0xcd0] sm:$0xff]
    %v2796 = vld [vmem:[%s5 + $0xcd8] sm:$0xff]
    %v2797 = vld [vmem:[%s5 + $0xce0] sm:$0xff]
    %v2798 = vld [vmem:[%s5 + $0xce8] sm:$0xff]
    %v2799 = vld [vmem:[%s5 + $0xcf0] sm:$0xff]
    %v2800 = vld [vmem:[%s5 + $0xcf8] sm:$0xff]
    %v2801 = vld [vmem:[%s5 + $0xd00] sm:$0xff]
    %v2802 = vld [vmem:[%s5 + $0xd08] sm:$0xff]
    %v2803 = vld [vmem:[%s5 + $0xd10] sm:$0xff]
    %v2804 = vld [vmem:[%s5 + $0xd18] sm:$0xff]
    %v2805 = vld [vmem:[%s5 + $0xd20] sm:$0xff]
    %v2806 = vld [vmem:[%s5 + $0xd28] sm:$0xff]
    %v2807 = vld [vmem:[%s5 + $0xd30] sm:$0xff]
    %v2808 = vld [vmem:[%s5 + $0xd38] sm:$0xff]
    %v2809 = vld [vmem:[%s5 + $0xd40] sm:$0xff]
    %v2810 = vld [vmem:[%s5 + $0xd48] sm:$0xff]
    %v2811 = vld [vmem:[%s5 + $0xd50] sm:$0xff]
    %v2812 = vld [vmem:[%s5 + $0xd58] sm:$0xff]
    %v2813 = vld [vmem:[%s5 + $0xd60] sm:$0xff]
    %v2814 = vld [vmem:[%s5 + $0xd68] sm:$0xff]
    %v2815 = vld [vmem:[%s5 + $0xd70] sm:$0xff]
    %v2816 = vld [vmem:[%s5 + $0xd78] sm:$0xff]
    %v2817 = vld [vmem:[%s5 + $0xd80] sm:$0xff]
    %v2818 = vld [vmem:[%s5 + $0xd88] sm:$0xff]
    %v2819 = vld [vmem:[%s5 + $0xd90] sm:$0xff]
    %v2820 = vld [vmem:[%s5 + $0xd98] sm:$0xff]
    %v2821 = vld [vmem:[%s5 + $0xda0] sm:$0xff]
    %v2822 = vld [vmem:[%s5 + $0xda8] sm:$0xff]
    %v2823 = vld [vmem:[%s5 + $0xdb0] sm:$0xff]
    %v2824 = vld [vmem:[%s5 + $0xdb8] sm:$0xff]
    %v2825 = vld [vmem:[%s5 + $0xdc0] sm:$0xff]
    %v2826 = vld [vmem:[%s5 + $0xdc8] sm:$0xff]
    %v2827 = vld [vmem:[%s5 + $0xdd0] sm:$0xff]
    %v2828 = vld [vmem:[%s5 + $0xdd8] sm:$0xff]
    %v2829 = vld [vmem:[%s5 + $0xde0] sm:$0xff]
    %v2830 = vld [vmem:[%s5 + $0xde8] sm:$0xff]
    %v2831 = vld [vmem:[%s5 + $0xdf0] sm:$0xff]
    %v2832 = vld [vmem:[%s5 + $0xdf8] sm:$0xff]
    %v2833 = vld [vmem:[%s5 + $0xe00] sm:$0xff]
    %v2834 = vld [vmem:[%s5 + $0xe08] sm:$0xff]
    %v2835 = vld [vmem:[%s5 + $0xe10] sm:$0xff]
    %v2836 = vld [vmem:[%s5 + $0xe18] sm:$0xff]
    %v2837 = vld [vmem:[%s5 + $0xe20] sm:$0xff]
    %v2838 = vld [vmem:[%s5 + $0xe28] sm:$0xff]
    %v2839 = vld [vmem:[%s5 + $0xe30] sm:$0xff]
    %v2840 = vld [vmem:[%s5 + $0xe38] sm:$0xff]
    %v2841 = vld [vmem:[%s5 + $0xe40] sm:$0xff]
    %v2842 = vld [vmem:[%s5 + $0xe48] sm:$0xff]
    %v2843 = vld [vmem:[%s5 + $0xe50] sm:$0xff]
    %v2844 = vld [vmem:[%s5 + $0xe58] sm:$0xff]
    %v2845 = vld [vmem:[%s5 + $0xe60] sm:$0xff]
    %v2846 = vld [vmem:[%s5 + $0xe68] sm:$0xff]
    %v2847 = vld [vmem:[%s5 + $0xe70] sm:$0xff]
    %v2848 = vld [vmem:[%s5 + $0xe78] sm:$0xff]
    %v2849 = vld [vmem:[%s5 + $0xe80] sm:$0xff]
    %v2850 = vld [vmem:[%s5 + $0xe88] sm:$0xff]
    %v2851 = vld [vmem:[%s5 + $0xe90] sm:$0xff]
    %v2852 = vld [vmem:[%s5 + $0xe98] sm:$0xff]
    %v2853 = vld [vmem:[%s5 + $0xea0] sm:$0xff]
    %v2854 = vld [vmem:[%s5 + $0xea8] sm:$0xff]
    %v2855 = vld [vmem:[%s5 + $0xeb0] sm:$0xff]
    %v2856 = vld [vmem:[%s5 + $0xeb8] sm:$0xff]
    %v2857 = vld [vmem:[%s5 + $0xec0] sm:$0xff]
    %v2858 = vld [vmem:[%s5 + $0xec8] sm:$0xff]
    %v2859 = vld [vmem:[%s5 + $0xed0] sm:$0xff]
    %v2860 = vld [vmem:[%s5 + $0xed8] sm:$0xff]
    %v2861 = vld [vmem:[%s5 + $0xee0] sm:$0xff]
    %v2862 = vld [vmem:[%s5 + $0xee8] sm:$0xff]
    %v2863 = vld [vmem:[%s5 + $0xef0] sm:$0xff]
    %v2864 = vld [vmem:[%s5 + $0xef8] sm:$0xff]
    %v2865 = vld [vmem:[%s5 + $0xf00] sm:$0xff]
    %v2866 = vld [vmem:[%s5 + $0xf08] sm:$0xff]
    %v2867 = vld [vmem:[%s5 + $0xf10] sm:$0xff]
    %v2868 = vld [vmem:[%s5 + $0xf18] sm:$0xff]
    %v2869 = vld [vmem:[%s5 + $0xf20] sm:$0xff]
    %v2870 = vld [vmem:[%s5 + $0xf28] sm:$0xff]
    %v2871 = vld [vmem:[%s5 + $0xf30] sm:$0xff]
    %v2872 = vld [vmem:[%s5 + $0xf38] sm:$0xff]
    %v2873 = vld [vmem:[%s5 + $0xf40] sm:$0xff]
    %v2874 = vld [vmem:[%s5 + $0xf48] sm:$0xff]
    %v2875 = vld [vmem:[%s5 + $0xf50] sm:$0xff]
    %v2876 = vld [vmem:[%s5 + $0xf58] sm:$0xff]
    %v2877 = vld [vmem:[%s5 + $0xf60] sm:$0xff]
    %v2878 = vld [vmem:[%s5 + $0xf68] sm:$0xff]
    %v2879 = vld [vmem:[%s5 + $0xf70] sm:$0xff]
    %v2880 = vld [vmem:[%s5 + $0xf78] sm:$0xff]
    %v2881 = vld [vmem:[%s5 + $0xf80] sm:$0xff]
    %v2882 = vld [vmem:[%s5 + $0xf88] sm:$0xff]
    %v2883 = vld [vmem:[%s5 + $0xf90] sm:$0xff]
    %v2884 = vld [vmem:[%s5 + $0xf98] sm:$0xff]
    %v2885 = vld [vmem:[%s5 + $0xfa0] sm:$0xff]
    %v2886 = vld [vmem:[%s5 + $0xfa8] sm:$0xff]
    %v2887 = vld [vmem:[%s5 + $0xfb0] sm:$0xff]
    %v2888 = vld [vmem:[%s5 + $0xfb8] sm:$0xff]
    %v2889 = vld [vmem:[%s5 + $0xfc0] sm:$0xff]
    %v2890 = vld [vmem:[%s5 + $0xfc8] sm:$0xff]
    %v2891 = vld [vmem:[%s5 + $0xfd0] sm:$0xff]
    %v2892 = vld [vmem:[%s5 + $0xfd8] sm:$0xff]
    %v2893 = vld [vmem:[%s5 + $0xfe0] sm:$0xff]
    %v2894 = vld [vmem:[%s5 + $0xfe8] sm:$0xff]
    %v2895 = vld [vmem:[%s5 + $0xff0] sm:$0xff]
    %v2896 = vld [vmem:[%s5 + $0xff8] sm:$0xff]
    %v2897 = vld [vmem:[%s5 + $0x1000] sm:$0xff]
    %v2898 = vld [vmem:[%s5 + $0x1008] sm:$0xff]
    %v2899 = vld [vmem:[%s5 + $0x1010] sm:$0xff]
    %v2900 = vld [vmem:[%s5 + $0x1018] sm:$0xff]
    %v2901 = vld [vmem:[%s5 + $0x1020] sm:$0xff]
    %v2902 = vld [vmem:[%s5 + $0x1028] sm:$0xff]
    %v2903 = vld [vmem:[%s5 + $0x1030] sm:$0xff]
    %v2904 = vld [vmem:[%s5 + $0x1038] sm:$0xff]
    %v2905 = vld [vmem:[%s5 + $0x1040] sm:$0xff]
    %v2906 = vld [vmem:[%s5 + $0x1048] sm:$0xff]
    %v2907 = vld [vmem:[%s5 + $0x1050] sm:$0xff]
    %v2908 = vld [vmem:[%s5 + $0x1058] sm:$0xff]
    %v2909 = vld [vmem:[%s5 + $0x1060] sm:$0xff]
    %v2910 = vld [vmem:[%s5 + $0x1068] sm:$0xff]
    %v2911 = vld [vmem:[%s5 + $0x1070] sm:$0xff]
    %v2912 = vld [vmem:[%s5 + $0x1078] sm:$0xff]
    %v2913 = vld [vmem:[%s5 + $0x1080] sm:$0xff]
    %v2914 = vld [vmem:[%s5 + $0x1088] sm:$0xff]
    %v2915 = vld [vmem:[%s5 + $0x1090] sm:$0xff]
    %v2916 = vld [vmem:[%s5 + $0x1098] sm:$0xff]
    %v2917 = vld [vmem:[%s5 + $0x10a0] sm:$0xff]
    %v2918 = vld [vmem:[%s5 + $0x10a8] sm:$0xff]
    %v2919 = vld [vmem:[%s5 + $0x10b0] sm:$0xff]
    %v2920 = vld [vmem:[%s5 + $0x10b8] sm:$0xff]
    %v2921 = vld [vmem:[%s5 + $0x10c0] sm:$0xff]
    %v2922 = vld [vmem:[%s5 + $0x10c8] sm:$0xff]
    %v2923 = vld [vmem:[%s5 + $0x10d0] sm:$0xff]
    %v2924 = vld [vmem:[%s5 + $0x10d8] sm:$0xff]
    %v2925 = vld [vmem:[%s5 + $0x10e0] sm:$0xff]
    %v2926 = vld [vmem:[%s5 + $0x10e8] sm:$0xff]
    %v2927 = vld [vmem:[%s5 + $0x10f0] sm:$0xff]
    %v2928 = vld [vmem:[%s5 + $0x10f8] sm:$0xff]
    %v2929 = vld [vmem:[%s5 + $0x1100] sm:$0xff]
    %v2930 = vld [vmem:[%s5 + $0x1108] sm:$0xff]
    %v2931 = vld [vmem:[%s5 + $0x1110] sm:$0xff]
    %v2932 = vld [vmem:[%s5 + $0x1118] sm:$0xff]
    %v2933 = vld [vmem:[%s5 + $0x1120] sm:$0xff]
    %v2934 = vld [vmem:[%s5 + $0x1128] sm:$0xff]
    %v2935 = vld [vmem:[%s5 + $0x1130] sm:$0xff]
    %v2936 = vld [vmem:[%s5 + $0x1138] sm:$0xff]
    %v2937 = vld [vmem:[%s5 + $0x1140] sm:$0xff]
    %v2938 = vld [vmem:[%s5 + $0x1148] sm:$0xff]
    %v2939 = vld [vmem:[%s5 + $0x1150] sm:$0xff]
    %v2940 = vld [vmem:[%s5 + $0x1158] sm:$0xff]
    %v2941 = vld [vmem:[%s5 + $0x1160] sm:$0xff]
    %v2942 = vld [vmem:[%s5 + $0x1168] sm:$0xff]
    %v2943 = vld [vmem:[%s5 + $0x1170] sm:$0xff]
    %v2944 = vld [vmem:[%s5 + $0x1178] sm:$0xff]
    %v2945 = vld [vmem:[%s5 + $0x1180] sm:$0xff]
    %v2946 = vld [vmem:[%s5 + $0x1188] sm:$0xff]
    %v2947 = vld [vmem:[%s5 + $0x1190] sm:$0xff]
    %v2948 = vld [vmem:[%s5 + $0x1198] sm:$0xff]
    %v2949 = vld [vmem:[%s5 + $0x11a0] sm:$0xff]
    %v2950 = vld [vmem:[%s5 + $0x11a8] sm:$0xff]
    %v2951 = vld [vmem:[%s5 + $0x11b0] sm:$0xff]
    %v2952 = vld [vmem:[%s5 + $0x11b8] sm:$0xff]
    %v2953 = vld [vmem:[%s5 + $0x11c0] sm:$0xff]
    %v2954 = vld [vmem:[%s5 + $0x11c8] sm:$0xff]
    %v2955 = vld [vmem:[%s5 + $0x11d0] sm:$0xff]
    %v2956 = vld [vmem:[%s5 + $0x11d8] sm:$0xff]
    %v2957 = vld [vmem:[%s5 + $0x11e0] sm:$0xff]
    %v2958 = vld [vmem:[%s5 + $0x11e8] sm:$0xff]
    %v2959 = vld [vmem:[%s5 + $0x11f0] sm:$0xff]
    %v2960 = vld [vmem:[%s5 + $0x11f8] sm:$0xff]
    %v2961 = vld [vmem:[%s5 + $0x1200] sm:$0xff]
    %v2962 = vld [vmem:[%s5 + $0x1208] sm:$0xff]
    %v2963 = vld [vmem:[%s5 + $0x1210] sm:$0xff]
    %v2964 = vld [vmem:[%s5 + $0x1218] sm:$0xff]
    %v2965 = vld [vmem:[%s5 + $0x1220] sm:$0xff]
    %v2966 = vld [vmem:[%s5 + $0x1228] sm:$0xff]
    %v2967 = vld [vmem:[%s5 + $0x1230] sm:$0xff]
    %v2968 = vld [vmem:[%s5 + $0x1238] sm:$0xff]
    %v2969 = vld [vmem:[%s5 + $0x1240] sm:$0xff]
    %v2970 = vld [vmem:[%s5 + $0x1248] sm:$0xff]
    %v2971 = vld [vmem:[%s5 + $0x1250] sm:$0xff]
    %v2972 = vld [vmem:[%s5 + $0x1258] sm:$0xff]
    %v2973 = vld [vmem:[%s5 + $0x1260] sm:$0xff]
    %v2974 = vld [vmem:[%s5 + $0x1268] sm:$0xff]
    %v2975 = vld [vmem:[%s5 + $0x1270] sm:$0xff]
    %v2976 = vld [vmem:[%s5 + $0x1278] sm:$0xff]
    %v2977 = vld [vmem:[%s5 + $0x1280] sm:$0xff]
    %v2978 = vld [vmem:[%s5 + $0x1288] sm:$0xff]
    %v2979 = vld [vmem:[%s5 + $0x1290] sm:$0xff]
    %v2980 = vld [vmem:[%s5 + $0x1298] sm:$0xff]
    %v2981 = vld [vmem:[%s5 + $0x12a0] sm:$0xff]
    %v2982 = vld [vmem:[%s5 + $0x12a8] sm:$0xff]
    %v2983 = vld [vmem:[%s5 + $0x12b0] sm:$0xff]
    %v2984 = vld [vmem:[%s5 + $0x12b8] sm:$0xff]
    %v2985 = vld [vmem:[%s5 + $0x12c0] sm:$0xff]
    %v2986 = vld [vmem:[%s5 + $0x12c8] sm:$0xff]
    %v2987 = vld [vmem:[%s5 + $0x12d0] sm:$0xff]
    %v2988 = vld [vmem:[%s5 + $0x12d8] sm:$0xff]
    %v2989 = vld [vmem:[%s5 + $0x12e0] sm:$0xff]
    %v2990 = vld [vmem:[%s5 + $0x12e8] sm:$0xff]
    %v2991 = vld [vmem:[%s5 + $0x12f0] sm:$0xff]
    %v2992 = vld [vmem:[%s5 + $0x12f8] sm:$0xff]
    %v2993 = vld [vmem:[%s5 + $0x1300] sm:$0xff]
    %v2994 = vld [vmem:[%s5 + $0x1308] sm:$0xff]
    %v2995 = vld [vmem:[%s5 + $0x1310] sm:$0xff]
    %v2996 = vld [vmem:[%s5 + $0x1318] sm:$0xff]
    %v2997 = vld [vmem:[%s5 + $0x1320] sm:$0xff]
    %v2998 = vld [vmem:[%s5 + $0x1328] sm:$0xff]
    %v2999 = vld [vmem:[%s5 + $0x1330] sm:$0xff]
    %v3000 = vld [vmem:[%s5 + $0x1338] sm:$0xff]
    %v3001 = vld [vmem:[%s5 + $0x1340] sm:$0xff]
    %v3002 = vld [vmem:[%s5 + $0x1348] sm:$0xff]
    %v3003 = vld [vmem:[%s5 + $0x1350] sm:$0xff]
    %v3004 = vld [vmem:[%s5 + $0x1358] sm:$0xff]
    %v3005 = vld [vmem:[%s5 + $0x1360] sm:$0xff]
    %v3006 = vld [vmem:[%s5 + $0x1368] sm:$0xff]
    %v3007 = vld [vmem:[%s5 + $0x1370] sm:$0xff]
    %v3008 = vld [vmem:[%s5 + $0x1378] sm:$0xff]
    %v3009 = vld [vmem:[%s5 + $0x1380] sm:$0xff]
    %v3010 = vld [vmem:[%s5 + $0x1388] sm:$0xff]
    %v3011 = vld [vmem:[%s5 + $0x1390] sm:$0xff]
    %v3012 = vld [vmem:[%s5 + $0x1398] sm:$0xff]
    %v3013 = vld [vmem:[%s5 + $0x13a0] sm:$0xff]
    %v3014 = vld [vmem:[%s5 + $0x13a8] sm:$0xff]
    %v3015 = vld [vmem:[%s5 + $0x13b0] sm:$0xff]
    %v3016 = vld [vmem:[%s5 + $0x13b8] sm:$0xff]
    %v3017 = vld [vmem:[%s5 + $0x13c0] sm:$0xff]
    %v3018 = vld [vmem:[%s5 + $0x13c8] sm:$0xff]
    %v3019 = vld [vmem:[%s5 + $0x13d0] sm:$0xff]
    %v3020 = vld [vmem:[%s5 + $0x13d8] sm:$0xff]
    %v3021 = vld [vmem:[%s5 + $0x13e0] sm:$0xff]
    %v3022 = vld [vmem:[%s5 + $0x13e8] sm:$0xff]
    %v3023 = vld [vmem:[%s5 + $0x13f0] sm:$0xff]
    %v3024 = vld [vmem:[%s5 + $0x13f8] sm:$0xff]
    %v3025 = vld [vmem:[%s5 + $0x1400] sm:$0xff]
    %v3026 = vld [vmem:[%s5 + $0x1408] sm:$0xff]
    %v3027 = vld [vmem:[%s5 + $0x1410] sm:$0xff]
    %v3028 = vld [vmem:[%s5 + $0x1418] sm:$0xff]
    %v3029 = vld [vmem:[%s5 + $0x1420] sm:$0xff]
    %v3030 = vld [vmem:[%s5 + $0x1428] sm:$0xff]
    %v3031 = vld [vmem:[%s5 + $0x1430] sm:$0xff]
    %v3032 = vld [vmem:[%s5 + $0x1438] sm:$0xff]
    %v3033 = vld [vmem:[%s5 + $0x1440] sm:$0xff]
    %v3034 = vld [vmem:[%s5 + $0x1448] sm:$0xff]
    %v3035 = vld [vmem:[%s5 + $0x1450] sm:$0xff]
    %v3036 = vld [vmem:[%s5 + $0x1458] sm:$0xff]
    %v3037 = vld [vmem:[%s5 + $0x1460] sm:$0xff]
    %v3038 = vld [vmem:[%s5 + $0x1468] sm:$0xff]
    %v3039 = vld [vmem:[%s5 + $0x1470] sm:$0xff]
    %v3040 = vld [vmem:[%s5 + $0x1478] sm:$0xff]
    %v3041 = vld [vmem:[%s5 + $0x1480] sm:$0xff]
    %v3042 = vld [vmem:[%s5 + $0x1488] sm:$0xff]
    %v3043 = vld [vmem:[%s5 + $0x1490] sm:$0xff]
    %v3044 = vld [vmem:[%s5 + $0x1498] sm:$0xff]
    %v3045 = vld [vmem:[%s5 + $0x14a0] sm:$0xff]
    %v3046 = vld [vmem:[%s5 + $0x14a8] sm:$0xff]
    %v3047 = vld [vmem:[%s5 + $0x14b0] sm:$0xff]
    %v3048 = vld [vmem:[%s5 + $0x14b8] sm:$0xff]
    %v3049 = vld [vmem:[%s5 + $0x14c0] sm:$0xff]
    %v3050 = vld [vmem:[%s5 + $0x14c8] sm:$0xff]
    %v3051 = vld [vmem:[%s5 + $0x14d0] sm:$0xff]
    %v3052 = vld [vmem:[%s5 + $0x14d8] sm:$0xff]
    %v3053 = vld [vmem:[%s5 + $0x14e0] sm:$0xff]
    %v3054 = vld [vmem:[%s5 + $0x14e8] sm:$0xff]
    %v3055 = vld [vmem:[%s5 + $0x14f0] sm:$0xff]
    %v3056 = vld [vmem:[%s5 + $0x14f8] sm:$0xff]
    %v3057 = vld [vmem:[%s5 + $0x1500] sm:$0xff]
    %v3058 = vld [vmem:[%s5 + $0x1508] sm:$0xff]
    %v3059 = vld [vmem:[%s5 + $0x1510] sm:$0xff]
    %v3060 = vld [vmem:[%s5 + $0x1518] sm:$0xff]
    %v3061 = vld [vmem:[%s5 + $0x1520] sm:$0xff]
    %v3062 = vld [vmem:[%s5 + $0x1528] sm:$0xff]
    %v3063 = vld [vmem:[%s5 + $0x1530] sm:$0xff]
    %v3064 = vld [vmem:[%s5 + $0x1538] sm:$0xff]
    %v3065 = vld [vmem:[%s5 + $0x1540] sm:$0xff]
    %v3066 = vld [vmem:[%s5 + $0x1548] sm:$0xff]
    %v3067 = vld [vmem:[%s5 + $0x1550] sm:$0xff]
    %v3068 = vld [vmem:[%s5 + $0x1558] sm:$0xff]
    %v3069 = vld [vmem:[%s5 + $0x1560] sm:$0xff]
    %v3070 = vld [vmem:[%s5 + $0x1568] sm:$0xff]
    %v3071 = vld [vmem:[%s5 + $0x1570] sm:$0xff]
    %v3072 = vld [vmem:[%s5 + $0x1578] sm:$0xff]
    %v3073 = vld [vmem:[%s5 + $0x1580] sm:$0xff]
    %v3074 = vld [vmem:[%s5 + $0x1588] sm:$0xff]
    %v3075 = vld [vmem:[%s5 + $0x1590] sm:$0xff]
    %v3076 = vld [vmem:[%s5 + $0x1598] sm:$0xff]
    %v3077 = vld [vmem:[%s5 + $0x15a0] sm:$0xff]
    %v3078 = vld [vmem:[%s5 + $0x15a8] sm:$0xff]
    %v3079 = vld [vmem:[%s5 + $0x15b0] sm:$0xff]
    %v3080 = vld [vmem:[%s5 + $0x15b8] sm:$0xff]
    %v3081 = vld [vmem:[%s5 + $0x15c0] sm:$0xff]
    %v3082 = vld [vmem:[%s5 + $0x15c8] sm:$0xff]
    %v3083 = vld [vmem:[%s5 + $0x15d0] sm:$0xff]
    %v3084 = vld [vmem:[%s5 + $0x15d8] sm:$0xff]
    %v3085 = vld [vmem:[%s5 + $0x15e0] sm:$0xff]
    %v3086 = vld [vmem:[%s5 + $0x15e8] sm:$0xff]
    %v3087 = vld [vmem:[%s5 + $0x15f0] sm:$0xff]
    %v3088 = vld [vmem:[%s5 + $0x15f8] sm:$0xff]
    %v3089 = vld [vmem:[%s5 + $0x1600] sm:$0xff]
    %v3090 = vld [vmem:[%s5 + $0x1608] sm:$0xff]
    %v3091 = vld [vmem:[%s5 + $0x1610] sm:$0xff]
    %v3092 = vld [vmem:[%s5 + $0x1618] sm:$0xff]
    %v3093 = vld [vmem:[%s5 + $0x1620] sm:$0xff]
    %v3094 = vld [vmem:[%s5 + $0x1628] sm:$0xff]
    %v3095 = vld [vmem:[%s5 + $0x1630] sm:$0xff]
    %v3096 = vld [vmem:[%s5 + $0x1638] sm:$0xff]
    %v3097 = vld [vmem:[%s5 + $0x1640] sm:$0xff]
    %v3098 = vld [vmem:[%s5 + $0x1648] sm:$0xff]
    %v3099 = vld [vmem:[%s5 + $0x1650] sm:$0xff]
    %v3100 = vld [vmem:[%s5 + $0x1658] sm:$0xff]
    %v3101 = vld [vmem:[%s5 + $0x1660] sm:$0xff]
    %v3102 = vld [vmem:[%s5 + $0x1668] sm:$0xff]
    %v3103 = vld [vmem:[%s5 + $0x1670] sm:$0xff]
    %v3104 = vld [vmem:[%s5 + $0x1678] sm:$0xff]
    %v3105 = vld [vmem:[%s5 + $0x1680] sm:$0xff]
    %v3106 = vld [vmem:[%s5 + $0x1688] sm:$0xff]
    %v3107 = vld [vmem:[%s5 + $0x1690] sm:$0xff]
    %v3108 = vld [vmem:[%s5 + $0x1698] sm:$0xff]
    %v3109 = vld [vmem:[%s5 + $0x16a0] sm:$0xff]
    %v3110 = vld [vmem:[%s5 + $0x16a8] sm:$0xff]
    %v3111 = vld [vmem:[%s5 + $0x16b0] sm:$0xff]
    %v3112 = vld [vmem:[%s5 + $0x16b8] sm:$0xff]
    %v3113 = vld [vmem:[%s5 + $0x16c0] sm:$0xff]
    %v3114 = vld [vmem:[%s5 + $0x16c8] sm:$0xff]
    %v3115 = vld [vmem:[%s5 + $0x16d0] sm:$0xff]
    %v3116 = vld [vmem:[%s5 + $0x16d8] sm:$0xff]
    %v3117 = vld [vmem:[%s5 + $0x16e0] sm:$0xff]
    %v3118 = vld [vmem:[%s5 + $0x16e8] sm:$0xff]
    %v3119 = vld [vmem:[%s5 + $0x16f0] sm:$0xff]
    %v3120 = vld [vmem:[%s5 + $0x16f8] sm:$0xff]
    %v3121 = vld [vmem:[%s5 + $0x1700] sm:$0xff]
    %v3122 = vld [vmem:[%s5 + $0x1708] sm:$0xff]
    %v3123 = vld [vmem:[%s5 + $0x1710] sm:$0xff]
    %v3124 = vld [vmem:[%s5 + $0x1718] sm:$0xff]
    %v3125 = vld [vmem:[%s5 + $0x1720] sm:$0xff]
    %v3126 = vld [vmem:[%s5 + $0x1728] sm:$0xff]
    %v3127 = vld [vmem:[%s5 + $0x1730] sm:$0xff]
    %v3128 = vld [vmem:[%s5 + $0x1738] sm:$0xff]
    %v3129 = vld [vmem:[%s5 + $0x1740] sm:$0xff]
    %v3130 = vld [vmem:[%s5 + $0x1748] sm:$0xff]
    %v3131 = vld [vmem:[%s5 + $0x1750] sm:$0xff]
    %v3132 = vld [vmem:[%s5 + $0x1758] sm:$0xff]
    %v3133 = vld [vmem:[%s5 + $0x1760] sm:$0xff]
    %v3134 = vld [vmem:[%s5 + $0x1768] sm:$0xff]
    %v3135 = vld [vmem:[%s5 + $0x1770] sm:$0xff]
    %v3136 = vld [vmem:[%s5 + $0x1778] sm:$0xff]
    %v3137 = vld [vmem:[%s5 + $0x1780] sm:$0xff]
    %v3138 = vld [vmem:[%s5 + $0x1788] sm:$0xff]
    %v3139 = vld [vmem:[%s5 + $0x1790] sm:$0xff]
    %v3140 = vld [vmem:[%s5 + $0x1798] sm:$0xff]
    %v3141 = vld [vmem:[%s5 + $0x17a0] sm:$0xff]
    %v3142 = vld [vmem:[%s5 + $0x17a8] sm:$0xff]
    %v3143 = vld [vmem:[%s5 + $0x17b0] sm:$0xff]
    %v3144 = vld [vmem:[%s5 + $0x17b8] sm:$0xff]
    %v3145 = vld [vmem:[%s5 + $0x17c0] sm:$0xff]
    %v3146 = vld [vmem:[%s5 + $0x17c8] sm:$0xff]
    %v3147 = vld [vmem:[%s5 + $0x17d0] sm:$0xff]
    %v3148 = vld [vmem:[%s5 + $0x17d8] sm:$0xff]
    %v3149 = vld [vmem:[%s5 + $0x17e0] sm:$0xff]
    %v3150 = vld [vmem:[%s5 + $0x17e8] sm:$0xff]
    %v3151 = vld [vmem:[%s5 + $0x17f0] sm:$0xff]
    %v3152 = vld [vmem:[%s5 + $0x17f8] sm:$0xff]
    %v3153 = vld [vmem:[%s5 + $0x1800] sm:$0xff]
    %v3154 = vld [vmem:[%s5 + $0x1808] sm:$0xff]
    %v3155 = vld [vmem:[%s5 + $0x1810] sm:$0xff]
    %v3156 = vld [vmem:[%s5 + $0x1818] sm:$0xff]
    %v3157 = vld [vmem:[%s5 + $0x1820] sm:$0xff]
    %v3158 = vld [vmem:[%s5 + $0x1828] sm:$0xff]
    %v3159 = vld [vmem:[%s5 + $0x1830] sm:$0xff]
    %v3160 = vld [vmem:[%s5 + $0x1838] sm:$0xff]
    %v3161 = vld [vmem:[%s5 + $0x1840] sm:$0xff]
    %v3162 = vld [vmem:[%s5 + $0x1848] sm:$0xff]
    %v3163 = vld [vmem:[%s5 + $0x1850] sm:$0xff]
    %v3164 = vld [vmem:[%s5 + $0x1858] sm:$0xff]
    %v3165 = vld [vmem:[%s5 + $0x1860] sm:$0xff]
    %v3166 = vld [vmem:[%s5 + $0x1868] sm:$0xff]
    %v3167 = vld [vmem:[%s5 + $0x1870] sm:$0xff]
    %v3168 = vld [vmem:[%s5 + $0x1878] sm:$0xff]
    %v3169 = vld [vmem:[%s5 + $0x1880] sm:$0xff]
    %v3170 = vld [vmem:[%s5 + $0x1888] sm:$0xff]
    %v3171 = vld [vmem:[%s5 + $0x1890] sm:$0xff]
    %v3172 = vld [vmem:[%s5 + $0x1898] sm:$0xff]
    %v3173 = vld [vmem:[%s5 + $0x18a0] sm:$0xff]
    %v3174 = vld [vmem:[%s5 + $0x18a8] sm:$0xff]
    %v3175 = vld [vmem:[%s5 + $0x18b0] sm:$0xff]
    %v3176 = vld [vmem:[%s5 + $0x18b8] sm:$0xff]
    %v3177 = vld [vmem:[%s5 + $0x18c0] sm:$0xff]
    %v3178 = vld [vmem:[%s5 + $0x18c8] sm:$0xff]
    %v3179 = vld [vmem:[%s5 + $0x18d0] sm:$0xff]
    %v3180 = vld [vmem:[%s5 + $0x18d8] sm:$0xff]
    %v3181 = vld [vmem:[%s5 + $0x18e0] sm:$0xff]
    %v3182 = vld [vmem:[%s5 + $0x18e8] sm:$0xff]
    %v3183 = vld [vmem:[%s5 + $0x18f0] sm:$0xff]
    %v3184 = vld [vmem:[%s5 + $0x18f8] sm:$0xff]
    %v3185 = vld [vmem:[%s5 + $0x1900] sm:$0xff]
    %v3186 = vld [vmem:[%s5 + $0x1908] sm:$0xff]
    %v3187 = vld [vmem:[%s5 + $0x1910] sm:$0xff]
    %v3188 = vld [vmem:[%s5 + $0x1918] sm:$0xff]
    %v3189 = vld [vmem:[%s5 + $0x1920] sm:$0xff]
    %v3190 = vld [vmem:[%s5 + $0x1928] sm:$0xff]
    %v3191 = vld [vmem:[%s5 + $0x1930] sm:$0xff]
    %v3192 = vld [vmem:[%s5 + $0x1938] sm:$0xff]
    %v3193 = vld [vmem:[%s5 + $0x1940] sm:$0xff]
    %v3194 = vld [vmem:[%s5 + $0x1948] sm:$0xff]
    %v3195 = vld [vmem:[%s5 + $0x1950] sm:$0xff]
    %v3196 = vld [vmem:[%s5 + $0x1958] sm:$0xff]
    %v3197 = vld [vmem:[%s5 + $0x1960] sm:$0xff]
    %v3198 = vld [vmem:[%s5 + $0x1968] sm:$0xff]
    %v3199 = vld [vmem:[%s5 + $0x1970] sm:$0xff]
    %v3200 = vld [vmem:[%s5 + $0x1978] sm:$0xff]
    %v3201 = vld [vmem:[%s5 + $0x1980] sm:$0xff]
    %v3202 = vld [vmem:[%s5 + $0x1988] sm:$0xff]
    %v3203 = vld [vmem:[%s5 + $0x1990] sm:$0xff]
    %v3204 = vld [vmem:[%s5 + $0x1998] sm:$0xff]
    %v3205 = vld [vmem:[%s5 + $0x19a0] sm:$0xff]
    %v3206 = vld [vmem:[%s5 + $0x19a8] sm:$0xff]
    %v3207 = vld [vmem:[%s5 + $0x19b0] sm:$0xff]
    %v3208 = vld [vmem:[%s5 + $0x19b8] sm:$0xff]
    %v3209 = vld [vmem:[%s5 + $0x19c0] sm:$0xff]
    %v3210 = vld [vmem:[%s5 + $0x19c8] sm:$0xff]
    %v3211 = vld [vmem:[%s5 + $0x19d0] sm:$0xff]
    %v3212 = vld [vmem:[%s5 + $0x19d8] sm:$0xff]
    %v3213 = vld [vmem:[%s5 + $0x19e0] sm:$0xff]
    %v3214 = vld [vmem:[%s5 + $0x19e8] sm:$0xff]
    %v3215 = vld [vmem:[%s5 + $0x19f0] sm:$0xff]
    %v3216 = vld [vmem:[%s5 + $0x19f8] sm:$0xff]
    %v3217 = vld [vmem:[%s5 + $0x1a00] sm:$0xff]
    %v3218 = vld [vmem:[%s5 + $0x1a08] sm:$0xff]
    %v3219 = vld [vmem:[%s5 + $0x1a10] sm:$0xff]
    %v3220 = vld [vmem:[%s5 + $0x1a18] sm:$0xff]
    %v3221 = vld [vmem:[%s5 + $0x1a20] sm:$0xff]
    %v3222 = vld [vmem:[%s5 + $0x1a28] sm:$0xff]
    %v3223 = vld [vmem:[%s5 + $0x1a30] sm:$0xff]
    %v3224 = vld [vmem:[%s5 + $0x1a38] sm:$0xff]
    %v3225 = vld [vmem:[%s5 + $0x1a40] sm:$0xff]
    %v3226 = vld [vmem:[%s5 + $0x1a48] sm:$0xff]
    %v3227 = vld [vmem:[%s5 + $0x1a50] sm:$0xff]
    %v3228 = vld [vmem:[%s5 + $0x1a58] sm:$0xff]
    %v3229 = vld [vmem:[%s5 + $0x1a60] sm:$0xff]
    %v3230 = vld [vmem:[%s5 + $0x1a68] sm:$0xff]
    %v3231 = vld [vmem:[%s5 + $0x1a70] sm:$0xff]
    %v3232 = vld [vmem:[%s5 + $0x1a78] sm:$0xff]
    %v3233 = vld [vmem:[%s5 + $0x1a80] sm:$0xff]
    %v3234 = vld [vmem:[%s5 + $0x1a88] sm:$0xff]
    %v3235 = vld [vmem:[%s5 + $0x1a90] sm:$0xff]
    %v3236 = vld [vmem:[%s5 + $0x1a98] sm:$0xff]
    %v3237 = vld [vmem:[%s5 + $0x1aa0] sm:$0xff]
    %v3238 = vld [vmem:[%s5 + $0x1aa8] sm:$0xff]
    %v3239 = vld [vmem:[%s5 + $0x1ab0] sm:$0xff]
    %v3240 = vld [vmem:[%s5 + $0x1ab8] sm:$0xff]
    %v3241 = vld [vmem:[%s5 + $0x1ac0] sm:$0xff]
    %v3242 = vld [vmem:[%s5 + $0x1ac8] sm:$0xff]
    %v3243 = vld [vmem:[%s5 + $0x1ad0] sm:$0xff]
    %v3244 = vld [vmem:[%s5 + $0x1ad8] sm:$0xff]
    %v3245 = vld [vmem:[%s5 + $0x1ae0] sm:$0xff]
    %v3246 = vld [vmem:[%s5 + $0x1ae8] sm:$0xff]
    %v3247 = vld [vmem:[%s5 + $0x1af0] sm:$0xff]
    %v3248 = vld [vmem:[%s5 + $0x1af8] sm:$0xff]
    %v3249 = vld [vmem:[%s6] sm:$0xff]
    %v3251 = vlaneseq
    %v3252 = vshrl.u32 %v3251, 7
    %v3253 = vsub.s32 0, %v3252
    %v3254 = vrot.slane %v3249, %v3253
    %v3255 = vlaneseq
    %v3256 = vshrl.u32 %v3255, 7
    %v3257 = vsub.s32 1, %v3256
    %v3258 = vrot.slane %v3249, %v3257
    %v3259 = vlaneseq
    %v3260 = vshrl.u32 %v3259, 7
    %v3261 = vsub.s32 2, %v3260
    %v3262 = vrot.slane %v3249, %v3261
    %v3263 = vlaneseq
    %v3264 = vshrl.u32 %v3263, 7
    %v3265 = vsub.s32 3, %v3264
    %v3266 = vrot.slane %v3249, %v3265
    %v3267 = vlaneseq
    %v3268 = vshrl.u32 %v3267, 7
    %v3269 = vsub.s32 4, %v3268
    %v3270 = vrot.slane %v3249, %v3269
    %v3271 = vlaneseq
    %v3272 = vshrl.u32 %v3271, 7
    %v3273 = vsub.s32 5, %v3272
    %v3274 = vrot.slane %v3249, %v3273
    %v3275 = vlaneseq
    %v3276 = vshrl.u32 %v3275, 7
    %v3277 = vsub.s32 6, %v3276
    %v3278 = vrot.slane %v3249, %v3277
    %v3279 = vlaneseq
    %v3280 = vshrl.u32 %v3279, 7
    %v3281 = vsub.s32 7, %v3280
    %v3282 = vrot.slane %v3249, %v3281
    %v3292 = vsel %vm1235, %v2384, 0
    %3294 = vmatprep.subr.mxu0 %v2386
    %3295 = vmatpush1.msra.mxu0 %v2385
    %3296 = vmatprep.subr.mxu0 %v2394
    %3297 = vmatpush1.msra.mxu0 %v2393
    %3298 = vmatprep.subr.mxu0 %v2402
    %3299 = vmatpush1.msra.mxu0 %v2401
    %3300 = vmatprep.subr.mxu0 %v2410
    %3301 = vmatpush1.msra.mxu0 %v2409
    %3302 = vmatprep.subr.mxu0 %v2418
    %3303 = vmatpush1.msra.mxu0 %v2417
    %3304 = vmatprep.subr.mxu0 %v2426
    %3305 = vmatpush1.msra.mxu0 %v2425
    %3306 = vmatprep.subr.mxu0 %v2434
    %3307 = vmatpush1.msra.mxu0 %v2433
    %3308 = vmatprep.subr.mxu0 %v2442
    %3309 = vmatpush1.msra.mxu0 %v2441
    %3310 = vmatprep.subr.mxu0 %v2450
    %3311 = vmatpush1.msra.mxu0 %v2449
    %3312 = vmatprep.subr.mxu0 %v2458
    %3313 = vmatpush1.msra.mxu0 %v2457
    %3314 = vmatprep.subr.mxu0 %v2466
    %3315 = vmatpush1.msra.mxu0 %v2465
    %3316 = vmatprep.subr.mxu0 %v2474
    %3317 = vmatpush1.msra.mxu0 %v2473
    %3318 = vmatprep.subr.mxu0 %v2482
    %3319 = vmatpush1.msra.mxu0 %v2481
    %3320 = vmatprep.subr.mxu0 %v2490
    %3321 = vmatpush1.msra.mxu0 %v2489
    %3322 = vmatprep.subr.mxu0 %v2498
    %3323 = vmatpush1.msra.mxu0 %v2497
    %3324 = vmatprep.subr.mxu0 %v2506
    %3325 = vmatpush1.msra.mxu0 %v2505
    %3326 = vmatprep.subr.mxu0 %v2514
    %3327 = vmatpush1.msra.mxu0 %v2513
    %3328 = vmatprep.subr.mxu0 %v2522
    %3329 = vmatpush1.msra.mxu0 %v2521
    %3330 = vmatprep.subr.mxu0 %v2530
    %3331 = vmatpush1.msra.mxu0 %v2529
    %3332 = vmatprep.subr.mxu0 %v2538
    %3333 = vmatpush1.msra.mxu0 %v2537
    %3334 = vmatprep.subr.mxu0 %v2546
    %3335 = vmatpush1.msra.mxu0 %v2545
    %3336 = vmatprep.subr.mxu0 %v2554
    %3337 = vmatpush1.msra.mxu0 %v2553
    %3338 = vmatprep.subr.mxu0 %v2562
    %3339 = vmatpush1.msra.mxu0 %v2561
    %3340 = vmatprep.subr.mxu0 %v2570
    %3341 = vmatpush1.msra.mxu0 %v2569
    %3342 = vmatprep.subr.mxu0 %v2578
    %3343 = vmatpush1.msra.mxu0 %v2577
    %3344 = vmatprep.subr.mxu0 %v2586
    %3345 = vmatpush1.msra.mxu0 %v2585
    %3346 = vmatprep.subr.mxu0 %v2594
    %3347 = vmatpush1.msra.mxu0 %v2593
    %3348 = vmatprep.subr.mxu0 %v2602
    %3349 = vmatpush1.msra.mxu0 %v2601
    %3350 = vmatprep.subr.mxu0 %v2610
    %3351 = vmatpush1.msra.mxu0 %v2609
    %3352 = vmatprep.subr.mxu0 %v2618
    %3353 = vmatpush1.msra.mxu0 %v2617
    %3354 = vmatprep.subr.mxu0 %v2626
    %3355 = vmatpush1.msra.mxu0 %v2625
    %3356 = vmatprep.subr.mxu0 %v2634
    %3357 = vmatpush1.msra.mxu0 %v2633
    %3358 = vmatprep.mubr.f32.mxu0 %v2374
    %3359 = vmatmul.mubr.f32.gmra.mrb[0].mxu0 %v2372
    %v3360 = vpop.f32.mrb[0].mxu0
    %v3361 = vadd.f32 %v3254, %v3360
    %v3362 = vpop.f32.mrb[0].mxu0
    %v3363 = vadd.f32 %v3258, %v3362
    %3364 = vdwg.mxu0
    %3365 = vmatprep.subr.mxu0 %v2642
    %3366 = vmatpush1.msra.mxu0 %v2641
    %3367 = vmatprep.subr.mxu0 %v2650
    %3368 = vmatpush1.msra.mxu0 %v2649
    %3369 = vmatprep.subr.mxu0 %v2658
    %3370 = vmatpush1.msra.mxu0 %v2657
    %3371 = vmatprep.subr.mxu0 %v2666
    %3372 = vmatpush1.msra.mxu0 %v2665
    %3373 = vmatprep.subr.mxu0 %v2674
    %3374 = vmatpush1.msra.mxu0 %v2673
    %3375 = vmatprep.subr.mxu0 %v2682
    %3376 = vmatpush1.msra.mxu0 %v2681
    %3377 = vmatprep.subr.mxu0 %v2690
    %3378 = vmatpush1.msra.mxu0 %v2689
    %3379 = vmatprep.subr.mxu0 %v2698
    %3380 = vmatpush1.msra.mxu0 %v2697
    %3381 = vmatprep.subr.mxu0 %v2706
    %3382 = vmatpush1.msra.mxu0 %v2705
    %3383 = vmatprep.subr.mxu0 %v2714
    %3384 = vmatpush1.msra.mxu0 %v2713
    %3385 = vmatprep.subr.mxu0 %v2722
    %3386 = vmatpush1.msra.mxu0 %v2721
    %3387 = vmatprep.subr.mxu0 %v2730
    %3388 = vmatpush1.msra.mxu0 %v2729
    %3389 = vmatprep.subr.mxu0 %v2738
    %3390 = vmatpush1.msra.mxu0 %v2737
    %3391 = vmatprep.subr.mxu0 %v2746
    %3392 = vmatpush1.msra.mxu0 %v2745
    %3393 = vmatprep.subr.mxu0 %v2754
    %3394 = vmatpush1.msra.mxu0 %v2753
    %3395 = vmatprep.subr.mxu0 %v2762
    %3396 = vmatpush1.msra.mxu0 %v2761
    %3397 = vmatprep.subr.mxu0 %v2770
    %3398 = vmatpush1.msra.mxu0 %v2769
    %3399 = vmatprep.subr.mxu0 %v2778
    %3400 = vmatpush1.msra.mxu0 %v2777
    %3401 = vmatprep.subr.mxu0 %v2786
    %3402 = vmatpush1.msra.mxu0 %v2785
    %3403 = vmatprep.subr.mxu0 %v2794
    %3404 = vmatpush1.msra.mxu0 %v2793
    %3405 = vmatprep.subr.mxu0 %v2802
    %3406 = vmatpush1.msra.mxu0 %v2801
    %3407 = vmatprep.subr.mxu0 %v2810
    %3408 = vmatpush1.msra.mxu0 %v2809
    %3409 = vmatprep.subr.mxu0 %v2818
    %3410 = vmatpush1.msra.mxu0 %v2817
    %3411 = vmatprep.subr.mxu0 %v2826
    %3412 = vmatpush1.msra.mxu0 %v2825
    %3413 = vmatprep.subr.mxu0 %v2834
    %3414 = vmatpush1.msra.mxu0 %v2833
    %3415 = vmatprep.subr.mxu0 %v2842
    %3416 = vmatpush1.msra.mxu0 %v2841
    %3417 = vmatprep.subr.mxu0 %v2850
    %3418 = vmatpush1.msra.mxu0 %v2849
    %3419 = vmatprep.subr.mxu0 %v2858
    %3420 = vmatpush1.msra.mxu0 %v2857
    %3421 = vmatprep.subr.mxu0 %v2866
    %3422 = vmatpush1.msra.mxu0 %v2865
    %3423 = vmatprep.subr.mxu0 %v2874
    %3424 = vmatpush1.msra.mxu0 %v2873
    %3425 = vmatprep.subr.mxu0 %v2882
    %3426 = vmatpush1.msra.mxu0 %v2881
    %3427 = vmatprep.subr.mxu0 %v2890
    %3428 = vmatpush1.msra.mxu0 %v2889
    %3429 = vmatprep.mubr.f32.mxu0 %v2378
    %3430 = vmatmul.mubr.f32.gmra.mrb[0].mxu0 %v2376
    %v3431 = vpop.f32.mrb[0].mxu0
    %v3432 = vadd.f32 %v3361, %v3431
    %v3433 = vpop.f32.mrb[0].mxu0
    %v3434 = vadd.f32 %v3363, %v3433
    %3435 = vdwg.mxu0
    %3436 = vmatprep.subr.mxu0 %v2898
    %3437 = vmatpush1.msra.mxu0 %v2897
    %3438 = vmatprep.subr.mxu0 %v2906
    %3439 = vmatpush1.msra.mxu0 %v2905
    %3440 = vmatprep.subr.mxu0 %v2914
    %3441 = vmatpush1.msra.mxu0 %v2913
    %3442 = vmatprep.subr.mxu0 %v2922
    %3443 = vmatpush1.msra.mxu0 %v2921
    %3444 = vmatprep.subr.mxu0 %v2930
    %3445 = vmatpush1.msra.mxu0 %v2929
    %3446 = vmatprep.subr.mxu0 %v2938
    %3447 = vmatpush1.msra.mxu0 %v2937
    %3448 = vmatprep.subr.mxu0 %v2946
    %3449 = vmatpush1.msra.mxu0 %v2945
    %3450 = vmatprep.subr.mxu0 %v2954
    %3451 = vmatpush1.msra.mxu0 %v2953
    %3452 = vmatprep.subr.mxu0 %v2962
    %3453 = vmatpush1.msra.mxu0 %v2961
    %3454 = vmatprep.subr.mxu0 %v2970
    %3455 = vmatpush1.msra.mxu0 %v2969
    %3456 = vmatprep.subr.mxu0 %v2978
    %3457 = vmatpush1.msra.mxu0 %v2977
    %3458 = vmatprep.subr.mxu0 %v2986
    %3459 = vmatpush1.msra.mxu0 %v2985
    %3460 = vmatprep.subr.mxu0 %v2994
    %3461 = vmatpush1.msra.mxu0 %v2993
    %3462 = vmatprep.subr.mxu0 %v3002
    %3463 = vmatpush1.msra.mxu0 %v3001
    %3464 = vmatprep.subr.mxu0 %v3010
    %3465 = vmatpush1.msra.mxu0 %v3009
    %3466 = vmatprep.subr.mxu0 %v3018
    %3467 = vmatpush1.msra.mxu0 %v3017
    %3468 = vmatprep.subr.mxu0 %v3026
    %3469 = vmatpush1.msra.mxu0 %v3025
    %3470 = vmatprep.subr.mxu0 %v3034
    %3471 = vmatpush1.msra.mxu0 %v3033
    %3472 = vmatprep.subr.mxu0 %v3042
    %3473 = vmatpush1.msra.mxu0 %v3041
    %3474 = vmatprep.subr.mxu0 %v3050
    %3475 = vmatpush1.msra.mxu0 %v3049
    %3476 = vmatprep.subr.mxu0 %v3058
    %3477 = vmatpush1.msra.mxu0 %v3057
    %3478 = vmatprep.subr.mxu0 %v3066
    %3479 = vmatpush1.msra.mxu0 %v3065
    %3480 = vmatprep.subr.mxu0 %v3074
    %3481 = vmatpush1.msra.mxu0 %v3073
    %3482 = vmatprep.subr.mxu0 %v3082
    %3483 = vmatpush1.msra.mxu0 %v3081
    %3484 = vmatprep.subr.mxu0 %v3090
    %3485 = vmatpush1.msra.mxu0 %v3089
    %3486 = vmatprep.subr.mxu0 %v3098
    %3487 = vmatpush1.msra.mxu0 %v3097
    %3488 = vmatprep.subr.mxu0 %v3106
    %3489 = vmatpush1.msra.mxu0 %v3105
    %3490 = vmatprep.subr.mxu0 %v3114
    %3491 = vmatpush1.msra.mxu0 %v3113
    %3492 = vmatprep.subr.mxu0 %v3122
    %3493 = vmatpush1.msra.mxu0 %v3121
    %3494 = vmatprep.subr.mxu0 %v3130
    %3495 = vmatpush1.msra.mxu0 %v3129
    %3496 = vmatprep.subr.mxu0 %v3138
    %3497 = vmatpush1.msra.mxu0 %v3137
    %3498 = vmatprep.subr.mxu0 %v3146
    %3499 = vmatpush1.msra.mxu0 %v3145
    %3500 = vmatprep.mubr.f32.mxu0 %v2382
    %3501 = vmatmul.mubr.f32.gmra.mrb[0].mxu0 %v2380
    %v3502 = vpop.f32.mrb[0].mxu0
    %v3503 = vadd.f32 %v3432, %v3502
    %v3504 = vpop.f32.mrb[0].mxu0
    %v3505 = vadd.f32 %v3434, %v3504
    %3506 = vdwg.mxu0
    %3507 = vmatprep.subr.mxu0 %v3154
    %3508 = vmatpush1.msra.mxu0 %v3153
    %3509 = vmatprep.subr.mxu0 %v3162
    %3510 = vmatpush1.msra.mxu0 %v3161
    %3511 = vmatprep.subr.mxu0 %v3170
    %3512 = vmatpush1.msra.mxu0 %v3169
    %3513 = vmatprep.subr.mxu0 %v3178
    %3514 = vmatpush1.msra.mxu0 %v3177
    %3515 = vmatprep.subr.mxu0 %v3186
    %3516 = vmatpush1.msra.mxu0 %v3185
    %3517 = vmatprep.subr.mxu0 %v3194
    %3518 = vmatpush1.msra.mxu0 %v3193
    %3519 = vmatprep.subr.mxu0 %v3202
    %3520 = vmatpush1.msra.mxu0 %v3201
    %3521 = vmatprep.subr.mxu0 %v3210
    %3522 = vmatpush1.msra.mxu0 %v3209
    %3523 = vmatprep.subr.mxu0 %v3218
    %3524 = vmatpush1.msra.mxu0 %v3217
    %3525 = vmatprep.subr.mxu0 %v3226
    %3526 = vmatpush1.msra.mxu0 %v3225
    %3527 = vmatprep.subr.mxu0 %v3234
    %3528 = vmatpush1.msra.mxu0 %v3233
    %3529 = vmatprep.subr.mxu0 %v3242
    %3530 = vmatpush1.msra.mxu0 %v3241
    %3531 = vmatprep.subr.mxu0 0.0
    %3532 = vmatpush1.msra.mxu0 0.0
    %3533 = vmatprep.subr.mxu0 0.0
    %3534 = vmatpush1.msra.mxu0 0.0
    %3535 = vmatprep.subr.mxu0 0.0
    %3536 = vmatpush1.msra.mxu0 0.0
    %3537 = vmatprep.subr.mxu0 0.0
    %3538 = vmatpush1.msra.mxu0 0.0
    %3539 = vmatprep.subr.mxu0 0.0
    %3540 = vmatpush1.msra.mxu0 0.0
    %3541 = vmatprep.subr.mxu0 0.0
    %3542 = vmatpush1.msra.mxu0 0.0
    %3543 = vmatprep.subr.mxu0 0.0
    %3544 = vmatpush1.msra.mxu0 0.0
    %3545 = vmatprep.subr.mxu0 0.0
    %3546 = vmatpush1.msra.mxu0 0.0
    %3547 = vmatprep.subr.mxu0 0.0
    %3548 = vmatpush1.msra.mxu0 0.0
    %3549 = vmatprep.subr.mxu0 0.0
    %3550 = vmatpush1.msra.mxu0 0.0
    %3551 = vmatprep.subr.mxu0 0.0
    %3552 = vmatpush1.msra.mxu0 0.0
    %3553 = vmatprep.subr.mxu0 0.0
    %3554 = vmatpush1.msra.mxu0 0.0
    %3555 = vmatprep.subr.mxu0 0.0
    %3556 = vmatpush1.msra.mxu0 0.0
    %3557 = vmatprep.subr.mxu0 0.0
    %3558 = vmatpush1.msra.mxu0 0.0
    %3559 = vmatprep.subr.mxu0 0.0
    %3560 = vmatpush1.msra.mxu0 0.0
    %3561 = vmatprep.subr.mxu0 0.0
    %3562 = vmatpush1.msra.mxu0 0.0
    %3563 = vmatprep.subr.mxu0 0.0
    %3564 = vmatpush1.msra.mxu0 0.0
    %3565 = vmatprep.subr.mxu0 0.0
    %3566 = vmatpush1.msra.mxu0 0.0
    %3567 = vmatprep.subr.mxu0 0.0
    %3568 = vmatpush1.msra.mxu0 0.0
    %3569 = vmatprep.subr.mxu0 0.0
    %3570 = vmatpush1.msra.mxu0 0.0
    %3571 = vmatprep.mubr.f32.mxu0 0.0
    %3572 = vmatmul.mubr.f32.gmra.mrb[0].mxu0 %v3292
    %v3573 = vpop.f32.mrb[0].mxu0
    %v3574 = vadd.f32 %v3503, %v3573
    %v3575 = vpop.f32.mrb[0].mxu0
    %v3576 = vadd.f32 %v3505, %v3575
    %3577 = vdwg.mxu0
    %3578 = vmatprep.subr.mxu0 %v2388
    %3579 = vmatpush1.msra.mxu0 %v2387
    %3580 = vmatprep.subr.mxu0 %v2396
    %3581 = vmatpush1.msra.mxu0 %v2395
    %3582 = vmatprep.subr.mxu0 %v2404
    %3583 = vmatpush1.msra.mxu0 %v2403
    %3584 = vmatprep.subr.mxu0 %v2412
    %3585 = vmatpush1.msra.mxu0 %v2411
    %3586 = vmatprep.subr.mxu0 %v2420
    %3587 = vmatpush1.msra.mxu0 %v2419
    %3588 = vmatprep.subr.mxu0 %v2428
    %3589 = vmatpush1.msra.mxu0 %v2427
    %3590 = vmatprep.subr.mxu0 %v2436
    %3591 = vmatpush1.msra.mxu0 %v2435
    %3592 = vmatprep.subr.mxu0 %v2444
    %3593 = vmatpush1.msra.mxu0 %v2443
    %3594 = vmatprep.subr.mxu0 %v2452
    %3595 = vmatpush1.msra.mxu0 %v2451
    %3596 = vmatprep.subr.mxu0 %v2460
    %3597 = vmatpush1.msra.mxu0 %v2459
    %3598 = vmatprep.subr.mxu0 %v2468
    %3599 = vmatpush1.msra.mxu0 %v2467
    %3600 = vmatprep.subr.mxu0 %v2476
    %3601 = vmatpush1.msra.mxu0 %v2475
    %3602 = vmatprep.subr.mxu0 %v2484
    %3603 = vmatpush1.msra.mxu0 %v2483
    %3604 = vmatprep.subr.mxu0 %v2492
    %3605 = vmatpush1.msra.mxu0 %v2491
    %3606 = vmatprep.subr.mxu0 %v2500
    %3607 = vmatpush1.msra.mxu0 %v2499
    %3608 = vmatprep.subr.mxu0 %v2508
    %3609 = vmatpush1.msra.mxu0 %v2507
    %3610 = vmatprep.subr.mxu0 %v2516
    %3611 = vmatpush1.msra.mxu0 %v2515
    %3612 = vmatprep.subr.mxu0 %v2524
    %3613 = vmatpush1.msra.mxu0 %v2523
    %3614 = vmatprep.subr.mxu0 %v2532
    %3615 = vmatpush1.msra.mxu0 %v2531
    %3616 = vmatprep.subr.mxu0 %v2540
    %3617 = vmatpush1.msra.mxu0 %v2539
    %3618 = vmatprep.subr.mxu0 %v2548
    %3619 = vmatpush1.msra.mxu0 %v2547
    %3620 = vmatprep.subr.mxu0 %v2556
    %3621 = vmatpush1.msra.mxu0 %v2555
    %3622 = vmatprep.subr.mxu0 %v2564
    %3623 = vmatpush1.msra.mxu0 %v2563
    %3624 = vmatprep.subr.mxu0 %v2572
    %3625 = vmatpush1.msra.mxu0 %v2571
    %3626 = vmatprep.subr.mxu0 %v2580
    %3627 = vmatpush1.msra.mxu0 %v2579
    %3628 = vmatprep.subr.mxu0 %v2588
    %3629 = vmatpush1.msra.mxu0 %v2587
    %3630 = vmatprep.subr.mxu0 %v2596
    %3631 = vmatpush1.msra.mxu0 %v2595
    %3632 = vmatprep.subr.mxu0 %v2604
    %3633 = vmatpush1.msra.mxu0 %v2603
    %3634 = vmatprep.subr.mxu0 %v2612
    %3635 = vmatpush1.msra.mxu0 %v2611
    %3636 = vmatprep.subr.mxu0 %v2620
    %3637 = vmatpush1.msra.mxu0 %v2619
    %3638 = vmatprep.subr.mxu0 %v2628
    %3639 = vmatpush1.msra.mxu0 %v2627
    %3640 = vmatprep.subr.mxu0 %v2636
    %3641 = vmatpush1.msra.mxu0 %v2635
    %3642 = vmatprep.mubr.f32.mxu0 %v2374
    %3643 = vmatmul.mubr.f32.gmra.mrb[0].mxu0 %v2372
    %v3644 = vpop.f32.mrb[0].mxu0
    %v3645 = vadd.f32 %v3262, %v3644
    %v3646 = vpop.f32.mrb[0].mxu0
    %v3647 = vadd.f32 %v3266, %v3646
    %3648 = vdwg.mxu0
    %3649 = vmatprep.subr.mxu0 %v2644
    %3650 = vmatpush1.msra.mxu0 %v2643
    %3651 = vmatprep.subr.mxu0 %v2652
    %3652 = vmatpush1.msra.mxu0 %v2651
    %3653 = vmatprep.subr.mxu0 %v2660
    %3654 = vmatpush1.msra.mxu0 %v2659
    %3655 = vmatprep.subr.mxu0 %v2668
    %3656 = vmatpush1.msra.mxu0 %v2667
    %3657 = vmatprep.subr.mxu0 %v2676
    %3658 = vmatpush1.msra.mxu0 %v2675
    %3659 = vmatprep.subr.mxu0 %v2684
    %3660 = vmatpush1.msra.mxu0 %v2683
    %3661 = vmatprep.subr.mxu0 %v2692
    %3662 = vmatpush1.msra.mxu0 %v2691
    %3663 = vmatprep.subr.mxu0 %v2700
    %3664 = vmatpush1.msra.mxu0 %v2699
    %3665 = vmatprep.subr.mxu0 %v2708
    %3666 = vmatpush1.msra.mxu0 %v2707
    %3667 = vmatprep.subr.mxu0 %v2716
    %3668 = vmatpush1.msra.mxu0 %v2715
    %3669 = vmatprep.subr.mxu0 %v2724
    %3670 = vmatpush1.msra.mxu0 %v2723
    %3671 = vmatprep.subr.mxu0 %v2732
    %3672 = vmatpush1.msra.mxu0 %v2731
    %3673 = vmatprep.subr.mxu0 %v2740
    %3674 = vmatpush1.msra.mxu0 %v2739
    %3675 = vmatprep.subr.mxu0 %v2748
    %3676 = vmatpush1.msra.mxu0 %v2747
    %3677 = vmatprep.subr.mxu0 %v2756
    %3678 = vmatpush1.msra.mxu0 %v2755
    %3679 = vmatprep.subr.mxu0 %v2764
    %3680 = vmatpush1.msra.mxu0 %v2763
    %3681 = vmatprep.subr.mxu0 %v2772
    %3682 = vmatpush1.msra.mxu0 %v2771
    %3683 = vmatprep.subr.mxu0 %v2780
    %3684 = vmatpush1.msra.mxu0 %v2779
    %3685 = vmatprep.subr.mxu0 %v2788
    %3686 = vmatpush1.msra.mxu0 %v2787
    %3687 = vmatprep.subr.mxu0 %v2796
    %3688 = vmatpush1.msra.mxu0 %v2795
    %3689 = vmatprep.subr.mxu0 %v2804
    %3690 = vmatpush1.msra.mxu0 %v2803
    %3691 = vmatprep.subr.mxu0 %v2812
    %3692 = vmatpush1.msra.mxu0 %v2811
    %3693 = vmatprep.subr.mxu0 %v2820
    %3694 = vmatpush1.msra.mxu0 %v2819
    %3695 = vmatprep.subr.mxu0 %v2828
    %3696 = vmatpush1.msra.mxu0 %v2827
    %3697 = vmatprep.subr.mxu0 %v2836
    %3698 = vmatpush1.msra.mxu0 %v2835
    %3699 = vmatprep.subr.mxu0 %v2844
    %3700 = vmatpush1.msra.mxu0 %v2843
    %3701 = vmatprep.subr.mxu0 %v2852
    %3702 = vmatpush1.msra.mxu0 %v2851
    %3703 = vmatprep.subr.mxu0 %v2860
    %3704 = vmatpush1.msra.mxu0 %v2859
    %3705 = vmatprep.subr.mxu0 %v2868
    %3706 = vmatpush1.msra.mxu0 %v2867
    %3707 = vmatprep.subr.mxu0 %v2876
    %3708 = vmatpush1.msra.mxu0 %v2875
    %3709 = vmatprep.subr.mxu0 %v2884
    %3710 = vmatpush1.msra.mxu0 %v2883
    %3711 = vmatprep.subr.mxu0 %v2892
    %3712 = vmatpush1.msra.mxu0 %v2891
    %3713 = vmatprep.mubr.f32.mxu0 %v2378
    %3714 = vmatmul.mubr.f32.gmra.mrb[0].mxu0 %v2376
    %v3715 = vpop.f32.mrb[0].mxu0
    %v3716 = vadd.f32 %v3645, %v3715
    %v3717 = vpop.f32.mrb[0].mxu0
    %v3718 = vadd.f32 %v3647, %v3717
    %3719 = vdwg.mxu0
    %3720 = vmatprep.subr.mxu0 %v2900
    %3721 = vmatpush1.msra.mxu0 %v2899
    %3722 = vmatprep.subr.mxu0 %v2908
    %3723 = vmatpush1.msra.mxu0 %v2907
    %3724 = vmatprep.subr.mxu0 %v2916
    %3725 = vmatpush1.msra.mxu0 %v2915
    %3726 = vmatprep.subr.mxu0 %v2924
    %3727 = vmatpush1.msra.mxu0 %v2923
    %3728 = vmatprep.subr.mxu0 %v2932
    %3729 = vmatpush1.msra.mxu0 %v2931
    %3730 = vmatprep.subr.mxu0 %v2940
    %3731 = vmatpush1.msra.mxu0 %v2939
    %3732 = vmatprep.subr.mxu0 %v2948
    %3733 = vmatpush1.msra.mxu0 %v2947
    %3734 = vmatprep.subr.mxu0 %v2956
    %3735 = vmatpush1.msra.mxu0 %v2955
    %3736 = vmatprep.subr.mxu0 %v2964
    %3737 = vmatpush1.msra.mxu0 %v2963
    %3738 = vmatprep.subr.mxu0 %v2972
    %3739 = vmatpush1.msra.mxu0 %v2971
    %3740 = vmatprep.subr.mxu0 %v2980
    %3741 = vmatpush1.msra.mxu0 %v2979
    %3742 = vmatprep.subr.mxu0 %v2988
    %3743 = vmatpush1.msra.mxu0 %v2987
    %3744 = vmatprep.subr.mxu0 %v2996
    %3745 = vmatpush1.msra.mxu0 %v2995
    %3746 = vmatprep.subr.mxu0 %v3004
    %3747 = vmatpush1.msra.mxu0 %v3003
    %3748 = vmatprep.subr.mxu0 %v3012
    %3749 = vmatpush1.msra.mxu0 %v3011
    %3750 = vmatprep.subr.mxu0 %v3020
    %3751 = vmatpush1.msra.mxu0 %v3019
    %3752 = vmatprep.subr.mxu0 %v3028
    %3753 = vmatpush1.msra.mxu0 %v3027
    %3754 = vmatprep.subr.mxu0 %v3036
    %3755 = vmatpush1.msra.mxu0 %v3035
    %3756 = vmatprep.subr.mxu0 %v3044
    %3757 = vmatpush1.msra.mxu0 %v3043
    %3758 = vmatprep.subr.mxu0 %v3052
    %3759 = vmatpush1.msra.mxu0 %v3051
    %3760 = vmatprep.subr.mxu0 %v3060
    %3761 = vmatpush1.msra.mxu0 %v3059
    %3762 = vmatprep.subr.mxu0 %v3068
    %3763 = vmatpush1.msra.mxu0 %v3067
    %3764 = vmatprep.subr.mxu0 %v3076
    %3765 = vmatpush1.msra.mxu0 %v3075
    %3766 = vmatprep.subr.mxu0 %v3084
    %3767 = vmatpush1.msra.mxu0 %v3083
    %3768 = vmatprep.subr.mxu0 %v3092
    %3769 = vmatpush1.msra.mxu0 %v3091
    %3770 = vmatprep.subr.mxu0 %v3100
    %3771 = vmatpush1.msra.mxu0 %v3099
    %3772 = vmatprep.subr.mxu0 %v3108
    %3773 = vmatpush1.msra.mxu0 %v3107
    %3774 = vmatprep.subr.mxu0 %v3116
    %3775 = vmatpush1.msra.mxu0 %v3115
    %3776 = vmatprep.subr.mxu0 %v3124
    %3777 = vmatpush1.msra.mxu0 %v3123
    %3778 = vmatprep.subr.mxu0 %v3132
    %3779 = vmatpush1.msra.mxu0 %v3131
    %3780 = vmatprep.subr.mxu0 %v3140
    %3781 = vmatpush1.msra.mxu0 %v3139
    %3782 = vmatprep.subr.mxu0 %v3148
    %3783 = vmatpush1.msra.mxu0 %v3147
    %3784 = vmatprep.mubr.f32.mxu0 %v2382
    %3785 = vmatmul.mubr.f32.gmra.mrb[0].mxu0 %v2380
    %v3786 = vpop.f32.mrb[0].mxu0
    %v3787 = vadd.f32 %v3716, %v3786
    %v3788 = vpop.f32.mrb[0].mxu0
    %v3789 = vadd.f32 %v3718, %v3788
    %3790 = vdwg.mxu0
    %3791 = vmatprep.subr.mxu0 %v3156
    %3792 = vmatpush1.msra.mxu0 %v3155
    %3793 = vmatprep.subr.mxu0 %v3164
    %3794 = vmatpush1.msra.mxu0 %v3163
    %3795 = vmatprep.subr.mxu0 %v3172
    %3796 = vmatpush1.msra.mxu0 %v3171
    %3797 = vmatprep.subr.mxu0 %v3180
    %3798 = vmatpush1.msra.mxu0 %v3179
    %3799 = vmatprep.subr.mxu0 %v3188
    %3800 = vmatpush1.msra.mxu0 %v3187
    %3801 = vmatprep.subr.mxu0 %v3196
    %3802 = vmatpush1.msra.mxu0 %v3195
    %3803 = vmatprep.subr.mxu0 %v3204
    %3804 = vmatpush1.msra.mxu0 %v3203
    %3805 = vmatprep.subr.mxu0 %v3212
    %3806 = vmatpush1.msra.mxu0 %v3211
    %3807 = vmatprep.subr.mxu0 %v3220
    %3808 = vmatpush1.msra.mxu0 %v3219
    %3809 = vmatprep.subr.mxu0 %v3228
    %3810 = vmatpush1.msra.mxu0 %v3227
    %3811 = vmatprep.subr.mxu0 %v3236
    %3812 = vmatpush1.msra.mxu0 %v3235
    %3813 = vmatprep.subr.mxu0 %v3244
    %3814 = vmatpush1.msra.mxu0 %v3243
    %3815 = vmatprep.subr.mxu0 0.0
    %3816 = vmatpush1.msra.mxu0 0.0
    %3817 = vmatprep.subr.mxu0 0.0
    %3818 = vmatpush1.msra.mxu0 0.0
    %3819 = vmatprep.subr.mxu0 0.0
    %3820 = vmatpush1.msra.mxu0 0.0
    %3821 = vmatprep.subr.mxu0 0.0
    %3822 = vmatpush1.msra.mxu0 0.0
    %3823 = vmatprep.subr.mxu0 0.0
    %3824 = vmatpush1.msra.mxu0 0.0
    %3825 = vmatprep.subr.mxu0 0.0
    %3826 = vmatpush1.msra.mxu0 0.0
    %3827 = vmatprep.subr.mxu0 0.0
    %3828 = vmatpush1.msra.mxu0 0.0
    %3829 = vmatprep.subr.mxu0 0.0
    %3830 = vmatpush1.msra.mxu0 0.0
    %3831 = vmatprep.subr.mxu0 0.0
    %3832 = vmatpush1.msra.mxu0 0.0
    %3833 = vmatprep.subr.mxu0 0.0
    %3834 = vmatpush1.msra.mxu0 0.0
    %3835 = vmatprep.subr.mxu0 0.0
    %3836 = vmatpush1.msra.mxu0 0.0
    %3837 = vmatprep.subr.mxu0 0.0
    %3838 = vmatpush1.msra.mxu0 0.0
    %3839 = vmatprep.subr.mxu0 0.0
    %3840 = vmatpush1.msra.mxu0 0.0
    %3841 = vmatprep.subr.mxu0 0.0
    %3842 = vmatpush1.msra.mxu0 0.0
    %3843 = vmatprep.subr.mxu0 0.0
    %3844 = vmatpush1.msra.mxu0 0.0
    %3845 = vmatprep.subr.mxu0 0.0
    %3846 = vmatpush1.msra.mxu0 0.0
    %3847 = vmatprep.subr.mxu0 0.0
    %3848 = vmatpush1.msra.mxu0 0.0
    %3849 = vmatprep.subr.mxu0 0.0
    %3850 = vmatpush1.msra.mxu0 0.0
    %3851 = vmatprep.subr.mxu0 0.0
    %3852 = vmatpush1.msra.mxu0 0.0
    %3853 = vmatprep.subr.mxu0 0.0
    %3854 = vmatpush1.msra.mxu0 0.0
    %3855 = vmatprep.mubr.f32.mxu0 0.0
    %3856 = vmatmul.mubr.f32.gmra.mrb[0].mxu0 %v3292
    %v3857 = vpop.f32.mrb[0].mxu0
    %v3858 = vadd.f32 %v3787, %v3857
    %v3859 = vpop.f32.mrb[0].mxu0
    %v3860 = vadd.f32 %v3789, %v3859
    %3861 = vdwg.mxu0
    %3862 = vmatprep.subr.mxu0 %v2390
    %3863 = vmatpush1.msra.mxu0 %v2389
    %3864 = vmatprep.subr.mxu0 %v2398
    %3865 = vmatpush1.msra.mxu0 %v2397
    %3866 = vmatprep.subr.mxu0 %v2406
    %3867 = vmatpush1.msra.mxu0 %v2405
    %3868 = vmatprep.subr.mxu0 %v2414
    %3869 = vmatpush1.msra.mxu0 %v2413
    %3870 = vmatprep.subr.mxu0 %v2422
    %3871 = vmatpush1.msra.mxu0 %v2421
    %3872 = vmatprep.subr.mxu0 %v2430
    %3873 = vmatpush1.msra.mxu0 %v2429
    %3874 = vmatprep.subr.mxu0 %v2438
    %3875 = vmatpush1.msra.mxu0 %v2437
    %3876 = vmatprep.subr.mxu0 %v2446
    %3877 = vmatpush1.msra.mxu0 %v2445
    %3878 = vmatprep.subr.mxu0 %v2454
    %3879 = vmatpush1.msra.mxu0 %v2453
    %3880 = vmatprep.subr.mxu0 %v2462
    %3881 = vmatpush1.msra.mxu0 %v2461
    %3882 = vmatprep.subr.mxu0 %v2470
    %3883 = vmatpush1.msra.mxu0 %v2469
    %3884 = vmatprep.subr.mxu0 %v2478
    %3885 = vmatpush1.msra.mxu0 %v2477
    %3886 = vmatprep.subr.mxu0 %v2486
    %3887 = vmatpush1.msra.mxu0 %v2485
    %3888 = vmatprep.subr.mxu0 %v2494
    %3889 = vmatpush1.msra.mxu0 %v2493
    %3890 = vmatprep.subr.mxu0 %v2502
    %3891 = vmatpush1.msra.mxu0 %v2501
    %3892 = vmatprep.subr.mxu0 %v2510
    %3893 = vmatpush1.msra.mxu0 %v2509
    %3894 = vmatprep.subr.mxu0 %v2518
    %3895 = vmatpush1.msra.mxu0 %v2517
    %3896 = vmatprep.subr.mxu0 %v2526
    %3897 = vmatpush1.msra.mxu0 %v2525
    %3898 = vmatprep.subr.mxu0 %v2534
    %3899 = vmatpush1.msra.mxu0 %v2533
    %3900 = vmatprep.subr.mxu0 %v2542
    %3901 = vmatpush1.msra.mxu0 %v2541
    %3902 = vmatprep.subr.mxu0 %v2550
    %3903 = vmatpush1.msra.mxu0 %v2549
    %3904 = vmatprep.subr.mxu0 %v2558
    %3905 = vmatpush1.msra.mxu0 %v2557
    %3906 = vmatprep.subr.mxu0 %v2566
    %3907 = vmatpush1.msra.mxu0 %v2565
    %3908 = vmatprep.subr.mxu0 %v2574
    %3909 = vmatpush1.msra.mxu0 %v2573
    %3910 = vmatprep.subr.mxu0 %v2582
    %3911 = vmatpush1.msra.mxu0 %v2581
    %3912 = vmatprep.subr.mxu0 %v2590
    %3913 = vmatpush1.msra.mxu0 %v2589
    %3914 = vmatprep.subr.mxu0 %v2598
    %3915 = vmatpush1.msra.mxu0 %v2597
    %3916 = vmatprep.subr.mxu0 %v2606
    %3917 = vmatpush1.msra.mxu0 %v2605
    %3918 = vmatprep.subr.mxu0 %v2614
    %3919 = vmatpush1.msra.mxu0 %v2613
    %3920 = vmatprep.subr.mxu0 %v2622
    %3921 = vmatpush1.msra.mxu0 %v2621
    %3922 = vmatprep.subr.mxu0 %v2630
    %3923 = vmatpush1.msra.mxu0 %v2629
    %3924 = vmatprep.subr.mxu0 %v2638
    %3925 = vmatpush1.msra.mxu0 %v2637
    %3926 = vmatprep.mubr.f32.mxu0 %v2374
    %3927 = vmatmul.mubr.f32.gmra.mrb[0].mxu0 %v2372
    %v3928 = vpop.f32.mrb[0].mxu0
    %v3929 = vadd.f32 %v3270, %v3928
    %v3930 = vpop.f32.mrb[0].mxu0
    %v3931 = vadd.f32 %v3274, %v3930
    %3932 = vdwg.mxu0
    %3933 = vmatprep.subr.mxu0 %v2646
    %3934 = vmatpush1.msra.mxu0 %v2645
    %3935 = vmatprep.subr.mxu0 %v2654
    %3936 = vmatpush1.msra.mxu0 %v2653
    %3937 = vmatprep.subr.mxu0 %v2662
    %3938 = vmatpush1.msra.mxu0 %v2661
    %3939 = vmatprep.subr.mxu0 %v2670
    %3940 = vmatpush1.msra.mxu0 %v2669
    %3941 = vmatprep.subr.mxu0 %v2678
    %3942 = vmatpush1.msra.mxu0 %v2677
    %3943 = vmatprep.subr.mxu0 %v2686
    %3944 = vmatpush1.msra.mxu0 %v2685
    %3945 = vmatprep.subr.mxu0 %v2694
    %3946 = vmatpush1.msra.mxu0 %v2693
    %3947 = vmatprep.subr.mxu0 %v2702
    %3948 = vmatpush1.msra.mxu0 %v2701
    %3949 = vmatprep.subr.mxu0 %v2710
    %3950 = vmatpush1.msra.mxu0 %v2709
    %3951 = vmatprep.subr.mxu0 %v2718
    %3952 = vmatpush1.msra.mxu0 %v2717
    %3953 = vmatprep.subr.mxu0 %v2726
    %3954 = vmatpush1.msra.mxu0 %v2725
    %3955 = vmatprep.subr.mxu0 %v2734
    %3956 = vmatpush1.msra.mxu0 %v2733
    %3957 = vmatprep.subr.mxu0 %v2742
    %3958 = vmatpush1.msra.mxu0 %v2741
    %3959 = vmatprep.subr.mxu0 %v2750
    %3960 = vmatpush1.msra.mxu0 %v2749
    %3961 = vmatprep.subr.mxu0 %v2758
    %3962 = vmatpush1.msra.mxu0 %v2757
    %3963 = vmatprep.subr.mxu0 %v2766
    %3964 = vmatpush1.msra.mxu0 %v2765
    %3965 = vmatprep.subr.mxu0 %v2774
    %3966 = vmatpush1.msra.mxu0 %v2773
    %3967 = vmatprep.subr.mxu0 %v2782
    %3968 = vmatpush1.msra.mxu0 %v2781
    %3969 = vmatprep.subr.mxu0 %v2790
    %3970 = vmatpush1.msra.mxu0 %v2789
    %3971 = vmatprep.subr.mxu0 %v2798
    %3972 = vmatpush1.msra.mxu0 %v2797
    %3973 = vmatprep.subr.mxu0 %v2806
    %3974 = vmatpush1.msra.mxu0 %v2805
    %3975 = vmatprep.subr.mxu0 %v2814
    %3976 = vmatpush1.msra.mxu0 %v2813
    %3977 = vmatprep.subr.mxu0 %v2822
    %3978 = vmatpush1.msra.mxu0 %v2821
    %3979 = vmatprep.subr.mxu0 %v2830
    %3980 = vmatpush1.msra.mxu0 %v2829
    %3981 = vmatprep.subr.mxu0 %v2838
    %3982 = vmatpush1.msra.mxu0 %v2837
    %3983 = vmatprep.subr.mxu0 %v2846
    %3984 = vmatpush1.msra.mxu0 %v2845
    %3985 = vmatprep.subr.mxu0 %v2854
    %3986 = vmatpush1.msra.mxu0 %v2853
    %3987 = vmatprep.subr.mxu0 %v2862
    %3988 = vmatpush1.msra.mxu0 %v2861
    %3989 = vmatprep.subr.mxu0 %v2870
    %3990 = vmatpush1.msra.mxu0 %v2869
    %3991 = vmatprep.subr.mxu0 %v2878
    %3992 = vmatpush1.msra.mxu0 %v2877
    %3993 = vmatprep.subr.mxu0 %v2886
    %3994 = vmatpush1.msra.mxu0 %v2885
    %3995 = vmatprep.subr.mxu0 %v2894
    %3996 = vmatpush1.msra.mxu0 %v2893
    %3997 = vmatprep.mubr.f32.mxu0 %v2378
    %3998 = vmatmul.mubr.f32.gmra.mrb[0].mxu0 %v2376
    %v3999 = vpop.f32.mrb[0].mxu0
    %v4000 = vadd.f32 %v3929, %v3999
    %v4001 = vpop.f32.mrb[0].mxu0
    %v4002 = vadd.f32 %v3931, %v4001
    %4003 = vdwg.mxu0
    %4004 = vmatprep.subr.mxu0 %v2902
    %4005 = vmatpush1.msra.mxu0 %v2901
    %4006 = vmatprep.subr.mxu0 %v2910
    %4007 = vmatpush1.msra.mxu0 %v2909
    %4008 = vmatprep.subr.mxu0 %v2918
    %4009 = vmatpush1.msra.mxu0 %v2917
    %4010 = vmatprep.subr.mxu0 %v2926
    %4011 = vmatpush1.msra.mxu0 %v2925
    %4012 = vmatprep.subr.mxu0 %v2934
    %4013 = vmatpush1.msra.mxu0 %v2933
    %4014 = vmatprep.subr.mxu0 %v2942
    %4015 = vmatpush1.msra.mxu0 %v2941
    %4016 = vmatprep.subr.mxu0 %v2950
    %4017 = vmatpush1.msra.mxu0 %v2949
    %4018 = vmatprep.subr.mxu0 %v2958
    %4019 = vmatpush1.msra.mxu0 %v2957
    %4020 = vmatprep.subr.mxu0 %v2966
    %4021 = vmatpush1.msra.mxu0 %v2965
    %4022 = vmatprep.subr.mxu0 %v2974
    %4023 = vmatpush1.msra.mxu0 %v2973
    %4024 = vmatprep.subr.mxu0 %v2982
    %4025 = vmatpush1.msra.mxu0 %v2981
    %4026 = vmatprep.subr.mxu0 %v2990
    %4027 = vmatpush1.msra.mxu0 %v2989
    %4028 = vmatprep.subr.mxu0 %v2998
    %4029 = vmatpush1.msra.mxu0 %v2997
    %4030 = vmatprep.subr.mxu0 %v3006
    %4031 = vmatpush1.msra.mxu0 %v3005
    %4032 = vmatprep.subr.mxu0 %v3014
    %4033 = vmatpush1.msra.mxu0 %v3013
    %4034 = vmatprep.subr.mxu0 %v3022
    %4035 = vmatpush1.msra.mxu0 %v3021
    %4036 = vmatprep.subr.mxu0 %v3030
    %4037 = vmatpush1.msra.mxu0 %v3029
    %4038 = vmatprep.subr.mxu0 %v3038
    %4039 = vmatpush1.msra.mxu0 %v3037
    %4040 = vmatprep.subr.mxu0 %v3046
    %4041 = vmatpush1.msra.mxu0 %v3045
    %4042 = vmatprep.subr.mxu0 %v3054
    %4043 = vmatpush1.msra.mxu0 %v3053
    %4044 = vmatprep.subr.mxu0 %v3062
    %4045 = vmatpush1.msra.mxu0 %v3061
    %4046 = vmatprep.subr.mxu0 %v3070
    %4047 = vmatpush1.msra.mxu0 %v3069
    %4048 = vmatprep.subr.mxu0 %v3078
    %4049 = vmatpush1.msra.mxu0 %v3077
    %4050 = vmatprep.subr.mxu0 %v3086
    %4051 = vmatpush1.msra.mxu0 %v3085
    %4052 = vmatprep.subr.mxu0 %v3094
    %4053 = vmatpush1.msra.mxu0 %v3093
    %4054 = vmatprep.subr.mxu0 %v3102
    %4055 = vmatpush1.msra.mxu0 %v3101
    %4056 = vmatprep.subr.mxu0 %v3110
    %4057 = vmatpush1.msra.mxu0 %v3109
    %4058 = vmatprep.subr.mxu0 %v3118
    %4059 = vmatpush1.msra.mxu0 %v3117
    %4060 = vmatprep.subr.mxu0 %v3126
    %4061 = vmatpush1.msra.mxu0 %v3125
    %4062 = vmatprep.subr.mxu0 %v3134
    %4063 = vmatpush1.msra.mxu0 %v3133
    %4064 = vmatprep.subr.mxu0 %v3142
    %4065 = vmatpush1.msra.mxu0 %v3141
    %4066 = vmatprep.subr.mxu0 %v3150
    %4067 = vmatpush1.msra.mxu0 %v3149
    %4068 = vmatprep.mubr.f32.mxu0 %v2382
    %4069 = vmatmul.mubr.f32.gmra.mrb[0].mxu0 %v2380
    %v4070 = vpop.f32.mrb[0].mxu0
    %v4071 = vadd.f32 %v4000, %v4070
    %v4072 = vpop.f32.mrb[0].mxu0
    %v4073 = vadd.f32 %v4002, %v4072
    %4074 = vdwg.mxu0
    %4075 = vmatprep.subr.mxu0 %v3158
    %4076 = vmatpush1.msra.mxu0 %v3157
    %4077 = vmatprep.subr.mxu0 %v3166
    %4078 = vmatpush1.msra.mxu0 %v3165
    %4079 = vmatprep.subr.mxu0 %v3174
    %4080 = vmatpush1.msra.mxu0 %v3173
    %4081 = vmatprep.subr.mxu0 %v3182
    %4082 = vmatpush1.msra.mxu0 %v3181
    %4083 = vmatprep.subr.mxu0 %v3190
    %4084 = vmatpush1.msra.mxu0 %v3189
    %4085 = vmatprep.subr.mxu0 %v3198
    %4086 = vmatpush1.msra.mxu0 %v3197
    %4087 = vmatprep.subr.mxu0 %v3206
    %4088 = vmatpush1.msra.mxu0 %v3205
    %4089 = vmatprep.subr.mxu0 %v3214
    %4090 = vmatpush1.msra.mxu0 %v3213
    %4091 = vmatprep.subr.mxu0 %v3222
    %4092 = vmatpush1.msra.mxu0 %v3221
    %4093 = vmatprep.subr.mxu0 %v3230
    %4094 = vmatpush1.msra.mxu0 %v3229
    %4095 = vmatprep.subr.mxu0 %v3238
    %4096 = vmatpush1.msra.mxu0 %v3237
    %4097 = vmatprep.subr.mxu0 %v3246
    %4098 = vmatpush1.msra.mxu0 %v3245
    %4099 = vmatprep.subr.mxu0 0.0
    %4100 = vmatpush1.msra.mxu0 0.0
    %4101 = vmatprep.subr.mxu0 0.0
    %4102 = vmatpush1.msra.mxu0 0.0
    %4103 = vmatprep.subr.mxu0 0.0
    %4104 = vmatpush1.msra.mxu0 0.0
    %4105 = vmatprep.subr.mxu0 0.0
    %4106 = vmatpush1.msra.mxu0 0.0
    %4107 = vmatprep.subr.mxu0 0.0
    %4108 = vmatpush1.msra.mxu0 0.0
    %4109 = vmatprep.subr.mxu0 0.0
    %4110 = vmatpush1.msra.mxu0 0.0
    %4111 = vmatprep.subr.mxu0 0.0
    %4112 = vmatpush1.msra.mxu0 0.0
    %4113 = vmatprep.subr.mxu0 0.0
    %4114 = vmatpush1.msra.mxu0 0.0
    %4115 = vmatprep.subr.mxu0 0.0
    %4116 = vmatpush1.msra.mxu0 0.0
    %4117 = vmatprep.subr.mxu0 0.0
    %4118 = vmatpush1.msra.mxu0 0.0
    %4119 = vmatprep.subr.mxu0 0.0
    %4120 = vmatpush1.msra.mxu0 0.0
    %4121 = vmatprep.subr.mxu0 0.0
    %4122 = vmatpush1.msra.mxu0 0.0
    %4123 = vmatprep.subr.mxu0 0.0
    %4124 = vmatpush1.msra.mxu0 0.0
    %4125 = vmatprep.subr.mxu0 0.0
    %4126 = vmatpush1.msra.mxu0 0.0
    %4127 = vmatprep.subr.mxu0 0.0
    %4128 = vmatpush1.msra.mxu0 0.0
    %4129 = vmatprep.subr.mxu0 0.0
    %4130 = vmatpush1.msra.mxu0 0.0
    %4131 = vmatprep.subr.mxu0 0.0
    %4132 = vmatpush1.msra.mxu0 0.0
    %4133 = vmatprep.subr.mxu0 0.0
    %4134 = vmatpush1.msra.mxu0 0.0
    %4135 = vmatprep.subr.mxu0 0.0
    %4136 = vmatpush1.msra.mxu0 0.0
    %4137 = vmatprep.subr.mxu0 0.0
    %4138 = vmatpush1.msra.mxu0 0.0
    %4139 = vmatprep.mubr.f32.mxu0 0.0
    %4140 = vmatmul.mubr.f32.gmra.mrb[0].mxu0 %v3292
    %v4141 = vpop.f32.mrb[0].mxu0
    %v4142 = vadd.f32 %v4071, %v4141
    %v4143 = vpop.f32.mrb[0].mxu0
    %v4144 = vadd.f32 %v4073, %v4143
    %4145 = vdwg.mxu0
    %4146 = vmatprep.subr.mxu0 %v2392
    %4147 = vmatpush1.msra.mxu0 %v2391
    %4148 = vmatprep.subr.mxu0 %v2400
    %4149 = vmatpush1.msra.mxu0 %v2399
    %4150 = vmatprep.subr.mxu0 %v2408
    %4151 = vmatpush1.msra.mxu0 %v2407
    %4152 = vmatprep.subr.mxu0 %v2416
    %4153 = vmatpush1.msra.mxu0 %v2415
    %4154 = vmatprep.subr.mxu0 %v2424
    %4155 = vmatpush1.msra.mxu0 %v2423
    %4156 = vmatprep.subr.mxu0 %v2432
    %4157 = vmatpush1.msra.mxu0 %v2431
    %4158 = vmatprep.subr.mxu0 %v2440
    %4159 = vmatpush1.msra.mxu0 %v2439
    %4160 = vmatprep.subr.mxu0 %v2448
    %4161 = vmatpush1.msra.mxu0 %v2447
    %4162 = vmatprep.subr.mxu0 %v2456
    %4163 = vmatpush1.msra.mxu0 %v2455
    %4164 = vmatprep.subr.mxu0 %v2464
    %4165 = vmatpush1.msra.mxu0 %v2463
    %4166 = vmatprep.subr.mxu0 %v2472
    %4167 = vmatpush1.msra.mxu0 %v2471
    %4168 = vmatprep.subr.mxu0 %v2480
    %4169 = vmatpush1.msra.mxu0 %v2479
    %4170 = vmatprep.subr.mxu0 %v2488
    %4171 = vmatpush1.msra.mxu0 %v2487
    %4172 = vmatprep.subr.mxu0 %v2496
    %4173 = vmatpush1.msra.mxu0 %v2495
    %4174 = vmatprep.subr.mxu0 %v2504
    %4175 = vmatpush1.msra.mxu0 %v2503
    %4176 = vmatprep.subr.mxu0 %v2512
    %4177 = vmatpush1.msra.mxu0 %v2511
    %4178 = vmatprep.subr.mxu0 %v2520
    %4179 = vmatpush1.msra.mxu0 %v2519
    %4180 = vmatprep.subr.mxu0 %v2528
    %4181 = vmatpush1.msra.mxu0 %v2527
    %4182 = vmatprep.subr.mxu0 %v2536
    %4183 = vmatpush1.msra.mxu0 %v2535
    %4184 = vmatprep.subr.mxu0 %v2544
    %4185 = vmatpush1.msra.mxu0 %v2543
    %4186 = vmatprep.subr.mxu0 %v2552
    %4187 = vmatpush1.msra.mxu0 %v2551
    %4188 = vmatprep.subr.mxu0 %v2560
    %4189 = vmatpush1.msra.mxu0 %v2559
    %4190 = vmatprep.subr.mxu0 %v2568
    %4191 = vmatpush1.msra.mxu0 %v2567
    %4192 = vmatprep.subr.mxu0 %v2576
    %4193 = vmatpush1.msra.mxu0 %v2575
    %4194 = vmatprep.subr.mxu0 %v2584
    %4195 = vmatpush1.msra.mxu0 %v2583
    %4196 = vmatprep.subr.mxu0 %v2592
    %4197 = vmatpush1.msra.mxu0 %v2591
    %4198 = vmatprep.subr.mxu0 %v2600
    %4199 = vmatpush1.msra.mxu0 %v2599
    %4200 = vmatprep.subr.mxu0 %v2608
    %4201 = vmatpush1.msra.mxu0 %v2607
    %4202 = vmatprep.subr.mxu0 %v2616
    %4203 = vmatpush1.msra.mxu0 %v2615
    %4204 = vmatprep.subr.mxu0 %v2624
    %4205 = vmatpush1.msra.mxu0 %v2623
    %4206 = vmatprep.subr.mxu0 %v2632
    %4207 = vmatpush1.msra.mxu0 %v2631
    %4208 = vmatprep.subr.mxu0 %v2640
    %4209 = vmatpush1.msra.mxu0 %v2639
    %4210 = vmatprep.mubr.f32.mxu0 %v2374
    %4211 = vmatmul.mubr.f32.gmra.mrb[0].mxu0 %v2372
    %v4212 = vpop.f32.mrb[0].mxu0
    %v4213 = vadd.f32 %v3278, %v4212
    %v4214 = vpop.f32.mrb[0].mxu0
    %v4215 = vadd.f32 %v3282, %v4214
    %4216 = vdwg.mxu0
    %4217 = vmatprep.subr.mxu0 %v2648
    %4218 = vmatpush1.msra.mxu0 %v2647
    %4219 = vmatprep.subr.mxu0 %v2656
    %4220 = vmatpush1.msra.mxu0 %v2655
    %4221 = vmatprep.subr.mxu0 %v2664
    %4222 = vmatpush1.msra.mxu0 %v2663
    %4223 = vmatprep.subr.mxu0 %v2672
    %4224 = vmatpush1.msra.mxu0 %v2671
    %4225 = vmatprep.subr.mxu0 %v2680
    %4226 = vmatpush1.msra.mxu0 %v2679
    %4227 = vmatprep.subr.mxu0 %v2688
    %4228 = vmatpush1.msra.mxu0 %v2687
    %4229 = vmatprep.subr.mxu0 %v2696
    %4230 = vmatpush1.msra.mxu0 %v2695
    %4231 = vmatprep.subr.mxu0 %v2704
    %4232 = vmatpush1.msra.mxu0 %v2703
    %4233 = vmatprep.subr.mxu0 %v2712
    %4234 = vmatpush1.msra.mxu0 %v2711
    %4235 = vmatprep.subr.mxu0 %v2720
    %4236 = vmatpush1.msra.mxu0 %v2719
    %4237 = vmatprep.subr.mxu0 %v2728
    %4238 = vmatpush1.msra.mxu0 %v2727
    %4239 = vmatprep.subr.mxu0 %v2736
    %4240 = vmatpush1.msra.mxu0 %v2735
    %4241 = vmatprep.subr.mxu0 %v2744
    %4242 = vmatpush1.msra.mxu0 %v2743
    %4243 = vmatprep.subr.mxu0 %v2752
    %4244 = vmatpush1.msra.mxu0 %v2751
    %4245 = vmatprep.subr.mxu0 %v2760
    %4246 = vmatpush1.msra.mxu0 %v2759
    %4247 = vmatprep.subr.mxu0 %v2768
    %4248 = vmatpush1.msra.mxu0 %v2767
    %4249 = vmatprep.subr.mxu0 %v2776
    %4250 = vmatpush1.msra.mxu0 %v2775
    %4251 = vmatprep.subr.mxu0 %v2784
    %4252 = vmatpush1.msra.mxu0 %v2783
    %4253 = vmatprep.subr.mxu0 %v2792
    %4254 = vmatpush1.msra.mxu0 %v2791
    %4255 = vmatprep.subr.mxu0 %v2800
    %4256 = vmatpush1.msra.mxu0 %v2799
    %4257 = vmatprep.subr.mxu0 %v2808
    %4258 = vmatpush1.msra.mxu0 %v2807
    %4259 = vmatprep.subr.mxu0 %v2816
    %4260 = vmatpush1.msra.mxu0 %v2815
    %4261 = vmatprep.subr.mxu0 %v2824
    %4262 = vmatpush1.msra.mxu0 %v2823
    %4263 = vmatprep.subr.mxu0 %v2832
    %4264 = vmatpush1.msra.mxu0 %v2831
    %4265 = vmatprep.subr.mxu0 %v2840
    %4266 = vmatpush1.msra.mxu0 %v2839
    %4267 = vmatprep.subr.mxu0 %v2848
    %4268 = vmatpush1.msra.mxu0 %v2847
    %4269 = vmatprep.subr.mxu0 %v2856
    %4270 = vmatpush1.msra.mxu0 %v2855
    %4271 = vmatprep.subr.mxu0 %v2864
    %4272 = vmatpush1.msra.mxu0 %v2863
    %4273 = vmatprep.subr.mxu0 %v2872
    %4274 = vmatpush1.msra.mxu0 %v2871
    %4275 = vmatprep.subr.mxu0 %v2880
    %4276 = vmatpush1.msra.mxu0 %v2879
    %4277 = vmatprep.subr.mxu0 %v2888
    %4278 = vmatpush1.msra.mxu0 %v2887
    %4279 = vmatprep.subr.mxu0 %v2896
    %4280 = vmatpush1.msra.mxu0 %v2895
    %4281 = vmatprep.mubr.f32.mxu0 %v2378
    %4282 = vmatmul.mubr.f32.gmra.mrb[0].mxu0 %v2376
    %v4283 = vpop.f32.mrb[0].mxu0
    %v4284 = vadd.f32 %v4213, %v4283
    %v4285 = vpop.f32.mrb[0].mxu0
    %v4286 = vadd.f32 %v4215, %v4285
    %4287 = vdwg.mxu0
    %4288 = vmatprep.subr.mxu0 %v2904
    %4289 = vmatpush1.msra.mxu0 %v2903
    %4290 = vmatprep.subr.mxu0 %v2912
    %4291 = vmatpush1.msra.mxu0 %v2911
    %4292 = vmatprep.subr.mxu0 %v2920
    %4293 = vmatpush1.msra.mxu0 %v2919
    %4294 = vmatprep.subr.mxu0 %v2928
    %4295 = vmatpush1.msra.mxu0 %v2927
    %4296 = vmatprep.subr.mxu0 %v2936
    %4297 = vmatpush1.msra.mxu0 %v2935
    %4298 = vmatprep.subr.mxu0 %v2944
    %4299 = vmatpush1.msra.mxu0 %v2943
    %4300 = vmatprep.subr.mxu0 %v2952
    %4301 = vmatpush1.msra.mxu0 %v2951
    %4302 = vmatprep.subr.mxu0 %v2960
    %4303 = vmatpush1.msra.mxu0 %v2959
    %4304 = vmatprep.subr.mxu0 %v2968
    %4305 = vmatpush1.msra.mxu0 %v2967
    %4306 = vmatprep.subr.mxu0 %v2976
    %4307 = vmatpush1.msra.mxu0 %v2975
    %4308 = vmatprep.subr.mxu0 %v2984
    %4309 = vmatpush1.msra.mxu0 %v2983
    %4310 = vmatprep.subr.mxu0 %v2992
    %4311 = vmatpush1.msra.mxu0 %v2991
    %4312 = vmatprep.subr.mxu0 %v3000
    %4313 = vmatpush1.msra.mxu0 %v2999
    %4314 = vmatprep.subr.mxu0 %v3008
    %4315 = vmatpush1.msra.mxu0 %v3007
    %4316 = vmatprep.subr.mxu0 %v3016
    %4317 = vmatpush1.msra.mxu0 %v3015
    %4318 = vmatprep.subr.mxu0 %v3024
    %4319 = vmatpush1.msra.mxu0 %v3023
    %4320 = vmatprep.subr.mxu0 %v3032
    %4321 = vmatpush1.msra.mxu0 %v3031
    %4322 = vmatprep.subr.mxu0 %v3040
    %4323 = vmatpush1.msra.mxu0 %v3039
    %4324 = vmatprep.subr.mxu0 %v3048
    %4325 = vmatpush1.msra.mxu0 %v3047
    %4326 = vmatprep.subr.mxu0 %v3056
    %4327 = vmatpush1.msra.mxu0 %v3055
    %4328 = vmatprep.subr.mxu0 %v3064
    %4329 = vmatpush1.msra.mxu0 %v3063
    %4330 = vmatprep.subr.mxu0 %v3072
    %4331 = vmatpush1.msra.mxu0 %v3071
    %4332 = vmatprep.subr.mxu0 %v3080
    %4333 = vmatpush1.msra.mxu0 %v3079
    %4334 = vmatprep.subr.mxu0 %v3088
    %4335 = vmatpush1.msra.mxu0 %v3087
    %4336 = vmatprep.subr.mxu0 %v3096
    %4337 = vmatpush1.msra.mxu0 %v3095
    %4338 = vmatprep.subr.mxu0 %v3104
    %4339 = vmatpush1.msra.mxu0 %v3103
    %4340 = vmatprep.subr.mxu0 %v3112
    %4341 = vmatpush1.msra.mxu0 %v3111
    %4342 = vmatprep.subr.mxu0 %v3120
    %4343 = vmatpush1.msra.mxu0 %v3119
    %4344 = vmatprep.subr.mxu0 %v3128
    %4345 = vmatpush1.msra.mxu0 %v3127
    %4346 = vmatprep.subr.mxu0 %v3136
    %4347 = vmatpush1.msra.mxu0 %v3135
    %4348 = vmatprep.subr.mxu0 %v3144
    %4349 = vmatpush1.msra.mxu0 %v3143
    %4350 = vmatprep.subr.mxu0 %v3152
    %4351 = vmatpush1.msra.mxu0 %v3151
    %4352 = vmatprep.mubr.f32.mxu0 %v2382
    %4353 = vmatmul.mubr.f32.gmra.mrb[0].mxu0 %v2380
    %v4354 = vpop.f32.mrb[0].mxu0
    %v4355 = vadd.f32 %v4284, %v4354
    %v4356 = vpop.f32.mrb[0].mxu0
    %v4357 = vadd.f32 %v4286, %v4356
    %4358 = vdwg.mxu0
    %4359 = vmatprep.subr.mxu0 %v3160
    %4360 = vmatpush1.msra.mxu0 %v3159
    %4361 = vmatprep.subr.mxu0 %v3168
    %4362 = vmatpush1.msra.mxu0 %v3167
    %4363 = vmatprep.subr.mxu0 %v3176
    %4364 = vmatpush1.msra.mxu0 %v3175
    %4365 = vmatprep.subr.mxu0 %v3184
    %4366 = vmatpush1.msra.mxu0 %v3183
    %4367 = vmatprep.subr.mxu0 %v3192
    %4368 = vmatpush1.msra.mxu0 %v3191
    %4369 = vmatprep.subr.mxu0 %v3200
    %4370 = vmatpush1.msra.mxu0 %v3199
    %4371 = vmatprep.subr.mxu0 %v3208
    %4372 = vmatpush1.msra.mxu0 %v3207
    %4373 = vmatprep.subr.mxu0 %v3216
    %4374 = vmatpush1.msra.mxu0 %v3215
    %4375 = vmatprep.subr.mxu0 %v3224
    %4376 = vmatpush1.msra.mxu0 %v3223
    %4377 = vmatprep.subr.mxu0 %v3232
    %4378 = vmatpush1.msra.mxu0 %v3231
    %4379 = vmatprep.subr.mxu0 %v3240
    %4380 = vmatpush1.msra.mxu0 %v3239
    %4381 = vmatprep.subr.mxu0 %v3248
    %4382 = vmatpush1.msra.mxu0 %v3247
    %4383 = vmatprep.subr.mxu0 0.0
    %4384 = vmatpush1.msra.mxu0 0.0
    %4385 = vmatprep.subr.mxu0 0.0
    %4386 = vmatpush1.msra.mxu0 0.0
    %4387 = vmatprep.subr.mxu0 0.0
    %4388 = vmatpush1.msra.mxu0 0.0
    %4389 = vmatprep.subr.mxu0 0.0
    %4390 = vmatpush1.msra.mxu0 0.0
    %4391 = vmatprep.subr.mxu0 0.0
    %4392 = vmatpush1.msra.mxu0 0.0
    %4393 = vmatprep.subr.mxu0 0.0
    %4394 = vmatpush1.msra.mxu0 0.0
    %4395 = vmatprep.subr.mxu0 0.0
    %4396 = vmatpush1.msra.mxu0 0.0
    %4397 = vmatprep.subr.mxu0 0.0
    %4398 = vmatpush1.msra.mxu0 0.0
    %4399 = vmatprep.subr.mxu0 0.0
    %4400 = vmatpush1.msra.mxu0 0.0
    %4401 = vmatprep.subr.mxu0 0.0
    %4402 = vmatpush1.msra.mxu0 0.0
    %4403 = vmatprep.subr.mxu0 0.0
    %4404 = vmatpush1.msra.mxu0 0.0
    %4405 = vmatprep.subr.mxu0 0.0
    %4406 = vmatpush1.msra.mxu0 0.0
    %4407 = vmatprep.subr.mxu0 0.0
    %4408 = vmatpush1.msra.mxu0 0.0
    %4409 = vmatprep.subr.mxu0 0.0
    %4410 = vmatpush1.msra.mxu0 0.0
    %4411 = vmatprep.subr.mxu0 0.0
    %4412 = vmatpush1.msra.mxu0 0.0
    %4413 = vmatprep.subr.mxu0 0.0
    %4414 = vmatpush1.msra.mxu0 0.0
    %4415 = vmatprep.subr.mxu0 0.0
    %4416 = vmatpush1.msra.mxu0 0.0
    %4417 = vmatprep.subr.mxu0 0.0
    %4418 = vmatpush1.msra.mxu0 0.0
    %4419 = vmatprep.subr.mxu0 0.0
    %4420 = vmatpush1.msra.mxu0 0.0
    %4421 = vmatprep.subr.mxu0 0.0
    %4422 = vmatpush1.msra.mxu0 0.0
    %4423 = vmatprep.mubr.f32.mxu0 0.0
    %4424 = vmatmul.mubr.f32.gmra.mrb[0].mxu0 %v3292
    %v4425 = vpop.f32.mrb[0].mxu0
    %v4426 = vadd.f32 %v4355, %v4425
    %v4427 = vpop.f32.mrb[0].mxu0
    %v4428 = vadd.f32 %v4357, %v4427
    %4429 = vdwg.mxu0
    %v4438 = vcombine.low %v3574, %v3576
    %v4439 = vcombine.low %v3858, %v3860
    %v4441 = vunpack.c.l.s4 1983009808
    %v4442 = vunpack.c.0.s8 %v4441
    %v4443 = vlaneseq
    %v4444 = vshrl.u32 %v4443, 7
    %v4445 = vsub.s32 %v4442, %v4444
    %v4446 = vrot.slane %v4438, %v4445
    %v4448 = vunpack.c.l.s4 1983009808
    %v4449 = vunpack.c.0.s8 %v4448
    %v4450 = vlaneseq
    %v4451 = vshrl.u32 %v4450, 7
    %v4452 = vsub.s32 %v4449, %v4451
    %v4453 = vrot.slane %v4439, %v4452
    %v4454 = vcombine.low %v4446, %v4453
    %v4455 = vcombine.low %v4142, %v4144
    %v4456 = vcombine.low %v4426, %v4428
    %v4458 = vunpack.c.l.s4 1983009808
    %v4459 = vunpack.c.0.s8 %v4458
    %v4460 = vlaneseq
    %v4461 = vshrl.u32 %v4460, 7
    %v4462 = vsub.s32 %v4459, %v4461
    %v4463 = vrot.slane %v4455, %v4462
    %v4465 = vunpack.c.l.s4 1983009808
    %v4466 = vunpack.c.0.s8 %v4465
    %v4467 = vlaneseq
    %v4468 = vshrl.u32 %v4467, 7
    %v4469 = vsub.s32 %v4466, %v4468
    %v4470 = vrot.slane %v4456, %v4469
    %v4471 = vcombine.low %v4463, %v4470
    %4474 = vst [vmem:[#allocation2] sm:$0xff] %v4454
    %vm4475 = vcmask 1041408
    %vm4476 = vcmask 1043458
    %vm4477 = vmor %vm4476, %vm4475
    %vm4478 = vcmask 1045508
    %vm4479 = vmor %vm4478, %vm4477
    %vm4480 = vcmask 850950
    %vm4481 = vmor %vm4480, %vm4479
    %4482 = vst.msk [vmem:[#allocation2 + $0x8] sm:$0xff] %vm4481, %v4471
    // Predicated region
    $region30: #{forward.15} parent=1 // pred_check
      _
    $region31: #{forward.15} parent=1 // pred_check_branch
      %4484 = sbr.rel (0) target = $region33
    $region32: #{forward.15} parent=1 // pred_region
      %s4486 = ssub.s32 256, 256
      %4487 = vsyncadd [#allocation3], %s4486
      %s4489 = sshll.u32 [#allocation2], 4
      %s4490 = int_to_ptr.vmem [resolvable:$true] %s4489
      %4492 = dma.vmem_to_hbm [thread:$0]  %s4490, 256, %s7, [#allocation3]
    $region33: #{forward.15} parent=1 // pred_fallthru
      _
    // Predicated region
    $region34: #{forward.15} parent=1 // pred_check
      _
    $region35: #{forward.15} parent=1 // pred_check_branch
      %4494 = sbr.rel (0) target = $region37
    $region36: #{forward.15} parent=1 // pred_region
      %4495 = dma.done [#allocation3], 256
    $region37: #{forward.15} parent=1 // pred_fallthru
      _
    %4496 = vsyncpa [#allocation3], 1

</llo_original>
